<compile_context>
chip_gen: v7x
topology: tpu7x:2x2x1
jax: 0.10.0
libtpu: 0.0.40
codegen_flags: <defaults>
</compile_context>

<pallas_src>
import functools
import numpy as np
import jax
import jax.numpy as jnp
from jax.experimental import pallas as pl
from jax.experimental.pallas import tpu as pltpu


LANES = 128          # channel padding for activations / outputs (lane-dense)
MARGIN = 16          # zero rows around the flattened canvas (>= wc + 1 = 11)
ACTS = ("relu", "relu", "relu", "none", "none", "none", "sigmoid")


# ------------------------------ Pallas kernel --------------------------------

def fused_cnn_kernel(x_ref, w_ref, b_ref, m_ref, o_ref, ext_ref, *, wc, cin_pad):
    """Whole 7-layer conv/convT pipeline for ONE batch sample, VMEM resident.

    x_ref  : (1, P, 128)             flattened zero-ringed input canvas, P = hc*wc
    w_ref  : (7, 9*cin_pad, 128)     per-layer bf16 GEMM weights (taps*Cin x Cout)
    b_ref  : (7, 1, 128)             per-layer f32 biases (zero padded)
    m_ref  : (7, P, 128)             per-layer lane-dense valid-region masks
    o_ref  : (1, P, 128)             last layer's canvas output (lane dense)
    ext_ref: (ext_rows, 128) scratch zero-bordered activation canvas
    """
    p = x_ref.shape[1]
    n_layers = w_ref.shape[0]
    ext_rows = ext_ref.shape[0]
    lanes = ext_ref.shape[1]

    # Zero only the margin strips (both stores sublane-aligned); the interior
    # is overwritten by the input right after, so rows [lo, MARGIN+p) of the
    # bottom strip are safely re-written.
    ext_ref[0:MARGIN, :] = jnp.zeros((MARGIN, lanes), jnp.float32)
    lo = ((MARGIN + p) // 8) * 8
    ext_ref[lo:ext_rows, :] = jnp.zeros((ext_rows - lo, lanes), jnp.float32)
    ext_ref[MARGIN:MARGIN + p, :] = x_ref[0]

    # The 9 taps of a 3x3 stencil are 9 constant row-shifts of the flattened
    # (row-major) canvas.
    shifts = [(dy - 1) * wc + (dx - 1) for dy in range(3) for dx in range(3)]

    for l in range(n_layers):
        # im2col without the VMEM round-trip: 9 shifted lane-slices of the
        # canvas concatenated along K and fed straight to the MXU.
        patches = jnp.concatenate(
            [ext_ref[MARGIN + s:MARGIN + s + p, 0:cin_pad] for s in shifts],
            axis=1)                                        # (P, 9*cin_pad) f32

        # 2-pass split-bf16 matmul: only the activations are split; weights are
        # already bf16 (precomputed in the wrapper).  f32 accumulation.
        p_hi = patches.astype(jnp.bfloat16)
        p_lo = (patches - p_hi.astype(jnp.float32)).astype(jnp.bfloat16)
        wmat = w_ref[l]                                    # (9*cin_pad, 128) bf16
        acc = jnp.dot(p_hi, wmat, preferred_element_type=jnp.float32)
        acc = acc + jnp.dot(p_lo, wmat, preferred_element_type=jnp.float32)

        acc = acc + b_ref[l]                               # (P,128) + (1,128)
        act = ACTS[l]
        if act == "relu":
            acc = jnp.maximum(acc, 0.0)
        elif act == "sigmoid":
            # exp on the EUP; approximate reciprocal also on the EUP (free slot).
            acc = pl.reciprocal(1.0 + jnp.exp(-acc), approx=True)

        if l + 1 < n_layers:
            # Zero everything outside this layer's valid output region so the
            # canvas zeros double as the next layer's conv padding.
            ext_ref[MARGIN:MARGIN + p, :] = acc * m_ref[l]
        else:
            o_ref[0] = acc                                 # lane-dense full vst


# ----------------------- weight / bias layout conversions --------------------

def _gemm_weight_conv(w_oihw, cin_pad, cout_pad=LANES):
    # PyTorch Conv2d weight (Cout, Cin, 3, 3) -> (9*cin_pad, cout_pad)
    co, ci, kh, kw = w_oihw.shape
    wt = jnp.transpose(w_oihw, (2, 3, 1, 0))                     # (kh,kw,ci,co)
    wt = jnp.pad(wt, ((0, 0), (0, 0), (0, cin_pad - ci), (0, cout_pad - co)))
    return wt.reshape(kh * kw * cin_pad, cout_pad)


def _gemm_weight_convT(w_iokk, cin_pad, cout_pad=LANES):
    # PyTorch ConvTranspose2d weight (Cin, Cout, 3, 3) -> equivalent-conv GEMM slab
    ci, co, kh, kw = w_iokk.shape
    wf = jnp.flip(w_iokk, axis=(2, 3))                           # spatial flip
    wt = jnp.transpose(wf, (2, 3, 0, 1))                         # (kh,kw,ci,co)
    wt = jnp.pad(wt, ((0, 0), (0, 0), (0, cin_pad - ci), (0, cout_pad - co)))
    return wt.reshape(kh * kw * cin_pad, cout_pad)


def _pad_bias(b, cout_pad=LANES):
    return jnp.pad(b, (0, cout_pad - b.shape[0])).reshape(1, cout_pad)


# ------------------------------ model forward --------------------------------

def dropout_model_forward(params, x_nchw):
    # nn.Dropout2d(0.3) is active only when training; eval-mode forward is identity.
    n, c, h, w = x_nchw.shape
    assert h == w, "square input expected (8x8 model)"
    hc, wc = h + 2, w + 2                   # canvas = input + 1-pixel zero ring
    assert MARGIN >= wc + 1
    p_s = hc * wc                           # per-sample canvas rows
    cin_pad = 8 * c                         # widest layer input (conv_middle / conv_T1)
    ext_rows = ((MARGIN + p_s + MARGIN + 7) // 8) * 8

    # ---- input canvas: NCHW -> NHWC, channel-pad to 128, 1-pixel zero ring ----
    x_nhwc = jnp.transpose(x_nchw, (0, 2, 3, 1))
    xc = jnp.pad(x_nhwc, ((0, 0), (1, 1), (1, 1), (0, LANES - c)))
    x_canvas = xc.reshape(n, p_s, LANES)

    # ---- per-layer GEMM weights / biases (data-movement glue in JAX) ----
    # Weights go to bf16 in the wrapper (static data, halves the weight DMA and
    # removes all in-kernel weight casting).
    w_all = jnp.stack([
        _gemm_weight_conv(params["conv1_w"], cin_pad),
        _gemm_weight_conv(params["conv2_w"], cin_pad),
        _gemm_weight_conv(params["conv3_w"], cin_pad),
        _gemm_weight_conv(params["convm_w"], cin_pad),
        _gemm_weight_convT(params["convT1_w"], cin_pad),
        _gemm_weight_convT(params["convT2_w"], cin_pad),
        _gemm_weight_convT(params["convT3_w"], cin_pad),
    ]).astype(jnp.bfloat16)                                      # (7, 9*cin_pad, 128)
    b_all = jnp.stack([
        _pad_bias(params["conv1_b"]), _pad_bias(params["conv2_b"]),
        _pad_bias(params["conv3_b"]), _pad_bias(params["convm_b"]),
        _pad_bias(params["convT1_b"]), _pad_bias(params["convT2_b"]),
        _pad_bias(params["convT3_b"]),
    ])                                                           # (7, 1, 128)

    # ---- per-layer valid-output-region masks (lane-dense, shared by samples) ----
    offs = [2, 3, 4, 4, 3, 2, 1]
    sizes = [h - 2, h - 4, h - 6, h - 6, h - 4, h - 2, h]
    masks = np.zeros((7, hc, wc), np.float32)
    for l, (o, s) in enumerate(zip(offs, sizes)):
        masks[l, o:o + s, o:o + s] = 1.0
    m_all = jnp.asarray(np.ascontiguousarray(
        np.broadcast_to(masks.reshape(7, p_s, 1), (7, p_s, LANES))))

    grid_spec = pltpu.PrefetchScalarGridSpec(
        num_scalar_prefetch=0,
        grid=(n,),                                               # one sample per step
        in_specs=[
            pl.BlockSpec((1, p_s, LANES), lambda b: (b, 0, 0)),          # x canvas
            pl.BlockSpec((7, 9 * cin_pad, LANES), lambda b: (0, 0, 0)),  # weights
            pl.BlockSpec((7, 1, LANES), lambda b: (0, 0, 0)),            # biases
            pl.BlockSpec((7, p_s, LANES), lambda b: (0, 0, 0)),          # masks
        ],
        out_specs=pl.BlockSpec((1, p_s, LANES), lambda b: (b, 0, 0)),
        scratch_shapes=[
            pltpu.VMEM((ext_rows, LANES), jnp.float32),          # activation canvas
        ],
    )

    out = pl.pallas_call(
        functools.partial(fused_cnn_kernel, wc=wc, cin_pad=cin_pad),
        out_shape=jax.ShapeDtypeStruct((n, p_s, LANES), jnp.float32),
        grid_spec=grid_spec,
        compiler_params=pltpu.CompilerParams(
            dimension_semantics=("parallel",),     # v7x: one sample per TensorCore
            vmem_limit_bytes=32 * 1024 * 1024),    # guard for future batch scaling
    )(x_canvas, w_all, b_all, m_all)                             # (N, P, 128)

    y = out.reshape(n, hc, wc, LANES)[:, 1:1 + h, 1:1 + w, :c]
    return jnp.transpose(y, (0, 3, 1, 2))                        # NHWC -> NCHW


# ------------------------------ parameters -----------------------------------

def init_params(key, channel):
    ks = jax.random.split(key, 14)

    def u(k, shape, fan_in):
        bnd = 1.0 / np.sqrt(fan_in)
        return jax.random.uniform(k, shape, jnp.float32, -bnd, bnd)

    c = channel
    p = {}
    # Conv2d weights: (Cout, Cin, 3, 3)
    p["conv1_w"] = u(ks[0], (2 * c, c, 3, 3), c * 9);        p["conv1_b"] = u(ks[1], (2 * c,), c * 9)
    p["conv2_w"] = u(ks[2], (4 * c, 2 * c, 3, 3), 2 * c * 9); p["conv2_b"] = u(ks[3], (4 * c,), 2 * c * 9)
    p["conv3_w"] = u(ks[4], (8 * c, 4 * c, 3, 3), 4 * c * 9); p["conv3_b"] = u(ks[5], (8 * c,), 4 * c * 9)
    p["convm_w"] = u(ks[6], (8 * c, 8 * c, 3, 3), 8 * c * 9); p["convm_b"] = u(ks[7], (8 * c,), 8 * c * 9)
    # ConvTranspose2d weights: (Cin, Cout, 3, 3)
    p["convT1_w"] = u(ks[8], (8 * c, 4 * c, 3, 3), 4 * c * 9);  p["convT1_b"] = u(ks[9], (4 * c,), 4 * c * 9)
    p["convT2_w"] = u(ks[10], (4 * c, 2 * c, 3, 3), 2 * c * 9); p["convT2_b"] = u(ks[11], (2 * c,), 2 * c * 9)
    p["convT3_w"] = u(ks[12], (2 * c, c, 3, 3), c * 9);         p["convT3_b"] = u(ks[13], (c,), c * 9)
    return p


# ------------------------- pure numpy reference ------------------------------

def np_conv2d(x, w, b, pad=0):
    n, cin, h, ww = x.shape
    cout, _, kh, kw = w.shape
    xp = np.pad(x, ((0, 0), (0, 0), (pad, pad), (pad, pad)))
    ho, wo = h + 2 * pad - kh + 1, ww + 2 * pad - kw + 1
    y = np.zeros((n, cout, ho, wo), np.float32)
    wmat = w.reshape(cout, -1)
    for i in range(ho):
        for j in range(wo):
            patch = xp[:, :, i:i + kh, j:j + kw].reshape(n, -1)
            y[:, :, i, j] = patch @ wmat.T + b
    return y


def np_convT2d(x, w, b):
    n, cin, h, ww = x.shape
    _, cout, kh, kw = w.shape
    y = np.zeros((n, cout, h + kh - 1, ww + kw - 1), np.float32)
    for i in range(h):
        for j in range(ww):
            y[:, :, i:i + kh, j:j + kw] += np.einsum("nc,cokl->nokl", x[:, :, i, j], w)
    return y + b.reshape(1, cout, 1, 1)


def np_reference(params, x):
    relu = lambda a: np.maximum(a, 0.0)
    y = relu(np_conv2d(x, params["conv1_w"], params["conv1_b"]))
    y = relu(np_conv2d(y, params["conv2_w"], params["conv2_b"]))
    y = relu(np_conv2d(y, params["conv3_w"], params["conv3_b"]))
    y = np_conv2d(y, params["convm_w"], params["convm_b"], pad=1)
    y = np_convT2d(y, params["convT1_w"], params["convT1_b"])
    y = np_convT2d(y, params["convT2_w"], params["convT2_b"])
    y = 1.0 / (1.0 + np.exp(-np_convT2d(y, params["convT3_w"], params["convT3_b"])))
    return y


# ---------------------------------- main --------------------------------------

if __name__ == "__main__":
    channel = 4
    key = jax.random.PRNGKey(0)
    kx, kp = jax.random.split(key)
    # The architecture implies an 8x8 spatial input (hence "8x8" in the name).
    x = jax.random.normal(kx, (2, channel, 8, 8), jnp.float32)   # NCHW, like PyTorch
    params = init_params(kp, channel)

    fwd = jax.jit(dropout_model_forward)
    y = fwd(params, x)
    jax.block_until_ready(y)

    assert y.shape == (2, channel, 8, 8), y.shape

    np_params = {k: np.asarray(v) for k, v in params.items()}
    ref = np_reference(np_params, np.asarray(x))
    np.testing.assert_allclose(np.asarray(y), ref, rtol=2e-3, atol=2e-3)

    print("KERNEL_OK")
</pallas_src>

<mosaic_0001>
module attributes {stable_mosaic.version = 11 : i64} {
  func.func @fused_cnn_kernel(%arg0: i32, %arg1: memref<1x100x128xf32, #tpu.memory_space<vmem>>, %arg2: memref<7x288x128xbf16, #tpu.memory_space<vmem>>, %arg3: memref<7x1x128xf32, #tpu.memory_space<vmem>>, %arg4: memref<7x100x128xf32, #tpu.memory_space<vmem>>, %arg5: memref<1x100x128xf32, #tpu.memory_space<vmem>>, %arg6: memref<136x128xf32, #tpu.memory_space<vmem>>) attributes {dimension_semantics = [#tpu.dimension_semantics<parallel>], iteration_bounds = array<i64: 2>, scalar_prefetch = 0 : i64, scratch_operands = 1 : i64, tpu.core_type = #tpu.core_type<tc>, window_params = [{transform_indices = @transform_0, window_bounds = array<i64: 1, 100, 128>}, {pipeline_mode = #tpu.pipeline_mode<synchronous>, transform_indices = @transform_1, window_bounds = array<i64: 7, 288, 128>}, {pipeline_mode = #tpu.pipeline_mode<synchronous>, transform_indices = @transform_2, window_bounds = array<i64: 7, 1, 128>}, {pipeline_mode = #tpu.pipeline_mode<synchronous>, transform_indices = @transform_3, window_bounds = array<i64: 7, 100, 128>}, {transform_indices = @transform_4, window_bounds = array<i64: 1, 100, 128>}]} {
    %cst = arith.constant 0.000000e+00 : f32
    %0 = vector.broadcast %cst : f32 to vector<16x128xf32>
    %c0 = arith.constant 0 : index
    %c0_0 = arith.constant 0 : index
    %1 = vector.load %arg6[%c0, %c0_0] : memref<136x128xf32, #tpu.memory_space<vmem>>, vector<16x128xf32>
    tpu.vector_store %arg6[%c0, %c0_0], %0 {strides = array<i32>} : memref<136x128xf32, #tpu.memory_space<vmem>>, vector<16x128xf32>,
    %cst_1 = arith.constant 0.000000e+00 : f32
    %2 = vector.broadcast %cst_1 : f32 to vector<24x128xf32>
    %c112 = arith.constant 112 : index
    %c0_2 = arith.constant 0 : index
    %3 = vector.load %arg6[%c112, %c0_2] : memref<136x128xf32, #tpu.memory_space<vmem>>, vector<24x128xf32>
    tpu.vector_store %arg6[%c112, %c0_2], %2 {strides = array<i32>} : memref<136x128xf32, #tpu.memory_space<vmem>>, vector<24x128xf32>,
    %c0_3 = arith.constant 0 : index
    %c0_4 = arith.constant 0 : index
    %c0_5 = arith.constant 0 : index
    %4 = vector.load %arg1[%c0_3, %c0_4, %c0_5] : memref<1x100x128xf32, #tpu.memory_space<vmem>>, vector<1x100x128xf32>
    %5 = vector.shape_cast %4 : vector<1x100x128xf32> to vector<100x128xf32>
    %c16 = arith.constant 16 : index
    %c0_6 = arith.constant 0 : index
    %6 = vector.load %arg6[%c16, %c0_6] : memref<136x128xf32, #tpu.memory_space<vmem>>, vector<100x128xf32>
    tpu.vector_store %arg6[%c16, %c0_6], %5 {strides = array<i32>} : memref<136x128xf32, #tpu.memory_space<vmem>>, vector<100x128xf32>,
    %c5 = arith.constant 5 : index
    %c0_7 = arith.constant 0 : index
    %7 = vector.load %arg6[%c5, %c0_7] : memref<136x128xf32, #tpu.memory_space<vmem>>, vector<100x32xf32>
    %c6 = arith.constant 6 : index
    %c0_8 = arith.constant 0 : index
    %8 = vector.load %arg6[%c6, %c0_8] : memref<136x128xf32, #tpu.memory_space<vmem>>, vector<100x32xf32>
    %c7 = arith.constant 7 : index
    %c0_9 = arith.constant 0 : index
    %9 = vector.load %arg6[%c7, %c0_9] : memref<136x128xf32, #tpu.memory_space<vmem>>, vector<100x32xf32>
    %c15 = arith.constant 15 : index
    %c0_10 = arith.constant 0 : index
    %10 = vector.load %arg6[%c15, %c0_10] : memref<136x128xf32, #tpu.memory_space<vmem>>, vector<100x32xf32>
    %c16_11 = arith.constant 16 : index
    %c0_12 = arith.constant 0 : index
    %11 = vector.load %arg6[%c16_11, %c0_12] : memref<136x128xf32, #tpu.memory_space<vmem>>, vector<100x32xf32>
    %c17 = arith.constant 17 : index
    %c0_13 = arith.constant 0 : index
    %12 = vector.load %arg6[%c17, %c0_13] : memref<136x128xf32, #tpu.memory_space<vmem>>, vector<100x32xf32>
    %c25 = arith.constant 25 : index
    %c0_14 = arith.constant 0 : index
    %13 = vector.load %arg6[%c25, %c0_14] : memref<136x128xf32, #tpu.memory_space<vmem>>, vector<100x32xf32>
    %c26 = arith.constant 26 : index
    %c0_15 = arith.constant 0 : index
    %14 = vector.load %arg6[%c26, %c0_15] : memref<136x128xf32, #tpu.memory_space<vmem>>, vector<100x32xf32>
    %c27 = arith.constant 27 : index
    %c0_16 = arith.constant 0 : index
    %15 = vector.load %arg6[%c27, %c0_16] : memref<136x128xf32, #tpu.memory_space<vmem>>, vector<100x32xf32>
    %16 = tpu.concatenate %7, %8, %9, %10, %11, %12, %13, %14, %15 in 1 : vector<100x32xf32>, vector<100x32xf32>, vector<100x32xf32>, vector<100x32xf32>, vector<100x32xf32>, vector<100x32xf32>, vector<100x32xf32>, vector<100x32xf32>, vector<100x32xf32> -> vector<100x288xf32>
    %17 = arith.truncf %16 : vector<100x288xf32> to vector<100x288xbf16>
    %18 = arith.extf %17 : vector<100x288xbf16> to vector<100x288xf32>
    %19 = arith.subf %16, %18 : vector<100x288xf32>
    %20 = arith.truncf %19 : vector<100x288xf32> to vector<100x288xbf16>
    %c0_17 = arith.constant 0 : index
    %c0_18 = arith.constant 0 : index
    %c0_19 = arith.constant 0 : index
    %21 = vector.load %arg2[%c0_17, %c0_18, %c0_19] : memref<7x288x128xbf16, #tpu.memory_space<vmem>>, vector<1x288x128xbf16>
    %22 = vector.shape_cast %21 : vector<1x288x128xbf16> to vector<288x128xbf16>
    %cst_20 = arith.constant dense<0.000000e+00> : vector<100x128xf32>
    %23 = tpu.matmul %17, %22, %cst_20 {dimension_numbers = #tpu.dot_dimension_numbers<[1], [0], [0], [1], [0, 0, 1, 1], [], []>} : vector<100x288xbf16>, vector<288x128xbf16>, vector<100x128xf32> -> vector<100x128xf32>
    %cst_21 = arith.constant dense<0.000000e+00> : vector<100x128xf32>
    %24 = tpu.matmul %20, %22, %cst_21 {dimension_numbers = #tpu.dot_dimension_numbers<[1], [0], [0], [1], [0, 0, 1, 1], [], []>} : vector<100x288xbf16>, vector<288x128xbf16>, vector<100x128xf32> -> vector<100x128xf32>
    %25 = arith.addf %23, %24 : vector<100x128xf32>
    %c0_22 = arith.constant 0 : index
    %c0_23 = arith.constant 0 : index
    %c0_24 = arith.constant 0 : index
    %26 = vector.load %arg3[%c0_22, %c0_23, %c0_24] : memref<7x1x128xf32, #tpu.memory_space<vmem>>, vector<1x1x128xf32>
    %27 = vector.shape_cast %26 : vector<1x1x128xf32> to vector<1x128xf32>
    %28 = vector.broadcast %27 : vector<1x128xf32> to vector<100x128xf32>
    %29 = arith.addf %25, %28 : vector<100x128xf32>
    %cst_25 = arith.constant 0.000000e+00 : f32
    %30 = vector.broadcast %cst_25 : f32 to vector<100x128xf32>
    %31 = arith.maximumf %29, %30 : vector<100x128xf32>
    %c0_26 = arith.constant 0 : index
    %c0_27 = arith.constant 0 : index
    %c0_28 = arith.constant 0 : index
    %32 = vector.load %arg4[%c0_26, %c0_27, %c0_28] : memref<7x100x128xf32, #tpu.memory_space<vmem>>, vector<1x100x128xf32>
    %33 = vector.shape_cast %32 : vector<1x100x128xf32> to vector<100x128xf32>
    %34 = arith.mulf %31, %33 : vector<100x128xf32>
    %c16_29 = arith.constant 16 : index
    %c0_30 = arith.constant 0 : index
    %35 = vector.load %arg6[%c16_29, %c0_30] : memref<136x128xf32, #tpu.memory_space<vmem>>, vector<100x128xf32>
    tpu.vector_store %arg6[%c16_29, %c0_30], %34 {strides = array<i32>} : memref<136x128xf32, #tpu.memory_space<vmem>>, vector<100x128xf32>,
    %c5_31 = arith.constant 5 : index
    %c0_32 = arith.constant 0 : index
    %36 = vector.load %arg6[%c5_31, %c0_32] : memref<136x128xf32, #tpu.memory_space<vmem>>, vector<100x32xf32>
    %c6_33 = arith.constant 6 : index
    %c0_34 = arith.constant 0 : index
    %37 = vector.load %arg6[%c6_33, %c0_34] : memref<136x128xf32, #tpu.memory_space<vmem>>, vector<100x32xf32>
    %c7_35 = arith.constant 7 : index
    %c0_36 = arith.constant 0 : index
    %38 = vector.load %arg6[%c7_35, %c0_36] : memref<136x128xf32, #tpu.memory_space<vmem>>, vector<100x32xf32>
    %c15_37 = arith.constant 15 : index
    %c0_38 = arith.constant 0 : index
    %39 = vector.load %arg6[%c15_37, %c0_38] : memref<136x128xf32, #tpu.memory_space<vmem>>, vector<100x32xf32>
    %c16_39 = arith.constant 16 : index
    %c0_40 = arith.constant 0 : index
    %40 = vector.load %arg6[%c16_39, %c0_40] : memref<136x128xf32, #tpu.memory_space<vmem>>, vector<100x32xf32>
    %c17_41 = arith.constant 17 : index
    %c0_42 = arith.constant 0 : index
    %41 = vector.load %arg6[%c17_41, %c0_42] : memref<136x128xf32, #tpu.memory_space<vmem>>, vector<100x32xf32>
    %c25_43 = arith.constant 25 : index
    %c0_44 = arith.constant 0 : index
    %42 = vector.load %arg6[%c25_43, %c0_44] : memref<136x128xf32, #tpu.memory_space<vmem>>, vector<100x32xf32>
    %c26_45 = arith.constant 26 : index
    %c0_46 = arith.constant 0 : index
    %43 = vector.load %arg6[%c26_45, %c0_46] : memref<136x128xf32, #tpu.memory_space<vmem>>, vector<100x32xf32>
    %c27_47 = arith.constant 27 : index
    %c0_48 = arith.constant 0 : index
    %44 = vector.load %arg6[%c27_47, %c0_48] : memref<136x128xf32, #tpu.memory_space<vmem>>, vector<100x32xf32>
    %45 = tpu.concatenate %36, %37, %38, %39, %40, %41, %42, %43, %44 in 1 : vector<100x32xf32>, vector<100x32xf32>, vector<100x32xf32>, vector<100x32xf32>, vector<100x32xf32>, vector<100x32xf32>, vector<100x32xf32>, vector<100x32xf32>, vector<100x32xf32> -> vector<100x288xf32>
    %46 = arith.truncf %45 : vector<100x288xf32> to vector<100x288xbf16>
    %47 = arith.extf %46 : vector<100x288xbf16> to vector<100x288xf32>
    %48 = arith.subf %45, %47 : vector<100x288xf32>
    %49 = arith.truncf %48 : vector<100x288xf32> to vector<100x288xbf16>
    %c1 = arith.constant 1 : index
    %c0_49 = arith.constant 0 : index
    %c0_50 = arith.constant 0 : index
    %50 = vector.load %arg2[%c1, %c0_49, %c0_50] : memref<7x288x128xbf16, #tpu.memory_space<vmem>>, vector<1x288x128xbf16>
    %51 = vector.shape_cast %50 : vector<1x288x128xbf16> to vector<288x128xbf16>
    %cst_51 = arith.constant dense<0.000000e+00> : vector<100x128xf32>
    %52 = tpu.matmul %46, %51, %cst_51 {dimension_numbers = #tpu.dot_dimension_numbers<[1], [0], [0], [1], [0, 0, 1, 1], [], []>} : vector<100x288xbf16>, vector<288x128xbf16>, vector<100x128xf32> -> vector<100x128xf32>
    %cst_52 = arith.constant dense<0.000000e+00> : vector<100x128xf32>
    %53 = tpu.matmul %49, %51, %cst_52 {dimension_numbers = #tpu.dot_dimension_numbers<[1], [0], [0], [1], [0, 0, 1, 1], [], []>} : vector<100x288xbf16>, vector<288x128xbf16>, vector<100x128xf32> -> vector<100x128xf32>
    %54 = arith.addf %52, %53 : vector<100x128xf32>
    %c1_53 = arith.constant 1 : index
    %c0_54 = arith.constant 0 : index
    %c0_55 = arith.constant 0 : index
    %55 = vector.load %arg3[%c1_53, %c0_54, %c0_55] : memref<7x1x128xf32, #tpu.memory_space<vmem>>, vector<1x1x128xf32>
    %56 = vector.shape_cast %55 : vector<1x1x128xf32> to vector<1x128xf32>
    %57 = vector.broadcast %56 : vector<1x128xf32> to vector<100x128xf32>
    %58 = arith.addf %54, %57 : vector<100x128xf32>
    %cst_56 = arith.constant 0.000000e+00 : f32
    %59 = vector.broadcast %cst_56 : f32 to vector<100x128xf32>
    %60 = arith.maximumf %58, %59 : vector<100x128xf32>
    %c1_57 = arith.constant 1 : index
    %c0_58 = arith.constant 0 : index
    %c0_59 = arith.constant 0 : index
    %61 = vector.load %arg4[%c1_57, %c0_58, %c0_59] : memref<7x100x128xf32, #tpu.memory_space<vmem>>, vector<1x100x128xf32>
    %62 = vector.shape_cast %61 : vector<1x100x128xf32> to vector<100x128xf32>
    %63 = arith.mulf %60, %62 : vector<100x128xf32>
    %c16_60 = arith.constant 16 : index
    %c0_61 = arith.constant 0 : index
    %64 = vector.load %arg6[%c16_60, %c0_61] : memref<136x128xf32, #tpu.memory_space<vmem>>, vector<100x128xf32>
    tpu.vector_store %arg6[%c16_60, %c0_61], %63 {strides = array<i32>} : memref<136x128xf32, #tpu.memory_space<vmem>>, vector<100x128xf32>,
    %c5_62 = arith.constant 5 : index
    %c0_63 = arith.constant 0 : index
    %65 = vector.load %arg6[%c5_62, %c0_63] : memref<136x128xf32, #tpu.memory_space<vmem>>, vector<100x32xf32>
    %c6_64 = arith.constant 6 : index
    %c0_65 = arith.constant 0 : index
    %66 = vector.load %arg6[%c6_64, %c0_65] : memref<136x128xf32, #tpu.memory_space<vmem>>, vector<100x32xf32>
    %c7_66 = arith.constant 7 : index
    %c0_67 = arith.constant 0 : index
    %67 = vector.load %arg6[%c7_66, %c0_67] : memref<136x128xf32, #tpu.memory_space<vmem>>, vector<100x32xf32>
    %c15_68 = arith.constant 15 : index
    %c0_69 = arith.constant 0 : index
    %68 = vector.load %arg6[%c15_68, %c0_69] : memref<136x128xf32, #tpu.memory_space<vmem>>, vector<100x32xf32>
    %c16_70 = arith.constant 16 : index
    %c0_71 = arith.constant 0 : index
    %69 = vector.load %arg6[%c16_70, %c0_71] : memref<136x128xf32, #tpu.memory_space<vmem>>, vector<100x32xf32>
    %c17_72 = arith.constant 17 : index
    %c0_73 = arith.constant 0 : index
    %70 = vector.load %arg6[%c17_72, %c0_73] : memref<136x128xf32, #tpu.memory_space<vmem>>, vector<100x32xf32>
    %c25_74 = arith.constant 25 : index
    %c0_75 = arith.constant 0 : index
    %71 = vector.load %arg6[%c25_74, %c0_75] : memref<136x128xf32, #tpu.memory_space<vmem>>, vector<100x32xf32>
    %c26_76 = arith.constant 26 : index
    %c0_77 = arith.constant 0 : index
    %72 = vector.load %arg6[%c26_76, %c0_77] : memref<136x128xf32, #tpu.memory_space<vmem>>, vector<100x32xf32>
    %c27_78 = arith.constant 27 : index
    %c0_79 = arith.constant 0 : index
    %73 = vector.load %arg6[%c27_78, %c0_79] : memref<136x128xf32, #tpu.memory_space<vmem>>, vector<100x32xf32>
    %74 = tpu.concatenate %65, %66, %67, %68, %69, %70, %71, %72, %73 in 1 : vector<100x32xf32>, vector<100x32xf32>, vector<100x32xf32>, vector<100x32xf32>, vector<100x32xf32>, vector<100x32xf32>, vector<100x32xf32>, vector<100x32xf32>, vector<100x32xf32> -> vector<100x288xf32>
    %75 = arith.truncf %74 : vector<100x288xf32> to vector<100x288xbf16>
    %76 = arith.extf %75 : vector<100x288xbf16> to vector<100x288xf32>
    %77 = arith.subf %74, %76 : vector<100x288xf32>
    %78 = arith.truncf %77 : vector<100x288xf32> to vector<100x288xbf16>
    %c2 = arith.constant 2 : index
    %c0_80 = arith.constant 0 : index
    %c0_81 = arith.constant 0 : index
    %79 = vector.load %arg2[%c2, %c0_80, %c0_81] : memref<7x288x128xbf16, #tpu.memory_space<vmem>>, vector<1x288x128xbf16>
    %80 = vector.shape_cast %79 : vector<1x288x128xbf16> to vector<288x128xbf16>
    %cst_82 = arith.constant dense<0.000000e+00> : vector<100x128xf32>
    %81 = tpu.matmul %75, %80, %cst_82 {dimension_numbers = #tpu.dot_dimension_numbers<[1], [0], [0], [1], [0, 0, 1, 1], [], []>} : vector<100x288xbf16>, vector<288x128xbf16>, vector<100x128xf32> -> vector<100x128xf32>
    %cst_83 = arith.constant dense<0.000000e+00> : vector<100x128xf32>
    %82 = tpu.matmul %78, %80, %cst_83 {dimension_numbers = #tpu.dot_dimension_numbers<[1], [0], [0], [1], [0, 0, 1, 1], [], []>} : vector<100x288xbf16>, vector<288x128xbf16>, vector<100x128xf32> -> vector<100x128xf32>
    %83 = arith.addf %81, %82 : vector<100x128xf32>
    %c2_84 = arith.constant 2 : index
    %c0_85 = arith.constant 0 : index
    %c0_86 = arith.constant 0 : index
    %84 = vector.load %arg3[%c2_84, %c0_85, %c0_86] : memref<7x1x128xf32, #tpu.memory_space<vmem>>, vector<1x1x128xf32>
    %85 = vector.shape_cast %84 : vector<1x1x128xf32> to vector<1x128xf32>
    %86 = vector.broadcast %85 : vector<1x128xf32> to vector<100x128xf32>
    %87 = arith.addf %83, %86 : vector<100x128xf32>
    %cst_87 = arith.constant 0.000000e+00 : f32
    %88 = vector.broadcast %cst_87 : f32 to vector<100x128xf32>
    %89 = arith.maximumf %87, %88 : vector<100x128xf32>
    %c2_88 = arith.constant 2 : index
    %c0_89 = arith.constant 0 : index
    %c0_90 = arith.constant 0 : index
    %90 = vector.load %arg4[%c2_88, %c0_89, %c0_90] : memref<7x100x128xf32, #tpu.memory_space<vmem>>, vector<1x100x128xf32>
    %91 = vector.shape_cast %90 : vector<1x100x128xf32> to vector<100x128xf32>
    %92 = arith.mulf %89, %91 : vector<100x128xf32>
    %c16_91 = arith.constant 16 : index
    %c0_92 = arith.constant 0 : index
    %93 = vector.load %arg6[%c16_91, %c0_92] : memref<136x128xf32, #tpu.memory_space<vmem>>, vector<100x128xf32>
    tpu.vector_store %arg6[%c16_91, %c0_92], %92 {strides = array<i32>} : memref<136x128xf32, #tpu.memory_space<vmem>>, vector<100x128xf32>,
    %c5_93 = arith.constant 5 : index
    %c0_94 = arith.constant 0 : index
    %94 = vector.load %arg6[%c5_93, %c0_94] : memref<136x128xf32, #tpu.memory_space<vmem>>, vector<100x32xf32>
    %c6_95 = arith.constant 6 : index
    %c0_96 = arith.constant 0 : index
    %95 = vector.load %arg6[%c6_95, %c0_96] : memref<136x128xf32, #tpu.memory_space<vmem>>, vector<100x32xf32>
    %c7_97 = arith.constant 7 : index
    %c0_98 = arith.constant 0 : index
    %96 = vector.load %arg6[%c7_97, %c0_98] : memref<136x128xf32, #tpu.memory_space<vmem>>, vector<100x32xf32>
    %c15_99 = arith.constant 15 : index
    %c0_100 = arith.constant 0 : index
    %97 = vector.load %arg6[%c15_99, %c0_100] : memref<136x128xf32, #tpu.memory_space<vmem>>, vector<100x32xf32>
    %c16_101 = arith.constant 16 : index
    %c0_102 = arith.constant 0 : index
    %98 = vector.load %arg6[%c16_101, %c0_102] : memref<136x128xf32, #tpu.memory_space<vmem>>, vector<100x32xf32>
    %c17_103 = arith.constant 17 : index
    %c0_104 = arith.constant 0 : index
    %99 = vector.load %arg6[%c17_103, %c0_104] : memref<136x128xf32, #tpu.memory_space<vmem>>, vector<100x32xf32>
    %c25_105 = arith.constant 25 : index
    %c0_106 = arith.constant 0 : index
    %100 = vector.load %arg6[%c25_105, %c0_106] : memref<136x128xf32, #tpu.memory_space<vmem>>, vector<100x32xf32>
    %c26_107 = arith.constant 26 : index
    %c0_108 = arith.constant 0 : index
    %101 = vector.load %arg6[%c26_107, %c0_108] : memref<136x128xf32, #tpu.memory_space<vmem>>, vector<100x32xf32>
    %c27_109 = arith.constant 27 : index
    %c0_110 = arith.constant 0 : index
    %102 = vector.load %arg6[%c27_109, %c0_110] : memref<136x128xf32, #tpu.memory_space<vmem>>, vector<100x32xf32>
    %103 = tpu.concatenate %94, %95, %96, %97, %98, %99, %100, %101, %102 in 1 : vector<100x32xf32>, vector<100x32xf32>, vector<100x32xf32>, vector<100x32xf32>, vector<100x32xf32>, vector<100x32xf32>, vector<100x32xf32>, vector<100x32xf32>, vector<100x32xf32> -> vector<100x288xf32>
    %104 = arith.truncf %103 : vector<100x288xf32> to vector<100x288xbf16>
    %105 = arith.extf %104 : vector<100x288xbf16> to vector<100x288xf32>
    %106 = arith.subf %103, %105 : vector<100x288xf32>
    %107 = arith.truncf %106 : vector<100x288xf32> to vector<100x288xbf16>
    %c3 = arith.constant 3 : index
    %c0_111 = arith.constant 0 : index
    %c0_112 = arith.constant 0 : index
    %108 = vector.load %arg2[%c3, %c0_111, %c0_112] : memref<7x288x128xbf16, #tpu.memory_space<vmem>>, vector<1x288x128xbf16>
    %109 = vector.shape_cast %108 : vector<1x288x128xbf16> to vector<288x128xbf16>
    %cst_113 = arith.constant dense<0.000000e+00> : vector<100x128xf32>
    %110 = tpu.matmul %104, %109, %cst_113 {dimension_numbers = #tpu.dot_dimension_numbers<[1], [0], [0], [1], [0, 0, 1, 1], [], []>} : vector<100x288xbf16>, vector<288x128xbf16>, vector<100x128xf32> -> vector<100x128xf32>
    %cst_114 = arith.constant dense<0.000000e+00> : vector<100x128xf32>
    %111 = tpu.matmul %107, %109, %cst_114 {dimension_numbers = #tpu.dot_dimension_numbers<[1], [0], [0], [1], [0, 0, 1, 1], [], []>} : vector<100x288xbf16>, vector<288x128xbf16>, vector<100x128xf32> -> vector<100x128xf32>
    %112 = arith.addf %110, %111 : vector<100x128xf32>
    %c3_115 = arith.constant 3 : index
    %c0_116 = arith.constant 0 : index
    %c0_117 = arith.constant 0 : index
    %113 = vector.load %arg3[%c3_115, %c0_116, %c0_117] : memref<7x1x128xf32, #tpu.memory_space<vmem>>, vector<1x1x128xf32>
    %114 = vector.shape_cast %113 : vector<1x1x128xf32> to vector<1x128xf32>
    %115 = vector.broadcast %114 : vector<1x128xf32> to vector<100x128xf32>
    %116 = arith.addf %112, %115 : vector<100x128xf32>
    %c3_118 = arith.constant 3 : index
    %c0_119 = arith.constant 0 : index
    %c0_120 = arith.constant 0 : index
    %117 = vector.load %arg4[%c3_118, %c0_119, %c0_120] : memref<7x100x128xf32, #tpu.memory_space<vmem>>, vector<1x100x128xf32>
    %118 = vector.shape_cast %117 : vector<1x100x128xf32> to vector<100x128xf32>
    %119 = arith.mulf %116, %118 : vector<100x128xf32>
    %c16_121 = arith.constant 16 : index
    %c0_122 = arith.constant 0 : index
    %120 = vector.load %arg6[%c16_121, %c0_122] : memref<136x128xf32, #tpu.memory_space<vmem>>, vector<100x128xf32>
    tpu.vector_store %arg6[%c16_121, %c0_122], %119 {strides = array<i32>} : memref<136x128xf32, #tpu.memory_space<vmem>>, vector<100x128xf32>,
    %c5_123 = arith.constant 5 : index
    %c0_124 = arith.constant 0 : index
    %121 = vector.load %arg6[%c5_123, %c0_124] : memref<136x128xf32, #tpu.memory_space<vmem>>, vector<100x32xf32>
    %c6_125 = arith.constant 6 : index
    %c0_126 = arith.constant 0 : index
    %122 = vector.load %arg6[%c6_125, %c0_126] : memref<136x128xf32, #tpu.memory_space<vmem>>, vector<100x32xf32>
    %c7_127 = arith.constant 7 : index
    %c0_128 = arith.constant 0 : index
    %123 = vector.load %arg6[%c7_127, %c0_128] : memref<136x128xf32, #tpu.memory_space<vmem>>, vector<100x32xf32>
    %c15_129 = arith.constant 15 : index
    %c0_130 = arith.constant 0 : index
    %124 = vector.load %arg6[%c15_129, %c0_130] : memref<136x128xf32, #tpu.memory_space<vmem>>, vector<100x32xf32>
    %c16_131 = arith.constant 16 : index
    %c0_132 = arith.constant 0 : index
    %125 = vector.load %arg6[%c16_131, %c0_132] : memref<136x128xf32, #tpu.memory_space<vmem>>, vector<100x32xf32>
    %c17_133 = arith.constant 17 : index
    %c0_134 = arith.constant 0 : index
    %126 = vector.load %arg6[%c17_133, %c0_134] : memref<136x128xf32, #tpu.memory_space<vmem>>, vector<100x32xf32>
    %c25_135 = arith.constant 25 : index
    %c0_136 = arith.constant 0 : index
    %127 = vector.load %arg6[%c25_135, %c0_136] : memref<136x128xf32, #tpu.memory_space<vmem>>, vector<100x32xf32>
    %c26_137 = arith.constant 26 : index
    %c0_138 = arith.constant 0 : index
    %128 = vector.load %arg6[%c26_137, %c0_138] : memref<136x128xf32, #tpu.memory_space<vmem>>, vector<100x32xf32>
    %c27_139 = arith.constant 27 : index
    %c0_140 = arith.constant 0 : index
    %129 = vector.load %arg6[%c27_139, %c0_140] : memref<136x128xf32, #tpu.memory_space<vmem>>, vector<100x32xf32>
    %130 = tpu.concatenate %121, %122, %123, %124, %125, %126, %127, %128, %129 in 1 : vector<100x32xf32>, vector<100x32xf32>, vector<100x32xf32>, vector<100x32xf32>, vector<100x32xf32>, vector<100x32xf32>, vector<100x32xf32>, vector<100x32xf32>, vector<100x32xf32> -> vector<100x288xf32>
    %131 = arith.truncf %130 : vector<100x288xf32> to vector<100x288xbf16>
    %132 = arith.extf %131 : vector<100x288xbf16> to vector<100x288xf32>
    %133 = arith.subf %130, %132 : vector<100x288xf32>
    %134 = arith.truncf %133 : vector<100x288xf32> to vector<100x288xbf16>
    %c4 = arith.constant 4 : index
    %c0_141 = arith.constant 0 : index
    %c0_142 = arith.constant 0 : index
    %135 = vector.load %arg2[%c4, %c0_141, %c0_142] : memref<7x288x128xbf16, #tpu.memory_space<vmem>>, vector<1x288x128xbf16>
    %136 = vector.shape_cast %135 : vector<1x288x128xbf16> to vector<288x128xbf16>
    %cst_143 = arith.constant dense<0.000000e+00> : vector<100x128xf32>
    %137 = tpu.matmul %131, %136, %cst_143 {dimension_numbers = #tpu.dot_dimension_numbers<[1], [0], [0], [1], [0, 0, 1, 1], [], []>} : vector<100x288xbf16>, vector<288x128xbf16>, vector<100x128xf32> -> vector<100x128xf32>
    %cst_144 = arith.constant dense<0.000000e+00> : vector<100x128xf32>
    %138 = tpu.matmul %134, %136, %cst_144 {dimension_numbers = #tpu.dot_dimension_numbers<[1], [0], [0], [1], [0, 0, 1, 1], [], []>} : vector<100x288xbf16>, vector<288x128xbf16>, vector<100x128xf32> -> vector<100x128xf32>
    %139 = arith.addf %137, %138 : vector<100x128xf32>
    %c4_145 = arith.constant 4 : index
    %c0_146 = arith.constant 0 : index
    %c0_147 = arith.constant 0 : index
    %140 = vector.load %arg3[%c4_145, %c0_146, %c0_147] : memref<7x1x128xf32, #tpu.memory_space<vmem>>, vector<1x1x128xf32>
    %141 = vector.shape_cast %140 : vector<1x1x128xf32> to vector<1x128xf32>
    %142 = vector.broadcast %141 : vector<1x128xf32> to vector<100x128xf32>
    %143 = arith.addf %139, %142 : vector<100x128xf32>
    %c4_148 = arith.constant 4 : index
    %c0_149 = arith.constant 0 : index
    %c0_150 = arith.constant 0 : index
    %144 = vector.load %arg4[%c4_148, %c0_149, %c0_150] : memref<7x100x128xf32, #tpu.memory_space<vmem>>, vector<1x100x128xf32>
    %145 = vector.shape_cast %144 : vector<1x100x128xf32> to vector<100x128xf32>
    %146 = arith.mulf %143, %145 : vector<100x128xf32>
    %c16_151 = arith.constant 16 : index
    %c0_152 = arith.constant 0 : index
    %147 = vector.load %arg6[%c16_151, %c0_152] : memref<136x128xf32, #tpu.memory_space<vmem>>, vector<100x128xf32>
    tpu.vector_store %arg6[%c16_151, %c0_152], %146 {strides = array<i32>} : memref<136x128xf32, #tpu.memory_space<vmem>>, vector<100x128xf32>,
    %c5_153 = arith.constant 5 : index
    %c0_154 = arith.constant 0 : index
    %148 = vector.load %arg6[%c5_153, %c0_154] : memref<136x128xf32, #tpu.memory_space<vmem>>, vector<100x32xf32>
    %c6_155 = arith.constant 6 : index
    %c0_156 = arith.constant 0 : index
    %149 = vector.load %arg6[%c6_155, %c0_156] : memref<136x128xf32, #tpu.memory_space<vmem>>, vector<100x32xf32>
    %c7_157 = arith.constant 7 : index
    %c0_158 = arith.constant 0 : index
    %150 = vector.load %arg6[%c7_157, %c0_158] : memref<136x128xf32, #tpu.memory_space<vmem>>, vector<100x32xf32>
    %c15_159 = arith.constant 15 : index
    %c0_160 = arith.constant 0 : index
    %151 = vector.load %arg6[%c15_159, %c0_160] : memref<136x128xf32, #tpu.memory_space<vmem>>, vector<100x32xf32>
    %c16_161 = arith.constant 16 : index
    %c0_162 = arith.constant 0 : index
    %152 = vector.load %arg6[%c16_161, %c0_162] : memref<136x128xf32, #tpu.memory_space<vmem>>, vector<100x32xf32>
    %c17_163 = arith.constant 17 : index
    %c0_164 = arith.constant 0 : index
    %153 = vector.load %arg6[%c17_163, %c0_164] : memref<136x128xf32, #tpu.memory_space<vmem>>, vector<100x32xf32>
    %c25_165 = arith.constant 25 : index
    %c0_166 = arith.constant 0 : index
    %154 = vector.load %arg6[%c25_165, %c0_166] : memref<136x128xf32, #tpu.memory_space<vmem>>, vector<100x32xf32>
    %c26_167 = arith.constant 26 : index
    %c0_168 = arith.constant 0 : index
    %155 = vector.load %arg6[%c26_167, %c0_168] : memref<136x128xf32, #tpu.memory_space<vmem>>, vector<100x32xf32>
    %c27_169 = arith.constant 27 : index
    %c0_170 = arith.constant 0 : index
    %156 = vector.load %arg6[%c27_169, %c0_170] : memref<136x128xf32, #tpu.memory_space<vmem>>, vector<100x32xf32>
    %157 = tpu.concatenate %148, %149, %150, %151, %152, %153, %154, %155, %156 in 1 : vector<100x32xf32>, vector<100x32xf32>, vector<100x32xf32>, vector<100x32xf32>, vector<100x32xf32>, vector<100x32xf32>, vector<100x32xf32>, vector<100x32xf32>, vector<100x32xf32> -> vector<100x288xf32>
    %158 = arith.truncf %157 : vector<100x288xf32> to vector<100x288xbf16>
    %159 = arith.extf %158 : vector<100x288xbf16> to vector<100x288xf32>
    %160 = arith.subf %157, %159 : vector<100x288xf32>
    %161 = arith.truncf %160 : vector<100x288xf32> to vector<100x288xbf16>
    %c5_171 = arith.constant 5 : index
    %c0_172 = arith.constant 0 : index
    %c0_173 = arith.constant 0 : index
    %162 = vector.load %arg2[%c5_171, %c0_172, %c0_173] : memref<7x288x128xbf16, #tpu.memory_space<vmem>>, vector<1x288x128xbf16>
    %163 = vector.shape_cast %162 : vector<1x288x128xbf16> to vector<288x128xbf16>
    %cst_174 = arith.constant dense<0.000000e+00> : vector<100x128xf32>
    %164 = tpu.matmul %158, %163, %cst_174 {dimension_numbers = #tpu.dot_dimension_numbers<[1], [0], [0], [1], [0, 0, 1, 1], [], []>} : vector<100x288xbf16>, vector<288x128xbf16>, vector<100x128xf32> -> vector<100x128xf32>
    %cst_175 = arith.constant dense<0.000000e+00> : vector<100x128xf32>
    %165 = tpu.matmul %161, %163, %cst_175 {dimension_numbers = #tpu.dot_dimension_numbers<[1], [0], [0], [1], [0, 0, 1, 1], [], []>} : vector<100x288xbf16>, vector<288x128xbf16>, vector<100x128xf32> -> vector<100x128xf32>
    %166 = arith.addf %164, %165 : vector<100x128xf32>
    %c5_176 = arith.constant 5 : index
    %c0_177 = arith.constant 0 : index
    %c0_178 = arith.constant 0 : index
    %167 = vector.load %arg3[%c5_176, %c0_177, %c0_178] : memref<7x1x128xf32, #tpu.memory_space<vmem>>, vector<1x1x128xf32>
    %168 = vector.shape_cast %167 : vector<1x1x128xf32> to vector<1x128xf32>
    %169 = vector.broadcast %168 : vector<1x128xf32> to vector<100x128xf32>
    %170 = arith.addf %166, %169 : vector<100x128xf32>
    %c5_179 = arith.constant 5 : index
    %c0_180 = arith.constant 0 : index
    %c0_181 = arith.constant 0 : index
    %171 = vector.load %arg4[%c5_179, %c0_180, %c0_181] : memref<7x100x128xf32, #tpu.memory_space<vmem>>, vector<1x100x128xf32>
    %172 = vector.shape_cast %171 : vector<1x100x128xf32> to vector<100x128xf32>
    %173 = arith.mulf %170, %172 : vector<100x128xf32>
    %c16_182 = arith.constant 16 : index
    %c0_183 = arith.constant 0 : index
    %174 = vector.load %arg6[%c16_182, %c0_183] : memref<136x128xf32, #tpu.memory_space<vmem>>, vector<100x128xf32>
    tpu.vector_store %arg6[%c16_182, %c0_183], %173 {strides = array<i32>} : memref<136x128xf32, #tpu.memory_space<vmem>>, vector<100x128xf32>,
    %c5_184 = arith.constant 5 : index
    %c0_185 = arith.constant 0 : index
    %175 = vector.load %arg6[%c5_184, %c0_185] : memref<136x128xf32, #tpu.memory_space<vmem>>, vector<100x32xf32>
    %c6_186 = arith.constant 6 : index
    %c0_187 = arith.constant 0 : index
    %176 = vector.load %arg6[%c6_186, %c0_187] : memref<136x128xf32, #tpu.memory_space<vmem>>, vector<100x32xf32>
    %c7_188 = arith.constant 7 : index
    %c0_189 = arith.constant 0 : index
    %177 = vector.load %arg6[%c7_188, %c0_189] : memref<136x128xf32, #tpu.memory_space<vmem>>, vector<100x32xf32>
    %c15_190 = arith.constant 15 : index
    %c0_191 = arith.constant 0 : index
    %178 = vector.load %arg6[%c15_190, %c0_191] : memref<136x128xf32, #tpu.memory_space<vmem>>, vector<100x32xf32>
    %c16_192 = arith.constant 16 : index
    %c0_193 = arith.constant 0 : index
    %179 = vector.load %arg6[%c16_192, %c0_193] : memref<136x128xf32, #tpu.memory_space<vmem>>, vector<100x32xf32>
    %c17_194 = arith.constant 17 : index
    %c0_195 = arith.constant 0 : index
    %180 = vector.load %arg6[%c17_194, %c0_195] : memref<136x128xf32, #tpu.memory_space<vmem>>, vector<100x32xf32>
    %c25_196 = arith.constant 25 : index
    %c0_197 = arith.constant 0 : index
    %181 = vector.load %arg6[%c25_196, %c0_197] : memref<136x128xf32, #tpu.memory_space<vmem>>, vector<100x32xf32>
    %c26_198 = arith.constant 26 : index
    %c0_199 = arith.constant 0 : index
    %182 = vector.load %arg6[%c26_198, %c0_199] : memref<136x128xf32, #tpu.memory_space<vmem>>, vector<100x32xf32>
    %c27_200 = arith.constant 27 : index
    %c0_201 = arith.constant 0 : index
    %183 = vector.load %arg6[%c27_200, %c0_201] : memref<136x128xf32, #tpu.memory_space<vmem>>, vector<100x32xf32>
    %184 = tpu.concatenate %175, %176, %177, %178, %179, %180, %181, %182, %183 in 1 : vector<100x32xf32>, vector<100x32xf32>, vector<100x32xf32>, vector<100x32xf32>, vector<100x32xf32>, vector<100x32xf32>, vector<100x32xf32>, vector<100x32xf32>, vector<100x32xf32> -> vector<100x288xf32>
    %185 = arith.truncf %184 : vector<100x288xf32> to vector<100x288xbf16>
    %186 = arith.extf %185 : vector<100x288xbf16> to vector<100x288xf32>
    %187 = arith.subf %184, %186 : vector<100x288xf32>
    %188 = arith.truncf %187 : vector<100x288xf32> to vector<100x288xbf16>
    %c6_202 = arith.constant 6 : index
    %c0_203 = arith.constant 0 : index
    %c0_204 = arith.constant 0 : index
    %189 = vector.load %arg2[%c6_202, %c0_203, %c0_204] : memref<7x288x128xbf16, #tpu.memory_space<vmem>>, vector<1x288x128xbf16>
    %190 = vector.shape_cast %189 : vector<1x288x128xbf16> to vector<288x128xbf16>
    %cst_205 = arith.constant dense<0.000000e+00> : vector<100x128xf32>
    %191 = tpu.matmul %185, %190, %cst_205 {dimension_numbers = #tpu.dot_dimension_numbers<[1], [0], [0], [1], [0, 0, 1, 1], [], []>} : vector<100x288xbf16>, vector<288x128xbf16>, vector<100x128xf32> -> vector<100x128xf32>
    %cst_206 = arith.constant dense<0.000000e+00> : vector<100x128xf32>
    %192 = tpu.matmul %188, %190, %cst_206 {dimension_numbers = #tpu.dot_dimension_numbers<[1], [0], [0], [1], [0, 0, 1, 1], [], []>} : vector<100x288xbf16>, vector<288x128xbf16>, vector<100x128xf32> -> vector<100x128xf32>
    %193 = arith.addf %191, %192 : vector<100x128xf32>
    %c6_207 = arith.constant 6 : index
    %c0_208 = arith.constant 0 : index
    %c0_209 = arith.constant 0 : index
    %194 = vector.load %arg3[%c6_207, %c0_208, %c0_209] : memref<7x1x128xf32, #tpu.memory_space<vmem>>, vector<1x1x128xf32>
    %195 = vector.shape_cast %194 : vector<1x1x128xf32> to vector<1x128xf32>
    %196 = vector.broadcast %195 : vector<1x128xf32> to vector<100x128xf32>
    %197 = arith.addf %193, %196 : vector<100x128xf32>
    %cst_210 = arith.constant 0.000000e+00 : f32
    %198 = vector.broadcast %cst_210 : f32 to vector<100x128xf32>
    %199 = arith.subf %198, %197 : vector<100x128xf32>
    %200 = math.exp %199 : vector<100x128xf32>
    %cst_211 = arith.constant 1.000000e+00 : f32
    %201 = vector.broadcast %cst_211 : f32 to vector<100x128xf32>
    %202 = arith.addf %201, %200 : vector<100x128xf32>
    %203 = tpu.reciprocal %202 {approx = true} : vector<100x128xf32> -> vector<100x128xf32>
    %c0_212 = arith.constant 0 : index
    %c0_213 = arith.constant 0 : index
    %c0_214 = arith.constant 0 : index
    %204 = vector.load %arg5[%c0_212, %c0_213, %c0_214] : memref<1x100x128xf32, #tpu.memory_space<vmem>>, vector<1x100x128xf32>
    %205 = vector.shape_cast %204 : vector<1x100x128xf32> to vector<100x128xf32>
    %206 = vector.shape_cast %203 : vector<100x128xf32> to vector<1x100x128xf32>
    tpu.vector_store %arg5[%c0_212, %c0_213, %c0_214], %206 {strides = array<i32>} : memref<1x100x128xf32, #tpu.memory_space<vmem>>, vector<1x100x128xf32>,
    return
  }
  func.func @transform_0(%arg0: i32) -> (i32, i32, i32) {
    %c0_i32 = arith.constant 0 : i32
    %c0_i32_0 = arith.constant 0 : i32
    %c0_i32_1 = arith.constant 0 : i32
    return %arg0, %c0_i32, %c0_i32_0 : i32, i32, i32
  }
  func.func @transform_1(%arg0: i32) -> (i32, i32, i32) {
    %c0_i32 = arith.constant 0 : i32
    %c0_i32_0 = arith.constant 0 : i32
    %c0_i32_1 = arith.constant 0 : i32
    %c0_i32_2 = arith.constant 0 : i32
    return %c0_i32, %c0_i32_0, %c0_i32_1 : i32, i32, i32
  }
  func.func @transform_2(%arg0: i32) -> (i32, i32, i32) {
    %c0_i32 = arith.constant 0 : i32
    %c0_i32_0 = arith.constant 0 : i32
    %c0_i32_1 = arith.constant 0 : i32
    %c0_i32_2 = arith.constant 0 : i32
    return %c0_i32, %c0_i32_0, %c0_i32_1 : i32, i32, i32
  }
  func.func @transform_3(%arg0: i32) -> (i32, i32, i32) {
    %c0_i32 = arith.constant 0 : i32
    %c0_i32_0 = arith.constant 0 : i32
    %c0_i32_1 = arith.constant 0 : i32
    %c0_i32_2 = arith.constant 0 : i32
    return %c0_i32, %c0_i32_0, %c0_i32_1 : i32, i32, i32
  }
  func.func @transform_4(%arg0: i32) -> (i32, i32, i32) {
    %c0_i32 = arith.constant 0 : i32
    %c0_i32_0 = arith.constant 0 : i32
    %c0_i32_1 = arith.constant 0 : i32
    return %arg0, %c0_i32, %c0_i32_0 : i32, i32, i32
  }
}

</mosaic_0001>

<llo_original>
// kernel: dropout_model_forward.1
$region0: #{dropout_model_forward.1}
  #allocation0 [shape = 'u32[]', space=smem, size = 0x4, offset = 0x4, fixed_abs, tag = 'smem constant byte address 0x4 - core index']
  #allocation1 [shape = 'u32[144,128]{1,0:T(1,128)}', space=vmem, size = 0x12000, scoped, tag = 'internal scratch']
  #allocation2 [shape = 'f32[136,128]{1,0:T(8,128)}', space=vmem, size = 0x11000, scoped, tag = 'scratch operand']
  %s0 = inlined_call_operand.vmem [shape: f32[2,100,128], index: 0, kind: input, shape index: {}]
  %s1 = inlined_call_operand.vmem [shape: bf16[7,288,128], index: 1, kind: input, shape index: {}]
  %s2 = inlined_call_operand.vmem [shape: f32[7,1,128], index: 2, kind: input, shape index: {}]
  %s3 = inlined_call_operand.vmem [shape: f32[7,100,128], index: 3, kind: input, shape index: {}]
  %s4 = inlined_call_operand.vmem [shape: f32[2,100,128], index: 4, kind: output, shape index: {}]
  %s5 = sld [smem:[#allocation0]]
  $region49: #{dropout_model_forward.1} parent=0
    _
  %s7 = ssub.s32 1, %s5
  %s8 = scalar_select 0, %s7, %s5
  loop: start=0, step=1, limit=4
  $region2: #{dropout_model_forward.1} parent=0 // loop_pre_header
    _
  $region3: #{dropout_model_forward.1} parent=0 // loop_header
    %s10 = sphi 0, %s14
    %p11 = scmp.ge.s32.totalorder %s10, 4
    %s20 = sphi 0, %s22
    %s23 = sphi 0, %s20
    %s24 = sphi 0, %s23
    %s40 = sphi 0, %s24
    %s44 = sphi 0, %s44
    %s46 = sphi 0, %s44
    %s47 = sphi 0, %s46
    %s61 = sphi 0, %s47
    %s65 = sphi 0, %s65
    %s67 = sphi 0, %s65
    %s68 = sphi 0, %s67
    %s82 = sphi 0, %s68
    %s86 = sphi 0, %s86
    %s88 = sphi 0, %s86
    %s89 = sphi 0, %s88
    %s103 = sphi 0, %s89
    %s109 = sphi 0, %s111
    %s112 = sphi 0, %s109
    %s113 = sphi 0, %s112
    %s129 = sphi 0, %s113
  $region4: #{dropout_model_forward.1} parent=0 // loop_header_branch
    %13 = sbr.rel (%p11) target = $region8
  $region5: #{dropout_model_forward.1} parent=0 // loop_body
    %s15 = ssub.s32 %s10, 1
    %s16 = ssub.s32 %s10, 2
    %s17 = sadd.s32 %s10, 1
    %s18 = ssub.s32 %s10, %s17
    %p19 = scmp.eq.s32.totalorder %s18, 0
    %s21 = sadd.s32 %s20, 1
    %s22 = scalar_select %p19, %s20, %s21
    %p25 = pneg %p19
    %p26 = scmp.eq.s32.totalorder %s10, 1
    %p27 = por %p25, %p26
    %p28 = scmp.ne.s32.totalorder %s20, %s23
    %p29 = scmp.eq.s32.totalorder %s10, 0
    %p30 = por %p28, %p29
    %p31 = scmp.ne.s32.totalorder %s20, %s23
    %p32 = scmp.eq.s32.totalorder %s15, 1
    %p33 = por %p31, %p32
    %p34 = scmp.ne.s32.totalorder %s23, %s24
    %p35 = scmp.eq.s32.totalorder %s15, 0
    %p36 = por %p34, %p35
    %p37 = scmp.ne.s32.totalorder %s23, %s24
    %p38 = scmp.eq.s32.totalorder %s16, 1
    %p39 = por %p37, %p38
    %p41 = scmp.ne.s32.totalorder %s24, %s40
    %p42 = scmp.eq.s32.totalorder %s16, 0
    %p43 = por %p41, %p42
    %s45 = sadd.s32 %s44, 1
    %p48 = scmp.eq.s32.totalorder %s10, 1
    %p49 = scmp.ne.s32.totalorder %s44, %s46
    %p50 = scmp.eq.s32.totalorder %s10, 0
    %p51 = por %p49, %p50
    %p52 = scmp.ne.s32.totalorder %s44, %s46
    %p53 = scmp.eq.s32.totalorder %s15, 1
    %p54 = por %p52, %p53
    %p55 = scmp.ne.s32.totalorder %s46, %s47
    %p56 = scmp.eq.s32.totalorder %s15, 0
    %p57 = por %p55, %p56
    %p58 = scmp.ne.s32.totalorder %s46, %s47
    %p59 = scmp.eq.s32.totalorder %s16, 1
    %p60 = por %p58, %p59
    %p62 = scmp.ne.s32.totalorder %s47, %s61
    %p63 = scmp.eq.s32.totalorder %s16, 0
    %p64 = por %p62, %p63
    %s66 = sadd.s32 %s65, 1
    %p69 = scmp.eq.s32.totalorder %s10, 1
    %p70 = scmp.ne.s32.totalorder %s65, %s67
    %p71 = scmp.eq.s32.totalorder %s10, 0
    %p72 = por %p70, %p71
    %p73 = scmp.ne.s32.totalorder %s65, %s67
    %p74 = scmp.eq.s32.totalorder %s15, 1
    %p75 = por %p73, %p74
    %p76 = scmp.ne.s32.totalorder %s67, %s68
    %p77 = scmp.eq.s32.totalorder %s15, 0
    %p78 = por %p76, %p77
    %p79 = scmp.ne.s32.totalorder %s67, %s68
    %p80 = scmp.eq.s32.totalorder %s16, 1
    %p81 = por %p79, %p80
    %p83 = scmp.ne.s32.totalorder %s68, %s82
    %p84 = scmp.eq.s32.totalorder %s16, 0
    %p85 = por %p83, %p84
    %s87 = sadd.s32 %s86, 1
    %p90 = scmp.eq.s32.totalorder %s10, 1
    %p91 = scmp.ne.s32.totalorder %s86, %s88
    %p92 = scmp.eq.s32.totalorder %s10, 0
    %p93 = por %p91, %p92
    %p94 = scmp.ne.s32.totalorder %s86, %s88
    %p95 = scmp.eq.s32.totalorder %s15, 1
    %p96 = por %p94, %p95
    %p97 = scmp.ne.s32.totalorder %s88, %s89
    %p98 = scmp.eq.s32.totalorder %s15, 0
    %p99 = por %p97, %p98
    %p100 = scmp.ne.s32.totalorder %s88, %s89
    %p101 = scmp.eq.s32.totalorder %s16, 1
    %p102 = por %p100, %p101
    %p104 = scmp.ne.s32.totalorder %s89, %s103
    %p105 = scmp.eq.s32.totalorder %s16, 0
    %p106 = por %p104, %p105
    %s107 = ssub.s32 %s10, %s17
    %p108 = scmp.eq.s32.totalorder %s107, 0
    %s110 = sadd.s32 %s109, 1
    %s111 = scalar_select %p108, %s109, %s110
    %p114 = pneg %p108
    %p115 = scmp.eq.s32.totalorder %s10, 1
    %p116 = por %p114, %p115
    %p117 = scmp.ne.s32.totalorder %s109, %s112
    %p118 = scmp.eq.s32.totalorder %s10, 0
    %p119 = por %p117, %p118
    %p120 = scmp.ne.s32.totalorder %s109, %s112
    %p121 = scmp.eq.s32.totalorder %s15, 1
    %p122 = por %p120, %p121
    %p123 = scmp.ne.s32.totalorder %s112, %s113
    %p124 = scmp.eq.s32.totalorder %s15, 0
    %p125 = por %p123, %p124
    %p126 = scmp.ne.s32.totalorder %s112, %s113
    %p127 = scmp.eq.s32.totalorder %s16, 1
    %p128 = por %p126, %p127
    %p130 = scmp.ne.s32.totalorder %s113, %s129
    %p131 = scmp.eq.s32.totalorder %s16, 0
    %p132 = por %p130, %p131
    %p133 = scmp.le.s32.totalorder 1, %s10
    %p134 = scmp.lt.s32.totalorder %s10, 3
    %p135 = pnand %p133, %p134
    %p136 = pneg %p135
    // Predicated region
    $region9: #{dropout_model_forward.1} parent=5 // pred_check
      _
    $region10: #{dropout_model_forward.1} parent=5 // pred_check_branch
      %138 = sbr.rel (%p135) target = $region12
    $region11: #{dropout_model_forward.1} parent=5 // pred_region
      %s139 = ssub.s32 %s10, 1
      // Predicated region
      $region13: #{dropout_model_forward.1} parent=11 // pred_check
        %p140 = pneg %p57
      $region14: #{dropout_model_forward.1} parent=11 // pred_check_branch
        %142 = sbr.rel (%p140) target = $region16
      $region15: #{dropout_model_forward.1} parent=11 // pred_region
        _
      $region16: #{dropout_model_forward.1} parent=11 // pred_fallthru
        _
      // Predicated region
      $region17: #{dropout_model_forward.1} parent=11 // pred_check
        %p143 = pneg %p78
      $region18: #{dropout_model_forward.1} parent=11 // pred_check_branch
        %145 = sbr.rel (%p143) target = $region20
      $region19: #{dropout_model_forward.1} parent=11 // pred_region
        _
      $region20: #{dropout_model_forward.1} parent=11 // pred_fallthru
        _
      // Predicated region
      $region21: #{dropout_model_forward.1} parent=11 // pred_check
        %p146 = pneg %p99
      $region22: #{dropout_model_forward.1} parent=11 // pred_check_branch
        %148 = sbr.rel (%p146) target = $region24
      $region23: #{dropout_model_forward.1} parent=11 // pred_region
        _
      $region24: #{dropout_model_forward.1} parent=11 // pred_fallthru
        _
    $region12: #{dropout_model_forward.1} parent=5 // pred_fallthru
      _
    %p149 = scmp.lt.s32.totalorder %s10, 2
    // Predicated region
    $region25: #{dropout_model_forward.1} parent=5 // pred_check
      %p150 = pneg %p149
    $region26: #{dropout_model_forward.1} parent=5 // pred_check_branch
      %152 = sbr.rel (%p150) target = $region28
    $region27: #{dropout_model_forward.1} parent=5 // pred_region
      // Predicated region
      $region29: #{dropout_model_forward.1} parent=27 // pred_check
        %p153 = pneg %p30
      $region30: #{dropout_model_forward.1} parent=27 // pred_check_branch
        %155 = sbr.rel (%p153) target = $region32
      $region31: #{dropout_model_forward.1} parent=27 // pred_region
        %p156 = scmp.lt.s32.totalorder %s10, 1
        %s157 = scalar_select %p156, %s10, 1
        %s158 = smul.addr %s157, 13
        %s159 = smul.addr %s158, 8
        %s160 = scalar_lea.vmem %s0, %s159
      $region32: #{dropout_model_forward.1} parent=27 // pred_fallthru
        _
    $region28: #{dropout_model_forward.1} parent=5 // pred_fallthru
      _
    %p161 = scmp.le.s32.totalorder 1, %s10
    %p162 = scmp.lt.s32.totalorder %s10, 3
    %p163 = pnand %p161, %p162
    %p164 = pneg %p163
    // Predicated region
    $region33: #{dropout_model_forward.1} parent=5 // pred_check
      _
    $region34: #{dropout_model_forward.1} parent=5 // pred_check_branch
      %166 = sbr.rel (%p163) target = $region36
    $region35: #{dropout_model_forward.1} parent=5 // pred_region
      %s167 = ssub.s32 %s10, 1
      %p168 = scmp.lt.s32.totalorder %s15, 1
      %s169 = scalar_select %p168, %s15, 1
      %s170 = smul.addr %s169, 13
      %s171 = smul.addr %s170, 8
      %s172 = scalar_lea.vmem %s0, %s171
      %p173 = pneg %p36
      %p174 = pneg %p33
      %p175 = pneg %p57
      %p176 = pneg %p54
      %p177 = pneg %p78
      %p178 = pneg %p75
      %p179 = pneg %p99
      %p180 = pneg %p96
      %p181 = pneg %p125
      %p182 = pneg %p122
      %p183 = scmp.lt.s32.totalorder %s15, 1
      %s184 = scalar_select %p183, %s15, 1
      %s185 = smul.addr %s184, 13
      %s186 = smul.addr %s185, 8
      %s187 = scalar_lea.vmem %s4, %s186
      %p188 = scmp.lt.s32.totalorder %s15, 1
      %s189 = scalar_select %p188, %s15, 1
      %s190 = smul.addr %s189, 13
      %s191 = smul.addr %s190, 8
      %s192 = scalar_lea.vmem %s0, %s191
      %p193 = scmp.lt.s32.totalorder %s15, 1
      %s194 = scalar_select %p193, %s15, 1
      %s195 = smul.addr %s194, 13
      %s196 = smul.addr %s195, 8
      %s197 = scalar_lea.vmem %s4, %s196
      %199 = vst [vmem:[#allocation2] sm:$0xff] 0.0
      %200 = vst [vmem:[#allocation2 + $0x8] sm:$0xff] 0.0
      %201 = vst [vmem:[#allocation2 + $0x70] sm:$0xff] 0.0
      %202 = vst [vmem:[#allocation2 + $0x78] sm:$0xff] 0.0
      %203 = vst [vmem:[#allocation2 + $0x80] sm:$0xff] 0.0
      %v204 = vld [vmem:[%s192] sm:$0xff]
      %v205 = vld [vmem:[%s192 + $0x8] sm:$0xff]
      %v206 = vld [vmem:[%s192 + $0x10] sm:$0xff]
      %v207 = vld [vmem:[%s192 + $0x18] sm:$0xff]
      %v208 = vld [vmem:[%s192 + $0x20] sm:$0xff]
      %v209 = vld [vmem:[%s192 + $0x28] sm:$0xff]
      %v210 = vld [vmem:[%s192 + $0x30] sm:$0xff]
      %v211 = vld [vmem:[%s192 + $0x38] sm:$0xff]
      %v212 = vld [vmem:[%s192 + $0x40] sm:$0xff]
      %v213 = vld [vmem:[%s192 + $0x48] sm:$0xff]
      %v214 = vld [vmem:[%s192 + $0x50] sm:$0xff]
      %v215 = vld [vmem:[%s192 + $0x58] sm:$0xff]
      %v216 = vld [vmem:[%s192 + $0x60] sm:$0xf]
      %217 = vst [vmem:[#allocation2 + $0x10] sm:$0xff] %v204
      %218 = vst [vmem:[#allocation2 + $0x18] sm:$0xff] %v205
      %219 = vst [vmem:[#allocation2 + $0x20] sm:$0xff] %v206
      %220 = vst [vmem:[#allocation2 + $0x28] sm:$0xff] %v207
      %221 = vst [vmem:[#allocation2 + $0x30] sm:$0xff] %v208
      %222 = vst [vmem:[#allocation2 + $0x38] sm:$0xff] %v209
      %223 = vst [vmem:[#allocation2 + $0x40] sm:$0xff] %v210
      %224 = vst [vmem:[#allocation2 + $0x48] sm:$0xff] %v211
      %225 = vst [vmem:[#allocation2 + $0x50] sm:$0xff] %v212
      %226 = vst [vmem:[#allocation2 + $0x58] sm:$0xff] %v213
      %227 = vst [vmem:[#allocation2 + $0x60] sm:$0xff] %v214
      %228 = vst [vmem:[#allocation2 + $0x68] sm:$0xff] %v215
      %229 = vst [vmem:[#allocation2 + $0x70] sm:$0xf] %v216
      %v230 = vld [vmem:[#allocation2 + $0x5] sm:$0xff]
      %v231 = vld [vmem:[#allocation2 + $0xd] sm:$0xff]
      %v232 = vld [vmem:[#allocation2 + $0x15] sm:$0xff]
      %v233 = vld [vmem:[#allocation2 + $0x1d] sm:$0xff]
      %v234 = vld [vmem:[#allocation2 + $0x25] sm:$0xff]
      %v235 = vld [vmem:[#allocation2 + $0x2d] sm:$0xff]
      %v236 = vld [vmem:[#allocation2 + $0x35] sm:$0xff]
      %v237 = vld [vmem:[#allocation2 + $0x3d] sm:$0xff]
      %v238 = vld [vmem:[#allocation2 + $0x45] sm:$0xff]
      %v239 = vld [vmem:[#allocation2 + $0x4d] sm:$0xff]
      %v240 = vld [vmem:[#allocation2 + $0x55] sm:$0xff]
      %v241 = vld [vmem:[#allocation2 + $0x5d] sm:$0xff]
      %v242 = vld [vmem:[#allocation2 + $0x65] sm:$0xf]
      %v243 = vld [vmem:[#allocation2 + $0x6] sm:$0xff]
      %v244 = vld [vmem:[#allocation2 + $0xe] sm:$0xff]
      %v245 = vld [vmem:[#allocation2 + $0x16] sm:$0xff]
      %v246 = vld [vmem:[#allocation2 + $0x1e] sm:$0xff]
      %v247 = vld [vmem:[#allocation2 + $0x26] sm:$0xff]
      %v248 = vld [vmem:[#allocation2 + $0x2e] sm:$0xff]
      %v249 = vld [vmem:[#allocation2 + $0x36] sm:$0xff]
      %v250 = vld [vmem:[#allocation2 + $0x3e] sm:$0xff]
      %v251 = vld [vmem:[#allocation2 + $0x46] sm:$0xff]
      %v252 = vld [vmem:[#allocation2 + $0x4e] sm:$0xff]
      %v253 = vld [vmem:[#allocation2 + $0x56] sm:$0xff]
      %v254 = vld [vmem:[#allocation2 + $0x5e] sm:$0xff]
      %v255 = vld [vmem:[#allocation2 + $0x66] sm:$0xf]
      %v256 = vld [vmem:[#allocation2 + $0x7] sm:$0xff]
      %v257 = vld [vmem:[#allocation2 + $0xf] sm:$0xff]
      %v258 = vld [vmem:[#allocation2 + $0x17] sm:$0xff]
      %v259 = vld [vmem:[#allocation2 + $0x1f] sm:$0xff]
      %v260 = vld [vmem:[#allocation2 + $0x27] sm:$0xff]
      %v261 = vld [vmem:[#allocation2 + $0x2f] sm:$0xff]
      %v262 = vld [vmem:[#allocation2 + $0x37] sm:$0xff]
      %v263 = vld [vmem:[#allocation2 + $0x3f] sm:$0xff]
      %v264 = vld [vmem:[#allocation2 + $0x47] sm:$0xff]
      %v265 = vld [vmem:[#allocation2 + $0x4f] sm:$0xff]
      %v266 = vld [vmem:[#allocation2 + $0x57] sm:$0xff]
      %v267 = vld [vmem:[#allocation2 + $0x5f] sm:$0xff]
      %v268 = vld [vmem:[#allocation2 + $0x67] sm:$0xf]
      %v269 = vld [vmem:[#allocation2 + $0x67] sm:$0xff]
      %v270 = vld [vmem:[#allocation2 + $0x6f] sm:$0xf]
      %v271 = vld [vmem:[#allocation2 + $0x10] sm:$0xff]
      %v272 = vld [vmem:[#allocation2 + $0x18] sm:$0xff]
      %v273 = vld [vmem:[#allocation2 + $0x20] sm:$0xff]
      %v274 = vld [vmem:[#allocation2 + $0x28] sm:$0xff]
      %v275 = vld [vmem:[#allocation2 + $0x30] sm:$0xff]
      %v276 = vld [vmem:[#allocation2 + $0x38] sm:$0xff]
      %v277 = vld [vmem:[#allocation2 + $0x40] sm:$0xff]
      %v278 = vld [vmem:[#allocation2 + $0x48] sm:$0xff]
      %v279 = vld [vmem:[#allocation2 + $0x50] sm:$0xff]
      %v280 = vld [vmem:[#allocation2 + $0x58] sm:$0xff]
      %v281 = vld [vmem:[#allocation2 + $0x60] sm:$0xff]
      %v282 = vld [vmem:[#allocation2 + $0x68] sm:$0xff]
      %v283 = vld [vmem:[#allocation2 + $0x70] sm:$0xf]
      %v284 = vld [vmem:[#allocation2 + $0x11] sm:$0xff]
      %v285 = vld [vmem:[#allocation2 + $0x19] sm:$0xff]
      %v286 = vld [vmem:[#allocation2 + $0x21] sm:$0xff]
      %v287 = vld [vmem:[#allocation2 + $0x29] sm:$0xff]
      %v288 = vld [vmem:[#allocation2 + $0x31] sm:$0xff]
      %v289 = vld [vmem:[#allocation2 + $0x39] sm:$0xff]
      %v290 = vld [vmem:[#allocation2 + $0x41] sm:$0xff]
      %v291 = vld [vmem:[#allocation2 + $0x49] sm:$0xff]
      %v292 = vld [vmem:[#allocation2 + $0x51] sm:$0xff]
      %v293 = vld [vmem:[#allocation2 + $0x59] sm:$0xff]
      %v294 = vld [vmem:[#allocation2 + $0x61] sm:$0xff]
      %v295 = vld [vmem:[#allocation2 + $0x69] sm:$0xff]
      %v296 = vld [vmem:[#allocation2 + $0x71] sm:$0xf]
      %v297 = vld [vmem:[#allocation2 + $0x71] sm:$0xff]
      %v298 = vld [vmem:[#allocation2 + $0x79] sm:$0xf]
      %v299 = vld [vmem:[#allocation2 + $0x1a] sm:$0xff]
      %v300 = vld [vmem:[#allocation2 + $0x22] sm:$0xff]
      %v301 = vld [vmem:[#allocation2 + $0x2a] sm:$0xff]
      %v302 = vld [vmem:[#allocation2 + $0x32] sm:$0xff]
      %v303 = vld [vmem:[#allocation2 + $0x3a] sm:$0xff]
      %v304 = vld [vmem:[#allocation2 + $0x42] sm:$0xff]
      %v305 = vld [vmem:[#allocation2 + $0x4a] sm:$0xff]
      %v306 = vld [vmem:[#allocation2 + $0x52] sm:$0xff]
      %v307 = vld [vmem:[#allocation2 + $0x5a] sm:$0xff]
      %v308 = vld [vmem:[#allocation2 + $0x62] sm:$0xff]
      %v309 = vld [vmem:[#allocation2 + $0x6a] sm:$0xff]
      %v310 = vld [vmem:[#allocation2 + $0x72] sm:$0xff]
      %v311 = vld [vmem:[#allocation2 + $0x7a] sm:$0xf]
      %v312 = vld [vmem:[#allocation2 + $0x1b] sm:$0xff]
      %v313 = vld [vmem:[#allocation2 + $0x23] sm:$0xff]
      %v314 = vld [vmem:[#allocation2 + $0x2b] sm:$0xff]
      %v315 = vld [vmem:[#allocation2 + $0x33] sm:$0xff]
      %v316 = vld [vmem:[#allocation2 + $0x3b] sm:$0xff]
      %v317 = vld [vmem:[#allocation2 + $0x43] sm:$0xff]
      %v318 = vld [vmem:[#allocation2 + $0x4b] sm:$0xff]
      %v319 = vld [vmem:[#allocation2 + $0x53] sm:$0xff]
      %v320 = vld [vmem:[#allocation2 + $0x5b] sm:$0xff]
      %v321 = vld [vmem:[#allocation2 + $0x63] sm:$0xff]
      %v322 = vld [vmem:[#allocation2 + $0x6b] sm:$0xff]
      %v323 = vld [vmem:[#allocation2 + $0x73] sm:$0xff]
      %v324 = vld [vmem:[#allocation2 + $0x7b] sm:$0xf]
      %338 = vrot.lane.b32.xlu0 %v243, 32
      %v339 = vpop.permute.xlu0 %338
      %340 = vrot.lane.b32.xlu0 %v244, 32
      %v341 = vpop.permute.xlu0 %340
      %342 = vrot.lane.b32.xlu0 %v245, 32
      %v343 = vpop.permute.xlu0 %342
      %344 = vrot.lane.b32.xlu0 %v246, 32
      %v345 = vpop.permute.xlu0 %344
      %346 = vrot.lane.b32.xlu0 %v247, 32
      %v347 = vpop.permute.xlu0 %346
      %348 = vrot.lane.b32.xlu0 %v248, 32
      %v349 = vpop.permute.xlu0 %348
      %350 = vrot.lane.b32.xlu0 %v249, 32
      %v351 = vpop.permute.xlu0 %350
      %352 = vrot.lane.b32.xlu0 %v250, 32
      %v353 = vpop.permute.xlu0 %352
      %354 = vrot.lane.b32.xlu0 %v251, 32
      %v355 = vpop.permute.xlu0 %354
      %356 = vrot.lane.b32.xlu0 %v252, 32
      %v357 = vpop.permute.xlu0 %356
      %358 = vrot.lane.b32.xlu0 %v253, 32
      %v359 = vpop.permute.xlu0 %358
      %360 = vrot.lane.b32.xlu0 %v254, 32
      %v361 = vpop.permute.xlu0 %360
      %362 = vrot.lane.b32.xlu0 %v255, 32
      %v363 = vpop.permute.xlu0 %362
      %390 = vrot.lane.b32.xlu0 %v256, 64
      %v391 = vpop.permute.xlu0 %390
      %392 = vrot.lane.b32.xlu0 %v257, 64
      %v393 = vpop.permute.xlu0 %392
      %394 = vrot.lane.b32.xlu0 %v258, 64
      %v395 = vpop.permute.xlu0 %394
      %396 = vrot.lane.b32.xlu0 %v259, 64
      %v397 = vpop.permute.xlu0 %396
      %398 = vrot.lane.b32.xlu0 %v260, 64
      %v399 = vpop.permute.xlu0 %398
      %400 = vrot.lane.b32.xlu0 %v261, 64
      %v401 = vpop.permute.xlu0 %400
      %402 = vrot.lane.b32.xlu0 %v262, 64
      %v403 = vpop.permute.xlu0 %402
      %404 = vrot.lane.b32.xlu0 %v263, 64
      %v405 = vpop.permute.xlu0 %404
      %406 = vrot.lane.b32.xlu0 %v264, 64
      %v407 = vpop.permute.xlu0 %406
      %408 = vrot.lane.b32.xlu0 %v265, 64
      %v409 = vpop.permute.xlu0 %408
      %410 = vrot.lane.b32.xlu0 %v266, 64
      %v411 = vpop.permute.xlu0 %410
      %412 = vrot.lane.b32.xlu0 %v267, 64
      %v413 = vpop.permute.xlu0 %412
      %414 = vrot.lane.b32.xlu0 %v268, 64
      %v415 = vpop.permute.xlu0 %414
      %431 = vrot.lane.b32.xlu0 %v257, 96
      %v432 = vpop.permute.xlu0 %431
      %433 = vrot.lane.b32.xlu0 %v258, 96
      %v434 = vpop.permute.xlu0 %433
      %435 = vrot.lane.b32.xlu0 %v259, 96
      %v436 = vpop.permute.xlu0 %435
      %437 = vrot.lane.b32.xlu0 %v260, 96
      %v438 = vpop.permute.xlu0 %437
      %439 = vrot.lane.b32.xlu0 %v261, 96
      %v440 = vpop.permute.xlu0 %439
      %441 = vrot.lane.b32.xlu0 %v262, 96
      %v442 = vpop.permute.xlu0 %441
      %443 = vrot.lane.b32.xlu0 %v263, 96
      %v444 = vpop.permute.xlu0 %443
      %445 = vrot.lane.b32.xlu0 %v264, 96
      %v446 = vpop.permute.xlu0 %445
      %447 = vrot.lane.b32.xlu0 %v265, 96
      %v448 = vpop.permute.xlu0 %447
      %449 = vrot.lane.b32.xlu0 %v266, 96
      %v450 = vpop.permute.xlu0 %449
      %451 = vrot.lane.b32.xlu0 %v267, 96
      %v452 = vpop.permute.xlu0 %451
      %453 = vrot.lane.b32.xlu0 %v269, 96
      %v454 = vpop.permute.xlu0 %453
      %455 = vrot.lane.b32.xlu0 %v270, 96
      %v456 = vpop.permute.xlu0 %455
      %483 = vrot.lane.b32.xlu0 %v284, 32
      %v484 = vpop.permute.xlu0 %483
      %485 = vrot.lane.b32.xlu0 %v285, 32
      %v486 = vpop.permute.xlu0 %485
      %487 = vrot.lane.b32.xlu0 %v286, 32
      %v488 = vpop.permute.xlu0 %487
      %489 = vrot.lane.b32.xlu0 %v287, 32
      %v490 = vpop.permute.xlu0 %489
      %491 = vrot.lane.b32.xlu0 %v288, 32
      %v492 = vpop.permute.xlu0 %491
      %493 = vrot.lane.b32.xlu0 %v289, 32
      %v494 = vpop.permute.xlu0 %493
      %495 = vrot.lane.b32.xlu0 %v290, 32
      %v496 = vpop.permute.xlu0 %495
      %497 = vrot.lane.b32.xlu0 %v291, 32
      %v498 = vpop.permute.xlu0 %497
      %499 = vrot.lane.b32.xlu0 %v292, 32
      %v500 = vpop.permute.xlu0 %499
      %501 = vrot.lane.b32.xlu0 %v293, 32
      %v502 = vpop.permute.xlu0 %501
      %503 = vrot.lane.b32.xlu0 %v294, 32
      %v504 = vpop.permute.xlu0 %503
      %505 = vrot.lane.b32.xlu0 %v295, 32
      %v506 = vpop.permute.xlu0 %505
      %507 = vrot.lane.b32.xlu0 %v296, 32
      %v508 = vpop.permute.xlu0 %507
      %524 = vrot.lane.b32.xlu0 %v285, 64
      %v525 = vpop.permute.xlu0 %524
      %526 = vrot.lane.b32.xlu0 %v286, 64
      %v527 = vpop.permute.xlu0 %526
      %528 = vrot.lane.b32.xlu0 %v287, 64
      %v529 = vpop.permute.xlu0 %528
      %530 = vrot.lane.b32.xlu0 %v288, 64
      %v531 = vpop.permute.xlu0 %530
      %532 = vrot.lane.b32.xlu0 %v289, 64
      %v533 = vpop.permute.xlu0 %532
      %534 = vrot.lane.b32.xlu0 %v290, 64
      %v535 = vpop.permute.xlu0 %534
      %536 = vrot.lane.b32.xlu0 %v291, 64
      %v537 = vpop.permute.xlu0 %536
      %538 = vrot.lane.b32.xlu0 %v292, 64
      %v539 = vpop.permute.xlu0 %538
      %540 = vrot.lane.b32.xlu0 %v293, 64
      %v541 = vpop.permute.xlu0 %540
      %542 = vrot.lane.b32.xlu0 %v294, 64
      %v543 = vpop.permute.xlu0 %542
      %544 = vrot.lane.b32.xlu0 %v295, 64
      %v545 = vpop.permute.xlu0 %544
      %546 = vrot.lane.b32.xlu0 %v297, 64
      %v547 = vpop.permute.xlu0 %546
      %548 = vrot.lane.b32.xlu0 %v298, 64
      %v549 = vpop.permute.xlu0 %548
      %576 = vrot.lane.b32.xlu0 %v299, 96
      %v577 = vpop.permute.xlu0 %576
      %578 = vrot.lane.b32.xlu0 %v300, 96
      %v579 = vpop.permute.xlu0 %578
      %580 = vrot.lane.b32.xlu0 %v301, 96
      %v581 = vpop.permute.xlu0 %580
      %582 = vrot.lane.b32.xlu0 %v302, 96
      %v583 = vpop.permute.xlu0 %582
      %584 = vrot.lane.b32.xlu0 %v303, 96
      %v585 = vpop.permute.xlu0 %584
      %586 = vrot.lane.b32.xlu0 %v304, 96
      %v587 = vpop.permute.xlu0 %586
      %588 = vrot.lane.b32.xlu0 %v305, 96
      %v589 = vpop.permute.xlu0 %588
      %590 = vrot.lane.b32.xlu0 %v306, 96
      %v591 = vpop.permute.xlu0 %590
      %592 = vrot.lane.b32.xlu0 %v307, 96
      %v593 = vpop.permute.xlu0 %592
      %594 = vrot.lane.b32.xlu0 %v308, 96
      %v595 = vpop.permute.xlu0 %594
      %596 = vrot.lane.b32.xlu0 %v309, 96
      %v597 = vpop.permute.xlu0 %596
      %598 = vrot.lane.b32.xlu0 %v310, 96
      %v599 = vpop.permute.xlu0 %598
      %600 = vrot.lane.b32.xlu0 %v311, 96
      %v601 = vpop.permute.xlu0 %600
      %vm615 = vcmask 261120
      %v616 = vsel %vm615, %v230, %v339
      %v617 = vsel %vm615, %v231, %v341
      %v618 = vsel %vm615, %v232, %v343
      %v619 = vsel %vm615, %v233, %v345
      %v620 = vsel %vm615, %v234, %v347
      %v621 = vsel %vm615, %v235, %v349
      %v622 = vsel %vm615, %v236, %v351
      %v623 = vsel %vm615, %v237, %v353
      %v624 = vsel %vm615, %v238, %v355
      %v625 = vsel %vm615, %v239, %v357
      %v626 = vsel %vm615, %v240, %v359
      %v627 = vsel %vm615, %v241, %v361
      %v628 = vsel %vm615, %v242, %v363
      %vm629 = vcmask 523264
      %v630 = vsel %vm629, %v616, %v391
      %v631 = vsel %vm629, %v617, %v393
      %v632 = vsel %vm629, %v618, %v395
      %v633 = vsel %vm629, %v619, %v397
      %v634 = vsel %vm629, %v620, %v399
      %v635 = vsel %vm629, %v621, %v401
      %v636 = vsel %vm629, %v622, %v403
      %v637 = vsel %vm629, %v623, %v405
      %v638 = vsel %vm629, %v624, %v407
      %v639 = vsel %vm629, %v625, %v409
      %v640 = vsel %vm629, %v626, %v411
      %v641 = vsel %vm629, %v627, %v413
      %v642 = vsel %vm629, %v628, %v415
      %vm643 = vcmask 785408
      %v644 = vsel %vm643, %v630, %v432
      %v645 = vsel %vm643, %v631, %v434
      %v646 = vsel %vm643, %v632, %v436
      %v647 = vsel %vm643, %v633, %v438
      %v648 = vsel %vm643, %v634, %v440
      %v649 = vsel %vm643, %v635, %v442
      %v650 = vsel %vm643, %v636, %v444
      %v651 = vsel %vm643, %v637, %v446
      %v652 = vsel %vm643, %v638, %v448
      %v653 = vsel %vm643, %v639, %v450
      %v654 = vsel %vm643, %v640, %v452
      %v655 = vsel %vm643, %v641, %v454
      %v656 = vsel %vm643, %v642, %v456
      %v657 = vsel %vm615, %v271, %v484
      %v658 = vsel %vm615, %v272, %v486
      %v659 = vsel %vm615, %v273, %v488
      %v660 = vsel %vm615, %v274, %v490
      %v661 = vsel %vm615, %v275, %v492
      %v662 = vsel %vm615, %v276, %v494
      %v663 = vsel %vm615, %v277, %v496
      %v664 = vsel %vm615, %v278, %v498
      %v665 = vsel %vm615, %v279, %v500
      %v666 = vsel %vm615, %v280, %v502
      %v667 = vsel %vm615, %v281, %v504
      %v668 = vsel %vm615, %v282, %v506
      %v669 = vsel %vm615, %v283, %v508
      %v670 = vsel %vm629, %v657, %v525
      %v671 = vsel %vm629, %v658, %v527
      %v672 = vsel %vm629, %v659, %v529
      %v673 = vsel %vm629, %v660, %v531
      %v674 = vsel %vm629, %v661, %v533
      %v675 = vsel %vm629, %v662, %v535
      %v676 = vsel %vm629, %v663, %v537
      %v677 = vsel %vm629, %v664, %v539
      %v678 = vsel %vm629, %v665, %v541
      %v679 = vsel %vm629, %v666, %v543
      %v680 = vsel %vm629, %v667, %v545
      %v681 = vsel %vm629, %v668, %v547
      %v682 = vsel %vm629, %v669, %v549
      %v683 = vsel %vm643, %v670, %v577
      %v684 = vsel %vm643, %v671, %v579
      %v685 = vsel %vm643, %v672, %v581
      %v686 = vsel %vm643, %v673, %v583
      %v687 = vsel %vm643, %v674, %v585
      %v688 = vsel %vm643, %v675, %v587
      %v689 = vsel %vm643, %v676, %v589
      %v690 = vsel %vm643, %v677, %v591
      %v691 = vsel %vm643, %v678, %v593
      %v692 = vsel %vm643, %v679, %v595
      %v693 = vsel %vm643, %v680, %v597
      %v694 = vsel %vm643, %v681, %v599
      %v695 = vsel %vm643, %v682, %v601
      %v696 = vpack.c.bf16 %v645, %v644
      %v697 = vpack.c.bf16 %v684, %v683
      %v698 = vpack.c.bf16 %v313, %v312
      %v699 = vpack.c.bf16 %v647, %v646
      %v700 = vpack.c.bf16 %v686, %v685
      %v701 = vpack.c.bf16 %v315, %v314
      %v702 = vpack.c.bf16 %v649, %v648
      %v703 = vpack.c.bf16 %v688, %v687
      %v704 = vpack.c.bf16 %v317, %v316
      %v705 = vpack.c.bf16 %v651, %v650
      %v706 = vpack.c.bf16 %v690, %v689
      %v707 = vpack.c.bf16 %v319, %v318
      %v708 = vpack.c.bf16 %v653, %v652
      %v709 = vpack.c.bf16 %v692, %v691
      %v710 = vpack.c.bf16 %v321, %v320
      %v711 = vpack.c.bf16 %v655, %v654
      %v712 = vpack.c.bf16 %v694, %v693
      %v713 = vpack.c.bf16 %v323, %v322
      %v714 = vpack.c.bf16 %v656, %v656
      %v715 = vpack.c.bf16 %v695, %v695
      %v716 = vpack.c.bf16 %v324, %v324
      %v717 = vunpack.c.l.bf16 %v696
      %v718 = vunpack.c.l.bf16 %v697
      %v719 = vunpack.c.l.bf16 %v698
      %v720 = vunpack.c.h.bf16 %v696
      %v721 = vunpack.c.h.bf16 %v697
      %v722 = vunpack.c.h.bf16 %v698
      %v723 = vunpack.c.l.bf16 %v699
      %v724 = vunpack.c.l.bf16 %v700
      %v725 = vunpack.c.l.bf16 %v701
      %v726 = vunpack.c.h.bf16 %v699
      %v727 = vunpack.c.h.bf16 %v700
      %v728 = vunpack.c.h.bf16 %v701
      %v729 = vunpack.c.l.bf16 %v702
      %v730 = vunpack.c.l.bf16 %v703
      %v731 = vunpack.c.l.bf16 %v704
      %v732 = vunpack.c.h.bf16 %v702
      %v733 = vunpack.c.h.bf16 %v703
      %v734 = vunpack.c.h.bf16 %v704
      %v735 = vunpack.c.l.bf16 %v705
      %v736 = vunpack.c.l.bf16 %v706
      %v737 = vunpack.c.l.bf16 %v707
      %v738 = vunpack.c.h.bf16 %v705
      %v739 = vunpack.c.h.bf16 %v706
      %v740 = vunpack.c.h.bf16 %v707
      %v741 = vunpack.c.l.bf16 %v708
      %v742 = vunpack.c.l.bf16 %v709
      %v743 = vunpack.c.l.bf16 %v710
      %v744 = vunpack.c.h.bf16 %v708
      %v745 = vunpack.c.h.bf16 %v709
      %v746 = vunpack.c.h.bf16 %v710
      %v747 = vunpack.c.l.bf16 %v711
      %v748 = vunpack.c.l.bf16 %v712
      %v749 = vunpack.c.l.bf16 %v713
      %v750 = vunpack.c.h.bf16 %v711
      %v751 = vunpack.c.h.bf16 %v712
      %v752 = vunpack.c.h.bf16 %v713
      %v753 = vunpack.c.l.bf16 %v714
      %v754 = vunpack.c.l.bf16 %v715
      %v755 = vunpack.c.l.bf16 %v716
      %v756 = vsub.f32 %v644, %v717
      %v757 = vsub.f32 %v683, %v718
      %v758 = vsub.f32 %v312, %v719
      %v759 = vsub.f32 %v645, %v720
      %v760 = vsub.f32 %v684, %v721
      %v761 = vsub.f32 %v313, %v722
      %v762 = vsub.f32 %v646, %v723
      %v763 = vsub.f32 %v685, %v724
      %v764 = vsub.f32 %v314, %v725
      %v765 = vsub.f32 %v647, %v726
      %v766 = vsub.f32 %v686, %v727
      %v767 = vsub.f32 %v315, %v728
      %v768 = vsub.f32 %v648, %v729
      %v769 = vsub.f32 %v687, %v730
      %v770 = vsub.f32 %v316, %v731
      %v771 = vsub.f32 %v649, %v732
      %v772 = vsub.f32 %v688, %v733
      %v773 = vsub.f32 %v317, %v734
      %v774 = vsub.f32 %v650, %v735
      %v775 = vsub.f32 %v689, %v736
      %v776 = vsub.f32 %v318, %v737
      %v777 = vsub.f32 %v651, %v738
      %v778 = vsub.f32 %v690, %v739
      %v779 = vsub.f32 %v319, %v740
      %v780 = vsub.f32 %v652, %v741
      %v781 = vsub.f32 %v691, %v742
      %v782 = vsub.f32 %v320, %v743
      %v783 = vsub.f32 %v653, %v744
      %v784 = vsub.f32 %v692, %v745
      %v785 = vsub.f32 %v321, %v746
      %v786 = vsub.f32 %v654, %v747
      %v787 = vsub.f32 %v693, %v748
      %v788 = vsub.f32 %v322, %v749
      %v789 = vsub.f32 %v655, %v750
      %v790 = vsub.f32 %v694, %v751
      %v791 = vsub.f32 %v323, %v752
      %v792 = vsub.f32 %v656, %v753
      %v793 = vsub.f32 %v695, %v754
      %v794 = vsub.f32 %v324, %v755
      %v795 = vpack.c.bf16 %v759, %v756
      %v796 = vpack.c.bf16 %v760, %v757
      %v797 = vpack.c.bf16 %v761, %v758
      %v798 = vpack.c.bf16 %v765, %v762
      %v799 = vpack.c.bf16 %v766, %v763
      %v800 = vpack.c.bf16 %v767, %v764
      %v801 = vpack.c.bf16 %v771, %v768
      %v802 = vpack.c.bf16 %v772, %v769
      %v803 = vpack.c.bf16 %v773, %v770
      %v804 = vpack.c.bf16 %v777, %v774
      %v805 = vpack.c.bf16 %v778, %v775
      %v806 = vpack.c.bf16 %v779, %v776
      %v807 = vpack.c.bf16 %v783, %v780
      %v808 = vpack.c.bf16 %v784, %v781
      %v809 = vpack.c.bf16 %v785, %v782
      %v810 = vpack.c.bf16 %v789, %v786
      %v811 = vpack.c.bf16 %v790, %v787
      %v812 = vpack.c.bf16 %v791, %v788
      %v813 = vpack.c.bf16 %v792, %v792
      %v814 = vpack.c.bf16 %v793, %v793
      %v815 = vpack.c.bf16 %v794, %v794
      %v816 = vld [vmem:[%s1] sm:$0xf]
      %v817 = vld [vmem:[%s1 + $0x4] sm:$0xf]
      %v818 = vld [vmem:[%s1 + $0x8] sm:$0xf]
      %v819 = vld [vmem:[%s1 + $0xc] sm:$0xf]
      %v820 = vld [vmem:[%s1 + $0x10] sm:$0xf]
      %v821 = vld [vmem:[%s1 + $0x14] sm:$0xf]
      %v822 = vld [vmem:[%s1 + $0x18] sm:$0xf]
      %v823 = vld [vmem:[%s1 + $0x1c] sm:$0xf]
      %v824 = vld [vmem:[%s1 + $0x20] sm:$0xf]
      %v825 = vld [vmem:[%s1 + $0x24] sm:$0xf]
      %v826 = vld [vmem:[%s1 + $0x28] sm:$0xf]
      %v827 = vld [vmem:[%s1 + $0x2c] sm:$0xf]
      %v828 = vld [vmem:[%s1 + $0x30] sm:$0xf]
      %v829 = vld [vmem:[%s1 + $0x34] sm:$0xf]
      %v830 = vld [vmem:[%s1 + $0x38] sm:$0xf]
      %v831 = vld [vmem:[%s1 + $0x3c] sm:$0xf]
      %v832 = vld [vmem:[%s1 + $0x40] sm:$0xf]
      %v833 = vld [vmem:[%s1 + $0x44] sm:$0xf]
      %v834 = vld [vmem:[%s1 + $0x48] sm:$0xf]
      %v835 = vld [vmem:[%s1 + $0x4c] sm:$0xf]
      %v836 = vld [vmem:[%s1 + $0x50] sm:$0xf]
      %v837 = vld [vmem:[%s1 + $0x54] sm:$0xf]
      %v838 = vld [vmem:[%s1 + $0x58] sm:$0xf]
      %v839 = vld [vmem:[%s1 + $0x5c] sm:$0xf]
      %v840 = vld [vmem:[%s1 + $0x60] sm:$0xf]
      %v841 = vld [vmem:[%s1 + $0x64] sm:$0xf]
      %v842 = vld [vmem:[%s1 + $0x68] sm:$0xf]
      %v843 = vld [vmem:[%s1 + $0x6c] sm:$0xf]
      %v844 = vld [vmem:[%s1 + $0x70] sm:$0xf]
      %v845 = vld [vmem:[%s1 + $0x74] sm:$0xf]
      %v846 = vld [vmem:[%s1 + $0x78] sm:$0xf]
      %v847 = vld [vmem:[%s1 + $0x7c] sm:$0xf]
      %v848 = vld [vmem:[%s1 + $0x80] sm:$0xf]
      %v849 = vld [vmem:[%s1 + $0x84] sm:$0xf]
      %v850 = vld [vmem:[%s1 + $0x88] sm:$0xf]
      %v851 = vld [vmem:[%s1 + $0x8c] sm:$0xf]
      %v888 = vunpack.c.l.b16 %v816
      %v889 = vunpack.c.l.b16 %v817
      %v890 = vunpack.c.l.b16 %v818
      %v891 = vunpack.c.l.b16 %v819
      %v892 = vunpack.c.l.b16 %v820
      %v893 = vunpack.c.l.b16 %v821
      %v894 = vunpack.c.l.b16 %v822
      %v895 = vunpack.c.l.b16 %v823
      %v896 = vunpack.c.l.b16 %v824
      %v897 = vunpack.c.l.b16 %v825
      %v898 = vunpack.c.l.b16 %v826
      %v899 = vunpack.c.l.b16 %v827
      %v900 = vunpack.c.l.b16 %v828
      %v901 = vunpack.c.l.b16 %v829
      %v902 = vunpack.c.l.b16 %v830
      %v903 = vunpack.c.l.b16 %v831
      %v904 = vunpack.c.l.b16 %v832
      %v905 = vunpack.c.l.b16 %v833
      %v906 = vunpack.c.l.b16 %v834
      %v907 = vunpack.c.l.b16 %v835
      %v908 = vunpack.c.l.b16 %v836
      %v909 = vunpack.c.l.b16 %v837
      %v910 = vunpack.c.l.b16 %v838
      %v911 = vunpack.c.l.b16 %v839
      %v912 = vunpack.c.l.b16 %v840
      %v913 = vunpack.c.l.b16 %v841
      %v914 = vunpack.c.l.b16 %v842
      %v915 = vunpack.c.l.b16 %v843
      %v916 = vunpack.c.l.b16 %v844
      %v917 = vunpack.c.l.b16 %v845
      %v918 = vunpack.c.l.b16 %v846
      %v919 = vunpack.c.l.b16 %v847
      %v920 = vunpack.c.l.b16 %v848
      %v921 = vunpack.c.l.b16 %v849
      %v922 = vunpack.c.l.b16 %v850
      %v923 = vunpack.c.l.b16 %v851
      %v924 = vpack.c.b16 %v889, %v888
      %v925 = vpack.c.b16 %v891, %v890
      %v926 = vpack.c.b16 %v893, %v892
      %v927 = vpack.c.b16 %v895, %v894
      %v928 = vpack.c.b16 %v897, %v896
      %v929 = vpack.c.b16 %v899, %v898
      %v930 = vpack.c.b16 %v901, %v900
      %v931 = vpack.c.b16 %v903, %v902
      %v932 = vpack.c.b16 %v905, %v904
      %v933 = vpack.c.b16 %v907, %v906
      %v934 = vpack.c.b16 %v909, %v908
      %v935 = vpack.c.b16 %v911, %v910
      %v936 = vpack.c.b16 %v913, %v912
      %v937 = vpack.c.b16 %v915, %v914
      %v938 = vpack.c.b16 %v917, %v916
      %v939 = vpack.c.b16 %v919, %v918
      %v940 = vpack.c.b16 %v921, %v920
      %v941 = vpack.c.b16 %v923, %v922
      %v961 = vsel %vm615, %v797, 0
      %v964 = vsel %vm615, %v800, 0
      %v967 = vsel %vm615, %v803, 0
      %v970 = vsel %vm615, %v806, 0
      %v973 = vsel %vm615, %v809, 0
      %v976 = vsel %vm615, %v812, 0
      %v979 = vsel %vm615, %v815, 0
      %981 = vmatprep.subr.bf16.mxu0 0
      %982 = vmatpush1.bf16.msra.mxu0 %v924
      %983 = vmatprep.subr.bf16.mxu0 0
      %984 = vmatpush1.bf16.msra.mxu0 %v925
      %985 = vmatprep.subr.bf16.mxu0 0
      %986 = vmatpush1.bf16.msra.mxu0 %v926
      %987 = vmatprep.subr.bf16.mxu0 0
      %988 = vmatpush1.bf16.msra.mxu0 %v927
      %989 = vmatprep.subr.bf16.mxu0 0
      %990 = vmatpush1.bf16.msra.mxu0 %v928
      %991 = vmatprep.subr.bf16.mxu0 0
      %992 = vmatpush1.bf16.msra.mxu0 %v929
      %993 = vmatprep.subr.bf16.mxu0 0
      %994 = vmatpush1.bf16.msra.mxu0 %v930
      %995 = vmatprep.subr.bf16.mxu0 0
      %996 = vmatpush1.bf16.msra.mxu0 %v931
      %997 = vmatprep.subr.bf16.mxu0 0
      %998 = vmatpush1.bf16.msra.mxu0 %v932
      %999 = vmatprep.subr.bf16.mxu0 0
      %1000 = vmatpush1.bf16.msra.mxu0 %v933
      %1001 = vmatprep.subr.bf16.mxu0 0
      %1002 = vmatpush1.bf16.msra.mxu0 %v934
      %1003 = vmatprep.subr.bf16.mxu0 0
      %1004 = vmatpush1.bf16.msra.mxu0 %v935
      %1005 = vmatprep.subr.bf16.mxu0 0
      %1006 = vmatpush1.bf16.msra.mxu0 %v936
      %1007 = vmatprep.subr.bf16.mxu0 0
      %1008 = vmatpush1.bf16.msra.mxu0 %v937
      %1009 = vmatprep.subr.bf16.mxu0 0
      %1010 = vmatpush1.bf16.msra.mxu0 %v938
      %1011 = vmatprep.subr.bf16.mxu0 0
      %1012 = vmatpush1.bf16.msra.mxu0 %v939
      %1013 = vmatprep.mubr.bf16.mxu0 %v796
      %1014 = vmatmul.mubr.bf16.gmra.mrb[0].mxu0 %v795
      %v1015 = vpop.f32.mrb[0].mxu0
      %v1016 = vadd.f32 0.0, %v1015
      %v1017 = vpop.f32.mrb[0].mxu0
      %v1018 = vpop.f32.mrb[0].mxu0
      %v1019 = vadd.f32 0.0, %v1018
      %v1020 = vpop.f32.mrb[0].mxu0
      %1021 = vmatprep.mubr.bf16.mxu0 %v799
      %1022 = vmatmul.mubr.bf16.gmra.mrb[0].mxu0 %v798
      %v1023 = vpop.f32.mrb[0].mxu0
      %v1024 = vadd.f32 0.0, %v1023
      %v1025 = vpop.f32.mrb[0].mxu0
      %v1026 = vpop.f32.mrb[0].mxu0
      %v1027 = vadd.f32 0.0, %v1026
      %v1028 = vpop.f32.mrb[0].mxu0
      %1029 = vmatprep.mubr.bf16.mxu0 %v802
      %1030 = vmatmul.mubr.bf16.gmra.mrb[0].mxu0 %v801
      %v1031 = vpop.f32.mrb[0].mxu0
      %v1032 = vadd.f32 0.0, %v1031
      %v1033 = vpop.f32.mrb[0].mxu0
      %v1034 = vpop.f32.mrb[0].mxu0
      %v1035 = vadd.f32 0.0, %v1034
      %v1036 = vpop.f32.mrb[0].mxu0
      %1037 = vmatprep.mubr.bf16.mxu0 %v805
      %1038 = vmatmul.mubr.bf16.gmra.mrb[0].mxu0 %v804
      %v1039 = vpop.f32.mrb[0].mxu0
      %v1040 = vadd.f32 0.0, %v1039
      %v1041 = vpop.f32.mrb[0].mxu0
      %v1042 = vpop.f32.mrb[0].mxu0
      %v1043 = vadd.f32 0.0, %v1042
      %v1044 = vpop.f32.mrb[0].mxu0
      %1045 = vmatprep.mubr.bf16.mxu0 %v808
      %1046 = vmatmul.mubr.bf16.gmra.mrb[0].mxu0 %v807
      %v1047 = vpop.f32.mrb[0].mxu0
      %v1048 = vadd.f32 0.0, %v1047
      %v1049 = vpop.f32.mrb[0].mxu0
      %v1050 = vpop.f32.mrb[0].mxu0
      %v1051 = vadd.f32 0.0, %v1050
      %v1052 = vpop.f32.mrb[0].mxu0
      %1053 = vmatprep.mubr.bf16.mxu0 %v811
      %1054 = vmatmul.mubr.bf16.gmra.mrb[0].mxu0 %v810
      %v1055 = vpop.f32.mrb[0].mxu0
      %v1056 = vadd.f32 0.0, %v1055
      %v1057 = vpop.f32.mrb[0].mxu0
      %v1058 = vpop.f32.mrb[0].mxu0
      %v1059 = vadd.f32 0.0, %v1058
      %v1060 = vpop.f32.mrb[0].mxu0
      %1061 = vmatprep.mubr.bf16.mxu0 %v814
      %1062 = vmatmul.mubr.bf16.gmra.mrb[0].mxu0 %v813
      %v1063 = vpop.f32.mrb[0].mxu0
      %v1064 = vadd.f32 0.0, %v1063
      %v1065 = vpop.f32.mrb[0].mxu0
      %v1066 = vpop.f32.mrb[0].mxu0
      %v1067 = vpop.f32.mrb[0].mxu0
      %1068 = vdwg.mxu0
      %1069 = vmatprep.subr.bf16.mxu0 0
      %1070 = vmatpush1.bf16.msra.mxu0 %v940
      %1071 = vmatprep.subr.bf16.mxu0 0
      %1072 = vmatpush1.bf16.msra.mxu0 %v941
      %1073 = vmatprep.subr.bf16.mxu0 0
      %1074 = vmatpush1.bf16.msra.mxu0 0
      %1075 = vmatprep.subr.bf16.mxu0 0
      %1076 = vmatpush1.bf16.msra.mxu0 0
      %1077 = vmatprep.subr.bf16.mxu0 0
      %1078 = vmatpush1.bf16.msra.mxu0 0
      %1079 = vmatprep.subr.bf16.mxu0 0
      %1080 = vmatpush1.bf16.msra.mxu0 0
      %1081 = vmatprep.subr.bf16.mxu0 0
      %1082 = vmatpush1.bf16.msra.mxu0 0
      %1083 = vmatprep.subr.bf16.mxu0 0
      %1084 = vmatpush1.bf16.msra.mxu0 0
      %1085 = vmatprep.subr.bf16.mxu0 0
      %1086 = vmatpush1.bf16.msra.mxu0 0
      %1087 = vmatprep.subr.bf16.mxu0 0
      %1088 = vmatpush1.bf16.msra.mxu0 0
      %1089 = vmatprep.subr.bf16.mxu0 0
      %1090 = vmatpush1.bf16.msra.mxu0 0
      %1091 = vmatprep.subr.bf16.mxu0 0
      %1092 = vmatpush1.bf16.msra.mxu0 0
      %1093 = vmatprep.subr.bf16.mxu0 0
      %1094 = vmatpush1.bf16.msra.mxu0 0
      %1095 = vmatprep.subr.bf16.mxu0 0
      %1096 = vmatpush1.bf16.msra.mxu0 0
      %1097 = vmatprep.subr.bf16.mxu0 0
      %1098 = vmatpush1.bf16.msra.mxu0 0
      %1099 = vmatprep.subr.bf16.mxu0 0
      %1100 = vmatpush1.bf16.msra.mxu0 0
      %1101 = vmatprep.mubr.bf16.mxu0 0
      %1102 = vmatmul.mubr.bf16.gmra.mrb[0].mxu0 %v961
      %v1103 = vpop.f32.mrb[0].mxu0
      %v1104 = vadd.f32 %v1016, %v1103
      %v1105 = vpop.f32.mrb[0].mxu0
      %v1106 = vpop.f32.mrb[0].mxu0
      %v1107 = vadd.f32 %v1019, %v1106
      %v1108 = vpop.f32.mrb[0].mxu0
      %1109 = vmatprep.mubr.bf16.mxu0 0
      %1110 = vmatmul.mubr.bf16.gmra.mrb[0].mxu0 %v964
      %v1111 = vpop.f32.mrb[0].mxu0
      %v1112 = vadd.f32 %v1024, %v1111
      %v1113 = vpop.f32.mrb[0].mxu0
      %v1114 = vpop.f32.mrb[0].mxu0
      %v1115 = vadd.f32 %v1027, %v1114
      %v1116 = vpop.f32.mrb[0].mxu0
      %1117 = vmatprep.mubr.bf16.mxu0 0
      %1118 = vmatmul.mubr.bf16.gmra.mrb[0].mxu0 %v967
      %v1119 = vpop.f32.mrb[0].mxu0
      %v1120 = vadd.f32 %v1032, %v1119
      %v1121 = vpop.f32.mrb[0].mxu0
      %v1122 = vpop.f32.mrb[0].mxu0
      %v1123 = vadd.f32 %v1035, %v1122
      %v1124 = vpop.f32.mrb[0].mxu0
      %1125 = vmatprep.mubr.bf16.mxu0 0
      %1126 = vmatmul.mubr.bf16.gmra.mrb[0].mxu0 %v970
      %v1127 = vpop.f32.mrb[0].mxu0
      %v1128 = vadd.f32 %v1040, %v1127
      %v1129 = vpop.f32.mrb[0].mxu0
      %v1130 = vpop.f32.mrb[0].mxu0
      %v1131 = vadd.f32 %v1043, %v1130
      %v1132 = vpop.f32.mrb[0].mxu0
      %1133 = vmatprep.mubr.bf16.mxu0 0
      %1134 = vmatmul.mubr.bf16.gmra.mrb[0].mxu0 %v973
      %v1135 = vpop.f32.mrb[0].mxu0
      %v1136 = vadd.f32 %v1048, %v1135
      %v1137 = vpop.f32.mrb[0].mxu0
      %v1138 = vpop.f32.mrb[0].mxu0
      %v1139 = vadd.f32 %v1051, %v1138
      %v1140 = vpop.f32.mrb[0].mxu0
      %1141 = vmatprep.mubr.bf16.mxu0 0
      %1142 = vmatmul.mubr.bf16.gmra.mrb[0].mxu0 %v976
      %v1143 = vpop.f32.mrb[0].mxu0
      %v1144 = vadd.f32 %v1056, %v1143
      %v1145 = vpop.f32.mrb[0].mxu0
      %v1146 = vpop.f32.mrb[0].mxu0
      %v1147 = vadd.f32 %v1059, %v1146
      %v1148 = vpop.f32.mrb[0].mxu0
      %1149 = vmatprep.mubr.bf16.mxu0 0
      %1150 = vmatmul.mubr.bf16.gmra.mrb[0].mxu0 %v979
      %v1151 = vpop.f32.mrb[0].mxu0
      %v1152 = vadd.f32 %v1064, %v1151
      %v1153 = vpop.f32.mrb[0].mxu0
      %v1154 = vpop.f32.mrb[0].mxu0
      %v1155 = vpop.f32.mrb[0].mxu0
      %1156 = vdwg.mxu0
      %v1158 = vsel %vm615, %v698, 0
      %v1161 = vsel %vm615, %v701, 0
      %v1164 = vsel %vm615, %v704, 0
      %v1167 = vsel %vm615, %v707, 0
      %v1170 = vsel %vm615, %v710, 0
      %v1173 = vsel %vm615, %v713, 0
      %v1176 = vsel %vm615, %v716, 0
      %1178 = vmatprep.subr.bf16.mxu0 0
      %1179 = vmatpush1.bf16.msra.mxu0 %v924
      %1180 = vmatprep.subr.bf16.mxu0 0
      %1181 = vmatpush1.bf16.msra.mxu0 %v925
      %1182 = vmatprep.subr.bf16.mxu0 0
      %1183 = vmatpush1.bf16.msra.mxu0 %v926
      %1184 = vmatprep.subr.bf16.mxu0 0
      %1185 = vmatpush1.bf16.msra.mxu0 %v927
      %1186 = vmatprep.subr.bf16.mxu0 0
      %1187 = vmatpush1.bf16.msra.mxu0 %v928
      %1188 = vmatprep.subr.bf16.mxu0 0
      %1189 = vmatpush1.bf16.msra.mxu0 %v929
      %1190 = vmatprep.subr.bf16.mxu0 0
      %1191 = vmatpush1.bf16.msra.mxu0 %v930
      %1192 = vmatprep.subr.bf16.mxu0 0
      %1193 = vmatpush1.bf16.msra.mxu0 %v931
      %1194 = vmatprep.subr.bf16.mxu0 0
      %1195 = vmatpush1.bf16.msra.mxu0 %v932
      %1196 = vmatprep.subr.bf16.mxu0 0
      %1197 = vmatpush1.bf16.msra.mxu0 %v933
      %1198 = vmatprep.subr.bf16.mxu0 0
      %1199 = vmatpush1.bf16.msra.mxu0 %v934
      %1200 = vmatprep.subr.bf16.mxu0 0
      %1201 = vmatpush1.bf16.msra.mxu0 %v935
      %1202 = vmatprep.subr.bf16.mxu0 0
      %1203 = vmatpush1.bf16.msra.mxu0 %v936
      %1204 = vmatprep.subr.bf16.mxu0 0
      %1205 = vmatpush1.bf16.msra.mxu0 %v937
      %1206 = vmatprep.subr.bf16.mxu0 0
      %1207 = vmatpush1.bf16.msra.mxu0 %v938
      %1208 = vmatprep.subr.bf16.mxu0 0
      %1209 = vmatpush1.bf16.msra.mxu0 %v939
      %1210 = vmatprep.mubr.bf16.mxu0 %v697
      %1211 = vmatmul.mubr.bf16.gmra.mrb[0].mxu0 %v696
      %v1212 = vpop.f32.mrb[0].mxu0
      %v1213 = vadd.f32 %v1104, %v1212
      %v1214 = vpop.f32.mrb[0].mxu0
      %v1215 = vpop.f32.mrb[0].mxu0
      %v1216 = vadd.f32 %v1107, %v1215
      %v1217 = vpop.f32.mrb[0].mxu0
      %1218 = vmatprep.mubr.bf16.mxu0 %v700
      %1219 = vmatmul.mubr.bf16.gmra.mrb[0].mxu0 %v699
      %v1220 = vpop.f32.mrb[0].mxu0
      %v1221 = vadd.f32 %v1112, %v1220
      %v1222 = vpop.f32.mrb[0].mxu0
      %v1223 = vpop.f32.mrb[0].mxu0
      %v1224 = vadd.f32 %v1115, %v1223
      %v1225 = vpop.f32.mrb[0].mxu0
      %1226 = vmatprep.mubr.bf16.mxu0 %v703
      %1227 = vmatmul.mubr.bf16.gmra.mrb[0].mxu0 %v702
      %v1228 = vpop.f32.mrb[0].mxu0
      %v1229 = vadd.f32 %v1120, %v1228
      %v1230 = vpop.f32.mrb[0].mxu0
      %v1231 = vpop.f32.mrb[0].mxu0
      %v1232 = vadd.f32 %v1123, %v1231
      %v1233 = vpop.f32.mrb[0].mxu0
      %1234 = vmatprep.mubr.bf16.mxu0 %v706
      %1235 = vmatmul.mubr.bf16.gmra.mrb[0].mxu0 %v705
      %v1236 = vpop.f32.mrb[0].mxu0
      %v1237 = vadd.f32 %v1128, %v1236
      %v1238 = vpop.f32.mrb[0].mxu0
      %v1239 = vpop.f32.mrb[0].mxu0
      %v1240 = vadd.f32 %v1131, %v1239
      %v1241 = vpop.f32.mrb[0].mxu0
      %1242 = vmatprep.mubr.bf16.mxu0 %v709
      %1243 = vmatmul.mubr.bf16.gmra.mrb[0].mxu0 %v708
      %v1244 = vpop.f32.mrb[0].mxu0
      %v1245 = vadd.f32 %v1136, %v1244
      %v1246 = vpop.f32.mrb[0].mxu0
      %v1247 = vpop.f32.mrb[0].mxu0
      %v1248 = vadd.f32 %v1139, %v1247
      %v1249 = vpop.f32.mrb[0].mxu0
      %1250 = vmatprep.mubr.bf16.mxu0 %v712
      %1251 = vmatmul.mubr.bf16.gmra.mrb[0].mxu0 %v711
      %v1252 = vpop.f32.mrb[0].mxu0
      %v1253 = vadd.f32 %v1144, %v1252
      %v1254 = vpop.f32.mrb[0].mxu0
      %v1255 = vpop.f32.mrb[0].mxu0
      %v1256 = vadd.f32 %v1147, %v1255
      %v1257 = vpop.f32.mrb[0].mxu0
      %1258 = vmatprep.mubr.bf16.mxu0 %v715
      %1259 = vmatmul.mubr.bf16.gmra.mrb[0].mxu0 %v714
      %v1260 = vpop.f32.mrb[0].mxu0
      %v1261 = vadd.f32 %v1152, %v1260
      %v1262 = vpop.f32.mrb[0].mxu0
      %v1263 = vpop.f32.mrb[0].mxu0
      %v1264 = vpop.f32.mrb[0].mxu0
      %1265 = vdwg.mxu0
      %1266 = vmatprep.subr.bf16.mxu0 0
      %1267 = vmatpush1.bf16.msra.mxu0 %v940
      %1268 = vmatprep.subr.bf16.mxu0 0
      %1269 = vmatpush1.bf16.msra.mxu0 %v941
      %1270 = vmatprep.subr.bf16.mxu0 0
      %1271 = vmatpush1.bf16.msra.mxu0 0
      %1272 = vmatprep.subr.bf16.mxu0 0
      %1273 = vmatpush1.bf16.msra.mxu0 0
      %1274 = vmatprep.subr.bf16.mxu0 0
      %1275 = vmatpush1.bf16.msra.mxu0 0
      %1276 = vmatprep.subr.bf16.mxu0 0
      %1277 = vmatpush1.bf16.msra.mxu0 0
      %1278 = vmatprep.subr.bf16.mxu0 0
      %1279 = vmatpush1.bf16.msra.mxu0 0
      %1280 = vmatprep.subr.bf16.mxu0 0
      %1281 = vmatpush1.bf16.msra.mxu0 0
      %1282 = vmatprep.subr.bf16.mxu0 0
      %1283 = vmatpush1.bf16.msra.mxu0 0
      %1284 = vmatprep.subr.bf16.mxu0 0
      %1285 = vmatpush1.bf16.msra.mxu0 0
      %1286 = vmatprep.subr.bf16.mxu0 0
      %1287 = vmatpush1.bf16.msra.mxu0 0
      %1288 = vmatprep.subr.bf16.mxu0 0
      %1289 = vmatpush1.bf16.msra.mxu0 0
      %1290 = vmatprep.subr.bf16.mxu0 0
      %1291 = vmatpush1.bf16.msra.mxu0 0
      %1292 = vmatprep.subr.bf16.mxu0 0
      %1293 = vmatpush1.bf16.msra.mxu0 0
      %1294 = vmatprep.subr.bf16.mxu0 0
      %1295 = vmatpush1.bf16.msra.mxu0 0
      %1296 = vmatprep.subr.bf16.mxu0 0
      %1297 = vmatpush1.bf16.msra.mxu0 0
      %1298 = vmatprep.mubr.bf16.mxu0 0
      %1299 = vmatmul.mubr.bf16.gmra.mrb[0].mxu0 %v1158
      %v1300 = vpop.f32.mrb[0].mxu0
      %v1301 = vadd.f32 %v1213, %v1300
      %v1302 = vpop.f32.mrb[0].mxu0
      %v1303 = vpop.f32.mrb[0].mxu0
      %v1304 = vadd.f32 %v1216, %v1303
      %v1305 = vpop.f32.mrb[0].mxu0
      %1306 = vmatprep.mubr.bf16.mxu0 0
      %1307 = vmatmul.mubr.bf16.gmra.mrb[0].mxu0 %v1161
      %v1308 = vpop.f32.mrb[0].mxu0
      %v1309 = vadd.f32 %v1221, %v1308
      %v1310 = vpop.f32.mrb[0].mxu0
      %v1311 = vpop.f32.mrb[0].mxu0
      %v1312 = vadd.f32 %v1224, %v1311
      %v1313 = vpop.f32.mrb[0].mxu0
      %1314 = vmatprep.mubr.bf16.mxu0 0
      %1315 = vmatmul.mubr.bf16.gmra.mrb[0].mxu0 %v1164
      %v1316 = vpop.f32.mrb[0].mxu0
      %v1317 = vadd.f32 %v1229, %v1316
      %v1318 = vpop.f32.mrb[0].mxu0
      %v1319 = vpop.f32.mrb[0].mxu0
      %v1320 = vadd.f32 %v1232, %v1319
      %v1321 = vpop.f32.mrb[0].mxu0
      %1322 = vmatprep.mubr.bf16.mxu0 0
      %1323 = vmatmul.mubr.bf16.gmra.mrb[0].mxu0 %v1167
      %v1324 = vpop.f32.mrb[0].mxu0
      %v1325 = vadd.f32 %v1237, %v1324
      %v1326 = vpop.f32.mrb[0].mxu0
      %v1327 = vpop.f32.mrb[0].mxu0
      %v1328 = vadd.f32 %v1240, %v1327
      %v1329 = vpop.f32.mrb[0].mxu0
      %1330 = vmatprep.mubr.bf16.mxu0 0
      %1331 = vmatmul.mubr.bf16.gmra.mrb[0].mxu0 %v1170
      %v1332 = vpop.f32.mrb[0].mxu0
      %v1333 = vadd.f32 %v1245, %v1332
      %v1334 = vpop.f32.mrb[0].mxu0
      %v1335 = vpop.f32.mrb[0].mxu0
      %v1336 = vadd.f32 %v1248, %v1335
      %v1337 = vpop.f32.mrb[0].mxu0
      %1338 = vmatprep.mubr.bf16.mxu0 0
      %1339 = vmatmul.mubr.bf16.gmra.mrb[0].mxu0 %v1173
      %v1340 = vpop.f32.mrb[0].mxu0
      %v1341 = vadd.f32 %v1253, %v1340
      %v1342 = vpop.f32.mrb[0].mxu0
      %v1343 = vpop.f32.mrb[0].mxu0
      %v1344 = vadd.f32 %v1256, %v1343
      %v1345 = vpop.f32.mrb[0].mxu0
      %1346 = vmatprep.mubr.bf16.mxu0 0
      %1347 = vmatmul.mubr.bf16.gmra.mrb[0].mxu0 %v1176
      %v1348 = vpop.f32.mrb[0].mxu0
      %v1349 = vadd.f32 %v1261, %v1348
      %v1350 = vpop.f32.mrb[0].mxu0
      %v1351 = vpop.f32.mrb[0].mxu0
      %v1352 = vpop.f32.mrb[0].mxu0
      %1353 = vdwg.mxu0
      %v1354 = vld [vmem:[%s2] sm:$0x1]
      %v1356 = vlaneseq
      %v1357 = vshrl.u32 %v1356, 7
      %v1358 = vsub.s32 0, %v1357
      %v1359 = vrot.slane %v1354, %v1358
      %v1361 = vadd.f32 %v1301, %v1359
      %v1362 = vadd.f32 %v1304, %v1359
      %v1363 = vadd.f32 %v1309, %v1359
      %v1364 = vadd.f32 %v1312, %v1359
      %v1365 = vadd.f32 %v1317, %v1359
      %v1366 = vadd.f32 %v1320, %v1359
      %v1367 = vadd.f32 %v1325, %v1359
      %v1368 = vadd.f32 %v1328, %v1359
      %v1369 = vadd.f32 %v1333, %v1359
      %v1370 = vadd.f32 %v1336, %v1359
      %v1371 = vadd.f32 %v1341, %v1359
      %v1372 = vadd.f32 %v1344, %v1359
      %v1373 = vadd.f32 %v1349, %v1359
      %v1374 = vmax.f32 %v1361, 0.0
      %v1375 = vmax.f32 %v1362, 0.0
      %v1376 = vmax.f32 %v1363, 0.0
      %v1377 = vmax.f32 %v1364, 0.0
      %v1378 = vmax.f32 %v1365, 0.0
      %v1379 = vmax.f32 %v1366, 0.0
      %v1380 = vmax.f32 %v1367, 0.0
      %v1381 = vmax.f32 %v1368, 0.0
      %v1382 = vmax.f32 %v1369, 0.0
      %v1383 = vmax.f32 %v1370, 0.0
      %v1384 = vmax.f32 %v1371, 0.0
      %v1385 = vmax.f32 %v1372, 0.0
      %v1386 = vmax.f32 %v1373, 0.0
      %v1387 = vld [vmem:[%s3] sm:$0xff]
      %v1388 = vld [vmem:[%s3 + $0x8] sm:$0xff]
      %v1389 = vld [vmem:[%s3 + $0x10] sm:$0xff]
      %v1390 = vld [vmem:[%s3 + $0x18] sm:$0xff]
      %v1391 = vld [vmem:[%s3 + $0x20] sm:$0xff]
      %v1392 = vld [vmem:[%s3 + $0x28] sm:$0xff]
      %v1393 = vld [vmem:[%s3 + $0x30] sm:$0xff]
      %v1394 = vld [vmem:[%s3 + $0x38] sm:$0xff]
      %v1395 = vld [vmem:[%s3 + $0x40] sm:$0xff]
      %v1396 = vld [vmem:[%s3 + $0x48] sm:$0xff]
      %v1397 = vld [vmem:[%s3 + $0x50] sm:$0xff]
      %v1398 = vld [vmem:[%s3 + $0x58] sm:$0xff]
      %v1399 = vld [vmem:[%s3 + $0x60] sm:$0xf]
      %v1400 = vmul.f32 %v1374, %v1387
      %v1401 = vmul.f32 %v1375, %v1388
      %v1402 = vmul.f32 %v1376, %v1389
      %v1403 = vmul.f32 %v1377, %v1390
      %v1404 = vmul.f32 %v1378, %v1391
      %v1405 = vmul.f32 %v1379, %v1392
      %v1406 = vmul.f32 %v1380, %v1393
      %v1407 = vmul.f32 %v1381, %v1394
      %v1408 = vmul.f32 %v1382, %v1395
      %v1409 = vmul.f32 %v1383, %v1396
      %v1410 = vmul.f32 %v1384, %v1397
      %v1411 = vmul.f32 %v1385, %v1398
      %v1412 = vmul.f32 %v1386, %v1399
      %1413 = vst [vmem:[#allocation2 + $0x10] sm:$0xff] %v1400
      %1414 = vst [vmem:[#allocation2 + $0x18] sm:$0xff] %v1401
      %1415 = vst [vmem:[#allocation2 + $0x20] sm:$0xff] %v1402
      %1416 = vst [vmem:[#allocation2 + $0x28] sm:$0xff] %v1403
      %1417 = vst [vmem:[#allocation2 + $0x30] sm:$0xff] %v1404
      %1418 = vst [vmem:[#allocation2 + $0x38] sm:$0xff] %v1405
      %1419 = vst [vmem:[#allocation2 + $0x40] sm:$0xff] %v1406
      %1420 = vst [vmem:[#allocation2 + $0x48] sm:$0xff] %v1407
      %1421 = vst [vmem:[#allocation2 + $0x50] sm:$0xff] %v1408
      %1422 = vst [vmem:[#allocation2 + $0x58] sm:$0xff] %v1409
      %1423 = vst [vmem:[#allocation2 + $0x60] sm:$0xff] %v1410
      %1424 = vst [vmem:[#allocation2 + $0x68] sm:$0xff] %v1411
      %1425 = vst [vmem:[#allocation2 + $0x70] sm:$0xf] %v1412
      %v1426 = vld [vmem:[#allocation2 + $0x5] sm:$0xff]
      %v1427 = vld [vmem:[#allocation2 + $0xd] sm:$0xff]
      %v1428 = vld [vmem:[#allocation2 + $0x15] sm:$0xff]
      %v1429 = vld [vmem:[#allocation2 + $0x1d] sm:$0xff]
      %v1430 = vld [vmem:[#allocation2 + $0x25] sm:$0xff]
      %v1431 = vld [vmem:[#allocation2 + $0x2d] sm:$0xff]
      %v1432 = vld [vmem:[#allocation2 + $0x35] sm:$0xff]
      %v1433 = vld [vmem:[#allocation2 + $0x3d] sm:$0xff]
      %v1434 = vld [vmem:[#allocation2 + $0x45] sm:$0xff]
      %v1435 = vld [vmem:[#allocation2 + $0x4d] sm:$0xff]
      %v1436 = vld [vmem:[#allocation2 + $0x55] sm:$0xff]
      %v1437 = vld [vmem:[#allocation2 + $0x5d] sm:$0xff]
      %v1438 = vld [vmem:[#allocation2 + $0x65] sm:$0xf]
      %v1439 = vld [vmem:[#allocation2 + $0x6] sm:$0xff]
      %v1440 = vld [vmem:[#allocation2 + $0xe] sm:$0xff]
      %v1441 = vld [vmem:[#allocation2 + $0x16] sm:$0xff]
      %v1442 = vld [vmem:[#allocation2 + $0x1e] sm:$0xff]
      %v1443 = vld [vmem:[#allocation2 + $0x26] sm:$0xff]
      %v1444 = vld [vmem:[#allocation2 + $0x2e] sm:$0xff]
      %v1445 = vld [vmem:[#allocation2 + $0x36] sm:$0xff]
      %v1446 = vld [vmem:[#allocation2 + $0x3e] sm:$0xff]
      %v1447 = vld [vmem:[#allocation2 + $0x46] sm:$0xff]
      %v1448 = vld [vmem:[#allocation2 + $0x4e] sm:$0xff]
      %v1449 = vld [vmem:[#allocation2 + $0x56] sm:$0xff]
      %v1450 = vld [vmem:[#allocation2 + $0x5e] sm:$0xff]
      %v1451 = vld [vmem:[#allocation2 + $0x66] sm:$0xf]
      %v1452 = vld [vmem:[#allocation2 + $0x7] sm:$0xff]
      %v1453 = vld [vmem:[#allocation2 + $0xf] sm:$0xff]
      %v1454 = vld [vmem:[#allocation2 + $0x17] sm:$0xff]
      %v1455 = vld [vmem:[#allocation2 + $0x1f] sm:$0xff]
      %v1456 = vld [vmem:[#allocation2 + $0x27] sm:$0xff]
      %v1457 = vld [vmem:[#allocation2 + $0x2f] sm:$0xff]
      %v1458 = vld [vmem:[#allocation2 + $0x37] sm:$0xff]
      %v1459 = vld [vmem:[#allocation2 + $0x3f] sm:$0xff]
      %v1460 = vld [vmem:[#allocation2 + $0x47] sm:$0xff]
      %v1461 = vld [vmem:[#allocation2 + $0x4f] sm:$0xff]
      %v1462 = vld [vmem:[#allocation2 + $0x57] sm:$0xff]
      %v1463 = vld [vmem:[#allocation2 + $0x5f] sm:$0xff]
      %v1464 = vld [vmem:[#allocation2 + $0x67] sm:$0xf]
      %v1465 = vld [vmem:[#allocation2 + $0x67] sm:$0xff]
      %v1466 = vld [vmem:[#allocation2 + $0x6f] sm:$0xf]
      %v1467 = vld [vmem:[#allocation2 + $0x10] sm:$0xff]
      %v1468 = vld [vmem:[#allocation2 + $0x18] sm:$0xff]
      %v1469 = vld [vmem:[#allocation2 + $0x20] sm:$0xff]
      %v1470 = vld [vmem:[#allocation2 + $0x28] sm:$0xff]
      %v1471 = vld [vmem:[#allocation2 + $0x30] sm:$0xff]
      %v1472 = vld [vmem:[#allocation2 + $0x38] sm:$0xff]
      %v1473 = vld [vmem:[#allocation2 + $0x40] sm:$0xff]
      %v1474 = vld [vmem:[#allocation2 + $0x48] sm:$0xff]
      %v1475 = vld [vmem:[#allocation2 + $0x50] sm:$0xff]
      %v1476 = vld [vmem:[#allocation2 + $0x58] sm:$0xff]
      %v1477 = vld [vmem:[#allocation2 + $0x60] sm:$0xff]
      %v1478 = vld [vmem:[#allocation2 + $0x68] sm:$0xff]
      %v1479 = vld [vmem:[#allocation2 + $0x70] sm:$0xf]
      %v1480 = vld [vmem:[#allocation2 + $0x11] sm:$0xff]
      %v1481 = vld [vmem:[#allocation2 + $0x19] sm:$0xff]
      %v1482 = vld [vmem:[#allocation2 + $0x21] sm:$0xff]
      %v1483 = vld [vmem:[#allocation2 + $0x29] sm:$0xff]
      %v1484 = vld [vmem:[#allocation2 + $0x31] sm:$0xff]
      %v1485 = vld [vmem:[#allocation2 + $0x39] sm:$0xff]
      %v1486 = vld [vmem:[#allocation2 + $0x41] sm:$0xff]
      %v1487 = vld [vmem:[#allocation2 + $0x49] sm:$0xff]
      %v1488 = vld [vmem:[#allocation2 + $0x51] sm:$0xff]
      %v1489 = vld [vmem:[#allocation2 + $0x59] sm:$0xff]
      %v1490 = vld [vmem:[#allocation2 + $0x61] sm:$0xff]
      %v1491 = vld [vmem:[#allocation2 + $0x69] sm:$0xff]
      %v1492 = vld [vmem:[#allocation2 + $0x71] sm:$0xf]
      %v1493 = vld [vmem:[#allocation2 + $0x71] sm:$0xff]
      %v1494 = vld [vmem:[#allocation2 + $0x79] sm:$0xf]
      %v1495 = vld [vmem:[#allocation2 + $0x1a] sm:$0xff]
      %v1496 = vld [vmem:[#allocation2 + $0x22] sm:$0xff]
      %v1497 = vld [vmem:[#allocation2 + $0x2a] sm:$0xff]
      %v1498 = vld [vmem:[#allocation2 + $0x32] sm:$0xff]
      %v1499 = vld [vmem:[#allocation2 + $0x3a] sm:$0xff]
      %v1500 = vld [vmem:[#allocation2 + $0x42] sm:$0xff]
      %v1501 = vld [vmem:[#allocation2 + $0x4a] sm:$0xff]
      %v1502 = vld [vmem:[#allocation2 + $0x52] sm:$0xff]
      %v1503 = vld [vmem:[#allocation2 + $0x5a] sm:$0xff]
      %v1504 = vld [vmem:[#allocation2 + $0x62] sm:$0xff]
      %v1505 = vld [vmem:[#allocation2 + $0x6a] sm:$0xff]
      %v1506 = vld [vmem:[#allocation2 + $0x72] sm:$0xff]
      %v1507 = vld [vmem:[#allocation2 + $0x7a] sm:$0xf]
      %v1508 = vld [vmem:[#allocation2 + $0x1b] sm:$0xff]
      %v1509 = vld [vmem:[#allocation2 + $0x23] sm:$0xff]
      %v1510 = vld [vmem:[#allocation2 + $0x2b] sm:$0xff]
      %v1511 = vld [vmem:[#allocation2 + $0x33] sm:$0xff]
      %v1512 = vld [vmem:[#allocation2 + $0x3b] sm:$0xff]
      %v1513 = vld [vmem:[#allocation2 + $0x43] sm:$0xff]
      %v1514 = vld [vmem:[#allocation2 + $0x4b] sm:$0xff]
      %v1515 = vld [vmem:[#allocation2 + $0x53] sm:$0xff]
      %v1516 = vld [vmem:[#allocation2 + $0x5b] sm:$0xff]
      %v1517 = vld [vmem:[#allocation2 + $0x63] sm:$0xff]
      %v1518 = vld [vmem:[#allocation2 + $0x6b] sm:$0xff]
      %v1519 = vld [vmem:[#allocation2 + $0x73] sm:$0xff]
      %v1520 = vld [vmem:[#allocation2 + $0x7b] sm:$0xf]
      %1534 = vrot.lane.b32.xlu0 %v1439, 32
      %v1535 = vpop.permute.xlu0 %1534
      %1536 = vrot.lane.b32.xlu0 %v1440, 32
      %v1537 = vpop.permute.xlu0 %1536
      %1538 = vrot.lane.b32.xlu0 %v1441, 32
      %v1539 = vpop.permute.xlu0 %1538
      %1540 = vrot.lane.b32.xlu0 %v1442, 32
      %v1541 = vpop.permute.xlu0 %1540
      %1542 = vrot.lane.b32.xlu0 %v1443, 32
      %v1543 = vpop.permute.xlu0 %1542
      %1544 = vrot.lane.b32.xlu0 %v1444, 32
      %v1545 = vpop.permute.xlu0 %1544
      %1546 = vrot.lane.b32.xlu0 %v1445, 32
      %v1547 = vpop.permute.xlu0 %1546
      %1548 = vrot.lane.b32.xlu0 %v1446, 32
      %v1549 = vpop.permute.xlu0 %1548
      %1550 = vrot.lane.b32.xlu0 %v1447, 32
      %v1551 = vpop.permute.xlu0 %1550
      %1552 = vrot.lane.b32.xlu0 %v1448, 32
      %v1553 = vpop.permute.xlu0 %1552
      %1554 = vrot.lane.b32.xlu0 %v1449, 32
      %v1555 = vpop.permute.xlu0 %1554
      %1556 = vrot.lane.b32.xlu0 %v1450, 32
      %v1557 = vpop.permute.xlu0 %1556
      %1558 = vrot.lane.b32.xlu0 %v1451, 32
      %v1559 = vpop.permute.xlu0 %1558
      %1586 = vrot.lane.b32.xlu0 %v1452, 64
      %v1587 = vpop.permute.xlu0 %1586
      %1588 = vrot.lane.b32.xlu0 %v1453, 64
      %v1589 = vpop.permute.xlu0 %1588
      %1590 = vrot.lane.b32.xlu0 %v1454, 64
      %v1591 = vpop.permute.xlu0 %1590
      %1592 = vrot.lane.b32.xlu0 %v1455, 64
      %v1593 = vpop.permute.xlu0 %1592
      %1594 = vrot.lane.b32.xlu0 %v1456, 64
      %v1595 = vpop.permute.xlu0 %1594
      %1596 = vrot.lane.b32.xlu0 %v1457, 64
      %v1597 = vpop.permute.xlu0 %1596
      %1598 = vrot.lane.b32.xlu0 %v1458, 64
      %v1599 = vpop.permute.xlu0 %1598
      %1600 = vrot.lane.b32.xlu0 %v1459, 64
      %v1601 = vpop.permute.xlu0 %1600
      %1602 = vrot.lane.b32.xlu0 %v1460, 64
      %v1603 = vpop.permute.xlu0 %1602
      %1604 = vrot.lane.b32.xlu0 %v1461, 64
      %v1605 = vpop.permute.xlu0 %1604
      %1606 = vrot.lane.b32.xlu0 %v1462, 64
      %v1607 = vpop.permute.xlu0 %1606
      %1608 = vrot.lane.b32.xlu0 %v1463, 64
      %v1609 = vpop.permute.xlu0 %1608
      %1610 = vrot.lane.b32.xlu0 %v1464, 64
      %v1611 = vpop.permute.xlu0 %1610
      %1627 = vrot.lane.b32.xlu0 %v1453, 96
      %v1628 = vpop.permute.xlu0 %1627
      %1629 = vrot.lane.b32.xlu0 %v1454, 96
      %v1630 = vpop.permute.xlu0 %1629
      %1631 = vrot.lane.b32.xlu0 %v1455, 96
      %v1632 = vpop.permute.xlu0 %1631
      %1633 = vrot.lane.b32.xlu0 %v1456, 96
      %v1634 = vpop.permute.xlu0 %1633
      %1635 = vrot.lane.b32.xlu0 %v1457, 96
      %v1636 = vpop.permute.xlu0 %1635
      %1637 = vrot.lane.b32.xlu0 %v1458, 96
      %v1638 = vpop.permute.xlu0 %1637
      %1639 = vrot.lane.b32.xlu0 %v1459, 96
      %v1640 = vpop.permute.xlu0 %1639
      %1641 = vrot.lane.b32.xlu0 %v1460, 96
      %v1642 = vpop.permute.xlu0 %1641
      %1643 = vrot.lane.b32.xlu0 %v1461, 96
      %v1644 = vpop.permute.xlu0 %1643
      %1645 = vrot.lane.b32.xlu0 %v1462, 96
      %v1646 = vpop.permute.xlu0 %1645
      %1647 = vrot.lane.b32.xlu0 %v1463, 96
      %v1648 = vpop.permute.xlu0 %1647
      %1649 = vrot.lane.b32.xlu0 %v1465, 96
      %v1650 = vpop.permute.xlu0 %1649
      %1651 = vrot.lane.b32.xlu0 %v1466, 96
      %v1652 = vpop.permute.xlu0 %1651
      %1679 = vrot.lane.b32.xlu0 %v1480, 32
      %v1680 = vpop.permute.xlu0 %1679
      %1681 = vrot.lane.b32.xlu0 %v1481, 32
      %v1682 = vpop.permute.xlu0 %1681
      %1683 = vrot.lane.b32.xlu0 %v1482, 32
      %v1684 = vpop.permute.xlu0 %1683
      %1685 = vrot.lane.b32.xlu0 %v1483, 32
      %v1686 = vpop.permute.xlu0 %1685
      %1687 = vrot.lane.b32.xlu0 %v1484, 32
      %v1688 = vpop.permute.xlu0 %1687
      %1689 = vrot.lane.b32.xlu0 %v1485, 32
      %v1690 = vpop.permute.xlu0 %1689
      %1691 = vrot.lane.b32.xlu0 %v1486, 32
      %v1692 = vpop.permute.xlu0 %1691
      %1693 = vrot.lane.b32.xlu0 %v1487, 32
      %v1694 = vpop.permute.xlu0 %1693
      %1695 = vrot.lane.b32.xlu0 %v1488, 32
      %v1696 = vpop.permute.xlu0 %1695
      %1697 = vrot.lane.b32.xlu0 %v1489, 32
      %v1698 = vpop.permute.xlu0 %1697
      %1699 = vrot.lane.b32.xlu0 %v1490, 32
      %v1700 = vpop.permute.xlu0 %1699
      %1701 = vrot.lane.b32.xlu0 %v1491, 32
      %v1702 = vpop.permute.xlu0 %1701
      %1703 = vrot.lane.b32.xlu0 %v1492, 32
      %v1704 = vpop.permute.xlu0 %1703
      %1720 = vrot.lane.b32.xlu0 %v1481, 64
      %v1721 = vpop.permute.xlu0 %1720
      %1722 = vrot.lane.b32.xlu0 %v1482, 64
      %v1723 = vpop.permute.xlu0 %1722
      %1724 = vrot.lane.b32.xlu0 %v1483, 64
      %v1725 = vpop.permute.xlu0 %1724
      %1726 = vrot.lane.b32.xlu0 %v1484, 64
      %v1727 = vpop.permute.xlu0 %1726
      %1728 = vrot.lane.b32.xlu0 %v1485, 64
      %v1729 = vpop.permute.xlu0 %1728
      %1730 = vrot.lane.b32.xlu0 %v1486, 64
      %v1731 = vpop.permute.xlu0 %1730
      %1732 = vrot.lane.b32.xlu0 %v1487, 64
      %v1733 = vpop.permute.xlu0 %1732
      %1734 = vrot.lane.b32.xlu0 %v1488, 64
      %v1735 = vpop.permute.xlu0 %1734
      %1736 = vrot.lane.b32.xlu0 %v1489, 64
      %v1737 = vpop.permute.xlu0 %1736
      %1738 = vrot.lane.b32.xlu0 %v1490, 64
      %v1739 = vpop.permute.xlu0 %1738
      %1740 = vrot.lane.b32.xlu0 %v1491, 64
      %v1741 = vpop.permute.xlu0 %1740
      %1742 = vrot.lane.b32.xlu0 %v1493, 64
      %v1743 = vpop.permute.xlu0 %1742
      %1744 = vrot.lane.b32.xlu0 %v1494, 64
      %v1745 = vpop.permute.xlu0 %1744
      %1772 = vrot.lane.b32.xlu0 %v1495, 96
      %v1773 = vpop.permute.xlu0 %1772
      %1774 = vrot.lane.b32.xlu0 %v1496, 96
      %v1775 = vpop.permute.xlu0 %1774
      %1776 = vrot.lane.b32.xlu0 %v1497, 96
      %v1777 = vpop.permute.xlu0 %1776
      %1778 = vrot.lane.b32.xlu0 %v1498, 96
      %v1779 = vpop.permute.xlu0 %1778
      %1780 = vrot.lane.b32.xlu0 %v1499, 96
      %v1781 = vpop.permute.xlu0 %1780
      %1782 = vrot.lane.b32.xlu0 %v1500, 96
      %v1783 = vpop.permute.xlu0 %1782
      %1784 = vrot.lane.b32.xlu0 %v1501, 96
      %v1785 = vpop.permute.xlu0 %1784
      %1786 = vrot.lane.b32.xlu0 %v1502, 96
      %v1787 = vpop.permute.xlu0 %1786
      %1788 = vrot.lane.b32.xlu0 %v1503, 96
      %v1789 = vpop.permute.xlu0 %1788
      %1790 = vrot.lane.b32.xlu0 %v1504, 96
      %v1791 = vpop.permute.xlu0 %1790
      %1792 = vrot.lane.b32.xlu0 %v1505, 96
      %v1793 = vpop.permute.xlu0 %1792
      %1794 = vrot.lane.b32.xlu0 %v1506, 96
      %v1795 = vpop.permute.xlu0 %1794
      %1796 = vrot.lane.b32.xlu0 %v1507, 96
      %v1797 = vpop.permute.xlu0 %1796
      %v1811 = vsel %vm615, %v1426, %v1535
      %v1812 = vsel %vm615, %v1427, %v1537
      %v1813 = vsel %vm615, %v1428, %v1539
      %v1814 = vsel %vm615, %v1429, %v1541
      %v1815 = vsel %vm615, %v1430, %v1543
      %v1816 = vsel %vm615, %v1431, %v1545
      %v1817 = vsel %vm615, %v1432, %v1547
      %v1818 = vsel %vm615, %v1433, %v1549
      %v1819 = vsel %vm615, %v1434, %v1551
      %v1820 = vsel %vm615, %v1435, %v1553
      %v1821 = vsel %vm615, %v1436, %v1555
      %v1822 = vsel %vm615, %v1437, %v1557
      %v1823 = vsel %vm615, %v1438, %v1559
      %v1824 = vsel %vm629, %v1811, %v1587
      %v1825 = vsel %vm629, %v1812, %v1589
      %v1826 = vsel %vm629, %v1813, %v1591
      %v1827 = vsel %vm629, %v1814, %v1593
      %v1828 = vsel %vm629, %v1815, %v1595
      %v1829 = vsel %vm629, %v1816, %v1597
      %v1830 = vsel %vm629, %v1817, %v1599
      %v1831 = vsel %vm629, %v1818, %v1601
      %v1832 = vsel %vm629, %v1819, %v1603
      %v1833 = vsel %vm629, %v1820, %v1605
      %v1834 = vsel %vm629, %v1821, %v1607
      %v1835 = vsel %vm629, %v1822, %v1609
      %v1836 = vsel %vm629, %v1823, %v1611
      %v1837 = vsel %vm643, %v1824, %v1628
      %v1838 = vsel %vm643, %v1825, %v1630
      %v1839 = vsel %vm643, %v1826, %v1632
      %v1840 = vsel %vm643, %v1827, %v1634
      %v1841 = vsel %vm643, %v1828, %v1636
      %v1842 = vsel %vm643, %v1829, %v1638
      %v1843 = vsel %vm643, %v1830, %v1640
      %v1844 = vsel %vm643, %v1831, %v1642
      %v1845 = vsel %vm643, %v1832, %v1644
      %v1846 = vsel %vm643, %v1833, %v1646
      %v1847 = vsel %vm643, %v1834, %v1648
      %v1848 = vsel %vm643, %v1835, %v1650
      %v1849 = vsel %vm643, %v1836, %v1652
      %v1850 = vsel %vm615, %v1467, %v1680
      %v1851 = vsel %vm615, %v1468, %v1682
      %v1852 = vsel %vm615, %v1469, %v1684
      %v1853 = vsel %vm615, %v1470, %v1686
      %v1854 = vsel %vm615, %v1471, %v1688
      %v1855 = vsel %vm615, %v1472, %v1690
      %v1856 = vsel %vm615, %v1473, %v1692
      %v1857 = vsel %vm615, %v1474, %v1694
      %v1858 = vsel %vm615, %v1475, %v1696
      %v1859 = vsel %vm615, %v1476, %v1698
      %v1860 = vsel %vm615, %v1477, %v1700
      %v1861 = vsel %vm615, %v1478, %v1702
      %v1862 = vsel %vm615, %v1479, %v1704
      %v1863 = vsel %vm629, %v1850, %v1721
      %v1864 = vsel %vm629, %v1851, %v1723
      %v1865 = vsel %vm629, %v1852, %v1725
      %v1866 = vsel %vm629, %v1853, %v1727
      %v1867 = vsel %vm629, %v1854, %v1729
      %v1868 = vsel %vm629, %v1855, %v1731
      %v1869 = vsel %vm629, %v1856, %v1733
      %v1870 = vsel %vm629, %v1857, %v1735
      %v1871 = vsel %vm629, %v1858, %v1737
      %v1872 = vsel %vm629, %v1859, %v1739
      %v1873 = vsel %vm629, %v1860, %v1741
      %v1874 = vsel %vm629, %v1861, %v1743
      %v1875 = vsel %vm629, %v1862, %v1745
      %v1876 = vsel %vm643, %v1863, %v1773
      %v1877 = vsel %vm643, %v1864, %v1775
      %v1878 = vsel %vm643, %v1865, %v1777
      %v1879 = vsel %vm643, %v1866, %v1779
      %v1880 = vsel %vm643, %v1867, %v1781
      %v1881 = vsel %vm643, %v1868, %v1783
      %v1882 = vsel %vm643, %v1869, %v1785
      %v1883 = vsel %vm643, %v1870, %v1787
      %v1884 = vsel %vm643, %v1871, %v1789
      %v1885 = vsel %vm643, %v1872, %v1791
      %v1886 = vsel %vm643, %v1873, %v1793
      %v1887 = vsel %vm643, %v1874, %v1795
      %v1888 = vsel %vm643, %v1875, %v1797
      %v1889 = vpack.c.bf16 %v1838, %v1837
      %v1890 = vpack.c.bf16 %v1877, %v1876
      %v1891 = vpack.c.bf16 %v1509, %v1508
      %v1892 = vpack.c.bf16 %v1840, %v1839
      %v1893 = vpack.c.bf16 %v1879, %v1878
      %v1894 = vpack.c.bf16 %v1511, %v1510
      %v1895 = vpack.c.bf16 %v1842, %v1841
      %v1896 = vpack.c.bf16 %v1881, %v1880
      %v1897 = vpack.c.bf16 %v1513, %v1512
      %v1898 = vpack.c.bf16 %v1844, %v1843
      %v1899 = vpack.c.bf16 %v1883, %v1882
      %v1900 = vpack.c.bf16 %v1515, %v1514
      %v1901 = vpack.c.bf16 %v1846, %v1845
      %v1902 = vpack.c.bf16 %v1885, %v1884
      %v1903 = vpack.c.bf16 %v1517, %v1516
      %v1904 = vpack.c.bf16 %v1848, %v1847
      %v1905 = vpack.c.bf16 %v1887, %v1886
      %v1906 = vpack.c.bf16 %v1519, %v1518
      %v1907 = vpack.c.bf16 %v1849, %v1849
      %v1908 = vpack.c.bf16 %v1888, %v1888
      %v1909 = vpack.c.bf16 %v1520, %v1520
      %v1910 = vunpack.c.l.bf16 %v1889
      %v1911 = vunpack.c.l.bf16 %v1890
      %v1912 = vunpack.c.l.bf16 %v1891
      %v1913 = vunpack.c.h.bf16 %v1889
      %v1914 = vunpack.c.h.bf16 %v1890
      %v1915 = vunpack.c.h.bf16 %v1891
      %v1916 = vunpack.c.l.bf16 %v1892
      %v1917 = vunpack.c.l.bf16 %v1893
      %v1918 = vunpack.c.l.bf16 %v1894
      %v1919 = vunpack.c.h.bf16 %v1892
      %v1920 = vunpack.c.h.bf16 %v1893
      %v1921 = vunpack.c.h.bf16 %v1894
      %v1922 = vunpack.c.l.bf16 %v1895
      %v1923 = vunpack.c.l.bf16 %v1896
      %v1924 = vunpack.c.l.bf16 %v1897
      %v1925 = vunpack.c.h.bf16 %v1895
      %v1926 = vunpack.c.h.bf16 %v1896
      %v1927 = vunpack.c.h.bf16 %v1897
      %v1928 = vunpack.c.l.bf16 %v1898
      %v1929 = vunpack.c.l.bf16 %v1899
      %v1930 = vunpack.c.l.bf16 %v1900
      %v1931 = vunpack.c.h.bf16 %v1898
      %v1932 = vunpack.c.h.bf16 %v1899
      %v1933 = vunpack.c.h.bf16 %v1900
      %v1934 = vunpack.c.l.bf16 %v1901
      %v1935 = vunpack.c.l.bf16 %v1902
      %v1936 = vunpack.c.l.bf16 %v1903
      %v1937 = vunpack.c.h.bf16 %v1901
      %v1938 = vunpack.c.h.bf16 %v1902
      %v1939 = vunpack.c.h.bf16 %v1903
      %v1940 = vunpack.c.l.bf16 %v1904
      %v1941 = vunpack.c.l.bf16 %v1905
      %v1942 = vunpack.c.l.bf16 %v1906
      %v1943 = vunpack.c.h.bf16 %v1904
      %v1944 = vunpack.c.h.bf16 %v1905
      %v1945 = vunpack.c.h.bf16 %v1906
      %v1946 = vunpack.c.l.bf16 %v1907
      %v1947 = vunpack.c.l.bf16 %v1908
      %v1948 = vunpack.c.l.bf16 %v1909
      %v1949 = vsub.f32 %v1837, %v1910
      %v1950 = vsub.f32 %v1876, %v1911
      %v1951 = vsub.f32 %v1508, %v1912
      %v1952 = vsub.f32 %v1838, %v1913
      %v1953 = vsub.f32 %v1877, %v1914
      %v1954 = vsub.f32 %v1509, %v1915
      %v1955 = vsub.f32 %v1839, %v1916
      %v1956 = vsub.f32 %v1878, %v1917
      %v1957 = vsub.f32 %v1510, %v1918
      %v1958 = vsub.f32 %v1840, %v1919
      %v1959 = vsub.f32 %v1879, %v1920
      %v1960 = vsub.f32 %v1511, %v1921
      %v1961 = vsub.f32 %v1841, %v1922
      %v1962 = vsub.f32 %v1880, %v1923
      %v1963 = vsub.f32 %v1512, %v1924
      %v1964 = vsub.f32 %v1842, %v1925
      %v1965 = vsub.f32 %v1881, %v1926
      %v1966 = vsub.f32 %v1513, %v1927
      %v1967 = vsub.f32 %v1843, %v1928
      %v1968 = vsub.f32 %v1882, %v1929
      %v1969 = vsub.f32 %v1514, %v1930
      %v1970 = vsub.f32 %v1844, %v1931
      %v1971 = vsub.f32 %v1883, %v1932
      %v1972 = vsub.f32 %v1515, %v1933
      %v1973 = vsub.f32 %v1845, %v1934
      %v1974 = vsub.f32 %v1884, %v1935
      %v1975 = vsub.f32 %v1516, %v1936
      %v1976 = vsub.f32 %v1846, %v1937
      %v1977 = vsub.f32 %v1885, %v1938
      %v1978 = vsub.f32 %v1517, %v1939
      %v1979 = vsub.f32 %v1847, %v1940
      %v1980 = vsub.f32 %v1886, %v1941
      %v1981 = vsub.f32 %v1518, %v1942
      %v1982 = vsub.f32 %v1848, %v1943
      %v1983 = vsub.f32 %v1887, %v1944
      %v1984 = vsub.f32 %v1519, %v1945
      %v1985 = vsub.f32 %v1849, %v1946
      %v1986 = vsub.f32 %v1888, %v1947
      %v1987 = vsub.f32 %v1520, %v1948
      %v1988 = vpack.c.bf16 %v1952, %v1949
      %v1989 = vpack.c.bf16 %v1953, %v1950
      %v1990 = vpack.c.bf16 %v1954, %v1951
      %v1991 = vpack.c.bf16 %v1958, %v1955
      %v1992 = vpack.c.bf16 %v1959, %v1956
      %v1993 = vpack.c.bf16 %v1960, %v1957
      %v1994 = vpack.c.bf16 %v1964, %v1961
      %v1995 = vpack.c.bf16 %v1965, %v1962
      %v1996 = vpack.c.bf16 %v1966, %v1963
      %v1997 = vpack.c.bf16 %v1970, %v1967
      %v1998 = vpack.c.bf16 %v1971, %v1968
      %v1999 = vpack.c.bf16 %v1972, %v1969
      %v2000 = vpack.c.bf16 %v1976, %v1973
      %v2001 = vpack.c.bf16 %v1977, %v1974
      %v2002 = vpack.c.bf16 %v1978, %v1975
      %v2003 = vpack.c.bf16 %v1982, %v1979
      %v2004 = vpack.c.bf16 %v1983, %v1980
      %v2005 = vpack.c.bf16 %v1984, %v1981
      %v2006 = vpack.c.bf16 %v1985, %v1985
      %v2007 = vpack.c.bf16 %v1986, %v1986
      %v2008 = vpack.c.bf16 %v1987, %v1987
      %s2009 = scalar_lea.vmem %s1, 144
      %v2010 = vld [vmem:[%s2009] sm:$0xf]
      %v2011 = vld [vmem:[%s2009 + $0x4] sm:$0xf]
      %v2012 = vld [vmem:[%s2009 + $0x8] sm:$0xf]
      %v2013 = vld [vmem:[%s2009 + $0xc] sm:$0xf]
      %v2014 = vld [vmem:[%s2009 + $0x10] sm:$0xf]
      %v2015 = vld [vmem:[%s2009 + $0x14] sm:$0xf]
      %v2016 = vld [vmem:[%s2009 + $0x18] sm:$0xf]
      %v2017 = vld [vmem:[%s2009 + $0x1c] sm:$0xf]
      %v2018 = vld [vmem:[%s2009 + $0x20] sm:$0xf]
      %v2019 = vld [vmem:[%s2009 + $0x24] sm:$0xf]
      %v2020 = vld [vmem:[%s2009 + $0x28] sm:$0xf]
      %v2021 = vld [vmem:[%s2009 + $0x2c] sm:$0xf]
      %v2022 = vld [vmem:[%s2009 + $0x30] sm:$0xf]
      %v2023 = vld [vmem:[%s2009 + $0x34] sm:$0xf]
      %v2024 = vld [vmem:[%s2009 + $0x38] sm:$0xf]
      %v2025 = vld [vmem:[%s2009 + $0x3c] sm:$0xf]
      %v2026 = vld [vmem:[%s2009 + $0x40] sm:$0xf]
      %v2027 = vld [vmem:[%s2009 + $0x44] sm:$0xf]
      %v2028 = vld [vmem:[%s2009 + $0x48] sm:$0xf]
      %v2029 = vld [vmem:[%s2009 + $0x4c] sm:$0xf]
      %v2030 = vld [vmem:[%s2009 + $0x50] sm:$0xf]
      %v2031 = vld [vmem:[%s2009 + $0x54] sm:$0xf]
      %v2032 = vld [vmem:[%s2009 + $0x58] sm:$0xf]
      %v2033 = vld [vmem:[%s2009 + $0x5c] sm:$0xf]
      %v2034 = vld [vmem:[%s2009 + $0x60] sm:$0xf]
      %v2035 = vld [vmem:[%s2009 + $0x64] sm:$0xf]
      %v2036 = vld [vmem:[%s2009 + $0x68] sm:$0xf]
      %v2037 = vld [vmem:[%s2009 + $0x6c] sm:$0xf]
      %v2038 = vld [vmem:[%s2009 + $0x70] sm:$0xf]
      %v2039 = vld [vmem:[%s2009 + $0x74] sm:$0xf]
      %v2040 = vld [vmem:[%s2009 + $0x78] sm:$0xf]
      %v2041 = vld [vmem:[%s2009 + $0x7c] sm:$0xf]
      %v2042 = vld [vmem:[%s2009 + $0x80] sm:$0xf]
      %v2043 = vld [vmem:[%s2009 + $0x84] sm:$0xf]
      %v2044 = vld [vmem:[%s2009 + $0x88] sm:$0xf]
      %v2045 = vld [vmem:[%s2009 + $0x8c] sm:$0xf]
      %v2082 = vunpack.c.l.b16 %v2010
      %v2083 = vunpack.c.l.b16 %v2011
      %v2084 = vunpack.c.l.b16 %v2012
      %v2085 = vunpack.c.l.b16 %v2013
      %v2086 = vunpack.c.l.b16 %v2014
      %v2087 = vunpack.c.l.b16 %v2015
      %v2088 = vunpack.c.l.b16 %v2016
      %v2089 = vunpack.c.l.b16 %v2017
      %v2090 = vunpack.c.l.b16 %v2018
      %v2091 = vunpack.c.l.b16 %v2019
      %v2092 = vunpack.c.l.b16 %v2020
      %v2093 = vunpack.c.l.b16 %v2021
      %v2094 = vunpack.c.l.b16 %v2022
      %v2095 = vunpack.c.l.b16 %v2023
      %v2096 = vunpack.c.l.b16 %v2024
      %v2097 = vunpack.c.l.b16 %v2025
      %v2098 = vunpack.c.l.b16 %v2026
      %v2099 = vunpack.c.l.b16 %v2027
      %v2100 = vunpack.c.l.b16 %v2028
      %v2101 = vunpack.c.l.b16 %v2029
      %v2102 = vunpack.c.l.b16 %v2030
      %v2103 = vunpack.c.l.b16 %v2031
      %v2104 = vunpack.c.l.b16 %v2032
      %v2105 = vunpack.c.l.b16 %v2033
      %v2106 = vunpack.c.l.b16 %v2034
      %v2107 = vunpack.c.l.b16 %v2035
      %v2108 = vunpack.c.l.b16 %v2036
      %v2109 = vunpack.c.l.b16 %v2037
      %v2110 = vunpack.c.l.b16 %v2038
      %v2111 = vunpack.c.l.b16 %v2039
      %v2112 = vunpack.c.l.b16 %v2040
      %v2113 = vunpack.c.l.b16 %v2041
      %v2114 = vunpack.c.l.b16 %v2042
      %v2115 = vunpack.c.l.b16 %v2043
      %v2116 = vunpack.c.l.b16 %v2044
      %v2117 = vunpack.c.l.b16 %v2045
      %v2118 = vpack.c.b16 %v2083, %v2082
      %v2119 = vpack.c.b16 %v2085, %v2084
      %v2120 = vpack.c.b16 %v2087, %v2086
      %v2121 = vpack.c.b16 %v2089, %v2088
      %v2122 = vpack.c.b16 %v2091, %v2090
      %v2123 = vpack.c.b16 %v2093, %v2092
      %v2124 = vpack.c.b16 %v2095, %v2094
      %v2125 = vpack.c.b16 %v2097, %v2096
      %v2126 = vpack.c.b16 %v2099, %v2098
      %v2127 = vpack.c.b16 %v2101, %v2100
      %v2128 = vpack.c.b16 %v2103, %v2102
      %v2129 = vpack.c.b16 %v2105, %v2104
      %v2130 = vpack.c.b16 %v2107, %v2106
      %v2131 = vpack.c.b16 %v2109, %v2108
      %v2132 = vpack.c.b16 %v2111, %v2110
      %v2133 = vpack.c.b16 %v2113, %v2112
      %v2134 = vpack.c.b16 %v2115, %v2114
      %v2135 = vpack.c.b16 %v2117, %v2116
      %v2155 = vsel %vm615, %v1990, 0
      %v2158 = vsel %vm615, %v1993, 0
      %v2161 = vsel %vm615, %v1996, 0
      %v2164 = vsel %vm615, %v1999, 0
      %v2167 = vsel %vm615, %v2002, 0
      %v2170 = vsel %vm615, %v2005, 0
      %v2173 = vsel %vm615, %v2008, 0
      %2175 = vmatprep.subr.bf16.mxu0 0
      %2176 = vmatpush1.bf16.msra.mxu0 %v2118
      %2177 = vmatprep.subr.bf16.mxu0 0
      %2178 = vmatpush1.bf16.msra.mxu0 %v2119
      %2179 = vmatprep.subr.bf16.mxu0 0
      %2180 = vmatpush1.bf16.msra.mxu0 %v2120
      %2181 = vmatprep.subr.bf16.mxu0 0
      %2182 = vmatpush1.bf16.msra.mxu0 %v2121
      %2183 = vmatprep.subr.bf16.mxu0 0
      %2184 = vmatpush1.bf16.msra.mxu0 %v2122
      %2185 = vmatprep.subr.bf16.mxu0 0
      %2186 = vmatpush1.bf16.msra.mxu0 %v2123
      %2187 = vmatprep.subr.bf16.mxu0 0
      %2188 = vmatpush1.bf16.msra.mxu0 %v2124
      %2189 = vmatprep.subr.bf16.mxu0 0
      %2190 = vmatpush1.bf16.msra.mxu0 %v2125
      %2191 = vmatprep.subr.bf16.mxu0 0
      %2192 = vmatpush1.bf16.msra.mxu0 %v2126
      %2193 = vmatprep.subr.bf16.mxu0 0
      %2194 = vmatpush1.bf16.msra.mxu0 %v2127
      %2195 = vmatprep.subr.bf16.mxu0 0
      %2196 = vmatpush1.bf16.msra.mxu0 %v2128
      %2197 = vmatprep.subr.bf16.mxu0 0
      %2198 = vmatpush1.bf16.msra.mxu0 %v2129
      %2199 = vmatprep.subr.bf16.mxu0 0
      %2200 = vmatpush1.bf16.msra.mxu0 %v2130
      %2201 = vmatprep.subr.bf16.mxu0 0
      %2202 = vmatpush1.bf16.msra.mxu0 %v2131
      %2203 = vmatprep.subr.bf16.mxu0 0
      %2204 = vmatpush1.bf16.msra.mxu0 %v2132
      %2205 = vmatprep.subr.bf16.mxu0 0
      %2206 = vmatpush1.bf16.msra.mxu0 %v2133
      %2207 = vmatprep.mubr.bf16.mxu0 %v1989
      %2208 = vmatmul.mubr.bf16.gmra.mrb[0].mxu0 %v1988
      %v2209 = vpop.f32.mrb[0].mxu0
      %v2210 = vadd.f32 0.0, %v2209
      %v2211 = vpop.f32.mrb[0].mxu0
      %v2212 = vpop.f32.mrb[0].mxu0
      %v2213 = vadd.f32 0.0, %v2212
      %v2214 = vpop.f32.mrb[0].mxu0
      %2215 = vmatprep.mubr.bf16.mxu0 %v1992
      %2216 = vmatmul.mubr.bf16.gmra.mrb[0].mxu0 %v1991
      %v2217 = vpop.f32.mrb[0].mxu0
      %v2218 = vadd.f32 0.0, %v2217
      %v2219 = vpop.f32.mrb[0].mxu0
      %v2220 = vpop.f32.mrb[0].mxu0
      %v2221 = vadd.f32 0.0, %v2220
      %v2222 = vpop.f32.mrb[0].mxu0
      %2223 = vmatprep.mubr.bf16.mxu0 %v1995
      %2224 = vmatmul.mubr.bf16.gmra.mrb[0].mxu0 %v1994
      %v2225 = vpop.f32.mrb[0].mxu0
      %v2226 = vadd.f32 0.0, %v2225
      %v2227 = vpop.f32.mrb[0].mxu0
      %v2228 = vpop.f32.mrb[0].mxu0
      %v2229 = vadd.f32 0.0, %v2228
      %v2230 = vpop.f32.mrb[0].mxu0
      %2231 = vmatprep.mubr.bf16.mxu0 %v1998
      %2232 = vmatmul.mubr.bf16.gmra.mrb[0].mxu0 %v1997
      %v2233 = vpop.f32.mrb[0].mxu0
      %v2234 = vadd.f32 0.0, %v2233
      %v2235 = vpop.f32.mrb[0].mxu0
      %v2236 = vpop.f32.mrb[0].mxu0
      %v2237 = vadd.f32 0.0, %v2236
      %v2238 = vpop.f32.mrb[0].mxu0
      %2239 = vmatprep.mubr.bf16.mxu0 %v2001
      %2240 = vmatmul.mubr.bf16.gmra.mrb[0].mxu0 %v2000
      %v2241 = vpop.f32.mrb[0].mxu0
      %v2242 = vadd.f32 0.0, %v2241
      %v2243 = vpop.f32.mrb[0].mxu0
      %v2244 = vpop.f32.mrb[0].mxu0
      %v2245 = vadd.f32 0.0, %v2244
      %v2246 = vpop.f32.mrb[0].mxu0
      %2247 = vmatprep.mubr.bf16.mxu0 %v2004
      %2248 = vmatmul.mubr.bf16.gmra.mrb[0].mxu0 %v2003
      %v2249 = vpop.f32.mrb[0].mxu0
      %v2250 = vadd.f32 0.0, %v2249
      %v2251 = vpop.f32.mrb[0].mxu0
      %v2252 = vpop.f32.mrb[0].mxu0
      %v2253 = vadd.f32 0.0, %v2252
      %v2254 = vpop.f32.mrb[0].mxu0
      %2255 = vmatprep.mubr.bf16.mxu0 %v2007
      %2256 = vmatmul.mubr.bf16.gmra.mrb[0].mxu0 %v2006
      %v2257 = vpop.f32.mrb[0].mxu0
      %v2258 = vadd.f32 0.0, %v2257
      %v2259 = vpop.f32.mrb[0].mxu0
      %v2260 = vpop.f32.mrb[0].mxu0
      %v2261 = vpop.f32.mrb[0].mxu0
      %2262 = vdwg.mxu0
      %2263 = vmatprep.subr.bf16.mxu0 0
      %2264 = vmatpush1.bf16.msra.mxu0 %v2134
      %2265 = vmatprep.subr.bf16.mxu0 0
      %2266 = vmatpush1.bf16.msra.mxu0 %v2135
      %2267 = vmatprep.subr.bf16.mxu0 0
      %2268 = vmatpush1.bf16.msra.mxu0 0
      %2269 = vmatprep.subr.bf16.mxu0 0
      %2270 = vmatpush1.bf16.msra.mxu0 0
      %2271 = vmatprep.subr.bf16.mxu0 0
      %2272 = vmatpush1.bf16.msra.mxu0 0
      %2273 = vmatprep.subr.bf16.mxu0 0
      %2274 = vmatpush1.bf16.msra.mxu0 0
      %2275 = vmatprep.subr.bf16.mxu0 0
      %2276 = vmatpush1.bf16.msra.mxu0 0
      %2277 = vmatprep.subr.bf16.mxu0 0
      %2278 = vmatpush1.bf16.msra.mxu0 0
      %2279 = vmatprep.subr.bf16.mxu0 0
      %2280 = vmatpush1.bf16.msra.mxu0 0
      %2281 = vmatprep.subr.bf16.mxu0 0
      %2282 = vmatpush1.bf16.msra.mxu0 0
      %2283 = vmatprep.subr.bf16.mxu0 0
      %2284 = vmatpush1.bf16.msra.mxu0 0
      %2285 = vmatprep.subr.bf16.mxu0 0
      %2286 = vmatpush1.bf16.msra.mxu0 0
      %2287 = vmatprep.subr.bf16.mxu0 0
      %2288 = vmatpush1.bf16.msra.mxu0 0
      %2289 = vmatprep.subr.bf16.mxu0 0
      %2290 = vmatpush1.bf16.msra.mxu0 0
      %2291 = vmatprep.subr.bf16.mxu0 0
      %2292 = vmatpush1.bf16.msra.mxu0 0
      %2293 = vmatprep.subr.bf16.mxu0 0
      %2294 = vmatpush1.bf16.msra.mxu0 0
      %2295 = vmatprep.mubr.bf16.mxu0 0
      %2296 = vmatmul.mubr.bf16.gmra.mrb[0].mxu0 %v2155
      %v2297 = vpop.f32.mrb[0].mxu0
      %v2298 = vadd.f32 %v2210, %v2297
      %v2299 = vpop.f32.mrb[0].mxu0
      %v2300 = vpop.f32.mrb[0].mxu0
      %v2301 = vadd.f32 %v2213, %v2300
      %v2302 = vpop.f32.mrb[0].mxu0
      %2303 = vmatprep.mubr.bf16.mxu0 0
      %2304 = vmatmul.mubr.bf16.gmra.mrb[0].mxu0 %v2158
      %v2305 = vpop.f32.mrb[0].mxu0
      %v2306 = vadd.f32 %v2218, %v2305
      %v2307 = vpop.f32.mrb[0].mxu0
      %v2308 = vpop.f32.mrb[0].mxu0
      %v2309 = vadd.f32 %v2221, %v2308
      %v2310 = vpop.f32.mrb[0].mxu0
      %2311 = vmatprep.mubr.bf16.mxu0 0
      %2312 = vmatmul.mubr.bf16.gmra.mrb[0].mxu0 %v2161
      %v2313 = vpop.f32.mrb[0].mxu0
      %v2314 = vadd.f32 %v2226, %v2313
      %v2315 = vpop.f32.mrb[0].mxu0
      %v2316 = vpop.f32.mrb[0].mxu0
      %v2317 = vadd.f32 %v2229, %v2316
      %v2318 = vpop.f32.mrb[0].mxu0
      %2319 = vmatprep.mubr.bf16.mxu0 0
      %2320 = vmatmul.mubr.bf16.gmra.mrb[0].mxu0 %v2164
      %v2321 = vpop.f32.mrb[0].mxu0
      %v2322 = vadd.f32 %v2234, %v2321
      %v2323 = vpop.f32.mrb[0].mxu0
      %v2324 = vpop.f32.mrb[0].mxu0
      %v2325 = vadd.f32 %v2237, %v2324
      %v2326 = vpop.f32.mrb[0].mxu0
      %2327 = vmatprep.mubr.bf16.mxu0 0
      %2328 = vmatmul.mubr.bf16.gmra.mrb[0].mxu0 %v2167
      %v2329 = vpop.f32.mrb[0].mxu0
      %v2330 = vadd.f32 %v2242, %v2329
      %v2331 = vpop.f32.mrb[0].mxu0
      %v2332 = vpop.f32.mrb[0].mxu0
      %v2333 = vadd.f32 %v2245, %v2332
      %v2334 = vpop.f32.mrb[0].mxu0
      %2335 = vmatprep.mubr.bf16.mxu0 0
      %2336 = vmatmul.mubr.bf16.gmra.mrb[0].mxu0 %v2170
      %v2337 = vpop.f32.mrb[0].mxu0
      %v2338 = vadd.f32 %v2250, %v2337
      %v2339 = vpop.f32.mrb[0].mxu0
      %v2340 = vpop.f32.mrb[0].mxu0
      %v2341 = vadd.f32 %v2253, %v2340
      %v2342 = vpop.f32.mrb[0].mxu0
      %2343 = vmatprep.mubr.bf16.mxu0 0
      %2344 = vmatmul.mubr.bf16.gmra.mrb[0].mxu0 %v2173
      %v2345 = vpop.f32.mrb[0].mxu0
      %v2346 = vadd.f32 %v2258, %v2345
      %v2347 = vpop.f32.mrb[0].mxu0
      %v2348 = vpop.f32.mrb[0].mxu0
      %v2349 = vpop.f32.mrb[0].mxu0
      %2350 = vdwg.mxu0
      %v2352 = vsel %vm615, %v1891, 0
      %v2355 = vsel %vm615, %v1894, 0
      %v2358 = vsel %vm615, %v1897, 0
      %v2361 = vsel %vm615, %v1900, 0
      %v2364 = vsel %vm615, %v1903, 0
      %v2367 = vsel %vm615, %v1906, 0
      %v2370 = vsel %vm615, %v1909, 0
      %2372 = vmatprep.subr.bf16.mxu0 0
      %2373 = vmatpush1.bf16.msra.mxu0 %v2118
      %2374 = vmatprep.subr.bf16.mxu0 0
      %2375 = vmatpush1.bf16.msra.mxu0 %v2119
      %2376 = vmatprep.subr.bf16.mxu0 0
      %2377 = vmatpush1.bf16.msra.mxu0 %v2120
      %2378 = vmatprep.subr.bf16.mxu0 0
      %2379 = vmatpush1.bf16.msra.mxu0 %v2121
      %2380 = vmatprep.subr.bf16.mxu0 0
      %2381 = vmatpush1.bf16.msra.mxu0 %v2122
      %2382 = vmatprep.subr.bf16.mxu0 0
      %2383 = vmatpush1.bf16.msra.mxu0 %v2123
      %2384 = vmatprep.subr.bf16.mxu0 0
      %2385 = vmatpush1.bf16.msra.mxu0 %v2124
      %2386 = vmatprep.subr.bf16.mxu0 0
      %2387 = vmatpush1.bf16.msra.mxu0 %v2125
      %2388 = vmatprep.subr.bf16.mxu0 0
      %2389 = vmatpush1.bf16.msra.mxu0 %v2126
      %2390 = vmatprep.subr.bf16.mxu0 0
      %2391 = vmatpush1.bf16.msra.mxu0 %v2127
      %2392 = vmatprep.subr.bf16.mxu0 0
      %2393 = vmatpush1.bf16.msra.mxu0 %v2128
      %2394 = vmatprep.subr.bf16.mxu0 0
      %2395 = vmatpush1.bf16.msra.mxu0 %v2129
      %2396 = vmatprep.subr.bf16.mxu0 0
      %2397 = vmatpush1.bf16.msra.mxu0 %v2130
      %2398 = vmatprep.subr.bf16.mxu0 0
      %2399 = vmatpush1.bf16.msra.mxu0 %v2131
      %2400 = vmatprep.subr.bf16.mxu0 0
      %2401 = vmatpush1.bf16.msra.mxu0 %v2132
      %2402 = vmatprep.subr.bf16.mxu0 0
      %2403 = vmatpush1.bf16.msra.mxu0 %v2133
      %2404 = vmatprep.mubr.bf16.mxu0 %v1890
      %2405 = vmatmul.mubr.bf16.gmra.mrb[0].mxu0 %v1889
      %v2406 = vpop.f32.mrb[0].mxu0
      %v2407 = vadd.f32 %v2298, %v2406
      %v2408 = vpop.f32.mrb[0].mxu0
      %v2409 = vpop.f32.mrb[0].mxu0
      %v2410 = vadd.f32 %v2301, %v2409
      %v2411 = vpop.f32.mrb[0].mxu0
      %2412 = vmatprep.mubr.bf16.mxu0 %v1893
      %2413 = vmatmul.mubr.bf16.gmra.mrb[0].mxu0 %v1892
      %v2414 = vpop.f32.mrb[0].mxu0
      %v2415 = vadd.f32 %v2306, %v2414
      %v2416 = vpop.f32.mrb[0].mxu0
      %v2417 = vpop.f32.mrb[0].mxu0
      %v2418 = vadd.f32 %v2309, %v2417
      %v2419 = vpop.f32.mrb[0].mxu0
      %2420 = vmatprep.mubr.bf16.mxu0 %v1896
      %2421 = vmatmul.mubr.bf16.gmra.mrb[0].mxu0 %v1895
      %v2422 = vpop.f32.mrb[0].mxu0
      %v2423 = vadd.f32 %v2314, %v2422
      %v2424 = vpop.f32.mrb[0].mxu0
      %v2425 = vpop.f32.mrb[0].mxu0
      %v2426 = vadd.f32 %v2317, %v2425
      %v2427 = vpop.f32.mrb[0].mxu0
      %2428 = vmatprep.mubr.bf16.mxu0 %v1899
      %2429 = vmatmul.mubr.bf16.gmra.mrb[0].mxu0 %v1898
      %v2430 = vpop.f32.mrb[0].mxu0
      %v2431 = vadd.f32 %v2322, %v2430
      %v2432 = vpop.f32.mrb[0].mxu0
      %v2433 = vpop.f32.mrb[0].mxu0
      %v2434 = vadd.f32 %v2325, %v2433
      %v2435 = vpop.f32.mrb[0].mxu0
      %2436 = vmatprep.mubr.bf16.mxu0 %v1902
      %2437 = vmatmul.mubr.bf16.gmra.mrb[0].mxu0 %v1901
      %v2438 = vpop.f32.mrb[0].mxu0
      %v2439 = vadd.f32 %v2330, %v2438
      %v2440 = vpop.f32.mrb[0].mxu0
      %v2441 = vpop.f32.mrb[0].mxu0
      %v2442 = vadd.f32 %v2333, %v2441
      %v2443 = vpop.f32.mrb[0].mxu0
      %2444 = vmatprep.mubr.bf16.mxu0 %v1905
      %2445 = vmatmul.mubr.bf16.gmra.mrb[0].mxu0 %v1904
      %v2446 = vpop.f32.mrb[0].mxu0
      %v2447 = vadd.f32 %v2338, %v2446
      %v2448 = vpop.f32.mrb[0].mxu0
      %v2449 = vpop.f32.mrb[0].mxu0
      %v2450 = vadd.f32 %v2341, %v2449
      %v2451 = vpop.f32.mrb[0].mxu0
      %2452 = vmatprep.mubr.bf16.mxu0 %v1908
      %2453 = vmatmul.mubr.bf16.gmra.mrb[0].mxu0 %v1907
      %v2454 = vpop.f32.mrb[0].mxu0
      %v2455 = vadd.f32 %v2346, %v2454
      %v2456 = vpop.f32.mrb[0].mxu0
      %v2457 = vpop.f32.mrb[0].mxu0
      %v2458 = vpop.f32.mrb[0].mxu0
      %2459 = vdwg.mxu0
      %2460 = vmatprep.subr.bf16.mxu0 0
      %2461 = vmatpush1.bf16.msra.mxu0 %v2134
      %2462 = vmatprep.subr.bf16.mxu0 0
      %2463 = vmatpush1.bf16.msra.mxu0 %v2135
      %2464 = vmatprep.subr.bf16.mxu0 0
      %2465 = vmatpush1.bf16.msra.mxu0 0
      %2466 = vmatprep.subr.bf16.mxu0 0
      %2467 = vmatpush1.bf16.msra.mxu0 0
      %2468 = vmatprep.subr.bf16.mxu0 0
      %2469 = vmatpush1.bf16.msra.mxu0 0
      %2470 = vmatprep.subr.bf16.mxu0 0
      %2471 = vmatpush1.bf16.msra.mxu0 0
      %2472 = vmatprep.subr.bf16.mxu0 0
      %2473 = vmatpush1.bf16.msra.mxu0 0
      %2474 = vmatprep.subr.bf16.mxu0 0
      %2475 = vmatpush1.bf16.msra.mxu0 0
      %2476 = vmatprep.subr.bf16.mxu0 0
      %2477 = vmatpush1.bf16.msra.mxu0 0
      %2478 = vmatprep.subr.bf16.mxu0 0
      %2479 = vmatpush1.bf16.msra.mxu0 0
      %2480 = vmatprep.subr.bf16.mxu0 0
      %2481 = vmatpush1.bf16.msra.mxu0 0
      %2482 = vmatprep.subr.bf16.mxu0 0
      %2483 = vmatpush1.bf16.msra.mxu0 0
      %2484 = vmatprep.subr.bf16.mxu0 0
      %2485 = vmatpush1.bf16.msra.mxu0 0
      %2486 = vmatprep.subr.bf16.mxu0 0
      %2487 = vmatpush1.bf16.msra.mxu0 0
      %2488 = vmatprep.subr.bf16.mxu0 0
      %2489 = vmatpush1.bf16.msra.mxu0 0
      %2490 = vmatprep.subr.bf16.mxu0 0
      %2491 = vmatpush1.bf16.msra.mxu0 0
      %2492 = vmatprep.mubr.bf16.mxu0 0
      %2493 = vmatmul.mubr.bf16.gmra.mrb[0].mxu0 %v2352
      %v2494 = vpop.f32.mrb[0].mxu0
      %v2495 = vadd.f32 %v2407, %v2494
      %v2496 = vpop.f32.mrb[0].mxu0
      %v2497 = vpop.f32.mrb[0].mxu0
      %v2498 = vadd.f32 %v2410, %v2497
      %v2499 = vpop.f32.mrb[0].mxu0
      %2500 = vmatprep.mubr.bf16.mxu0 0
      %2501 = vmatmul.mubr.bf16.gmra.mrb[0].mxu0 %v2355
      %v2502 = vpop.f32.mrb[0].mxu0
      %v2503 = vadd.f32 %v2415, %v2502
      %v2504 = vpop.f32.mrb[0].mxu0
      %v2505 = vpop.f32.mrb[0].mxu0
      %v2506 = vadd.f32 %v2418, %v2505
      %v2507 = vpop.f32.mrb[0].mxu0
      %2508 = vmatprep.mubr.bf16.mxu0 0
      %2509 = vmatmul.mubr.bf16.gmra.mrb[0].mxu0 %v2358
      %v2510 = vpop.f32.mrb[0].mxu0
      %v2511 = vadd.f32 %v2423, %v2510
      %v2512 = vpop.f32.mrb[0].mxu0
      %v2513 = vpop.f32.mrb[0].mxu0
      %v2514 = vadd.f32 %v2426, %v2513
      %v2515 = vpop.f32.mrb[0].mxu0
      %2516 = vmatprep.mubr.bf16.mxu0 0
      %2517 = vmatmul.mubr.bf16.gmra.mrb[0].mxu0 %v2361
      %v2518 = vpop.f32.mrb[0].mxu0
      %v2519 = vadd.f32 %v2431, %v2518
      %v2520 = vpop.f32.mrb[0].mxu0
      %v2521 = vpop.f32.mrb[0].mxu0
      %v2522 = vadd.f32 %v2434, %v2521
      %v2523 = vpop.f32.mrb[0].mxu0
      %2524 = vmatprep.mubr.bf16.mxu0 0
      %2525 = vmatmul.mubr.bf16.gmra.mrb[0].mxu0 %v2364
      %v2526 = vpop.f32.mrb[0].mxu0
      %v2527 = vadd.f32 %v2439, %v2526
      %v2528 = vpop.f32.mrb[0].mxu0
      %v2529 = vpop.f32.mrb[0].mxu0
      %v2530 = vadd.f32 %v2442, %v2529
      %v2531 = vpop.f32.mrb[0].mxu0
      %2532 = vmatprep.mubr.bf16.mxu0 0
      %2533 = vmatmul.mubr.bf16.gmra.mrb[0].mxu0 %v2367
      %v2534 = vpop.f32.mrb[0].mxu0
      %v2535 = vadd.f32 %v2447, %v2534
      %v2536 = vpop.f32.mrb[0].mxu0
      %v2537 = vpop.f32.mrb[0].mxu0
      %v2538 = vadd.f32 %v2450, %v2537
      %v2539 = vpop.f32.mrb[0].mxu0
      %2540 = vmatprep.mubr.bf16.mxu0 0
      %2541 = vmatmul.mubr.bf16.gmra.mrb[0].mxu0 %v2370
      %v2542 = vpop.f32.mrb[0].mxu0
      %v2543 = vadd.f32 %v2455, %v2542
      %v2544 = vpop.f32.mrb[0].mxu0
      %v2545 = vpop.f32.mrb[0].mxu0
      %v2546 = vpop.f32.mrb[0].mxu0
      %2547 = vdwg.mxu0
      %s2548 = scalar_lea.vmem %s2, 1
      %v2549 = vld [vmem:[%s2548] sm:$0x1]
      %v2551 = vlaneseq
      %v2552 = vshrl.u32 %v2551, 7
      %v2553 = vsub.s32 0, %v2552
      %v2554 = vrot.slane %v2549, %v2553
      %v2556 = vadd.f32 %v2495, %v2554
      %v2557 = vadd.f32 %v2498, %v2554
      %v2558 = vadd.f32 %v2503, %v2554
      %v2559 = vadd.f32 %v2506, %v2554
      %v2560 = vadd.f32 %v2511, %v2554
      %v2561 = vadd.f32 %v2514, %v2554
      %v2562 = vadd.f32 %v2519, %v2554
      %v2563 = vadd.f32 %v2522, %v2554
      %v2564 = vadd.f32 %v2527, %v2554
      %v2565 = vadd.f32 %v2530, %v2554
      %v2566 = vadd.f32 %v2535, %v2554
      %v2567 = vadd.f32 %v2538, %v2554
      %v2568 = vadd.f32 %v2543, %v2554
      %v2569 = vmax.f32 %v2556, 0.0
      %v2570 = vmax.f32 %v2557, 0.0
      %v2571 = vmax.f32 %v2558, 0.0
      %v2572 = vmax.f32 %v2559, 0.0
      %v2573 = vmax.f32 %v2560, 0.0
      %v2574 = vmax.f32 %v2561, 0.0
      %v2575 = vmax.f32 %v2562, 0.0
      %v2576 = vmax.f32 %v2563, 0.0
      %v2577 = vmax.f32 %v2564, 0.0
      %v2578 = vmax.f32 %v2565, 0.0
      %v2579 = vmax.f32 %v2566, 0.0
      %v2580 = vmax.f32 %v2567, 0.0
      %v2581 = vmax.f32 %v2568, 0.0
      %s2582 = scalar_lea.vmem %s3, 104
      %v2583 = vld [vmem:[%s2582] sm:$0xff]
      %v2584 = vld [vmem:[%s2582 + $0x8] sm:$0xff]
      %v2585 = vld [vmem:[%s2582 + $0x10] sm:$0xff]
      %v2586 = vld [vmem:[%s2582 + $0x18] sm:$0xff]
      %v2587 = vld [vmem:[%s2582 + $0x20] sm:$0xff]
      %v2588 = vld [vmem:[%s2582 + $0x28] sm:$0xff]
      %v2589 = vld [vmem:[%s2582 + $0x30] sm:$0xff]
      %v2590 = vld [vmem:[%s2582 + $0x38] sm:$0xff]
      %v2591 = vld [vmem:[%s2582 + $0x40] sm:$0xff]
      %v2592 = vld [vmem:[%s2582 + $0x48] sm:$0xff]
      %v2593 = vld [vmem:[%s2582 + $0x50] sm:$0xff]
      %v2594 = vld [vmem:[%s2582 + $0x58] sm:$0xff]
      %v2595 = vld [vmem:[%s2582 + $0x60] sm:$0xf]
      %v2596 = vmul.f32 %v2569, %v2583
      %v2597 = vmul.f32 %v2570, %v2584
      %v2598 = vmul.f32 %v2571, %v2585
      %v2599 = vmul.f32 %v2572, %v2586
      %v2600 = vmul.f32 %v2573, %v2587
      %v2601 = vmul.f32 %v2574, %v2588
      %v2602 = vmul.f32 %v2575, %v2589
      %v2603 = vmul.f32 %v2576, %v2590
      %v2604 = vmul.f32 %v2577, %v2591
      %v2605 = vmul.f32 %v2578, %v2592
      %v2606 = vmul.f32 %v2579, %v2593
      %v2607 = vmul.f32 %v2580, %v2594
      %v2608 = vmul.f32 %v2581, %v2595
      %2609 = vst [vmem:[#allocation2 + $0x10] sm:$0xff] %v2596
      %2610 = vst [vmem:[#allocation2 + $0x18] sm:$0xff] %v2597
      %2611 = vst [vmem:[#allocation2 + $0x20] sm:$0xff] %v2598
      %2612 = vst [vmem:[#allocation2 + $0x28] sm:$0xff] %v2599
      %2613 = vst [vmem:[#allocation2 + $0x30] sm:$0xff] %v2600
      %2614 = vst [vmem:[#allocation2 + $0x38] sm:$0xff] %v2601
      %2615 = vst [vmem:[#allocation2 + $0x40] sm:$0xff] %v2602
      %2616 = vst [vmem:[#allocation2 + $0x48] sm:$0xff] %v2603
      %2617 = vst [vmem:[#allocation2 + $0x50] sm:$0xff] %v2604
      %2618 = vst [vmem:[#allocation2 + $0x58] sm:$0xff] %v2605
      %2619 = vst [vmem:[#allocation2 + $0x60] sm:$0xff] %v2606
      %2620 = vst [vmem:[#allocation2 + $0x68] sm:$0xff] %v2607
      %2621 = vst [vmem:[#allocation2 + $0x70] sm:$0xf] %v2608
      %v2622 = vld [vmem:[#allocation2 + $0x5] sm:$0xff]
      %v2623 = vld [vmem:[#allocation2 + $0xd] sm:$0xff]
      %v2624 = vld [vmem:[#allocation2 + $0x15] sm:$0xff]
      %v2625 = vld [vmem:[#allocation2 + $0x1d] sm:$0xff]
      %v2626 = vld [vmem:[#allocation2 + $0x25] sm:$0xff]
      %v2627 = vld [vmem:[#allocation2 + $0x2d] sm:$0xff]
      %v2628 = vld [vmem:[#allocation2 + $0x35] sm:$0xff]
      %v2629 = vld [vmem:[#allocation2 + $0x3d] sm:$0xff]
      %v2630 = vld [vmem:[#allocation2 + $0x45] sm:$0xff]
      %v2631 = vld [vmem:[#allocation2 + $0x4d] sm:$0xff]
      %v2632 = vld [vmem:[#allocation2 + $0x55] sm:$0xff]
      %v2633 = vld [vmem:[#allocation2 + $0x5d] sm:$0xff]
      %v2634 = vld [vmem:[#allocation2 + $0x65] sm:$0xf]
      %v2635 = vld [vmem:[#allocation2 + $0x6] sm:$0xff]
      %v2636 = vld [vmem:[#allocation2 + $0xe] sm:$0xff]
      %v2637 = vld [vmem:[#allocation2 + $0x16] sm:$0xff]
      %v2638 = vld [vmem:[#allocation2 + $0x1e] sm:$0xff]
      %v2639 = vld [vmem:[#allocation2 + $0x26] sm:$0xff]
      %v2640 = vld [vmem:[#allocation2 + $0x2e] sm:$0xff]
      %v2641 = vld [vmem:[#allocation2 + $0x36] sm:$0xff]
      %v2642 = vld [vmem:[#allocation2 + $0x3e] sm:$0xff]
      %v2643 = vld [vmem:[#allocation2 + $0x46] sm:$0xff]
      %v2644 = vld [vmem:[#allocation2 + $0x4e] sm:$0xff]
      %v2645 = vld [vmem:[#allocation2 + $0x56] sm:$0xff]
      %v2646 = vld [vmem:[#allocation2 + $0x5e] sm:$0xff]
      %v2647 = vld [vmem:[#allocation2 + $0x66] sm:$0xf]
      %v2648 = vld [vmem:[#allocation2 + $0x7] sm:$0xff]
      %v2649 = vld [vmem:[#allocation2 + $0xf] sm:$0xff]
      %v2650 = vld [vmem:[#allocation2 + $0x17] sm:$0xff]
      %v2651 = vld [vmem:[#allocation2 + $0x1f] sm:$0xff]
      %v2652 = vld [vmem:[#allocation2 + $0x27] sm:$0xff]
      %v2653 = vld [vmem:[#allocation2 + $0x2f] sm:$0xff]
      %v2654 = vld [vmem:[#allocation2 + $0x37] sm:$0xff]
      %v2655 = vld [vmem:[#allocation2 + $0x3f] sm:$0xff]
      %v2656 = vld [vmem:[#allocation2 + $0x47] sm:$0xff]
      %v2657 = vld [vmem:[#allocation2 + $0x4f] sm:$0xff]
      %v2658 = vld [vmem:[#allocation2 + $0x57] sm:$0xff]
      %v2659 = vld [vmem:[#allocation2 + $0x5f] sm:$0xff]
      %v2660 = vld [vmem:[#allocation2 + $0x67] sm:$0xf]
      %v2661 = vld [vmem:[#allocation2 + $0x67] sm:$0xff]
      %v2662 = vld [vmem:[#allocation2 + $0x6f] sm:$0xf]
      %v2663 = vld [vmem:[#allocation2 + $0x10] sm:$0xff]
      %v2664 = vld [vmem:[#allocation2 + $0x18] sm:$0xff]
      %v2665 = vld [vmem:[#allocation2 + $0x20] sm:$0xff]
      %v2666 = vld [vmem:[#allocation2 + $0x28] sm:$0xff]
      %v2667 = vld [vmem:[#allocation2 + $0x30] sm:$0xff]
      %v2668 = vld [vmem:[#allocation2 + $0x38] sm:$0xff]
      %v2669 = vld [vmem:[#allocation2 + $0x40] sm:$0xff]
      %v2670 = vld [vmem:[#allocation2 + $0x48] sm:$0xff]
      %v2671 = vld [vmem:[#allocation2 + $0x50] sm:$0xff]
      %v2672 = vld [vmem:[#allocation2 + $0x58] sm:$0xff]
      %v2673 = vld [vmem:[#allocation2 + $0x60] sm:$0xff]
      %v2674 = vld [vmem:[#allocation2 + $0x68] sm:$0xff]
      %v2675 = vld [vmem:[#allocation2 + $0x70] sm:$0xf]
      %v2676 = vld [vmem:[#allocation2 + $0x11] sm:$0xff]
      %v2677 = vld [vmem:[#allocation2 + $0x19] sm:$0xff]
      %v2678 = vld [vmem:[#allocation2 + $0x21] sm:$0xff]
      %v2679 = vld [vmem:[#allocation2 + $0x29] sm:$0xff]
      %v2680 = vld [vmem:[#allocation2 + $0x31] sm:$0xff]
      %v2681 = vld [vmem:[#allocation2 + $0x39] sm:$0xff]
      %v2682 = vld [vmem:[#allocation2 + $0x41] sm:$0xff]
      %v2683 = vld [vmem:[#allocation2 + $0x49] sm:$0xff]
      %v2684 = vld [vmem:[#allocation2 + $0x51] sm:$0xff]
      %v2685 = vld [vmem:[#allocation2 + $0x59] sm:$0xff]
      %v2686 = vld [vmem:[#allocation2 + $0x61] sm:$0xff]
      %v2687 = vld [vmem:[#allocation2 + $0x69] sm:$0xff]
      %v2688 = vld [vmem:[#allocation2 + $0x71] sm:$0xf]
      %v2689 = vld [vmem:[#allocation2 + $0x71] sm:$0xff]
      %v2690 = vld [vmem:[#allocation2 + $0x79] sm:$0xf]
      %v2691 = vld [vmem:[#allocation2 + $0x1a] sm:$0xff]
      %v2692 = vld [vmem:[#allocation2 + $0x22] sm:$0xff]
      %v2693 = vld [vmem:[#allocation2 + $0x2a] sm:$0xff]
      %v2694 = vld [vmem:[#allocation2 + $0x32] sm:$0xff]
      %v2695 = vld [vmem:[#allocation2 + $0x3a] sm:$0xff]
      %v2696 = vld [vmem:[#allocation2 + $0x42] sm:$0xff]
      %v2697 = vld [vmem:[#allocation2 + $0x4a] sm:$0xff]
      %v2698 = vld [vmem:[#allocation2 + $0x52] sm:$0xff]
      %v2699 = vld [vmem:[#allocation2 + $0x5a] sm:$0xff]
      %v2700 = vld [vmem:[#allocation2 + $0x62] sm:$0xff]
      %v2701 = vld [vmem:[#allocation2 + $0x6a] sm:$0xff]
      %v2702 = vld [vmem:[#allocation2 + $0x72] sm:$0xff]
      %v2703 = vld [vmem:[#allocation2 + $0x7a] sm:$0xf]
      %v2704 = vld [vmem:[#allocation2 + $0x1b] sm:$0xff]
      %v2705 = vld [vmem:[#allocation2 + $0x23] sm:$0xff]
      %v2706 = vld [vmem:[#allocation2 + $0x2b] sm:$0xff]
      %v2707 = vld [vmem:[#allocation2 + $0x33] sm:$0xff]
      %v2708 = vld [vmem:[#allocation2 + $0x3b] sm:$0xff]
      %v2709 = vld [vmem:[#allocation2 + $0x43] sm:$0xff]
      %v2710 = vld [vmem:[#allocation2 + $0x4b] sm:$0xff]
      %v2711 = vld [vmem:[#allocation2 + $0x53] sm:$0xff]
      %v2712 = vld [vmem:[#allocation2 + $0x5b] sm:$0xff]
      %v2713 = vld [vmem:[#allocation2 + $0x63] sm:$0xff]
      %v2714 = vld [vmem:[#allocation2 + $0x6b] sm:$0xff]
      %v2715 = vld [vmem:[#allocation2 + $0x73] sm:$0xff]
      %v2716 = vld [vmem:[#allocation2 + $0x7b] sm:$0xf]
      %2730 = vrot.lane.b32.xlu0 %v2635, 32
      %v2731 = vpop.permute.xlu0 %2730
      %2732 = vrot.lane.b32.xlu0 %v2636, 32
      %v2733 = vpop.permute.xlu0 %2732
      %2734 = vrot.lane.b32.xlu0 %v2637, 32
      %v2735 = vpop.permute.xlu0 %2734
      %2736 = vrot.lane.b32.xlu0 %v2638, 32
      %v2737 = vpop.permute.xlu0 %2736
      %2738 = vrot.lane.b32.xlu0 %v2639, 32
      %v2739 = vpop.permute.xlu0 %2738
      %2740 = vrot.lane.b32.xlu0 %v2640, 32
      %v2741 = vpop.permute.xlu0 %2740
      %2742 = vrot.lane.b32.xlu0 %v2641, 32
      %v2743 = vpop.permute.xlu0 %2742
      %2744 = vrot.lane.b32.xlu0 %v2642, 32
      %v2745 = vpop.permute.xlu0 %2744
      %2746 = vrot.lane.b32.xlu0 %v2643, 32
      %v2747 = vpop.permute.xlu0 %2746
      %2748 = vrot.lane.b32.xlu0 %v2644, 32
      %v2749 = vpop.permute.xlu0 %2748
      %2750 = vrot.lane.b32.xlu0 %v2645, 32
      %v2751 = vpop.permute.xlu0 %2750
      %2752 = vrot.lane.b32.xlu0 %v2646, 32
      %v2753 = vpop.permute.xlu0 %2752
      %2754 = vrot.lane.b32.xlu0 %v2647, 32
      %v2755 = vpop.permute.xlu0 %2754
      %2782 = vrot.lane.b32.xlu0 %v2648, 64
      %v2783 = vpop.permute.xlu0 %2782
      %2784 = vrot.lane.b32.xlu0 %v2649, 64
      %v2785 = vpop.permute.xlu0 %2784
      %2786 = vrot.lane.b32.xlu0 %v2650, 64
      %v2787 = vpop.permute.xlu0 %2786
      %2788 = vrot.lane.b32.xlu0 %v2651, 64
      %v2789 = vpop.permute.xlu0 %2788
      %2790 = vrot.lane.b32.xlu0 %v2652, 64
      %v2791 = vpop.permute.xlu0 %2790
      %2792 = vrot.lane.b32.xlu0 %v2653, 64
      %v2793 = vpop.permute.xlu0 %2792
      %2794 = vrot.lane.b32.xlu0 %v2654, 64
      %v2795 = vpop.permute.xlu0 %2794
      %2796 = vrot.lane.b32.xlu0 %v2655, 64
      %v2797 = vpop.permute.xlu0 %2796
      %2798 = vrot.lane.b32.xlu0 %v2656, 64
      %v2799 = vpop.permute.xlu0 %2798
      %2800 = vrot.lane.b32.xlu0 %v2657, 64
      %v2801 = vpop.permute.xlu0 %2800
      %2802 = vrot.lane.b32.xlu0 %v2658, 64
      %v2803 = vpop.permute.xlu0 %2802
      %2804 = vrot.lane.b32.xlu0 %v2659, 64
      %v2805 = vpop.permute.xlu0 %2804
      %2806 = vrot.lane.b32.xlu0 %v2660, 64
      %v2807 = vpop.permute.xlu0 %2806
      %2823 = vrot.lane.b32.xlu0 %v2649, 96
      %v2824 = vpop.permute.xlu0 %2823
      %2825 = vrot.lane.b32.xlu0 %v2650, 96
      %v2826 = vpop.permute.xlu0 %2825
      %2827 = vrot.lane.b32.xlu0 %v2651, 96
      %v2828 = vpop.permute.xlu0 %2827
      %2829 = vrot.lane.b32.xlu0 %v2652, 96
      %v2830 = vpop.permute.xlu0 %2829
      %2831 = vrot.lane.b32.xlu0 %v2653, 96
      %v2832 = vpop.permute.xlu0 %2831
      %2833 = vrot.lane.b32.xlu0 %v2654, 96
      %v2834 = vpop.permute.xlu0 %2833
      %2835 = vrot.lane.b32.xlu0 %v2655, 96
      %v2836 = vpop.permute.xlu0 %2835
      %2837 = vrot.lane.b32.xlu0 %v2656, 96
      %v2838 = vpop.permute.xlu0 %2837
      %2839 = vrot.lane.b32.xlu0 %v2657, 96
      %v2840 = vpop.permute.xlu0 %2839
      %2841 = vrot.lane.b32.xlu0 %v2658, 96
      %v2842 = vpop.permute.xlu0 %2841
      %2843 = vrot.lane.b32.xlu0 %v2659, 96
      %v2844 = vpop.permute.xlu0 %2843
      %2845 = vrot.lane.b32.xlu0 %v2661, 96
      %v2846 = vpop.permute.xlu0 %2845
      %2847 = vrot.lane.b32.xlu0 %v2662, 96
      %v2848 = vpop.permute.xlu0 %2847
      %2875 = vrot.lane.b32.xlu0 %v2676, 32
      %v2876 = vpop.permute.xlu0 %2875
      %2877 = vrot.lane.b32.xlu0 %v2677, 32
      %v2878 = vpop.permute.xlu0 %2877
      %2879 = vrot.lane.b32.xlu0 %v2678, 32
      %v2880 = vpop.permute.xlu0 %2879
      %2881 = vrot.lane.b32.xlu0 %v2679, 32
      %v2882 = vpop.permute.xlu0 %2881
      %2883 = vrot.lane.b32.xlu0 %v2680, 32
      %v2884 = vpop.permute.xlu0 %2883
      %2885 = vrot.lane.b32.xlu0 %v2681, 32
      %v2886 = vpop.permute.xlu0 %2885
      %2887 = vrot.lane.b32.xlu0 %v2682, 32
      %v2888 = vpop.permute.xlu0 %2887
      %2889 = vrot.lane.b32.xlu0 %v2683, 32
      %v2890 = vpop.permute.xlu0 %2889
      %2891 = vrot.lane.b32.xlu0 %v2684, 32
      %v2892 = vpop.permute.xlu0 %2891
      %2893 = vrot.lane.b32.xlu0 %v2685, 32
      %v2894 = vpop.permute.xlu0 %2893
      %2895 = vrot.lane.b32.xlu0 %v2686, 32
      %v2896 = vpop.permute.xlu0 %2895
      %2897 = vrot.lane.b32.xlu0 %v2687, 32
      %v2898 = vpop.permute.xlu0 %2897
      %2899 = vrot.lane.b32.xlu0 %v2688, 32
      %v2900 = vpop.permute.xlu0 %2899
      %2916 = vrot.lane.b32.xlu0 %v2677, 64
      %v2917 = vpop.permute.xlu0 %2916
      %2918 = vrot.lane.b32.xlu0 %v2678, 64
      %v2919 = vpop.permute.xlu0 %2918
      %2920 = vrot.lane.b32.xlu0 %v2679, 64
      %v2921 = vpop.permute.xlu0 %2920
      %2922 = vrot.lane.b32.xlu0 %v2680, 64
      %v2923 = vpop.permute.xlu0 %2922
      %2924 = vrot.lane.b32.xlu0 %v2681, 64
      %v2925 = vpop.permute.xlu0 %2924
      %2926 = vrot.lane.b32.xlu0 %v2682, 64
      %v2927 = vpop.permute.xlu0 %2926
      %2928 = vrot.lane.b32.xlu0 %v2683, 64
      %v2929 = vpop.permute.xlu0 %2928
      %2930 = vrot.lane.b32.xlu0 %v2684, 64
      %v2931 = vpop.permute.xlu0 %2930
      %2932 = vrot.lane.b32.xlu0 %v2685, 64
      %v2933 = vpop.permute.xlu0 %2932
      %2934 = vrot.lane.b32.xlu0 %v2686, 64
      %v2935 = vpop.permute.xlu0 %2934
      %2936 = vrot.lane.b32.xlu0 %v2687, 64
      %v2937 = vpop.permute.xlu0 %2936
      %2938 = vrot.lane.b32.xlu0 %v2689, 64
      %v2939 = vpop.permute.xlu0 %2938
      %2940 = vrot.lane.b32.xlu0 %v2690, 64
      %v2941 = vpop.permute.xlu0 %2940
      %2968 = vrot.lane.b32.xlu0 %v2691, 96
      %v2969 = vpop.permute.xlu0 %2968
      %2970 = vrot.lane.b32.xlu0 %v2692, 96
      %v2971 = vpop.permute.xlu0 %2970
      %2972 = vrot.lane.b32.xlu0 %v2693, 96
      %v2973 = vpop.permute.xlu0 %2972
      %2974 = vrot.lane.b32.xlu0 %v2694, 96
      %v2975 = vpop.permute.xlu0 %2974
      %2976 = vrot.lane.b32.xlu0 %v2695, 96
      %v2977 = vpop.permute.xlu0 %2976
      %2978 = vrot.lane.b32.xlu0 %v2696, 96
      %v2979 = vpop.permute.xlu0 %2978
      %2980 = vrot.lane.b32.xlu0 %v2697, 96
      %v2981 = vpop.permute.xlu0 %2980
      %2982 = vrot.lane.b32.xlu0 %v2698, 96
      %v2983 = vpop.permute.xlu0 %2982
      %2984 = vrot.lane.b32.xlu0 %v2699, 96
      %v2985 = vpop.permute.xlu0 %2984
      %2986 = vrot.lane.b32.xlu0 %v2700, 96
      %v2987 = vpop.permute.xlu0 %2986
      %2988 = vrot.lane.b32.xlu0 %v2701, 96
      %v2989 = vpop.permute.xlu0 %2988
      %2990 = vrot.lane.b32.xlu0 %v2702, 96
      %v2991 = vpop.permute.xlu0 %2990
      %2992 = vrot.lane.b32.xlu0 %v2703, 96
      %v2993 = vpop.permute.xlu0 %2992
      %v3007 = vsel %vm615, %v2622, %v2731
      %v3008 = vsel %vm615, %v2623, %v2733
      %v3009 = vsel %vm615, %v2624, %v2735
      %v3010 = vsel %vm615, %v2625, %v2737
      %v3011 = vsel %vm615, %v2626, %v2739
      %v3012 = vsel %vm615, %v2627, %v2741
      %v3013 = vsel %vm615, %v2628, %v2743
      %v3014 = vsel %vm615, %v2629, %v2745
      %v3015 = vsel %vm615, %v2630, %v2747
      %v3016 = vsel %vm615, %v2631, %v2749
      %v3017 = vsel %vm615, %v2632, %v2751
      %v3018 = vsel %vm615, %v2633, %v2753
      %v3019 = vsel %vm615, %v2634, %v2755
      %v3020 = vsel %vm629, %v3007, %v2783
      %v3021 = vsel %vm629, %v3008, %v2785
      %v3022 = vsel %vm629, %v3009, %v2787
      %v3023 = vsel %vm629, %v3010, %v2789
      %v3024 = vsel %vm629, %v3011, %v2791
      %v3025 = vsel %vm629, %v3012, %v2793
      %v3026 = vsel %vm629, %v3013, %v2795
      %v3027 = vsel %vm629, %v3014, %v2797
      %v3028 = vsel %vm629, %v3015, %v2799
      %v3029 = vsel %vm629, %v3016, %v2801
      %v3030 = vsel %vm629, %v3017, %v2803
      %v3031 = vsel %vm629, %v3018, %v2805
      %v3032 = vsel %vm629, %v3019, %v2807
      %v3033 = vsel %vm643, %v3020, %v2824
      %v3034 = vsel %vm643, %v3021, %v2826
      %v3035 = vsel %vm643, %v3022, %v2828
      %v3036 = vsel %vm643, %v3023, %v2830
      %v3037 = vsel %vm643, %v3024, %v2832
      %v3038 = vsel %vm643, %v3025, %v2834
      %v3039 = vsel %vm643, %v3026, %v2836
      %v3040 = vsel %vm643, %v3027, %v2838
      %v3041 = vsel %vm643, %v3028, %v2840
      %v3042 = vsel %vm643, %v3029, %v2842
      %v3043 = vsel %vm643, %v3030, %v2844
      %v3044 = vsel %vm643, %v3031, %v2846
      %v3045 = vsel %vm643, %v3032, %v2848
      %v3046 = vsel %vm615, %v2663, %v2876
      %v3047 = vsel %vm615, %v2664, %v2878
      %v3048 = vsel %vm615, %v2665, %v2880
      %v3049 = vsel %vm615, %v2666, %v2882
      %v3050 = vsel %vm615, %v2667, %v2884
      %v3051 = vsel %vm615, %v2668, %v2886
      %v3052 = vsel %vm615, %v2669, %v2888
      %v3053 = vsel %vm615, %v2670, %v2890
      %v3054 = vsel %vm615, %v2671, %v2892
      %v3055 = vsel %vm615, %v2672, %v2894
      %v3056 = vsel %vm615, %v2673, %v2896
      %v3057 = vsel %vm615, %v2674, %v2898
      %v3058 = vsel %vm615, %v2675, %v2900
      %v3059 = vsel %vm629, %v3046, %v2917
      %v3060 = vsel %vm629, %v3047, %v2919
      %v3061 = vsel %vm629, %v3048, %v2921
      %v3062 = vsel %vm629, %v3049, %v2923
      %v3063 = vsel %vm629, %v3050, %v2925
      %v3064 = vsel %vm629, %v3051, %v2927
      %v3065 = vsel %vm629, %v3052, %v2929
      %v3066 = vsel %vm629, %v3053, %v2931
      %v3067 = vsel %vm629, %v3054, %v2933
      %v3068 = vsel %vm629, %v3055, %v2935
      %v3069 = vsel %vm629, %v3056, %v2937
      %v3070 = vsel %vm629, %v3057, %v2939
      %v3071 = vsel %vm629, %v3058, %v2941
      %v3072 = vsel %vm643, %v3059, %v2969
      %v3073 = vsel %vm643, %v3060, %v2971
      %v3074 = vsel %vm643, %v3061, %v2973
      %v3075 = vsel %vm643, %v3062, %v2975
      %v3076 = vsel %vm643, %v3063, %v2977
      %v3077 = vsel %vm643, %v3064, %v2979
      %v3078 = vsel %vm643, %v3065, %v2981
      %v3079 = vsel %vm643, %v3066, %v2983
      %v3080 = vsel %vm643, %v3067, %v2985
      %v3081 = vsel %vm643, %v3068, %v2987
      %v3082 = vsel %vm643, %v3069, %v2989
      %v3083 = vsel %vm643, %v3070, %v2991
      %v3084 = vsel %vm643, %v3071, %v2993
      %v3085 = vpack.c.bf16 %v3034, %v3033
      %v3086 = vpack.c.bf16 %v3073, %v3072
      %v3087 = vpack.c.bf16 %v2705, %v2704
      %v3088 = vpack.c.bf16 %v3036, %v3035
      %v3089 = vpack.c.bf16 %v3075, %v3074
      %v3090 = vpack.c.bf16 %v2707, %v2706
      %v3091 = vpack.c.bf16 %v3038, %v3037
      %v3092 = vpack.c.bf16 %v3077, %v3076
      %v3093 = vpack.c.bf16 %v2709, %v2708
      %v3094 = vpack.c.bf16 %v3040, %v3039
      %v3095 = vpack.c.bf16 %v3079, %v3078
      %v3096 = vpack.c.bf16 %v2711, %v2710
      %v3097 = vpack.c.bf16 %v3042, %v3041
      %v3098 = vpack.c.bf16 %v3081, %v3080
      %v3099 = vpack.c.bf16 %v2713, %v2712
      %v3100 = vpack.c.bf16 %v3044, %v3043
      %v3101 = vpack.c.bf16 %v3083, %v3082
      %v3102 = vpack.c.bf16 %v2715, %v2714
      %v3103 = vpack.c.bf16 %v3045, %v3045
      %v3104 = vpack.c.bf16 %v3084, %v3084
      %v3105 = vpack.c.bf16 %v2716, %v2716
      %v3106 = vunpack.c.l.bf16 %v3085
      %v3107 = vunpack.c.l.bf16 %v3086
      %v3108 = vunpack.c.l.bf16 %v3087
      %v3109 = vunpack.c.h.bf16 %v3085
      %v3110 = vunpack.c.h.bf16 %v3086
      %v3111 = vunpack.c.h.bf16 %v3087
      %v3112 = vunpack.c.l.bf16 %v3088
      %v3113 = vunpack.c.l.bf16 %v3089
      %v3114 = vunpack.c.l.bf16 %v3090
      %v3115 = vunpack.c.h.bf16 %v3088
      %v3116 = vunpack.c.h.bf16 %v3089
      %v3117 = vunpack.c.h.bf16 %v3090
      %v3118 = vunpack.c.l.bf16 %v3091
      %v3119 = vunpack.c.l.bf16 %v3092
      %v3120 = vunpack.c.l.bf16 %v3093
      %v3121 = vunpack.c.h.bf16 %v3091
      %v3122 = vunpack.c.h.bf16 %v3092
      %v3123 = vunpack.c.h.bf16 %v3093
      %v3124 = vunpack.c.l.bf16 %v3094
      %v3125 = vunpack.c.l.bf16 %v3095
      %v3126 = vunpack.c.l.bf16 %v3096
      %v3127 = vunpack.c.h.bf16 %v3094
      %v3128 = vunpack.c.h.bf16 %v3095
      %v3129 = vunpack.c.h.bf16 %v3096
      %v3130 = vunpack.c.l.bf16 %v3097
      %v3131 = vunpack.c.l.bf16 %v3098
      %v3132 = vunpack.c.l.bf16 %v3099
      %v3133 = vunpack.c.h.bf16 %v3097
      %v3134 = vunpack.c.h.bf16 %v3098
      %v3135 = vunpack.c.h.bf16 %v3099
      %v3136 = vunpack.c.l.bf16 %v3100
      %v3137 = vunpack.c.l.bf16 %v3101
      %v3138 = vunpack.c.l.bf16 %v3102
      %v3139 = vunpack.c.h.bf16 %v3100
      %v3140 = vunpack.c.h.bf16 %v3101
      %v3141 = vunpack.c.h.bf16 %v3102
      %v3142 = vunpack.c.l.bf16 %v3103
      %v3143 = vunpack.c.l.bf16 %v3104
      %v3144 = vunpack.c.l.bf16 %v3105
      %v3145 = vsub.f32 %v3033, %v3106
      %v3146 = vsub.f32 %v3072, %v3107
      %v3147 = vsub.f32 %v2704, %v3108
      %v3148 = vsub.f32 %v3034, %v3109
      %v3149 = vsub.f32 %v3073, %v3110
      %v3150 = vsub.f32 %v2705, %v3111
      %v3151 = vsub.f32 %v3035, %v3112
      %v3152 = vsub.f32 %v3074, %v3113
      %v3153 = vsub.f32 %v2706, %v3114
      %v3154 = vsub.f32 %v3036, %v3115
      %v3155 = vsub.f32 %v3075, %v3116
      %v3156 = vsub.f32 %v2707, %v3117
      %v3157 = vsub.f32 %v3037, %v3118
      %v3158 = vsub.f32 %v3076, %v3119
      %v3159 = vsub.f32 %v2708, %v3120
      %v3160 = vsub.f32 %v3038, %v3121
      %v3161 = vsub.f32 %v3077, %v3122
      %v3162 = vsub.f32 %v2709, %v3123
      %v3163 = vsub.f32 %v3039, %v3124
      %v3164 = vsub.f32 %v3078, %v3125
      %v3165 = vsub.f32 %v2710, %v3126
      %v3166 = vsub.f32 %v3040, %v3127
      %v3167 = vsub.f32 %v3079, %v3128
      %v3168 = vsub.f32 %v2711, %v3129
      %v3169 = vsub.f32 %v3041, %v3130
      %v3170 = vsub.f32 %v3080, %v3131
      %v3171 = vsub.f32 %v2712, %v3132
      %v3172 = vsub.f32 %v3042, %v3133
      %v3173 = vsub.f32 %v3081, %v3134
      %v3174 = vsub.f32 %v2713, %v3135
      %v3175 = vsub.f32 %v3043, %v3136
      %v3176 = vsub.f32 %v3082, %v3137
      %v3177 = vsub.f32 %v2714, %v3138
      %v3178 = vsub.f32 %v3044, %v3139
      %v3179 = vsub.f32 %v3083, %v3140
      %v3180 = vsub.f32 %v2715, %v3141
      %v3181 = vsub.f32 %v3045, %v3142
      %v3182 = vsub.f32 %v3084, %v3143
      %v3183 = vsub.f32 %v2716, %v3144
      %v3184 = vpack.c.bf16 %v3148, %v3145
      %v3185 = vpack.c.bf16 %v3149, %v3146
      %v3186 = vpack.c.bf16 %v3150, %v3147
      %v3187 = vpack.c.bf16 %v3154, %v3151
      %v3188 = vpack.c.bf16 %v3155, %v3152
      %v3189 = vpack.c.bf16 %v3156, %v3153
      %v3190 = vpack.c.bf16 %v3160, %v3157
      %v3191 = vpack.c.bf16 %v3161, %v3158
      %v3192 = vpack.c.bf16 %v3162, %v3159
      %v3193 = vpack.c.bf16 %v3166, %v3163
      %v3194 = vpack.c.bf16 %v3167, %v3164
      %v3195 = vpack.c.bf16 %v3168, %v3165
      %v3196 = vpack.c.bf16 %v3172, %v3169
      %v3197 = vpack.c.bf16 %v3173, %v3170
      %v3198 = vpack.c.bf16 %v3174, %v3171
      %v3199 = vpack.c.bf16 %v3178, %v3175
      %v3200 = vpack.c.bf16 %v3179, %v3176
      %v3201 = vpack.c.bf16 %v3180, %v3177
      %v3202 = vpack.c.bf16 %v3181, %v3181
      %v3203 = vpack.c.bf16 %v3182, %v3182
      %v3204 = vpack.c.bf16 %v3183, %v3183
      %s3205 = scalar_lea.vmem %s1, 288
      %v3206 = vld [vmem:[%s3205] sm:$0xf]
      %v3207 = vld [vmem:[%s3205 + $0x4] sm:$0xf]
      %v3208 = vld [vmem:[%s3205 + $0x8] sm:$0xf]
      %v3209 = vld [vmem:[%s3205 + $0xc] sm:$0xf]
      %v3210 = vld [vmem:[%s3205 + $0x10] sm:$0xf]
      %v3211 = vld [vmem:[%s3205 + $0x14] sm:$0xf]
      %v3212 = vld [vmem:[%s3205 + $0x18] sm:$0xf]
      %v3213 = vld [vmem:[%s3205 + $0x1c] sm:$0xf]
      %v3214 = vld [vmem:[%s3205 + $0x20] sm:$0xf]
      %v3215 = vld [vmem:[%s3205 + $0x24] sm:$0xf]
      %v3216 = vld [vmem:[%s3205 + $0x28] sm:$0xf]
      %v3217 = vld [vmem:[%s3205 + $0x2c] sm:$0xf]
      %v3218 = vld [vmem:[%s3205 + $0x30] sm:$0xf]
      %v3219 = vld [vmem:[%s3205 + $0x34] sm:$0xf]
      %v3220 = vld [vmem:[%s3205 + $0x38] sm:$0xf]
      %v3221 = vld [vmem:[%s3205 + $0x3c] sm:$0xf]
      %v3222 = vld [vmem:[%s3205 + $0x40] sm:$0xf]
      %v3223 = vld [vmem:[%s3205 + $0x44] sm:$0xf]
      %v3224 = vld [vmem:[%s3205 + $0x48] sm:$0xf]
      %v3225 = vld [vmem:[%s3205 + $0x4c] sm:$0xf]
      %v3226 = vld [vmem:[%s3205 + $0x50] sm:$0xf]
      %v3227 = vld [vmem:[%s3205 + $0x54] sm:$0xf]
      %v3228 = vld [vmem:[%s3205 + $0x58] sm:$0xf]
      %v3229 = vld [vmem:[%s3205 + $0x5c] sm:$0xf]
      %v3230 = vld [vmem:[%s3205 + $0x60] sm:$0xf]
      %v3231 = vld [vmem:[%s3205 + $0x64] sm:$0xf]
      %v3232 = vld [vmem:[%s3205 + $0x68] sm:$0xf]
      %v3233 = vld [vmem:[%s3205 + $0x6c] sm:$0xf]
      %v3234 = vld [vmem:[%s3205 + $0x70] sm:$0xf]
      %v3235 = vld [vmem:[%s3205 + $0x74] sm:$0xf]
      %v3236 = vld [vmem:[%s3205 + $0x78] sm:$0xf]
      %v3237 = vld [vmem:[%s3205 + $0x7c] sm:$0xf]
      %v3238 = vld [vmem:[%s3205 + $0x80] sm:$0xf]
      %v3239 = vld [vmem:[%s3205 + $0x84] sm:$0xf]
      %v3240 = vld [vmem:[%s3205 + $0x88] sm:$0xf]
      %v3241 = vld [vmem:[%s3205 + $0x8c] sm:$0xf]
      %v3278 = vunpack.c.l.b16 %v3206
      %v3279 = vunpack.c.l.b16 %v3207
      %v3280 = vunpack.c.l.b16 %v3208
      %v3281 = vunpack.c.l.b16 %v3209
      %v3282 = vunpack.c.l.b16 %v3210
      %v3283 = vunpack.c.l.b16 %v3211
      %v3284 = vunpack.c.l.b16 %v3212
      %v3285 = vunpack.c.l.b16 %v3213
      %v3286 = vunpack.c.l.b16 %v3214
      %v3287 = vunpack.c.l.b16 %v3215
      %v3288 = vunpack.c.l.b16 %v3216
      %v3289 = vunpack.c.l.b16 %v3217
      %v3290 = vunpack.c.l.b16 %v3218
      %v3291 = vunpack.c.l.b16 %v3219
      %v3292 = vunpack.c.l.b16 %v3220
      %v3293 = vunpack.c.l.b16 %v3221
      %v3294 = vunpack.c.l.b16 %v3222
      %v3295 = vunpack.c.l.b16 %v3223
      %v3296 = vunpack.c.l.b16 %v3224
      %v3297 = vunpack.c.l.b16 %v3225
      %v3298 = vunpack.c.l.b16 %v3226
      %v3299 = vunpack.c.l.b16 %v3227
      %v3300 = vunpack.c.l.b16 %v3228
      %v3301 = vunpack.c.l.b16 %v3229
      %v3302 = vunpack.c.l.b16 %v3230
      %v3303 = vunpack.c.l.b16 %v3231
      %v3304 = vunpack.c.l.b16 %v3232
      %v3305 = vunpack.c.l.b16 %v3233
      %v3306 = vunpack.c.l.b16 %v3234
      %v3307 = vunpack.c.l.b16 %v3235
      %v3308 = vunpack.c.l.b16 %v3236
      %v3309 = vunpack.c.l.b16 %v3237
      %v3310 = vunpack.c.l.b16 %v3238
      %v3311 = vunpack.c.l.b16 %v3239
      %v3312 = vunpack.c.l.b16 %v3240
      %v3313 = vunpack.c.l.b16 %v3241
      %v3314 = vpack.c.b16 %v3279, %v3278
      %v3315 = vpack.c.b16 %v3281, %v3280
      %v3316 = vpack.c.b16 %v3283, %v3282
      %v3317 = vpack.c.b16 %v3285, %v3284
      %v3318 = vpack.c.b16 %v3287, %v3286
      %v3319 = vpack.c.b16 %v3289, %v3288
      %v3320 = vpack.c.b16 %v3291, %v3290
      %v3321 = vpack.c.b16 %v3293, %v3292
      %v3322 = vpack.c.b16 %v3295, %v3294
      %v3323 = vpack.c.b16 %v3297, %v3296
      %v3324 = vpack.c.b16 %v3299, %v3298
      %v3325 = vpack.c.b16 %v3301, %v3300
      %v3326 = vpack.c.b16 %v3303, %v3302
      %v3327 = vpack.c.b16 %v3305, %v3304
      %v3328 = vpack.c.b16 %v3307, %v3306
      %v3329 = vpack.c.b16 %v3309, %v3308
      %v3330 = vpack.c.b16 %v3311, %v3310
      %v3331 = vpack.c.b16 %v3313, %v3312
      %v3351 = vsel %vm615, %v3186, 0
      %v3354 = vsel %vm615, %v3189, 0
      %v3357 = vsel %vm615, %v3192, 0
      %v3360 = vsel %vm615, %v3195, 0
      %v3363 = vsel %vm615, %v3198, 0
      %v3366 = vsel %vm615, %v3201, 0
      %v3369 = vsel %vm615, %v3204, 0
      %3371 = vmatprep.subr.bf16.mxu0 0
      %3372 = vmatpush1.bf16.msra.mxu0 %v3314
      %3373 = vmatprep.subr.bf16.mxu0 0
      %3374 = vmatpush1.bf16.msra.mxu0 %v3315
      %3375 = vmatprep.subr.bf16.mxu0 0
      %3376 = vmatpush1.bf16.msra.mxu0 %v3316
      %3377 = vmatprep.subr.bf16.mxu0 0
      %3378 = vmatpush1.bf16.msra.mxu0 %v3317
      %3379 = vmatprep.subr.bf16.mxu0 0
      %3380 = vmatpush1.bf16.msra.mxu0 %v3318
      %3381 = vmatprep.subr.bf16.mxu0 0
      %3382 = vmatpush1.bf16.msra.mxu0 %v3319
      %3383 = vmatprep.subr.bf16.mxu0 0
      %3384 = vmatpush1.bf16.msra.mxu0 %v3320
      %3385 = vmatprep.subr.bf16.mxu0 0
      %3386 = vmatpush1.bf16.msra.mxu0 %v3321
      %3387 = vmatprep.subr.bf16.mxu0 0
      %3388 = vmatpush1.bf16.msra.mxu0 %v3322
      %3389 = vmatprep.subr.bf16.mxu0 0
      %3390 = vmatpush1.bf16.msra.mxu0 %v3323
      %3391 = vmatprep.subr.bf16.mxu0 0
      %3392 = vmatpush1.bf16.msra.mxu0 %v3324
      %3393 = vmatprep.subr.bf16.mxu0 0
      %3394 = vmatpush1.bf16.msra.mxu0 %v3325
      %3395 = vmatprep.subr.bf16.mxu0 0
      %3396 = vmatpush1.bf16.msra.mxu0 %v3326
      %3397 = vmatprep.subr.bf16.mxu0 0
      %3398 = vmatpush1.bf16.msra.mxu0 %v3327
      %3399 = vmatprep.subr.bf16.mxu0 0
      %3400 = vmatpush1.bf16.msra.mxu0 %v3328
      %3401 = vmatprep.subr.bf16.mxu0 0
      %3402 = vmatpush1.bf16.msra.mxu0 %v3329
      %3403 = vmatprep.mubr.bf16.mxu0 %v3185
      %3404 = vmatmul.mubr.bf16.gmra.mrb[0].mxu0 %v3184
      %v3405 = vpop.f32.mrb[0].mxu0
      %v3406 = vadd.f32 0.0, %v3405
      %v3407 = vpop.f32.mrb[0].mxu0
      %v3408 = vpop.f32.mrb[0].mxu0
      %v3409 = vadd.f32 0.0, %v3408
      %v3410 = vpop.f32.mrb[0].mxu0
      %3411 = vmatprep.mubr.bf16.mxu0 %v3188
      %3412 = vmatmul.mubr.bf16.gmra.mrb[0].mxu0 %v3187
      %v3413 = vpop.f32.mrb[0].mxu0
      %v3414 = vadd.f32 0.0, %v3413
      %v3415 = vpop.f32.mrb[0].mxu0
      %v3416 = vpop.f32.mrb[0].mxu0
      %v3417 = vadd.f32 0.0, %v3416
      %v3418 = vpop.f32.mrb[0].mxu0
      %3419 = vmatprep.mubr.bf16.mxu0 %v3191
      %3420 = vmatmul.mubr.bf16.gmra.mrb[0].mxu0 %v3190
      %v3421 = vpop.f32.mrb[0].mxu0
      %v3422 = vadd.f32 0.0, %v3421
      %v3423 = vpop.f32.mrb[0].mxu0
      %v3424 = vpop.f32.mrb[0].mxu0
      %v3425 = vadd.f32 0.0, %v3424
      %v3426 = vpop.f32.mrb[0].mxu0
      %3427 = vmatprep.mubr.bf16.mxu0 %v3194
      %3428 = vmatmul.mubr.bf16.gmra.mrb[0].mxu0 %v3193
      %v3429 = vpop.f32.mrb[0].mxu0
      %v3430 = vadd.f32 0.0, %v3429
      %v3431 = vpop.f32.mrb[0].mxu0
      %v3432 = vpop.f32.mrb[0].mxu0
      %v3433 = vadd.f32 0.0, %v3432
      %v3434 = vpop.f32.mrb[0].mxu0
      %3435 = vmatprep.mubr.bf16.mxu0 %v3197
      %3436 = vmatmul.mubr.bf16.gmra.mrb[0].mxu0 %v3196
      %v3437 = vpop.f32.mrb[0].mxu0
      %v3438 = vadd.f32 0.0, %v3437
      %v3439 = vpop.f32.mrb[0].mxu0
      %v3440 = vpop.f32.mrb[0].mxu0
      %v3441 = vadd.f32 0.0, %v3440
      %v3442 = vpop.f32.mrb[0].mxu0
      %3443 = vmatprep.mubr.bf16.mxu0 %v3200
      %3444 = vmatmul.mubr.bf16.gmra.mrb[0].mxu0 %v3199
      %v3445 = vpop.f32.mrb[0].mxu0
      %v3446 = vadd.f32 0.0, %v3445
      %v3447 = vpop.f32.mrb[0].mxu0
      %v3448 = vpop.f32.mrb[0].mxu0
      %v3449 = vadd.f32 0.0, %v3448
      %v3450 = vpop.f32.mrb[0].mxu0
      %3451 = vmatprep.mubr.bf16.mxu0 %v3203
      %3452 = vmatmul.mubr.bf16.gmra.mrb[0].mxu0 %v3202
      %v3453 = vpop.f32.mrb[0].mxu0
      %v3454 = vadd.f32 0.0, %v3453
      %v3455 = vpop.f32.mrb[0].mxu0
      %v3456 = vpop.f32.mrb[0].mxu0
      %v3457 = vpop.f32.mrb[0].mxu0
      %3458 = vdwg.mxu0
      %3459 = vmatprep.subr.bf16.mxu0 0
      %3460 = vmatpush1.bf16.msra.mxu0 %v3330
      %3461 = vmatprep.subr.bf16.mxu0 0
      %3462 = vmatpush1.bf16.msra.mxu0 %v3331
      %3463 = vmatprep.subr.bf16.mxu0 0
      %3464 = vmatpush1.bf16.msra.mxu0 0
      %3465 = vmatprep.subr.bf16.mxu0 0
      %3466 = vmatpush1.bf16.msra.mxu0 0
      %3467 = vmatprep.subr.bf16.mxu0 0
      %3468 = vmatpush1.bf16.msra.mxu0 0
      %3469 = vmatprep.subr.bf16.mxu0 0
      %3470 = vmatpush1.bf16.msra.mxu0 0
      %3471 = vmatprep.subr.bf16.mxu0 0
      %3472 = vmatpush1.bf16.msra.mxu0 0
      %3473 = vmatprep.subr.bf16.mxu0 0
      %3474 = vmatpush1.bf16.msra.mxu0 0
      %3475 = vmatprep.subr.bf16.mxu0 0
      %3476 = vmatpush1.bf16.msra.mxu0 0
      %3477 = vmatprep.subr.bf16.mxu0 0
      %3478 = vmatpush1.bf16.msra.mxu0 0
      %3479 = vmatprep.subr.bf16.mxu0 0
      %3480 = vmatpush1.bf16.msra.mxu0 0
      %3481 = vmatprep.subr.bf16.mxu0 0
      %3482 = vmatpush1.bf16.msra.mxu0 0
      %3483 = vmatprep.subr.bf16.mxu0 0
      %3484 = vmatpush1.bf16.msra.mxu0 0
      %3485 = vmatprep.subr.bf16.mxu0 0
      %3486 = vmatpush1.bf16.msra.mxu0 0
      %3487 = vmatprep.subr.bf16.mxu0 0
      %3488 = vmatpush1.bf16.msra.mxu0 0
      %3489 = vmatprep.subr.bf16.mxu0 0
      %3490 = vmatpush1.bf16.msra.mxu0 0
      %3491 = vmatprep.mubr.bf16.mxu0 0
      %3492 = vmatmul.mubr.bf16.gmra.mrb[0].mxu0 %v3351
      %v3493 = vpop.f32.mrb[0].mxu0
      %v3494 = vadd.f32 %v3406, %v3493
      %v3495 = vpop.f32.mrb[0].mxu0
      %v3496 = vpop.f32.mrb[0].mxu0
      %v3497 = vadd.f32 %v3409, %v3496
      %v3498 = vpop.f32.mrb[0].mxu0
      %3499 = vmatprep.mubr.bf16.mxu0 0
      %3500 = vmatmul.mubr.bf16.gmra.mrb[0].mxu0 %v3354
      %v3501 = vpop.f32.mrb[0].mxu0
      %v3502 = vadd.f32 %v3414, %v3501
      %v3503 = vpop.f32.mrb[0].mxu0
      %v3504 = vpop.f32.mrb[0].mxu0
      %v3505 = vadd.f32 %v3417, %v3504
      %v3506 = vpop.f32.mrb[0].mxu0
      %3507 = vmatprep.mubr.bf16.mxu0 0
      %3508 = vmatmul.mubr.bf16.gmra.mrb[0].mxu0 %v3357
      %v3509 = vpop.f32.mrb[0].mxu0
      %v3510 = vadd.f32 %v3422, %v3509
      %v3511 = vpop.f32.mrb[0].mxu0
      %v3512 = vpop.f32.mrb[0].mxu0
      %v3513 = vadd.f32 %v3425, %v3512
      %v3514 = vpop.f32.mrb[0].mxu0
      %3515 = vmatprep.mubr.bf16.mxu0 0
      %3516 = vmatmul.mubr.bf16.gmra.mrb[0].mxu0 %v3360
      %v3517 = vpop.f32.mrb[0].mxu0
      %v3518 = vadd.f32 %v3430, %v3517
      %v3519 = vpop.f32.mrb[0].mxu0
      %v3520 = vpop.f32.mrb[0].mxu0
      %v3521 = vadd.f32 %v3433, %v3520
      %v3522 = vpop.f32.mrb[0].mxu0
      %3523 = vmatprep.mubr.bf16.mxu0 0
      %3524 = vmatmul.mubr.bf16.gmra.mrb[0].mxu0 %v3363
      %v3525 = vpop.f32.mrb[0].mxu0
      %v3526 = vadd.f32 %v3438, %v3525
      %v3527 = vpop.f32.mrb[0].mxu0
      %v3528 = vpop.f32.mrb[0].mxu0
      %v3529 = vadd.f32 %v3441, %v3528
      %v3530 = vpop.f32.mrb[0].mxu0
      %3531 = vmatprep.mubr.bf16.mxu0 0
      %3532 = vmatmul.mubr.bf16.gmra.mrb[0].mxu0 %v3366
      %v3533 = vpop.f32.mrb[0].mxu0
      %v3534 = vadd.f32 %v3446, %v3533
      %v3535 = vpop.f32.mrb[0].mxu0
      %v3536 = vpop.f32.mrb[0].mxu0
      %v3537 = vadd.f32 %v3449, %v3536
      %v3538 = vpop.f32.mrb[0].mxu0
      %3539 = vmatprep.mubr.bf16.mxu0 0
      %3540 = vmatmul.mubr.bf16.gmra.mrb[0].mxu0 %v3369
      %v3541 = vpop.f32.mrb[0].mxu0
      %v3542 = vadd.f32 %v3454, %v3541
      %v3543 = vpop.f32.mrb[0].mxu0
      %v3544 = vpop.f32.mrb[0].mxu0
      %v3545 = vpop.f32.mrb[0].mxu0
      %3546 = vdwg.mxu0
      %v3548 = vsel %vm615, %v3087, 0
      %v3551 = vsel %vm615, %v3090, 0
      %v3554 = vsel %vm615, %v3093, 0
      %v3557 = vsel %vm615, %v3096, 0
      %v3560 = vsel %vm615, %v3099, 0
      %v3563 = vsel %vm615, %v3102, 0
      %v3566 = vsel %vm615, %v3105, 0
      %3568 = vmatprep.subr.bf16.mxu0 0
      %3569 = vmatpush1.bf16.msra.mxu0 %v3314
      %3570 = vmatprep.subr.bf16.mxu0 0
      %3571 = vmatpush1.bf16.msra.mxu0 %v3315
      %3572 = vmatprep.subr.bf16.mxu0 0
      %3573 = vmatpush1.bf16.msra.mxu0 %v3316
      %3574 = vmatprep.subr.bf16.mxu0 0
      %3575 = vmatpush1.bf16.msra.mxu0 %v3317
      %3576 = vmatprep.subr.bf16.mxu0 0
      %3577 = vmatpush1.bf16.msra.mxu0 %v3318
      %3578 = vmatprep.subr.bf16.mxu0 0
      %3579 = vmatpush1.bf16.msra.mxu0 %v3319
      %3580 = vmatprep.subr.bf16.mxu0 0
      %3581 = vmatpush1.bf16.msra.mxu0 %v3320
      %3582 = vmatprep.subr.bf16.mxu0 0
      %3583 = vmatpush1.bf16.msra.mxu0 %v3321
      %3584 = vmatprep.subr.bf16.mxu0 0
      %3585 = vmatpush1.bf16.msra.mxu0 %v3322
      %3586 = vmatprep.subr.bf16.mxu0 0
      %3587 = vmatpush1.bf16.msra.mxu0 %v3323
      %3588 = vmatprep.subr.bf16.mxu0 0
      %3589 = vmatpush1.bf16.msra.mxu0 %v3324
      %3590 = vmatprep.subr.bf16.mxu0 0
      %3591 = vmatpush1.bf16.msra.mxu0 %v3325
      %3592 = vmatprep.subr.bf16.mxu0 0
      %3593 = vmatpush1.bf16.msra.mxu0 %v3326
      %3594 = vmatprep.subr.bf16.mxu0 0
      %3595 = vmatpush1.bf16.msra.mxu0 %v3327
      %3596 = vmatprep.subr.bf16.mxu0 0
      %3597 = vmatpush1.bf16.msra.mxu0 %v3328
      %3598 = vmatprep.subr.bf16.mxu0 0
      %3599 = vmatpush1.bf16.msra.mxu0 %v3329
      %3600 = vmatprep.mubr.bf16.mxu0 %v3086
      %3601 = vmatmul.mubr.bf16.gmra.mrb[0].mxu0 %v3085
      %v3602 = vpop.f32.mrb[0].mxu0
      %v3603 = vadd.f32 %v3494, %v3602
      %v3604 = vpop.f32.mrb[0].mxu0
      %v3605 = vpop.f32.mrb[0].mxu0
      %v3606 = vadd.f32 %v3497, %v3605
      %v3607 = vpop.f32.mrb[0].mxu0
      %3608 = vmatprep.mubr.bf16.mxu0 %v3089
      %3609 = vmatmul.mubr.bf16.gmra.mrb[0].mxu0 %v3088
      %v3610 = vpop.f32.mrb[0].mxu0
      %v3611 = vadd.f32 %v3502, %v3610
      %v3612 = vpop.f32.mrb[0].mxu0
      %v3613 = vpop.f32.mrb[0].mxu0
      %v3614 = vadd.f32 %v3505, %v3613
      %v3615 = vpop.f32.mrb[0].mxu0
      %3616 = vmatprep.mubr.bf16.mxu0 %v3092
      %3617 = vmatmul.mubr.bf16.gmra.mrb[0].mxu0 %v3091
      %v3618 = vpop.f32.mrb[0].mxu0
      %v3619 = vadd.f32 %v3510, %v3618
      %v3620 = vpop.f32.mrb[0].mxu0
      %v3621 = vpop.f32.mrb[0].mxu0
      %v3622 = vadd.f32 %v3513, %v3621
      %v3623 = vpop.f32.mrb[0].mxu0
      %3624 = vmatprep.mubr.bf16.mxu0 %v3095
      %3625 = vmatmul.mubr.bf16.gmra.mrb[0].mxu0 %v3094
      %v3626 = vpop.f32.mrb[0].mxu0
      %v3627 = vadd.f32 %v3518, %v3626
      %v3628 = vpop.f32.mrb[0].mxu0
      %v3629 = vpop.f32.mrb[0].mxu0
      %v3630 = vadd.f32 %v3521, %v3629
      %v3631 = vpop.f32.mrb[0].mxu0
      %3632 = vmatprep.mubr.bf16.mxu0 %v3098
      %3633 = vmatmul.mubr.bf16.gmra.mrb[0].mxu0 %v3097
      %v3634 = vpop.f32.mrb[0].mxu0
      %v3635 = vadd.f32 %v3526, %v3634
      %v3636 = vpop.f32.mrb[0].mxu0
      %v3637 = vpop.f32.mrb[0].mxu0
      %v3638 = vadd.f32 %v3529, %v3637
      %v3639 = vpop.f32.mrb[0].mxu0
      %3640 = vmatprep.mubr.bf16.mxu0 %v3101
      %3641 = vmatmul.mubr.bf16.gmra.mrb[0].mxu0 %v3100
      %v3642 = vpop.f32.mrb[0].mxu0
      %v3643 = vadd.f32 %v3534, %v3642
      %v3644 = vpop.f32.mrb[0].mxu0
      %v3645 = vpop.f32.mrb[0].mxu0
      %v3646 = vadd.f32 %v3537, %v3645
      %v3647 = vpop.f32.mrb[0].mxu0
      %3648 = vmatprep.mubr.bf16.mxu0 %v3104
      %3649 = vmatmul.mubr.bf16.gmra.mrb[0].mxu0 %v3103
      %v3650 = vpop.f32.mrb[0].mxu0
      %v3651 = vadd.f32 %v3542, %v3650
      %v3652 = vpop.f32.mrb[0].mxu0
      %v3653 = vpop.f32.mrb[0].mxu0
      %v3654 = vpop.f32.mrb[0].mxu0
      %3655 = vdwg.mxu0
      %3656 = vmatprep.subr.bf16.mxu0 0
      %3657 = vmatpush1.bf16.msra.mxu0 %v3330
      %3658 = vmatprep.subr.bf16.mxu0 0
      %3659 = vmatpush1.bf16.msra.mxu0 %v3331
      %3660 = vmatprep.subr.bf16.mxu0 0
      %3661 = vmatpush1.bf16.msra.mxu0 0
      %3662 = vmatprep.subr.bf16.mxu0 0
      %3663 = vmatpush1.bf16.msra.mxu0 0
      %3664 = vmatprep.subr.bf16.mxu0 0
      %3665 = vmatpush1.bf16.msra.mxu0 0
      %3666 = vmatprep.subr.bf16.mxu0 0
      %3667 = vmatpush1.bf16.msra.mxu0 0
      %3668 = vmatprep.subr.bf16.mxu0 0
      %3669 = vmatpush1.bf16.msra.mxu0 0
      %3670 = vmatprep.subr.bf16.mxu0 0
      %3671 = vmatpush1.bf16.msra.mxu0 0
      %3672 = vmatprep.subr.bf16.mxu0 0
      %3673 = vmatpush1.bf16.msra.mxu0 0
      %3674 = vmatprep.subr.bf16.mxu0 0
      %3675 = vmatpush1.bf16.msra.mxu0 0
      %3676 = vmatprep.subr.bf16.mxu0 0
      %3677 = vmatpush1.bf16.msra.mxu0 0
      %3678 = vmatprep.subr.bf16.mxu0 0
      %3679 = vmatpush1.bf16.msra.mxu0 0
      %3680 = vmatprep.subr.bf16.mxu0 0
      %3681 = vmatpush1.bf16.msra.mxu0 0
      %3682 = vmatprep.subr.bf16.mxu0 0
      %3683 = vmatpush1.bf16.msra.mxu0 0
      %3684 = vmatprep.subr.bf16.mxu0 0
      %3685 = vmatpush1.bf16.msra.mxu0 0
      %3686 = vmatprep.subr.bf16.mxu0 0
      %3687 = vmatpush1.bf16.msra.mxu0 0
      %3688 = vmatprep.mubr.bf16.mxu0 0
      %3689 = vmatmul.mubr.bf16.gmra.mrb[0].mxu0 %v3548
      %v3690 = vpop.f32.mrb[0].mxu0
      %v3691 = vadd.f32 %v3603, %v3690
      %v3692 = vpop.f32.mrb[0].mxu0
      %v3693 = vpop.f32.mrb[0].mxu0
      %v3694 = vadd.f32 %v3606, %v3693
      %v3695 = vpop.f32.mrb[0].mxu0
      %3696 = vmatprep.mubr.bf16.mxu0 0
      %3697 = vmatmul.mubr.bf16.gmra.mrb[0].mxu0 %v3551
      %v3698 = vpop.f32.mrb[0].mxu0
      %v3699 = vadd.f32 %v3611, %v3698
      %v3700 = vpop.f32.mrb[0].mxu0
      %v3701 = vpop.f32.mrb[0].mxu0
      %v3702 = vadd.f32 %v3614, %v3701
      %v3703 = vpop.f32.mrb[0].mxu0
      %3704 = vmatprep.mubr.bf16.mxu0 0
      %3705 = vmatmul.mubr.bf16.gmra.mrb[0].mxu0 %v3554
      %v3706 = vpop.f32.mrb[0].mxu0
      %v3707 = vadd.f32 %v3619, %v3706
      %v3708 = vpop.f32.mrb[0].mxu0
      %v3709 = vpop.f32.mrb[0].mxu0
      %v3710 = vadd.f32 %v3622, %v3709
      %v3711 = vpop.f32.mrb[0].mxu0
      %3712 = vmatprep.mubr.bf16.mxu0 0
      %3713 = vmatmul.mubr.bf16.gmra.mrb[0].mxu0 %v3557
      %v3714 = vpop.f32.mrb[0].mxu0
      %v3715 = vadd.f32 %v3627, %v3714
      %v3716 = vpop.f32.mrb[0].mxu0
      %v3717 = vpop.f32.mrb[0].mxu0
      %v3718 = vadd.f32 %v3630, %v3717
      %v3719 = vpop.f32.mrb[0].mxu0
      %3720 = vmatprep.mubr.bf16.mxu0 0
      %3721 = vmatmul.mubr.bf16.gmra.mrb[0].mxu0 %v3560
      %v3722 = vpop.f32.mrb[0].mxu0
      %v3723 = vadd.f32 %v3635, %v3722
      %v3724 = vpop.f32.mrb[0].mxu0
      %v3725 = vpop.f32.mrb[0].mxu0
      %v3726 = vadd.f32 %v3638, %v3725
      %v3727 = vpop.f32.mrb[0].mxu0
      %3728 = vmatprep.mubr.bf16.mxu0 0
      %3729 = vmatmul.mubr.bf16.gmra.mrb[0].mxu0 %v3563
      %v3730 = vpop.f32.mrb[0].mxu0
      %v3731 = vadd.f32 %v3643, %v3730
      %v3732 = vpop.f32.mrb[0].mxu0
      %v3733 = vpop.f32.mrb[0].mxu0
      %v3734 = vadd.f32 %v3646, %v3733
      %v3735 = vpop.f32.mrb[0].mxu0
      %3736 = vmatprep.mubr.bf16.mxu0 0
      %3737 = vmatmul.mubr.bf16.gmra.mrb[0].mxu0 %v3566
      %v3738 = vpop.f32.mrb[0].mxu0
      %v3739 = vadd.f32 %v3651, %v3738
      %v3740 = vpop.f32.mrb[0].mxu0
      %v3741 = vpop.f32.mrb[0].mxu0
      %v3742 = vpop.f32.mrb[0].mxu0
      %3743 = vdwg.mxu0
      %s3744 = scalar_lea.vmem %s2, 2
      %v3745 = vld [vmem:[%s3744] sm:$0x1]
      %v3747 = vlaneseq
      %v3748 = vshrl.u32 %v3747, 7
      %v3749 = vsub.s32 0, %v3748
      %v3750 = vrot.slane %v3745, %v3749
      %v3752 = vadd.f32 %v3691, %v3750
      %v3753 = vadd.f32 %v3694, %v3750
      %v3754 = vadd.f32 %v3699, %v3750
      %v3755 = vadd.f32 %v3702, %v3750
      %v3756 = vadd.f32 %v3707, %v3750
      %v3757 = vadd.f32 %v3710, %v3750
      %v3758 = vadd.f32 %v3715, %v3750
      %v3759 = vadd.f32 %v3718, %v3750
      %v3760 = vadd.f32 %v3723, %v3750
      %v3761 = vadd.f32 %v3726, %v3750
      %v3762 = vadd.f32 %v3731, %v3750
      %v3763 = vadd.f32 %v3734, %v3750
      %v3764 = vadd.f32 %v3739, %v3750
      %v3765 = vmax.f32 %v3752, 0.0
      %v3766 = vmax.f32 %v3753, 0.0
      %v3767 = vmax.f32 %v3754, 0.0
      %v3768 = vmax.f32 %v3755, 0.0
      %v3769 = vmax.f32 %v3756, 0.0
      %v3770 = vmax.f32 %v3757, 0.0
      %v3771 = vmax.f32 %v3758, 0.0
      %v3772 = vmax.f32 %v3759, 0.0
      %v3773 = vmax.f32 %v3760, 0.0
      %v3774 = vmax.f32 %v3761, 0.0
      %v3775 = vmax.f32 %v3762, 0.0
      %v3776 = vmax.f32 %v3763, 0.0
      %v3777 = vmax.f32 %v3764, 0.0
      %s3778 = scalar_lea.vmem %s3, 208
      %v3779 = vld [vmem:[%s3778] sm:$0xff]
      %v3780 = vld [vmem:[%s3778 + $0x8] sm:$0xff]
      %v3781 = vld [vmem:[%s3778 + $0x10] sm:$0xff]
      %v3782 = vld [vmem:[%s3778 + $0x18] sm:$0xff]
      %v3783 = vld [vmem:[%s3778 + $0x20] sm:$0xff]
      %v3784 = vld [vmem:[%s3778 + $0x28] sm:$0xff]
      %v3785 = vld [vmem:[%s3778 + $0x30] sm:$0xff]
      %v3786 = vld [vmem:[%s3778 + $0x38] sm:$0xff]
      %v3787 = vld [vmem:[%s3778 + $0x40] sm:$0xff]
      %v3788 = vld [vmem:[%s3778 + $0x48] sm:$0xff]
      %v3789 = vld [vmem:[%s3778 + $0x50] sm:$0xff]
      %v3790 = vld [vmem:[%s3778 + $0x58] sm:$0xff]
      %v3791 = vld [vmem:[%s3778 + $0x60] sm:$0xf]
      %v3792 = vmul.f32 %v3765, %v3779
      %v3793 = vmul.f32 %v3766, %v3780
      %v3794 = vmul.f32 %v3767, %v3781
      %v3795 = vmul.f32 %v3768, %v3782
      %v3796 = vmul.f32 %v3769, %v3783
      %v3797 = vmul.f32 %v3770, %v3784
      %v3798 = vmul.f32 %v3771, %v3785
      %v3799 = vmul.f32 %v3772, %v3786
      %v3800 = vmul.f32 %v3773, %v3787
      %v3801 = vmul.f32 %v3774, %v3788
      %v3802 = vmul.f32 %v3775, %v3789
      %v3803 = vmul.f32 %v3776, %v3790
      %v3804 = vmul.f32 %v3777, %v3791
      %3805 = vst [vmem:[#allocation2 + $0x10] sm:$0xff] %v3792
      %3806 = vst [vmem:[#allocation2 + $0x18] sm:$0xff] %v3793
      %3807 = vst [vmem:[#allocation2 + $0x20] sm:$0xff] %v3794
      %3808 = vst [vmem:[#allocation2 + $0x28] sm:$0xff] %v3795
      %3809 = vst [vmem:[#allocation2 + $0x30] sm:$0xff] %v3796
      %3810 = vst [vmem:[#allocation2 + $0x38] sm:$0xff] %v3797
      %3811 = vst [vmem:[#allocation2 + $0x40] sm:$0xff] %v3798
      %3812 = vst [vmem:[#allocation2 + $0x48] sm:$0xff] %v3799
      %3813 = vst [vmem:[#allocation2 + $0x50] sm:$0xff] %v3800
      %3814 = vst [vmem:[#allocation2 + $0x58] sm:$0xff] %v3801
      %3815 = vst [vmem:[#allocation2 + $0x60] sm:$0xff] %v3802
      %3816 = vst [vmem:[#allocation2 + $0x68] sm:$0xff] %v3803
      %3817 = vst [vmem:[#allocation2 + $0x70] sm:$0xf] %v3804
      %v3818 = vld [vmem:[#allocation2 + $0x5] sm:$0xff]
      %v3819 = vld [vmem:[#allocation2 + $0xd] sm:$0xff]
      %v3820 = vld [vmem:[#allocation2 + $0x15] sm:$0xff]
      %v3821 = vld [vmem:[#allocation2 + $0x1d] sm:$0xff]
      %v3822 = vld [vmem:[#allocation2 + $0x25] sm:$0xff]
      %v3823 = vld [vmem:[#allocation2 + $0x2d] sm:$0xff]
      %v3824 = vld [vmem:[#allocation2 + $0x35] sm:$0xff]
      %v3825 = vld [vmem:[#allocation2 + $0x3d] sm:$0xff]
      %v3826 = vld [vmem:[#allocation2 + $0x45] sm:$0xff]
      %v3827 = vld [vmem:[#allocation2 + $0x4d] sm:$0xff]
      %v3828 = vld [vmem:[#allocation2 + $0x55] sm:$0xff]
      %v3829 = vld [vmem:[#allocation2 + $0x5d] sm:$0xff]
      %v3830 = vld [vmem:[#allocation2 + $0x65] sm:$0xf]
      %v3831 = vld [vmem:[#allocation2 + $0x6] sm:$0xff]
      %v3832 = vld [vmem:[#allocation2 + $0xe] sm:$0xff]
      %v3833 = vld [vmem:[#allocation2 + $0x16] sm:$0xff]
      %v3834 = vld [vmem:[#allocation2 + $0x1e] sm:$0xff]
      %v3835 = vld [vmem:[#allocation2 + $0x26] sm:$0xff]
      %v3836 = vld [vmem:[#allocation2 + $0x2e] sm:$0xff]
      %v3837 = vld [vmem:[#allocation2 + $0x36] sm:$0xff]
      %v3838 = vld [vmem:[#allocation2 + $0x3e] sm:$0xff]
      %v3839 = vld [vmem:[#allocation2 + $0x46] sm:$0xff]
      %v3840 = vld [vmem:[#allocation2 + $0x4e] sm:$0xff]
      %v3841 = vld [vmem:[#allocation2 + $0x56] sm:$0xff]
      %v3842 = vld [vmem:[#allocation2 + $0x5e] sm:$0xff]
      %v3843 = vld [vmem:[#allocation2 + $0x66] sm:$0xf]
      %v3844 = vld [vmem:[#allocation2 + $0x7] sm:$0xff]
      %v3845 = vld [vmem:[#allocation2 + $0xf] sm:$0xff]
      %v3846 = vld [vmem:[#allocation2 + $0x17] sm:$0xff]
      %v3847 = vld [vmem:[#allocation2 + $0x1f] sm:$0xff]
      %v3848 = vld [vmem:[#allocation2 + $0x27] sm:$0xff]
      %v3849 = vld [vmem:[#allocation2 + $0x2f] sm:$0xff]
      %v3850 = vld [vmem:[#allocation2 + $0x37] sm:$0xff]
      %v3851 = vld [vmem:[#allocation2 + $0x3f] sm:$0xff]
      %v3852 = vld [vmem:[#allocation2 + $0x47] sm:$0xff]
      %v3853 = vld [vmem:[#allocation2 + $0x4f] sm:$0xff]
      %v3854 = vld [vmem:[#allocation2 + $0x57] sm:$0xff]
      %v3855 = vld [vmem:[#allocation2 + $0x5f] sm:$0xff]
      %v3856 = vld [vmem:[#allocation2 + $0x67] sm:$0xf]
      %v3857 = vld [vmem:[#allocation2 + $0x67] sm:$0xff]
      %v3858 = vld [vmem:[#allocation2 + $0x6f] sm:$0xf]
      %v3859 = vld [vmem:[#allocation2 + $0x10] sm:$0xff]
      %v3860 = vld [vmem:[#allocation2 + $0x18] sm:$0xff]
      %v3861 = vld [vmem:[#allocation2 + $0x20] sm:$0xff]
      %v3862 = vld [vmem:[#allocation2 + $0x28] sm:$0xff]
      %v3863 = vld [vmem:[#allocation2 + $0x30] sm:$0xff]
      %v3864 = vld [vmem:[#allocation2 + $0x38] sm:$0xff]
      %v3865 = vld [vmem:[#allocation2 + $0x40] sm:$0xff]
      %v3866 = vld [vmem:[#allocation2 + $0x48] sm:$0xff]
      %v3867 = vld [vmem:[#allocation2 + $0x50] sm:$0xff]
      %v3868 = vld [vmem:[#allocation2 + $0x58] sm:$0xff]
      %v3869 = vld [vmem:[#allocation2 + $0x60] sm:$0xff]
      %v3870 = vld [vmem:[#allocation2 + $0x68] sm:$0xff]
      %v3871 = vld [vmem:[#allocation2 + $0x70] sm:$0xf]
      %v3872 = vld [vmem:[#allocation2 + $0x11] sm:$0xff]
      %v3873 = vld [vmem:[#allocation2 + $0x19] sm:$0xff]
      %v3874 = vld [vmem:[#allocation2 + $0x21] sm:$0xff]
      %v3875 = vld [vmem:[#allocation2 + $0x29] sm:$0xff]
      %v3876 = vld [vmem:[#allocation2 + $0x31] sm:$0xff]
      %v3877 = vld [vmem:[#allocation2 + $0x39] sm:$0xff]
      %v3878 = vld [vmem:[#allocation2 + $0x41] sm:$0xff]
      %v3879 = vld [vmem:[#allocation2 + $0x49] sm:$0xff]
      %v3880 = vld [vmem:[#allocation2 + $0x51] sm:$0xff]
      %v3881 = vld [vmem:[#allocation2 + $0x59] sm:$0xff]
      %v3882 = vld [vmem:[#allocation2 + $0x61] sm:$0xff]
      %v3883 = vld [vmem:[#allocation2 + $0x69] sm:$0xff]
      %v3884 = vld [vmem:[#allocation2 + $0x71] sm:$0xf]
      %v3885 = vld [vmem:[#allocation2 + $0x71] sm:$0xff]
      %v3886 = vld [vmem:[#allocation2 + $0x79] sm:$0xf]
      %v3887 = vld [vmem:[#allocation2 + $0x1a] sm:$0xff]
      %v3888 = vld [vmem:[#allocation2 + $0x22] sm:$0xff]
      %v3889 = vld [vmem:[#allocation2 + $0x2a] sm:$0xff]
      %v3890 = vld [vmem:[#allocation2 + $0x32] sm:$0xff]
      %v3891 = vld [vmem:[#allocation2 + $0x3a] sm:$0xff]
      %v3892 = vld [vmem:[#allocation2 + $0x42] sm:$0xff]
      %v3893 = vld [vmem:[#allocation2 + $0x4a] sm:$0xff]
      %v3894 = vld [vmem:[#allocation2 + $0x52] sm:$0xff]
      %v3895 = vld [vmem:[#allocation2 + $0x5a] sm:$0xff]
      %v3896 = vld [vmem:[#allocation2 + $0x62] sm:$0xff]
      %v3897 = vld [vmem:[#allocation2 + $0x6a] sm:$0xff]
      %v3898 = vld [vmem:[#allocation2 + $0x72] sm:$0xff]
      %v3899 = vld [vmem:[#allocation2 + $0x7a] sm:$0xf]
      %v3900 = vld [vmem:[#allocation2 + $0x1b] sm:$0xff]
      %v3901 = vld [vmem:[#allocation2 + $0x23] sm:$0xff]
      %v3902 = vld [vmem:[#allocation2 + $0x2b] sm:$0xff]
      %v3903 = vld [vmem:[#allocation2 + $0x33] sm:$0xff]
      %v3904 = vld [vmem:[#allocation2 + $0x3b] sm:$0xff]
      %v3905 = vld [vmem:[#allocation2 + $0x43] sm:$0xff]
      %v3906 = vld [vmem:[#allocation2 + $0x4b] sm:$0xff]
      %v3907 = vld [vmem:[#allocation2 + $0x53] sm:$0xff]
      %v3908 = vld [vmem:[#allocation2 + $0x5b] sm:$0xff]
      %v3909 = vld [vmem:[#allocation2 + $0x63] sm:$0xff]
      %v3910 = vld [vmem:[#allocation2 + $0x6b] sm:$0xff]
      %v3911 = vld [vmem:[#allocation2 + $0x73] sm:$0xff]
      %v3912 = vld [vmem:[#allocation2 + $0x7b] sm:$0xf]
      %3926 = vrot.lane.b32.xlu0 %v3831, 32
      %v3927 = vpop.permute.xlu0 %3926
      %3928 = vrot.lane.b32.xlu0 %v3832, 32
      %v3929 = vpop.permute.xlu0 %3928
      %3930 = vrot.lane.b32.xlu0 %v3833, 32
      %v3931 = vpop.permute.xlu0 %3930
      %3932 = vrot.lane.b32.xlu0 %v3834, 32
      %v3933 = vpop.permute.xlu0 %3932
      %3934 = vrot.lane.b32.xlu0 %v3835, 32
      %v3935 = vpop.permute.xlu0 %3934
      %3936 = vrot.lane.b32.xlu0 %v3836, 32
      %v3937 = vpop.permute.xlu0 %3936
      %3938 = vrot.lane.b32.xlu0 %v3837, 32
      %v3939 = vpop.permute.xlu0 %3938
      %3940 = vrot.lane.b32.xlu0 %v3838, 32
      %v3941 = vpop.permute.xlu0 %3940
      %3942 = vrot.lane.b32.xlu0 %v3839, 32
      %v3943 = vpop.permute.xlu0 %3942
      %3944 = vrot.lane.b32.xlu0 %v3840, 32
      %v3945 = vpop.permute.xlu0 %3944
      %3946 = vrot.lane.b32.xlu0 %v3841, 32
      %v3947 = vpop.permute.xlu0 %3946
      %3948 = vrot.lane.b32.xlu0 %v3842, 32
      %v3949 = vpop.permute.xlu0 %3948
      %3950 = vrot.lane.b32.xlu0 %v3843, 32
      %v3951 = vpop.permute.xlu0 %3950
      %3978 = vrot.lane.b32.xlu0 %v3844, 64
      %v3979 = vpop.permute.xlu0 %3978
      %3980 = vrot.lane.b32.xlu0 %v3845, 64
      %v3981 = vpop.permute.xlu0 %3980
      %3982 = vrot.lane.b32.xlu0 %v3846, 64
      %v3983 = vpop.permute.xlu0 %3982
      %3984 = vrot.lane.b32.xlu0 %v3847, 64
      %v3985 = vpop.permute.xlu0 %3984
      %3986 = vrot.lane.b32.xlu0 %v3848, 64
      %v3987 = vpop.permute.xlu0 %3986
      %3988 = vrot.lane.b32.xlu0 %v3849, 64
      %v3989 = vpop.permute.xlu0 %3988
      %3990 = vrot.lane.b32.xlu0 %v3850, 64
      %v3991 = vpop.permute.xlu0 %3990
      %3992 = vrot.lane.b32.xlu0 %v3851, 64
      %v3993 = vpop.permute.xlu0 %3992
      %3994 = vrot.lane.b32.xlu0 %v3852, 64
      %v3995 = vpop.permute.xlu0 %3994
      %3996 = vrot.lane.b32.xlu0 %v3853, 64
      %v3997 = vpop.permute.xlu0 %3996
      %3998 = vrot.lane.b32.xlu0 %v3854, 64
      %v3999 = vpop.permute.xlu0 %3998
      %4000 = vrot.lane.b32.xlu0 %v3855, 64
      %v4001 = vpop.permute.xlu0 %4000
      %4002 = vrot.lane.b32.xlu0 %v3856, 64
      %v4003 = vpop.permute.xlu0 %4002
      %4019 = vrot.lane.b32.xlu0 %v3845, 96
      %v4020 = vpop.permute.xlu0 %4019
      %4021 = vrot.lane.b32.xlu0 %v3846, 96
      %v4022 = vpop.permute.xlu0 %4021
      %4023 = vrot.lane.b32.xlu0 %v3847, 96
      %v4024 = vpop.permute.xlu0 %4023
      %4025 = vrot.lane.b32.xlu0 %v3848, 96
      %v4026 = vpop.permute.xlu0 %4025
      %4027 = vrot.lane.b32.xlu0 %v3849, 96
      %v4028 = vpop.permute.xlu0 %4027
      %4029 = vrot.lane.b32.xlu0 %v3850, 96
      %v4030 = vpop.permute.xlu0 %4029
      %4031 = vrot.lane.b32.xlu0 %v3851, 96
      %v4032 = vpop.permute.xlu0 %4031
      %4033 = vrot.lane.b32.xlu0 %v3852, 96
      %v4034 = vpop.permute.xlu0 %4033
      %4035 = vrot.lane.b32.xlu0 %v3853, 96
      %v4036 = vpop.permute.xlu0 %4035
      %4037 = vrot.lane.b32.xlu0 %v3854, 96
      %v4038 = vpop.permute.xlu0 %4037
      %4039 = vrot.lane.b32.xlu0 %v3855, 96
      %v4040 = vpop.permute.xlu0 %4039
      %4041 = vrot.lane.b32.xlu0 %v3857, 96
      %v4042 = vpop.permute.xlu0 %4041
      %4043 = vrot.lane.b32.xlu0 %v3858, 96
      %v4044 = vpop.permute.xlu0 %4043
      %4071 = vrot.lane.b32.xlu0 %v3872, 32
      %v4072 = vpop.permute.xlu0 %4071
      %4073 = vrot.lane.b32.xlu0 %v3873, 32
      %v4074 = vpop.permute.xlu0 %4073
      %4075 = vrot.lane.b32.xlu0 %v3874, 32
      %v4076 = vpop.permute.xlu0 %4075
      %4077 = vrot.lane.b32.xlu0 %v3875, 32
      %v4078 = vpop.permute.xlu0 %4077
      %4079 = vrot.lane.b32.xlu0 %v3876, 32
      %v4080 = vpop.permute.xlu0 %4079
      %4081 = vrot.lane.b32.xlu0 %v3877, 32
      %v4082 = vpop.permute.xlu0 %4081
      %4083 = vrot.lane.b32.xlu0 %v3878, 32
      %v4084 = vpop.permute.xlu0 %4083
      %4085 = vrot.lane.b32.xlu0 %v3879, 32
      %v4086 = vpop.permute.xlu0 %4085
      %4087 = vrot.lane.b32.xlu0 %v3880, 32
      %v4088 = vpop.permute.xlu0 %4087
      %4089 = vrot.lane.b32.xlu0 %v3881, 32
      %v4090 = vpop.permute.xlu0 %4089
      %4091 = vrot.lane.b32.xlu0 %v3882, 32
      %v4092 = vpop.permute.xlu0 %4091
      %4093 = vrot.lane.b32.xlu0 %v3883, 32
      %v4094 = vpop.permute.xlu0 %4093
      %4095 = vrot.lane.b32.xlu0 %v3884, 32
      %v4096 = vpop.permute.xlu0 %4095
      %4112 = vrot.lane.b32.xlu0 %v3873, 64
      %v4113 = vpop.permute.xlu0 %4112
      %4114 = vrot.lane.b32.xlu0 %v3874, 64
      %v4115 = vpop.permute.xlu0 %4114
      %4116 = vrot.lane.b32.xlu0 %v3875, 64
      %v4117 = vpop.permute.xlu0 %4116
      %4118 = vrot.lane.b32.xlu0 %v3876, 64
      %v4119 = vpop.permute.xlu0 %4118
      %4120 = vrot.lane.b32.xlu0 %v3877, 64
      %v4121 = vpop.permute.xlu0 %4120
      %4122 = vrot.lane.b32.xlu0 %v3878, 64
      %v4123 = vpop.permute.xlu0 %4122
      %4124 = vrot.lane.b32.xlu0 %v3879, 64
      %v4125 = vpop.permute.xlu0 %4124
      %4126 = vrot.lane.b32.xlu0 %v3880, 64
      %v4127 = vpop.permute.xlu0 %4126
      %4128 = vrot.lane.b32.xlu0 %v3881, 64
      %v4129 = vpop.permute.xlu0 %4128
      %4130 = vrot.lane.b32.xlu0 %v3882, 64
      %v4131 = vpop.permute.xlu0 %4130
      %4132 = vrot.lane.b32.xlu0 %v3883, 64
      %v4133 = vpop.permute.xlu0 %4132
      %4134 = vrot.lane.b32.xlu0 %v3885, 64
      %v4135 = vpop.permute.xlu0 %4134
      %4136 = vrot.lane.b32.xlu0 %v3886, 64
      %v4137 = vpop.permute.xlu0 %4136
      %4164 = vrot.lane.b32.xlu0 %v3887, 96
      %v4165 = vpop.permute.xlu0 %4164
      %4166 = vrot.lane.b32.xlu0 %v3888, 96
      %v4167 = vpop.permute.xlu0 %4166
      %4168 = vrot.lane.b32.xlu0 %v3889, 96
      %v4169 = vpop.permute.xlu0 %4168
      %4170 = vrot.lane.b32.xlu0 %v3890, 96
      %v4171 = vpop.permute.xlu0 %4170
      %4172 = vrot.lane.b32.xlu0 %v3891, 96
      %v4173 = vpop.permute.xlu0 %4172
      %4174 = vrot.lane.b32.xlu0 %v3892, 96
      %v4175 = vpop.permute.xlu0 %4174
      %4176 = vrot.lane.b32.xlu0 %v3893, 96
      %v4177 = vpop.permute.xlu0 %4176
      %4178 = vrot.lane.b32.xlu0 %v3894, 96
      %v4179 = vpop.permute.xlu0 %4178
      %4180 = vrot.lane.b32.xlu0 %v3895, 96
      %v4181 = vpop.permute.xlu0 %4180
      %4182 = vrot.lane.b32.xlu0 %v3896, 96
      %v4183 = vpop.permute.xlu0 %4182
      %4184 = vrot.lane.b32.xlu0 %v3897, 96
      %v4185 = vpop.permute.xlu0 %4184
      %4186 = vrot.lane.b32.xlu0 %v3898, 96
      %v4187 = vpop.permute.xlu0 %4186
      %4188 = vrot.lane.b32.xlu0 %v3899, 96
      %v4189 = vpop.permute.xlu0 %4188
      %v4203 = vsel %vm615, %v3818, %v3927
      %v4204 = vsel %vm615, %v3819, %v3929
      %v4205 = vsel %vm615, %v3820, %v3931
      %v4206 = vsel %vm615, %v3821, %v3933
      %v4207 = vsel %vm615, %v3822, %v3935
      %v4208 = vsel %vm615, %v3823, %v3937
      %v4209 = vsel %vm615, %v3824, %v3939
      %v4210 = vsel %vm615, %v3825, %v3941
      %v4211 = vsel %vm615, %v3826, %v3943
      %v4212 = vsel %vm615, %v3827, %v3945
      %v4213 = vsel %vm615, %v3828, %v3947
      %v4214 = vsel %vm615, %v3829, %v3949
      %v4215 = vsel %vm615, %v3830, %v3951
      %v4216 = vsel %vm629, %v4203, %v3979
      %v4217 = vsel %vm629, %v4204, %v3981
      %v4218 = vsel %vm629, %v4205, %v3983
      %v4219 = vsel %vm629, %v4206, %v3985
      %v4220 = vsel %vm629, %v4207, %v3987
      %v4221 = vsel %vm629, %v4208, %v3989
      %v4222 = vsel %vm629, %v4209, %v3991
      %v4223 = vsel %vm629, %v4210, %v3993
      %v4224 = vsel %vm629, %v4211, %v3995
      %v4225 = vsel %vm629, %v4212, %v3997
      %v4226 = vsel %vm629, %v4213, %v3999
      %v4227 = vsel %vm629, %v4214, %v4001
      %v4228 = vsel %vm629, %v4215, %v4003
      %v4229 = vsel %vm643, %v4216, %v4020
      %v4230 = vsel %vm643, %v4217, %v4022
      %v4231 = vsel %vm643, %v4218, %v4024
      %v4232 = vsel %vm643, %v4219, %v4026
      %v4233 = vsel %vm643, %v4220, %v4028
      %v4234 = vsel %vm643, %v4221, %v4030
      %v4235 = vsel %vm643, %v4222, %v4032
      %v4236 = vsel %vm643, %v4223, %v4034
      %v4237 = vsel %vm643, %v4224, %v4036
      %v4238 = vsel %vm643, %v4225, %v4038
      %v4239 = vsel %vm643, %v4226, %v4040
      %v4240 = vsel %vm643, %v4227, %v4042
      %v4241 = vsel %vm643, %v4228, %v4044
      %v4242 = vsel %vm615, %v3859, %v4072
      %v4243 = vsel %vm615, %v3860, %v4074
      %v4244 = vsel %vm615, %v3861, %v4076
      %v4245 = vsel %vm615, %v3862, %v4078
      %v4246 = vsel %vm615, %v3863, %v4080
      %v4247 = vsel %vm615, %v3864, %v4082
      %v4248 = vsel %vm615, %v3865, %v4084
      %v4249 = vsel %vm615, %v3866, %v4086
      %v4250 = vsel %vm615, %v3867, %v4088
      %v4251 = vsel %vm615, %v3868, %v4090
      %v4252 = vsel %vm615, %v3869, %v4092
      %v4253 = vsel %vm615, %v3870, %v4094
      %v4254 = vsel %vm615, %v3871, %v4096
      %v4255 = vsel %vm629, %v4242, %v4113
      %v4256 = vsel %vm629, %v4243, %v4115
      %v4257 = vsel %vm629, %v4244, %v4117
      %v4258 = vsel %vm629, %v4245, %v4119
      %v4259 = vsel %vm629, %v4246, %v4121
      %v4260 = vsel %vm629, %v4247, %v4123
      %v4261 = vsel %vm629, %v4248, %v4125
      %v4262 = vsel %vm629, %v4249, %v4127
      %v4263 = vsel %vm629, %v4250, %v4129
      %v4264 = vsel %vm629, %v4251, %v4131
      %v4265 = vsel %vm629, %v4252, %v4133
      %v4266 = vsel %vm629, %v4253, %v4135
      %v4267 = vsel %vm629, %v4254, %v4137
      %v4268 = vsel %vm643, %v4255, %v4165
      %v4269 = vsel %vm643, %v4256, %v4167
      %v4270 = vsel %vm643, %v4257, %v4169
      %v4271 = vsel %vm643, %v4258, %v4171
      %v4272 = vsel %vm643, %v4259, %v4173
      %v4273 = vsel %vm643, %v4260, %v4175
      %v4274 = vsel %vm643, %v4261, %v4177
      %v4275 = vsel %vm643, %v4262, %v4179
      %v4276 = vsel %vm643, %v4263, %v4181
      %v4277 = vsel %vm643, %v4264, %v4183
      %v4278 = vsel %vm643, %v4265, %v4185
      %v4279 = vsel %vm643, %v4266, %v4187
      %v4280 = vsel %vm643, %v4267, %v4189
      %v4281 = vpack.c.bf16 %v4230, %v4229
      %v4282 = vpack.c.bf16 %v4269, %v4268
      %v4283 = vpack.c.bf16 %v3901, %v3900
      %v4284 = vpack.c.bf16 %v4232, %v4231
      %v4285 = vpack.c.bf16 %v4271, %v4270
      %v4286 = vpack.c.bf16 %v3903, %v3902
      %v4287 = vpack.c.bf16 %v4234, %v4233
      %v4288 = vpack.c.bf16 %v4273, %v4272
      %v4289 = vpack.c.bf16 %v3905, %v3904
      %v4290 = vpack.c.bf16 %v4236, %v4235
      %v4291 = vpack.c.bf16 %v4275, %v4274
      %v4292 = vpack.c.bf16 %v3907, %v3906
      %v4293 = vpack.c.bf16 %v4238, %v4237
      %v4294 = vpack.c.bf16 %v4277, %v4276
      %v4295 = vpack.c.bf16 %v3909, %v3908
      %v4296 = vpack.c.bf16 %v4240, %v4239
      %v4297 = vpack.c.bf16 %v4279, %v4278
      %v4298 = vpack.c.bf16 %v3911, %v3910
      %v4299 = vpack.c.bf16 %v4241, %v4241
      %v4300 = vpack.c.bf16 %v4280, %v4280
      %v4301 = vpack.c.bf16 %v3912, %v3912
      %v4302 = vunpack.c.l.bf16 %v4281
      %v4303 = vunpack.c.l.bf16 %v4282
      %v4304 = vunpack.c.l.bf16 %v4283
      %v4305 = vunpack.c.h.bf16 %v4281
      %v4306 = vunpack.c.h.bf16 %v4282
      %v4307 = vunpack.c.h.bf16 %v4283
      %v4308 = vunpack.c.l.bf16 %v4284
      %v4309 = vunpack.c.l.bf16 %v4285
      %v4310 = vunpack.c.l.bf16 %v4286
      %v4311 = vunpack.c.h.bf16 %v4284
      %v4312 = vunpack.c.h.bf16 %v4285
      %v4313 = vunpack.c.h.bf16 %v4286
      %v4314 = vunpack.c.l.bf16 %v4287
      %v4315 = vunpack.c.l.bf16 %v4288
      %v4316 = vunpack.c.l.bf16 %v4289
      %v4317 = vunpack.c.h.bf16 %v4287
      %v4318 = vunpack.c.h.bf16 %v4288
      %v4319 = vunpack.c.h.bf16 %v4289
      %v4320 = vunpack.c.l.bf16 %v4290
      %v4321 = vunpack.c.l.bf16 %v4291
      %v4322 = vunpack.c.l.bf16 %v4292
      %v4323 = vunpack.c.h.bf16 %v4290
      %v4324 = vunpack.c.h.bf16 %v4291
      %v4325 = vunpack.c.h.bf16 %v4292
      %v4326 = vunpack.c.l.bf16 %v4293
      %v4327 = vunpack.c.l.bf16 %v4294
      %v4328 = vunpack.c.l.bf16 %v4295
      %v4329 = vunpack.c.h.bf16 %v4293
      %v4330 = vunpack.c.h.bf16 %v4294
      %v4331 = vunpack.c.h.bf16 %v4295
      %v4332 = vunpack.c.l.bf16 %v4296
      %v4333 = vunpack.c.l.bf16 %v4297
      %v4334 = vunpack.c.l.bf16 %v4298
      %v4335 = vunpack.c.h.bf16 %v4296
      %v4336 = vunpack.c.h.bf16 %v4297
      %v4337 = vunpack.c.h.bf16 %v4298
      %v4338 = vunpack.c.l.bf16 %v4299
      %v4339 = vunpack.c.l.bf16 %v4300
      %v4340 = vunpack.c.l.bf16 %v4301
      %v4341 = vsub.f32 %v4229, %v4302
      %v4342 = vsub.f32 %v4268, %v4303
      %v4343 = vsub.f32 %v3900, %v4304
      %v4344 = vsub.f32 %v4230, %v4305
      %v4345 = vsub.f32 %v4269, %v4306
      %v4346 = vsub.f32 %v3901, %v4307
      %v4347 = vsub.f32 %v4231, %v4308
      %v4348 = vsub.f32 %v4270, %v4309
      %v4349 = vsub.f32 %v3902, %v4310
      %v4350 = vsub.f32 %v4232, %v4311
      %v4351 = vsub.f32 %v4271, %v4312
      %v4352 = vsub.f32 %v3903, %v4313
      %v4353 = vsub.f32 %v4233, %v4314
      %v4354 = vsub.f32 %v4272, %v4315
      %v4355 = vsub.f32 %v3904, %v4316
      %v4356 = vsub.f32 %v4234, %v4317
      %v4357 = vsub.f32 %v4273, %v4318
      %v4358 = vsub.f32 %v3905, %v4319
      %v4359 = vsub.f32 %v4235, %v4320
      %v4360 = vsub.f32 %v4274, %v4321
      %v4361 = vsub.f32 %v3906, %v4322
      %v4362 = vsub.f32 %v4236, %v4323
      %v4363 = vsub.f32 %v4275, %v4324
      %v4364 = vsub.f32 %v3907, %v4325
      %v4365 = vsub.f32 %v4237, %v4326
      %v4366 = vsub.f32 %v4276, %v4327
      %v4367 = vsub.f32 %v3908, %v4328
      %v4368 = vsub.f32 %v4238, %v4329
      %v4369 = vsub.f32 %v4277, %v4330
      %v4370 = vsub.f32 %v3909, %v4331
      %v4371 = vsub.f32 %v4239, %v4332
      %v4372 = vsub.f32 %v4278, %v4333
      %v4373 = vsub.f32 %v3910, %v4334
      %v4374 = vsub.f32 %v4240, %v4335
      %v4375 = vsub.f32 %v4279, %v4336
      %v4376 = vsub.f32 %v3911, %v4337
      %v4377 = vsub.f32 %v4241, %v4338
      %v4378 = vsub.f32 %v4280, %v4339
      %v4379 = vsub.f32 %v3912, %v4340
      %v4380 = vpack.c.bf16 %v4344, %v4341
      %v4381 = vpack.c.bf16 %v4345, %v4342
      %v4382 = vpack.c.bf16 %v4346, %v4343
      %v4383 = vpack.c.bf16 %v4350, %v4347
      %v4384 = vpack.c.bf16 %v4351, %v4348
      %v4385 = vpack.c.bf16 %v4352, %v4349
      %v4386 = vpack.c.bf16 %v4356, %v4353
      %v4387 = vpack.c.bf16 %v4357, %v4354
      %v4388 = vpack.c.bf16 %v4358, %v4355
      %v4389 = vpack.c.bf16 %v4362, %v4359
      %v4390 = vpack.c.bf16 %v4363, %v4360
      %v4391 = vpack.c.bf16 %v4364, %v4361
      %v4392 = vpack.c.bf16 %v4368, %v4365
      %v4393 = vpack.c.bf16 %v4369, %v4366
      %v4394 = vpack.c.bf16 %v4370, %v4367
      %v4395 = vpack.c.bf16 %v4374, %v4371
      %v4396 = vpack.c.bf16 %v4375, %v4372
      %v4397 = vpack.c.bf16 %v4376, %v4373
      %v4398 = vpack.c.bf16 %v4377, %v4377
      %v4399 = vpack.c.bf16 %v4378, %v4378
      %v4400 = vpack.c.bf16 %v4379, %v4379
      %s4401 = scalar_lea.vmem %s1, 432
      %v4402 = vld [vmem:[%s4401] sm:$0xf]
      %v4403 = vld [vmem:[%s4401 + $0x4] sm:$0xf]
      %v4404 = vld [vmem:[%s4401 + $0x8] sm:$0xf]
      %v4405 = vld [vmem:[%s4401 + $0xc] sm:$0xf]
      %v4406 = vld [vmem:[%s4401 + $0x10] sm:$0xf]
      %v4407 = vld [vmem:[%s4401 + $0x14] sm:$0xf]
      %v4408 = vld [vmem:[%s4401 + $0x18] sm:$0xf]
      %v4409 = vld [vmem:[%s4401 + $0x1c] sm:$0xf]
      %v4410 = vld [vmem:[%s4401 + $0x20] sm:$0xf]
      %v4411 = vld [vmem:[%s4401 + $0x24] sm:$0xf]
      %v4412 = vld [vmem:[%s4401 + $0x28] sm:$0xf]
      %v4413 = vld [vmem:[%s4401 + $0x2c] sm:$0xf]
      %v4414 = vld [vmem:[%s4401 + $0x30] sm:$0xf]
      %v4415 = vld [vmem:[%s4401 + $0x34] sm:$0xf]
      %v4416 = vld [vmem:[%s4401 + $0x38] sm:$0xf]
      %v4417 = vld [vmem:[%s4401 + $0x3c] sm:$0xf]
      %v4418 = vld [vmem:[%s4401 + $0x40] sm:$0xf]
      %v4419 = vld [vmem:[%s4401 + $0x44] sm:$0xf]
      %v4420 = vld [vmem:[%s4401 + $0x48] sm:$0xf]
      %v4421 = vld [vmem:[%s4401 + $0x4c] sm:$0xf]
      %v4422 = vld [vmem:[%s4401 + $0x50] sm:$0xf]
      %v4423 = vld [vmem:[%s4401 + $0x54] sm:$0xf]
      %v4424 = vld [vmem:[%s4401 + $0x58] sm:$0xf]
      %v4425 = vld [vmem:[%s4401 + $0x5c] sm:$0xf]
      %v4426 = vld [vmem:[%s4401 + $0x60] sm:$0xf]
      %v4427 = vld [vmem:[%s4401 + $0x64] sm:$0xf]
      %v4428 = vld [vmem:[%s4401 + $0x68] sm:$0xf]
      %v4429 = vld [vmem:[%s4401 + $0x6c] sm:$0xf]
      %v4430 = vld [vmem:[%s4401 + $0x70] sm:$0xf]
      %v4431 = vld [vmem:[%s4401 + $0x74] sm:$0xf]
      %v4432 = vld [vmem:[%s4401 + $0x78] sm:$0xf]
      %v4433 = vld [vmem:[%s4401 + $0x7c] sm:$0xf]
      %v4434 = vld [vmem:[%s4401 + $0x80] sm:$0xf]
      %v4435 = vld [vmem:[%s4401 + $0x84] sm:$0xf]
      %v4436 = vld [vmem:[%s4401 + $0x88] sm:$0xf]
      %v4437 = vld [vmem:[%s4401 + $0x8c] sm:$0xf]
      %v4474 = vunpack.c.l.b16 %v4402
      %v4475 = vunpack.c.l.b16 %v4403
      %v4476 = vunpack.c.l.b16 %v4404
      %v4477 = vunpack.c.l.b16 %v4405
      %v4478 = vunpack.c.l.b16 %v4406
      %v4479 = vunpack.c.l.b16 %v4407
      %v4480 = vunpack.c.l.b16 %v4408
      %v4481 = vunpack.c.l.b16 %v4409
      %v4482 = vunpack.c.l.b16 %v4410
      %v4483 = vunpack.c.l.b16 %v4411
      %v4484 = vunpack.c.l.b16 %v4412
      %v4485 = vunpack.c.l.b16 %v4413
      %v4486 = vunpack.c.l.b16 %v4414
      %v4487 = vunpack.c.l.b16 %v4415
      %v4488 = vunpack.c.l.b16 %v4416
      %v4489 = vunpack.c.l.b16 %v4417
      %v4490 = vunpack.c.l.b16 %v4418
      %v4491 = vunpack.c.l.b16 %v4419
      %v4492 = vunpack.c.l.b16 %v4420
      %v4493 = vunpack.c.l.b16 %v4421
      %v4494 = vunpack.c.l.b16 %v4422
      %v4495 = vunpack.c.l.b16 %v4423
      %v4496 = vunpack.c.l.b16 %v4424
      %v4497 = vunpack.c.l.b16 %v4425
      %v4498 = vunpack.c.l.b16 %v4426
      %v4499 = vunpack.c.l.b16 %v4427
      %v4500 = vunpack.c.l.b16 %v4428
      %v4501 = vunpack.c.l.b16 %v4429
      %v4502 = vunpack.c.l.b16 %v4430
      %v4503 = vunpack.c.l.b16 %v4431
      %v4504 = vunpack.c.l.b16 %v4432
      %v4505 = vunpack.c.l.b16 %v4433
      %v4506 = vunpack.c.l.b16 %v4434
      %v4507 = vunpack.c.l.b16 %v4435
      %v4508 = vunpack.c.l.b16 %v4436
      %v4509 = vunpack.c.l.b16 %v4437
      %v4510 = vpack.c.b16 %v4475, %v4474
      %v4511 = vpack.c.b16 %v4477, %v4476
      %v4512 = vpack.c.b16 %v4479, %v4478
      %v4513 = vpack.c.b16 %v4481, %v4480
      %v4514 = vpack.c.b16 %v4483, %v4482
      %v4515 = vpack.c.b16 %v4485, %v4484
      %v4516 = vpack.c.b16 %v4487, %v4486
      %v4517 = vpack.c.b16 %v4489, %v4488
      %v4518 = vpack.c.b16 %v4491, %v4490
      %v4519 = vpack.c.b16 %v4493, %v4492
      %v4520 = vpack.c.b16 %v4495, %v4494
      %v4521 = vpack.c.b16 %v4497, %v4496
      %v4522 = vpack.c.b16 %v4499, %v4498
      %v4523 = vpack.c.b16 %v4501, %v4500
      %v4524 = vpack.c.b16 %v4503, %v4502
      %v4525 = vpack.c.b16 %v4505, %v4504
      %v4526 = vpack.c.b16 %v4507, %v4506
      %v4527 = vpack.c.b16 %v4509, %v4508
      %v4547 = vsel %vm615, %v4382, 0
      %v4550 = vsel %vm615, %v4385, 0
      %v4553 = vsel %vm615, %v4388, 0
      %v4556 = vsel %vm615, %v4391, 0
      %v4559 = vsel %vm615, %v4394, 0
      %v4562 = vsel %vm615, %v4397, 0
      %v4565 = vsel %vm615, %v4400, 0
      %4567 = vmatprep.subr.bf16.mxu0 0
      %4568 = vmatpush1.bf16.msra.mxu0 %v4510
      %4569 = vmatprep.subr.bf16.mxu0 0
      %4570 = vmatpush1.bf16.msra.mxu0 %v4511
      %4571 = vmatprep.subr.bf16.mxu0 0
      %4572 = vmatpush1.bf16.msra.mxu0 %v4512
      %4573 = vmatprep.subr.bf16.mxu0 0
      %4574 = vmatpush1.bf16.msra.mxu0 %v4513
      %4575 = vmatprep.subr.bf16.mxu0 0
      %4576 = vmatpush1.bf16.msra.mxu0 %v4514
      %4577 = vmatprep.subr.bf16.mxu0 0
      %4578 = vmatpush1.bf16.msra.mxu0 %v4515
      %4579 = vmatprep.subr.bf16.mxu0 0
      %4580 = vmatpush1.bf16.msra.mxu0 %v4516
      %4581 = vmatprep.subr.bf16.mxu0 0
      %4582 = vmatpush1.bf16.msra.mxu0 %v4517
      %4583 = vmatprep.subr.bf16.mxu0 0
      %4584 = vmatpush1.bf16.msra.mxu0 %v4518
      %4585 = vmatprep.subr.bf16.mxu0 0
      %4586 = vmatpush1.bf16.msra.mxu0 %v4519
      %4587 = vmatprep.subr.bf16.mxu0 0
      %4588 = vmatpush1.bf16.msra.mxu0 %v4520
      %4589 = vmatprep.subr.bf16.mxu0 0
      %4590 = vmatpush1.bf16.msra.mxu0 %v4521
      %4591 = vmatprep.subr.bf16.mxu0 0
      %4592 = vmatpush1.bf16.msra.mxu0 %v4522
      %4593 = vmatprep.subr.bf16.mxu0 0
      %4594 = vmatpush1.bf16.msra.mxu0 %v4523
      %4595 = vmatprep.subr.bf16.mxu0 0
      %4596 = vmatpush1.bf16.msra.mxu0 %v4524
      %4597 = vmatprep.subr.bf16.mxu0 0
      %4598 = vmatpush1.bf16.msra.mxu0 %v4525
      %4599 = vmatprep.mubr.bf16.mxu0 %v4381
      %4600 = vmatmul.mubr.bf16.gmra.mrb[0].mxu0 %v4380
      %v4601 = vpop.f32.mrb[0].mxu0
      %v4602 = vadd.f32 0.0, %v4601
      %v4603 = vpop.f32.mrb[0].mxu0
      %v4604 = vpop.f32.mrb[0].mxu0
      %v4605 = vadd.f32 0.0, %v4604
      %v4606 = vpop.f32.mrb[0].mxu0
      %4607 = vmatprep.mubr.bf16.mxu0 %v4384
      %4608 = vmatmul.mubr.bf16.gmra.mrb[0].mxu0 %v4383
      %v4609 = vpop.f32.mrb[0].mxu0
      %v4610 = vadd.f32 0.0, %v4609
      %v4611 = vpop.f32.mrb[0].mxu0
      %v4612 = vpop.f32.mrb[0].mxu0
      %v4613 = vadd.f32 0.0, %v4612
      %v4614 = vpop.f32.mrb[0].mxu0
      %4615 = vmatprep.mubr.bf16.mxu0 %v4387
      %4616 = vmatmul.mubr.bf16.gmra.mrb[0].mxu0 %v4386
      %v4617 = vpop.f32.mrb[0].mxu0
      %v4618 = vadd.f32 0.0, %v4617
      %v4619 = vpop.f32.mrb[0].mxu0
      %v4620 = vpop.f32.mrb[0].mxu0
      %v4621 = vadd.f32 0.0, %v4620
      %v4622 = vpop.f32.mrb[0].mxu0
      %4623 = vmatprep.mubr.bf16.mxu0 %v4390
      %4624 = vmatmul.mubr.bf16.gmra.mrb[0].mxu0 %v4389
      %v4625 = vpop.f32.mrb[0].mxu0
      %v4626 = vadd.f32 0.0, %v4625
      %v4627 = vpop.f32.mrb[0].mxu0
      %v4628 = vpop.f32.mrb[0].mxu0
      %v4629 = vadd.f32 0.0, %v4628
      %v4630 = vpop.f32.mrb[0].mxu0
      %4631 = vmatprep.mubr.bf16.mxu0 %v4393
      %4632 = vmatmul.mubr.bf16.gmra.mrb[0].mxu0 %v4392
      %v4633 = vpop.f32.mrb[0].mxu0
      %v4634 = vadd.f32 0.0, %v4633
      %v4635 = vpop.f32.mrb[0].mxu0
      %v4636 = vpop.f32.mrb[0].mxu0
      %v4637 = vadd.f32 0.0, %v4636
      %v4638 = vpop.f32.mrb[0].mxu0
      %4639 = vmatprep.mubr.bf16.mxu0 %v4396
      %4640 = vmatmul.mubr.bf16.gmra.mrb[0].mxu0 %v4395
      %v4641 = vpop.f32.mrb[0].mxu0
      %v4642 = vadd.f32 0.0, %v4641
      %v4643 = vpop.f32.mrb[0].mxu0
      %v4644 = vpop.f32.mrb[0].mxu0
      %v4645 = vadd.f32 0.0, %v4644
      %v4646 = vpop.f32.mrb[0].mxu0
      %4647 = vmatprep.mubr.bf16.mxu0 %v4399
      %4648 = vmatmul.mubr.bf16.gmra.mrb[0].mxu0 %v4398
      %v4649 = vpop.f32.mrb[0].mxu0
      %v4650 = vadd.f32 0.0, %v4649
      %v4651 = vpop.f32.mrb[0].mxu0
      %v4652 = vpop.f32.mrb[0].mxu0
      %v4653 = vpop.f32.mrb[0].mxu0
      %4654 = vdwg.mxu0
      %4655 = vmatprep.subr.bf16.mxu0 0
      %4656 = vmatpush1.bf16.msra.mxu0 %v4526
      %4657 = vmatprep.subr.bf16.mxu0 0
      %4658 = vmatpush1.bf16.msra.mxu0 %v4527
      %4659 = vmatprep.subr.bf16.mxu0 0
      %4660 = vmatpush1.bf16.msra.mxu0 0
      %4661 = vmatprep.subr.bf16.mxu0 0
      %4662 = vmatpush1.bf16.msra.mxu0 0
      %4663 = vmatprep.subr.bf16.mxu0 0
      %4664 = vmatpush1.bf16.msra.mxu0 0
      %4665 = vmatprep.subr.bf16.mxu0 0
      %4666 = vmatpush1.bf16.msra.mxu0 0
      %4667 = vmatprep.subr.bf16.mxu0 0
      %4668 = vmatpush1.bf16.msra.mxu0 0
      %4669 = vmatprep.subr.bf16.mxu0 0
      %4670 = vmatpush1.bf16.msra.mxu0 0
      %4671 = vmatprep.subr.bf16.mxu0 0
      %4672 = vmatpush1.bf16.msra.mxu0 0
      %4673 = vmatprep.subr.bf16.mxu0 0
      %4674 = vmatpush1.bf16.msra.mxu0 0
      %4675 = vmatprep.subr.bf16.mxu0 0
      %4676 = vmatpush1.bf16.msra.mxu0 0
      %4677 = vmatprep.subr.bf16.mxu0 0
      %4678 = vmatpush1.bf16.msra.mxu0 0
      %4679 = vmatprep.subr.bf16.mxu0 0
      %4680 = vmatpush1.bf16.msra.mxu0 0
      %4681 = vmatprep.subr.bf16.mxu0 0
      %4682 = vmatpush1.bf16.msra.mxu0 0
      %4683 = vmatprep.subr.bf16.mxu0 0
      %4684 = vmatpush1.bf16.msra.mxu0 0
      %4685 = vmatprep.subr.bf16.mxu0 0
      %4686 = vmatpush1.bf16.msra.mxu0 0
      %4687 = vmatprep.mubr.bf16.mxu0 0
      %4688 = vmatmul.mubr.bf16.gmra.mrb[0].mxu0 %v4547
      %v4689 = vpop.f32.mrb[0].mxu0
      %v4690 = vadd.f32 %v4602, %v4689
      %v4691 = vpop.f32.mrb[0].mxu0
      %v4692 = vpop.f32.mrb[0].mxu0
      %v4693 = vadd.f32 %v4605, %v4692
      %v4694 = vpop.f32.mrb[0].mxu0
      %4695 = vmatprep.mubr.bf16.mxu0 0
      %4696 = vmatmul.mubr.bf16.gmra.mrb[0].mxu0 %v4550
      %v4697 = vpop.f32.mrb[0].mxu0
      %v4698 = vadd.f32 %v4610, %v4697
      %v4699 = vpop.f32.mrb[0].mxu0
      %v4700 = vpop.f32.mrb[0].mxu0
      %v4701 = vadd.f32 %v4613, %v4700
      %v4702 = vpop.f32.mrb[0].mxu0
      %4703 = vmatprep.mubr.bf16.mxu0 0
      %4704 = vmatmul.mubr.bf16.gmra.mrb[0].mxu0 %v4553
      %v4705 = vpop.f32.mrb[0].mxu0
      %v4706 = vadd.f32 %v4618, %v4705
      %v4707 = vpop.f32.mrb[0].mxu0
      %v4708 = vpop.f32.mrb[0].mxu0
      %v4709 = vadd.f32 %v4621, %v4708
      %v4710 = vpop.f32.mrb[0].mxu0
      %4711 = vmatprep.mubr.bf16.mxu0 0
      %4712 = vmatmul.mubr.bf16.gmra.mrb[0].mxu0 %v4556
      %v4713 = vpop.f32.mrb[0].mxu0
      %v4714 = vadd.f32 %v4626, %v4713
      %v4715 = vpop.f32.mrb[0].mxu0
      %v4716 = vpop.f32.mrb[0].mxu0
      %v4717 = vadd.f32 %v4629, %v4716
      %v4718 = vpop.f32.mrb[0].mxu0
      %4719 = vmatprep.mubr.bf16.mxu0 0
      %4720 = vmatmul.mubr.bf16.gmra.mrb[0].mxu0 %v4559
      %v4721 = vpop.f32.mrb[0].mxu0
      %v4722 = vadd.f32 %v4634, %v4721
      %v4723 = vpop.f32.mrb[0].mxu0
      %v4724 = vpop.f32.mrb[0].mxu0
      %v4725 = vadd.f32 %v4637, %v4724
      %v4726 = vpop.f32.mrb[0].mxu0
      %4727 = vmatprep.mubr.bf16.mxu0 0
      %4728 = vmatmul.mubr.bf16.gmra.mrb[0].mxu0 %v4562
      %v4729 = vpop.f32.mrb[0].mxu0
      %v4730 = vadd.f32 %v4642, %v4729
      %v4731 = vpop.f32.mrb[0].mxu0
      %v4732 = vpop.f32.mrb[0].mxu0
      %v4733 = vadd.f32 %v4645, %v4732
      %v4734 = vpop.f32.mrb[0].mxu0
      %4735 = vmatprep.mubr.bf16.mxu0 0
      %4736 = vmatmul.mubr.bf16.gmra.mrb[0].mxu0 %v4565
      %v4737 = vpop.f32.mrb[0].mxu0
      %v4738 = vadd.f32 %v4650, %v4737
      %v4739 = vpop.f32.mrb[0].mxu0
      %v4740 = vpop.f32.mrb[0].mxu0
      %v4741 = vpop.f32.mrb[0].mxu0
      %4742 = vdwg.mxu0
      %v4744 = vsel %vm615, %v4283, 0
      %v4747 = vsel %vm615, %v4286, 0
      %v4750 = vsel %vm615, %v4289, 0
      %v4753 = vsel %vm615, %v4292, 0
      %v4756 = vsel %vm615, %v4295, 0
      %v4759 = vsel %vm615, %v4298, 0
      %v4762 = vsel %vm615, %v4301, 0
      %4764 = vmatprep.subr.bf16.mxu0 0
      %4765 = vmatpush1.bf16.msra.mxu0 %v4510
      %4766 = vmatprep.subr.bf16.mxu0 0
      %4767 = vmatpush1.bf16.msra.mxu0 %v4511
      %4768 = vmatprep.subr.bf16.mxu0 0
      %4769 = vmatpush1.bf16.msra.mxu0 %v4512
      %4770 = vmatprep.subr.bf16.mxu0 0
      %4771 = vmatpush1.bf16.msra.mxu0 %v4513
      %4772 = vmatprep.subr.bf16.mxu0 0
      %4773 = vmatpush1.bf16.msra.mxu0 %v4514
      %4774 = vmatprep.subr.bf16.mxu0 0
      %4775 = vmatpush1.bf16.msra.mxu0 %v4515
      %4776 = vmatprep.subr.bf16.mxu0 0
      %4777 = vmatpush1.bf16.msra.mxu0 %v4516
      %4778 = vmatprep.subr.bf16.mxu0 0
      %4779 = vmatpush1.bf16.msra.mxu0 %v4517
      %4780 = vmatprep.subr.bf16.mxu0 0
      %4781 = vmatpush1.bf16.msra.mxu0 %v4518
      %4782 = vmatprep.subr.bf16.mxu0 0
      %4783 = vmatpush1.bf16.msra.mxu0 %v4519
      %4784 = vmatprep.subr.bf16.mxu0 0
      %4785 = vmatpush1.bf16.msra.mxu0 %v4520
      %4786 = vmatprep.subr.bf16.mxu0 0
      %4787 = vmatpush1.bf16.msra.mxu0 %v4521
      %4788 = vmatprep.subr.bf16.mxu0 0
      %4789 = vmatpush1.bf16.msra.mxu0 %v4522
      %4790 = vmatprep.subr.bf16.mxu0 0
      %4791 = vmatpush1.bf16.msra.mxu0 %v4523
      %4792 = vmatprep.subr.bf16.mxu0 0
      %4793 = vmatpush1.bf16.msra.mxu0 %v4524
      %4794 = vmatprep.subr.bf16.mxu0 0
      %4795 = vmatpush1.bf16.msra.mxu0 %v4525
      %4796 = vmatprep.mubr.bf16.mxu0 %v4282
      %4797 = vmatmul.mubr.bf16.gmra.mrb[0].mxu0 %v4281
      %v4798 = vpop.f32.mrb[0].mxu0
      %v4799 = vadd.f32 %v4690, %v4798
      %v4800 = vpop.f32.mrb[0].mxu0
      %v4801 = vpop.f32.mrb[0].mxu0
      %v4802 = vadd.f32 %v4693, %v4801
      %v4803 = vpop.f32.mrb[0].mxu0
      %4804 = vmatprep.mubr.bf16.mxu0 %v4285
      %4805 = vmatmul.mubr.bf16.gmra.mrb[0].mxu0 %v4284
      %v4806 = vpop.f32.mrb[0].mxu0
      %v4807 = vadd.f32 %v4698, %v4806
      %v4808 = vpop.f32.mrb[0].mxu0
      %v4809 = vpop.f32.mrb[0].mxu0
      %v4810 = vadd.f32 %v4701, %v4809
      %v4811 = vpop.f32.mrb[0].mxu0
      %4812 = vmatprep.mubr.bf16.mxu0 %v4288
      %4813 = vmatmul.mubr.bf16.gmra.mrb[0].mxu0 %v4287
      %v4814 = vpop.f32.mrb[0].mxu0
      %v4815 = vadd.f32 %v4706, %v4814
      %v4816 = vpop.f32.mrb[0].mxu0
      %v4817 = vpop.f32.mrb[0].mxu0
      %v4818 = vadd.f32 %v4709, %v4817
      %v4819 = vpop.f32.mrb[0].mxu0
      %4820 = vmatprep.mubr.bf16.mxu0 %v4291
      %4821 = vmatmul.mubr.bf16.gmra.mrb[0].mxu0 %v4290
      %v4822 = vpop.f32.mrb[0].mxu0
      %v4823 = vadd.f32 %v4714, %v4822
      %v4824 = vpop.f32.mrb[0].mxu0
      %v4825 = vpop.f32.mrb[0].mxu0
      %v4826 = vadd.f32 %v4717, %v4825
      %v4827 = vpop.f32.mrb[0].mxu0
      %4828 = vmatprep.mubr.bf16.mxu0 %v4294
      %4829 = vmatmul.mubr.bf16.gmra.mrb[0].mxu0 %v4293
      %v4830 = vpop.f32.mrb[0].mxu0
      %v4831 = vadd.f32 %v4722, %v4830
      %v4832 = vpop.f32.mrb[0].mxu0
      %v4833 = vpop.f32.mrb[0].mxu0
      %v4834 = vadd.f32 %v4725, %v4833
      %v4835 = vpop.f32.mrb[0].mxu0
      %4836 = vmatprep.mubr.bf16.mxu0 %v4297
      %4837 = vmatmul.mubr.bf16.gmra.mrb[0].mxu0 %v4296
      %v4838 = vpop.f32.mrb[0].mxu0
      %v4839 = vadd.f32 %v4730, %v4838
      %v4840 = vpop.f32.mrb[0].mxu0
      %v4841 = vpop.f32.mrb[0].mxu0
      %v4842 = vadd.f32 %v4733, %v4841
      %v4843 = vpop.f32.mrb[0].mxu0
      %4844 = vmatprep.mubr.bf16.mxu0 %v4300
      %4845 = vmatmul.mubr.bf16.gmra.mrb[0].mxu0 %v4299
      %v4846 = vpop.f32.mrb[0].mxu0
      %v4847 = vadd.f32 %v4738, %v4846
      %v4848 = vpop.f32.mrb[0].mxu0
      %v4849 = vpop.f32.mrb[0].mxu0
      %v4850 = vpop.f32.mrb[0].mxu0
      %4851 = vdwg.mxu0
      %4852 = vmatprep.subr.bf16.mxu0 0
      %4853 = vmatpush1.bf16.msra.mxu0 %v4526
      %4854 = vmatprep.subr.bf16.mxu0 0
      %4855 = vmatpush1.bf16.msra.mxu0 %v4527
      %4856 = vmatprep.subr.bf16.mxu0 0
      %4857 = vmatpush1.bf16.msra.mxu0 0
      %4858 = vmatprep.subr.bf16.mxu0 0
      %4859 = vmatpush1.bf16.msra.mxu0 0
      %4860 = vmatprep.subr.bf16.mxu0 0
      %4861 = vmatpush1.bf16.msra.mxu0 0
      %4862 = vmatprep.subr.bf16.mxu0 0
      %4863 = vmatpush1.bf16.msra.mxu0 0
      %4864 = vmatprep.subr.bf16.mxu0 0
      %4865 = vmatpush1.bf16.msra.mxu0 0
      %4866 = vmatprep.subr.bf16.mxu0 0
      %4867 = vmatpush1.bf16.msra.mxu0 0
      %4868 = vmatprep.subr.bf16.mxu0 0
      %4869 = vmatpush1.bf16.msra.mxu0 0
      %4870 = vmatprep.subr.bf16.mxu0 0
      %4871 = vmatpush1.bf16.msra.mxu0 0
      %4872 = vmatprep.subr.bf16.mxu0 0
      %4873 = vmatpush1.bf16.msra.mxu0 0
      %4874 = vmatprep.subr.bf16.mxu0 0
      %4875 = vmatpush1.bf16.msra.mxu0 0
      %4876 = vmatprep.subr.bf16.mxu0 0
      %4877 = vmatpush1.bf16.msra.mxu0 0
      %4878 = vmatprep.subr.bf16.mxu0 0
      %4879 = vmatpush1.bf16.msra.mxu0 0
      %4880 = vmatprep.subr.bf16.mxu0 0
      %4881 = vmatpush1.bf16.msra.mxu0 0
      %4882 = vmatprep.subr.bf16.mxu0 0
      %4883 = vmatpush1.bf16.msra.mxu0 0
      %4884 = vmatprep.mubr.bf16.mxu0 0
      %4885 = vmatmul.mubr.bf16.gmra.mrb[0].mxu0 %v4744
      %v4886 = vpop.f32.mrb[0].mxu0
      %v4887 = vadd.f32 %v4799, %v4886
      %v4888 = vpop.f32.mrb[0].mxu0
      %v4889 = vpop.f32.mrb[0].mxu0
      %v4890 = vadd.f32 %v4802, %v4889
      %v4891 = vpop.f32.mrb[0].mxu0
      %4892 = vmatprep.mubr.bf16.mxu0 0
      %4893 = vmatmul.mubr.bf16.gmra.mrb[0].mxu0 %v4747
      %v4894 = vpop.f32.mrb[0].mxu0
      %v4895 = vadd.f32 %v4807, %v4894
      %v4896 = vpop.f32.mrb[0].mxu0
      %v4897 = vpop.f32.mrb[0].mxu0
      %v4898 = vadd.f32 %v4810, %v4897
      %v4899 = vpop.f32.mrb[0].mxu0
      %4900 = vmatprep.mubr.bf16.mxu0 0
      %4901 = vmatmul.mubr.bf16.gmra.mrb[0].mxu0 %v4750
      %v4902 = vpop.f32.mrb[0].mxu0
      %v4903 = vadd.f32 %v4815, %v4902
      %v4904 = vpop.f32.mrb[0].mxu0
      %v4905 = vpop.f32.mrb[0].mxu0
      %v4906 = vadd.f32 %v4818, %v4905
      %v4907 = vpop.f32.mrb[0].mxu0
      %4908 = vmatprep.mubr.bf16.mxu0 0
      %4909 = vmatmul.mubr.bf16.gmra.mrb[0].mxu0 %v4753
      %v4910 = vpop.f32.mrb[0].mxu0
      %v4911 = vadd.f32 %v4823, %v4910
      %v4912 = vpop.f32.mrb[0].mxu0
      %v4913 = vpop.f32.mrb[0].mxu0
      %v4914 = vadd.f32 %v4826, %v4913
      %v4915 = vpop.f32.mrb[0].mxu0
      %4916 = vmatprep.mubr.bf16.mxu0 0
      %4917 = vmatmul.mubr.bf16.gmra.mrb[0].mxu0 %v4756
      %v4918 = vpop.f32.mrb[0].mxu0
      %v4919 = vadd.f32 %v4831, %v4918
      %v4920 = vpop.f32.mrb[0].mxu0
      %v4921 = vpop.f32.mrb[0].mxu0
      %v4922 = vadd.f32 %v4834, %v4921
      %v4923 = vpop.f32.mrb[0].mxu0
      %4924 = vmatprep.mubr.bf16.mxu0 0
      %4925 = vmatmul.mubr.bf16.gmra.mrb[0].mxu0 %v4759
      %v4926 = vpop.f32.mrb[0].mxu0
      %v4927 = vadd.f32 %v4839, %v4926
      %v4928 = vpop.f32.mrb[0].mxu0
      %v4929 = vpop.f32.mrb[0].mxu0
      %v4930 = vadd.f32 %v4842, %v4929
      %v4931 = vpop.f32.mrb[0].mxu0
      %4932 = vmatprep.mubr.bf16.mxu0 0
      %4933 = vmatmul.mubr.bf16.gmra.mrb[0].mxu0 %v4762
      %v4934 = vpop.f32.mrb[0].mxu0
      %v4935 = vadd.f32 %v4847, %v4934
      %v4936 = vpop.f32.mrb[0].mxu0
      %v4937 = vpop.f32.mrb[0].mxu0
      %v4938 = vpop.f32.mrb[0].mxu0
      %4939 = vdwg.mxu0
      %s4940 = scalar_lea.vmem %s2, 3
      %v4941 = vld [vmem:[%s4940] sm:$0x1]
      %v4943 = vlaneseq
      %v4944 = vshrl.u32 %v4943, 7
      %v4945 = vsub.s32 0, %v4944
      %v4946 = vrot.slane %v4941, %v4945
      %v4948 = vadd.f32 %v4887, %v4946
      %v4949 = vadd.f32 %v4890, %v4946
      %v4950 = vadd.f32 %v4895, %v4946
      %v4951 = vadd.f32 %v4898, %v4946
      %v4952 = vadd.f32 %v4903, %v4946
      %v4953 = vadd.f32 %v4906, %v4946
      %v4954 = vadd.f32 %v4911, %v4946
      %v4955 = vadd.f32 %v4914, %v4946
      %v4956 = vadd.f32 %v4919, %v4946
      %v4957 = vadd.f32 %v4922, %v4946
      %v4958 = vadd.f32 %v4927, %v4946
      %v4959 = vadd.f32 %v4930, %v4946
      %v4960 = vadd.f32 %v4935, %v4946
      %s4961 = scalar_lea.vmem %s3, 312
      %v4962 = vld [vmem:[%s4961] sm:$0xff]
      %v4963 = vld [vmem:[%s4961 + $0x8] sm:$0xff]
      %v4964 = vld [vmem:[%s4961 + $0x10] sm:$0xff]
      %v4965 = vld [vmem:[%s4961 + $0x18] sm:$0xff]
      %v4966 = vld [vmem:[%s4961 + $0x20] sm:$0xff]
      %v4967 = vld [vmem:[%s4961 + $0x28] sm:$0xff]
      %v4968 = vld [vmem:[%s4961 + $0x30] sm:$0xff]
      %v4969 = vld [vmem:[%s4961 + $0x38] sm:$0xff]
      %v4970 = vld [vmem:[%s4961 + $0x40] sm:$0xff]
      %v4971 = vld [vmem:[%s4961 + $0x48] sm:$0xff]
      %v4972 = vld [vmem:[%s4961 + $0x50] sm:$0xff]
      %v4973 = vld [vmem:[%s4961 + $0x58] sm:$0xff]
      %v4974 = vld [vmem:[%s4961 + $0x60] sm:$0xf]
      %v4975 = vmul.f32 %v4948, %v4962
      %v4976 = vmul.f32 %v4949, %v4963
      %v4977 = vmul.f32 %v4950, %v4964
      %v4978 = vmul.f32 %v4951, %v4965
      %v4979 = vmul.f32 %v4952, %v4966
      %v4980 = vmul.f32 %v4953, %v4967
      %v4981 = vmul.f32 %v4954, %v4968
      %v4982 = vmul.f32 %v4955, %v4969
      %v4983 = vmul.f32 %v4956, %v4970
      %v4984 = vmul.f32 %v4957, %v4971
      %v4985 = vmul.f32 %v4958, %v4972
      %v4986 = vmul.f32 %v4959, %v4973
      %v4987 = vmul.f32 %v4960, %v4974
      %4988 = vst [vmem:[#allocation2 + $0x10] sm:$0xff] %v4975
      %4989 = vst [vmem:[#allocation2 + $0x18] sm:$0xff] %v4976
      %4990 = vst [vmem:[#allocation2 + $0x20] sm:$0xff] %v4977
      %4991 = vst [vmem:[#allocation2 + $0x28] sm:$0xff] %v4978
      %4992 = vst [vmem:[#allocation2 + $0x30] sm:$0xff] %v4979
      %4993 = vst [vmem:[#allocation2 + $0x38] sm:$0xff] %v4980
      %4994 = vst [vmem:[#allocation2 + $0x40] sm:$0xff] %v4981
      %4995 = vst [vmem:[#allocation2 + $0x48] sm:$0xff] %v4982
      %4996 = vst [vmem:[#allocation2 + $0x50] sm:$0xff] %v4983
      %4997 = vst [vmem:[#allocation2 + $0x58] sm:$0xff] %v4984
      %4998 = vst [vmem:[#allocation2 + $0x60] sm:$0xff] %v4985
      %4999 = vst [vmem:[#allocation2 + $0x68] sm:$0xff] %v4986
      %5000 = vst [vmem:[#allocation2 + $0x70] sm:$0xf] %v4987
      %v5001 = vld [vmem:[#allocation2 + $0x5] sm:$0xff]
      %v5002 = vld [vmem:[#allocation2 + $0xd] sm:$0xff]
      %v5003 = vld [vmem:[#allocation2 + $0x15] sm:$0xff]
      %v5004 = vld [vmem:[#allocation2 + $0x1d] sm:$0xff]
      %v5005 = vld [vmem:[#allocation2 + $0x25] sm:$0xff]
      %v5006 = vld [vmem:[#allocation2 + $0x2d] sm:$0xff]
      %v5007 = vld [vmem:[#allocation2 + $0x35] sm:$0xff]
      %v5008 = vld [vmem:[#allocation2 + $0x3d] sm:$0xff]
      %v5009 = vld [vmem:[#allocation2 + $0x45] sm:$0xff]
      %v5010 = vld [vmem:[#allocation2 + $0x4d] sm:$0xff]
      %v5011 = vld [vmem:[#allocation2 + $0x55] sm:$0xff]
      %v5012 = vld [vmem:[#allocation2 + $0x5d] sm:$0xff]
      %v5013 = vld [vmem:[#allocation2 + $0x65] sm:$0xf]
      %v5014 = vld [vmem:[#allocation2 + $0x6] sm:$0xff]
      %v5015 = vld [vmem:[#allocation2 + $0xe] sm:$0xff]
      %v5016 = vld [vmem:[#allocation2 + $0x16] sm:$0xff]
      %v5017 = vld [vmem:[#allocation2 + $0x1e] sm:$0xff]
      %v5018 = vld [vmem:[#allocation2 + $0x26] sm:$0xff]
      %v5019 = vld [vmem:[#allocation2 + $0x2e] sm:$0xff]
      %v5020 = vld [vmem:[#allocation2 + $0x36] sm:$0xff]
      %v5021 = vld [vmem:[#allocation2 + $0x3e] sm:$0xff]
      %v5022 = vld [vmem:[#allocation2 + $0x46] sm:$0xff]
      %v5023 = vld [vmem:[#allocation2 + $0x4e] sm:$0xff]
      %v5024 = vld [vmem:[#allocation2 + $0x56] sm:$0xff]
      %v5025 = vld [vmem:[#allocation2 + $0x5e] sm:$0xff]
      %v5026 = vld [vmem:[#allocation2 + $0x66] sm:$0xf]
      %v5027 = vld [vmem:[#allocation2 + $0x7] sm:$0xff]
      %v5028 = vld [vmem:[#allocation2 + $0xf] sm:$0xff]
      %v5029 = vld [vmem:[#allocation2 + $0x17] sm:$0xff]
      %v5030 = vld [vmem:[#allocation2 + $0x1f] sm:$0xff]
      %v5031 = vld [vmem:[#allocation2 + $0x27] sm:$0xff]
      %v5032 = vld [vmem:[#allocation2 + $0x2f] sm:$0xff]
      %v5033 = vld [vmem:[#allocation2 + $0x37] sm:$0xff]
      %v5034 = vld [vmem:[#allocation2 + $0x3f] sm:$0xff]
      %v5035 = vld [vmem:[#allocation2 + $0x47] sm:$0xff]
      %v5036 = vld [vmem:[#allocation2 + $0x4f] sm:$0xff]
      %v5037 = vld [vmem:[#allocation2 + $0x57] sm:$0xff]
      %v5038 = vld [vmem:[#allocation2 + $0x5f] sm:$0xff]
      %v5039 = vld [vmem:[#allocation2 + $0x67] sm:$0xf]
      %v5040 = vld [vmem:[#allocation2 + $0x67] sm:$0xff]
      %v5041 = vld [vmem:[#allocation2 + $0x6f] sm:$0xf]
      %v5042 = vld [vmem:[#allocation2 + $0x10] sm:$0xff]
      %v5043 = vld [vmem:[#allocation2 + $0x18] sm:$0xff]
      %v5044 = vld [vmem:[#allocation2 + $0x20] sm:$0xff]
      %v5045 = vld [vmem:[#allocation2 + $0x28] sm:$0xff]
      %v5046 = vld [vmem:[#allocation2 + $0x30] sm:$0xff]
      %v5047 = vld [vmem:[#allocation2 + $0x38] sm:$0xff]
      %v5048 = vld [vmem:[#allocation2 + $0x40] sm:$0xff]
      %v5049 = vld [vmem:[#allocation2 + $0x48] sm:$0xff]
      %v5050 = vld [vmem:[#allocation2 + $0x50] sm:$0xff]
      %v5051 = vld [vmem:[#allocation2 + $0x58] sm:$0xff]
      %v5052 = vld [vmem:[#allocation2 + $0x60] sm:$0xff]
      %v5053 = vld [vmem:[#allocation2 + $0x68] sm:$0xff]
      %v5054 = vld [vmem:[#allocation2 + $0x70] sm:$0xf]
      %v5055 = vld [vmem:[#allocation2 + $0x11] sm:$0xff]
      %v5056 = vld [vmem:[#allocation2 + $0x19] sm:$0xff]
      %v5057 = vld [vmem:[#allocation2 + $0x21] sm:$0xff]
      %v5058 = vld [vmem:[#allocation2 + $0x29] sm:$0xff]
      %v5059 = vld [vmem:[#allocation2 + $0x31] sm:$0xff]
      %v5060 = vld [vmem:[#allocation2 + $0x39] sm:$0xff]
      %v5061 = vld [vmem:[#allocation2 + $0x41] sm:$0xff]
      %v5062 = vld [vmem:[#allocation2 + $0x49] sm:$0xff]
      %v5063 = vld [vmem:[#allocation2 + $0x51] sm:$0xff]
      %v5064 = vld [vmem:[#allocation2 + $0x59] sm:$0xff]
      %v5065 = vld [vmem:[#allocation2 + $0x61] sm:$0xff]
      %v5066 = vld [vmem:[#allocation2 + $0x69] sm:$0xff]
      %v5067 = vld [vmem:[#allocation2 + $0x71] sm:$0xf]
      %v5068 = vld [vmem:[#allocation2 + $0x71] sm:$0xff]
      %v5069 = vld [vmem:[#allocation2 + $0x79] sm:$0xf]
      %v5070 = vld [vmem:[#allocation2 + $0x1a] sm:$0xff]
      %v5071 = vld [vmem:[#allocation2 + $0x22] sm:$0xff]
      %v5072 = vld [vmem:[#allocation2 + $0x2a] sm:$0xff]
      %v5073 = vld [vmem:[#allocation2 + $0x32] sm:$0xff]
      %v5074 = vld [vmem:[#allocation2 + $0x3a] sm:$0xff]
      %v5075 = vld [vmem:[#allocation2 + $0x42] sm:$0xff]
      %v5076 = vld [vmem:[#allocation2 + $0x4a] sm:$0xff]
      %v5077 = vld [vmem:[#allocation2 + $0x52] sm:$0xff]
      %v5078 = vld [vmem:[#allocation2 + $0x5a] sm:$0xff]
      %v5079 = vld [vmem:[#allocation2 + $0x62] sm:$0xff]
      %v5080 = vld [vmem:[#allocation2 + $0x6a] sm:$0xff]
      %v5081 = vld [vmem:[#allocation2 + $0x72] sm:$0xff]
      %v5082 = vld [vmem:[#allocation2 + $0x7a] sm:$0xf]
      %v5083 = vld [vmem:[#allocation2 + $0x1b] sm:$0xff]
      %v5084 = vld [vmem:[#allocation2 + $0x23] sm:$0xff]
      %v5085 = vld [vmem:[#allocation2 + $0x2b] sm:$0xff]
      %v5086 = vld [vmem:[#allocation2 + $0x33] sm:$0xff]
      %v5087 = vld [vmem:[#allocation2 + $0x3b] sm:$0xff]
      %v5088 = vld [vmem:[#allocation2 + $0x43] sm:$0xff]
      %v5089 = vld [vmem:[#allocation2 + $0x4b] sm:$0xff]
      %v5090 = vld [vmem:[#allocation2 + $0x53] sm:$0xff]
      %v5091 = vld [vmem:[#allocation2 + $0x5b] sm:$0xff]
      %v5092 = vld [vmem:[#allocation2 + $0x63] sm:$0xff]
      %v5093 = vld [vmem:[#allocation2 + $0x6b] sm:$0xff]
      %v5094 = vld [vmem:[#allocation2 + $0x73] sm:$0xff]
      %v5095 = vld [vmem:[#allocation2 + $0x7b] sm:$0xf]
      %5109 = vrot.lane.b32.xlu0 %v5014, 32
      %v5110 = vpop.permute.xlu0 %5109
      %5111 = vrot.lane.b32.xlu0 %v5015, 32
      %v5112 = vpop.permute.xlu0 %5111
      %5113 = vrot.lane.b32.xlu0 %v5016, 32
      %v5114 = vpop.permute.xlu0 %5113
      %5115 = vrot.lane.b32.xlu0 %v5017, 32
      %v5116 = vpop.permute.xlu0 %5115
      %5117 = vrot.lane.b32.xlu0 %v5018, 32
      %v5118 = vpop.permute.xlu0 %5117
      %5119 = vrot.lane.b32.xlu0 %v5019, 32
      %v5120 = vpop.permute.xlu0 %5119
      %5121 = vrot.lane.b32.xlu0 %v5020, 32
      %v5122 = vpop.permute.xlu0 %5121
      %5123 = vrot.lane.b32.xlu0 %v5021, 32
      %v5124 = vpop.permute.xlu0 %5123
      %5125 = vrot.lane.b32.xlu0 %v5022, 32
      %v5126 = vpop.permute.xlu0 %5125
      %5127 = vrot.lane.b32.xlu0 %v5023, 32
      %v5128 = vpop.permute.xlu0 %5127
      %5129 = vrot.lane.b32.xlu0 %v5024, 32
      %v5130 = vpop.permute.xlu0 %5129
      %5131 = vrot.lane.b32.xlu0 %v5025, 32
      %v5132 = vpop.permute.xlu0 %5131
      %5133 = vrot.lane.b32.xlu0 %v5026, 32
      %v5134 = vpop.permute.xlu0 %5133
      %5161 = vrot.lane.b32.xlu0 %v5027, 64
      %v5162 = vpop.permute.xlu0 %5161
      %5163 = vrot.lane.b32.xlu0 %v5028, 64
      %v5164 = vpop.permute.xlu0 %5163
      %5165 = vrot.lane.b32.xlu0 %v5029, 64
      %v5166 = vpop.permute.xlu0 %5165
      %5167 = vrot.lane.b32.xlu0 %v5030, 64
      %v5168 = vpop.permute.xlu0 %5167
      %5169 = vrot.lane.b32.xlu0 %v5031, 64
      %v5170 = vpop.permute.xlu0 %5169
      %5171 = vrot.lane.b32.xlu0 %v5032, 64
      %v5172 = vpop.permute.xlu0 %5171
      %5173 = vrot.lane.b32.xlu0 %v5033, 64
      %v5174 = vpop.permute.xlu0 %5173
      %5175 = vrot.lane.b32.xlu0 %v5034, 64
      %v5176 = vpop.permute.xlu0 %5175
      %5177 = vrot.lane.b32.xlu0 %v5035, 64
      %v5178 = vpop.permute.xlu0 %5177
      %5179 = vrot.lane.b32.xlu0 %v5036, 64
      %v5180 = vpop.permute.xlu0 %5179
      %5181 = vrot.lane.b32.xlu0 %v5037, 64
      %v5182 = vpop.permute.xlu0 %5181
      %5183 = vrot.lane.b32.xlu0 %v5038, 64
      %v5184 = vpop.permute.xlu0 %5183
      %5185 = vrot.lane.b32.xlu0 %v5039, 64
      %v5186 = vpop.permute.xlu0 %5185
      %5202 = vrot.lane.b32.xlu0 %v5028, 96
      %v5203 = vpop.permute.xlu0 %5202
      %5204 = vrot.lane.b32.xlu0 %v5029, 96
      %v5205 = vpop.permute.xlu0 %5204
      %5206 = vrot.lane.b32.xlu0 %v5030, 96
      %v5207 = vpop.permute.xlu0 %5206
      %5208 = vrot.lane.b32.xlu0 %v5031, 96
      %v5209 = vpop.permute.xlu0 %5208
      %5210 = vrot.lane.b32.xlu0 %v5032, 96
      %v5211 = vpop.permute.xlu0 %5210
      %5212 = vrot.lane.b32.xlu0 %v5033, 96
      %v5213 = vpop.permute.xlu0 %5212
      %5214 = vrot.lane.b32.xlu0 %v5034, 96
      %v5215 = vpop.permute.xlu0 %5214
      %5216 = vrot.lane.b32.xlu0 %v5035, 96
      %v5217 = vpop.permute.xlu0 %5216
      %5218 = vrot.lane.b32.xlu0 %v5036, 96
      %v5219 = vpop.permute.xlu0 %5218
      %5220 = vrot.lane.b32.xlu0 %v5037, 96
      %v5221 = vpop.permute.xlu0 %5220
      %5222 = vrot.lane.b32.xlu0 %v5038, 96
      %v5223 = vpop.permute.xlu0 %5222
      %5224 = vrot.lane.b32.xlu0 %v5040, 96
      %v5225 = vpop.permute.xlu0 %5224
      %5226 = vrot.lane.b32.xlu0 %v5041, 96
      %v5227 = vpop.permute.xlu0 %5226
      %5254 = vrot.lane.b32.xlu0 %v5055, 32
      %v5255 = vpop.permute.xlu0 %5254
      %5256 = vrot.lane.b32.xlu0 %v5056, 32
      %v5257 = vpop.permute.xlu0 %5256
      %5258 = vrot.lane.b32.xlu0 %v5057, 32
      %v5259 = vpop.permute.xlu0 %5258
      %5260 = vrot.lane.b32.xlu0 %v5058, 32
      %v5261 = vpop.permute.xlu0 %5260
      %5262 = vrot.lane.b32.xlu0 %v5059, 32
      %v5263 = vpop.permute.xlu0 %5262
      %5264 = vrot.lane.b32.xlu0 %v5060, 32
      %v5265 = vpop.permute.xlu0 %5264
      %5266 = vrot.lane.b32.xlu0 %v5061, 32
      %v5267 = vpop.permute.xlu0 %5266
      %5268 = vrot.lane.b32.xlu0 %v5062, 32
      %v5269 = vpop.permute.xlu0 %5268
      %5270 = vrot.lane.b32.xlu0 %v5063, 32
      %v5271 = vpop.permute.xlu0 %5270
      %5272 = vrot.lane.b32.xlu0 %v5064, 32
      %v5273 = vpop.permute.xlu0 %5272
      %5274 = vrot.lane.b32.xlu0 %v5065, 32
      %v5275 = vpop.permute.xlu0 %5274
      %5276 = vrot.lane.b32.xlu0 %v5066, 32
      %v5277 = vpop.permute.xlu0 %5276
      %5278 = vrot.lane.b32.xlu0 %v5067, 32
      %v5279 = vpop.permute.xlu0 %5278
      %5295 = vrot.lane.b32.xlu0 %v5056, 64
      %v5296 = vpop.permute.xlu0 %5295
      %5297 = vrot.lane.b32.xlu0 %v5057, 64
      %v5298 = vpop.permute.xlu0 %5297
      %5299 = vrot.lane.b32.xlu0 %v5058, 64
      %v5300 = vpop.permute.xlu0 %5299
      %5301 = vrot.lane.b32.xlu0 %v5059, 64
      %v5302 = vpop.permute.xlu0 %5301
      %5303 = vrot.lane.b32.xlu0 %v5060, 64
      %v5304 = vpop.permute.xlu0 %5303
      %5305 = vrot.lane.b32.xlu0 %v5061, 64
      %v5306 = vpop.permute.xlu0 %5305
      %5307 = vrot.lane.b32.xlu0 %v5062, 64
      %v5308 = vpop.permute.xlu0 %5307
      %5309 = vrot.lane.b32.xlu0 %v5063, 64
      %v5310 = vpop.permute.xlu0 %5309
      %5311 = vrot.lane.b32.xlu0 %v5064, 64
      %v5312 = vpop.permute.xlu0 %5311
      %5313 = vrot.lane.b32.xlu0 %v5065, 64
      %v5314 = vpop.permute.xlu0 %5313
      %5315 = vrot.lane.b32.xlu0 %v5066, 64
      %v5316 = vpop.permute.xlu0 %5315
      %5317 = vrot.lane.b32.xlu0 %v5068, 64
      %v5318 = vpop.permute.xlu0 %5317
      %5319 = vrot.lane.b32.xlu0 %v5069, 64
      %v5320 = vpop.permute.xlu0 %5319
      %5347 = vrot.lane.b32.xlu0 %v5070, 96
      %v5348 = vpop.permute.xlu0 %5347
      %5349 = vrot.lane.b32.xlu0 %v5071, 96
      %v5350 = vpop.permute.xlu0 %5349
      %5351 = vrot.lane.b32.xlu0 %v5072, 96
      %v5352 = vpop.permute.xlu0 %5351
      %5353 = vrot.lane.b32.xlu0 %v5073, 96
      %v5354 = vpop.permute.xlu0 %5353
      %5355 = vrot.lane.b32.xlu0 %v5074, 96
      %v5356 = vpop.permute.xlu0 %5355
      %5357 = vrot.lane.b32.xlu0 %v5075, 96
      %v5358 = vpop.permute.xlu0 %5357
      %5359 = vrot.lane.b32.xlu0 %v5076, 96
      %v5360 = vpop.permute.xlu0 %5359
      %5361 = vrot.lane.b32.xlu0 %v5077, 96
      %v5362 = vpop.permute.xlu0 %5361
      %5363 = vrot.lane.b32.xlu0 %v5078, 96
      %v5364 = vpop.permute.xlu0 %5363
      %5365 = vrot.lane.b32.xlu0 %v5079, 96
      %v5366 = vpop.permute.xlu0 %5365
      %5367 = vrot.lane.b32.xlu0 %v5080, 96
      %v5368 = vpop.permute.xlu0 %5367
      %5369 = vrot.lane.b32.xlu0 %v5081, 96
      %v5370 = vpop.permute.xlu0 %5369
      %5371 = vrot.lane.b32.xlu0 %v5082, 96
      %v5372 = vpop.permute.xlu0 %5371
      %v5386 = vsel %vm615, %v5001, %v5110
      %v5387 = vsel %vm615, %v5002, %v5112
      %v5388 = vsel %vm615, %v5003, %v5114
      %v5389 = vsel %vm615, %v5004, %v5116
      %v5390 = vsel %vm615, %v5005, %v5118
      %v5391 = vsel %vm615, %v5006, %v5120
      %v5392 = vsel %vm615, %v5007, %v5122
      %v5393 = vsel %vm615, %v5008, %v5124
      %v5394 = vsel %vm615, %v5009, %v5126
      %v5395 = vsel %vm615, %v5010, %v5128
      %v5396 = vsel %vm615, %v5011, %v5130
      %v5397 = vsel %vm615, %v5012, %v5132
      %v5398 = vsel %vm615, %v5013, %v5134
      %v5399 = vsel %vm629, %v5386, %v5162
      %v5400 = vsel %vm629, %v5387, %v5164
      %v5401 = vsel %vm629, %v5388, %v5166
      %v5402 = vsel %vm629, %v5389, %v5168
      %v5403 = vsel %vm629, %v5390, %v5170
      %v5404 = vsel %vm629, %v5391, %v5172
      %v5405 = vsel %vm629, %v5392, %v5174
      %v5406 = vsel %vm629, %v5393, %v5176
      %v5407 = vsel %vm629, %v5394, %v5178
      %v5408 = vsel %vm629, %v5395, %v5180
      %v5409 = vsel %vm629, %v5396, %v5182
      %v5410 = vsel %vm629, %v5397, %v5184
      %v5411 = vsel %vm629, %v5398, %v5186
      %v5412 = vsel %vm643, %v5399, %v5203
      %v5413 = vsel %vm643, %v5400, %v5205
      %v5414 = vsel %vm643, %v5401, %v5207
      %v5415 = vsel %vm643, %v5402, %v5209
      %v5416 = vsel %vm643, %v5403, %v5211
      %v5417 = vsel %vm643, %v5404, %v5213
      %v5418 = vsel %vm643, %v5405, %v5215
      %v5419 = vsel %vm643, %v5406, %v5217
      %v5420 = vsel %vm643, %v5407, %v5219
      %v5421 = vsel %vm643, %v5408, %v5221
      %v5422 = vsel %vm643, %v5409, %v5223
      %v5423 = vsel %vm643, %v5410, %v5225
      %v5424 = vsel %vm643, %v5411, %v5227
      %v5425 = vsel %vm615, %v5042, %v5255
      %v5426 = vsel %vm615, %v5043, %v5257
      %v5427 = vsel %vm615, %v5044, %v5259
      %v5428 = vsel %vm615, %v5045, %v5261
      %v5429 = vsel %vm615, %v5046, %v5263
      %v5430 = vsel %vm615, %v5047, %v5265
      %v5431 = vsel %vm615, %v5048, %v5267
      %v5432 = vsel %vm615, %v5049, %v5269
      %v5433 = vsel %vm615, %v5050, %v5271
      %v5434 = vsel %vm615, %v5051, %v5273
      %v5435 = vsel %vm615, %v5052, %v5275
      %v5436 = vsel %vm615, %v5053, %v5277
      %v5437 = vsel %vm615, %v5054, %v5279
      %v5438 = vsel %vm629, %v5425, %v5296
      %v5439 = vsel %vm629, %v5426, %v5298
      %v5440 = vsel %vm629, %v5427, %v5300
      %v5441 = vsel %vm629, %v5428, %v5302
      %v5442 = vsel %vm629, %v5429, %v5304
      %v5443 = vsel %vm629, %v5430, %v5306
      %v5444 = vsel %vm629, %v5431, %v5308
      %v5445 = vsel %vm629, %v5432, %v5310
      %v5446 = vsel %vm629, %v5433, %v5312
      %v5447 = vsel %vm629, %v5434, %v5314
      %v5448 = vsel %vm629, %v5435, %v5316
      %v5449 = vsel %vm629, %v5436, %v5318
      %v5450 = vsel %vm629, %v5437, %v5320
      %v5451 = vsel %vm643, %v5438, %v5348
      %v5452 = vsel %vm643, %v5439, %v5350
      %v5453 = vsel %vm643, %v5440, %v5352
      %v5454 = vsel %vm643, %v5441, %v5354
      %v5455 = vsel %vm643, %v5442, %v5356
      %v5456 = vsel %vm643, %v5443, %v5358
      %v5457 = vsel %vm643, %v5444, %v5360
      %v5458 = vsel %vm643, %v5445, %v5362
      %v5459 = vsel %vm643, %v5446, %v5364
      %v5460 = vsel %vm643, %v5447, %v5366
      %v5461 = vsel %vm643, %v5448, %v5368
      %v5462 = vsel %vm643, %v5449, %v5370
      %v5463 = vsel %vm643, %v5450, %v5372
      %v5464 = vpack.c.bf16 %v5413, %v5412
      %v5465 = vpack.c.bf16 %v5452, %v5451
      %v5466 = vpack.c.bf16 %v5084, %v5083
      %v5467 = vpack.c.bf16 %v5415, %v5414
      %v5468 = vpack.c.bf16 %v5454, %v5453
      %v5469 = vpack.c.bf16 %v5086, %v5085
      %v5470 = vpack.c.bf16 %v5417, %v5416
      %v5471 = vpack.c.bf16 %v5456, %v5455
      %v5472 = vpack.c.bf16 %v5088, %v5087
      %v5473 = vpack.c.bf16 %v5419, %v5418
      %v5474 = vpack.c.bf16 %v5458, %v5457
      %v5475 = vpack.c.bf16 %v5090, %v5089
      %v5476 = vpack.c.bf16 %v5421, %v5420
      %v5477 = vpack.c.bf16 %v5460, %v5459
      %v5478 = vpack.c.bf16 %v5092, %v5091
      %v5479 = vpack.c.bf16 %v5423, %v5422
      %v5480 = vpack.c.bf16 %v5462, %v5461
      %v5481 = vpack.c.bf16 %v5094, %v5093
      %v5482 = vpack.c.bf16 %v5424, %v5424
      %v5483 = vpack.c.bf16 %v5463, %v5463
      %v5484 = vpack.c.bf16 %v5095, %v5095
      %v5485 = vunpack.c.l.bf16 %v5464
      %v5486 = vunpack.c.l.bf16 %v5465
      %v5487 = vunpack.c.l.bf16 %v5466
      %v5488 = vunpack.c.h.bf16 %v5464
      %v5489 = vunpack.c.h.bf16 %v5465
      %v5490 = vunpack.c.h.bf16 %v5466
      %v5491 = vunpack.c.l.bf16 %v5467
      %v5492 = vunpack.c.l.bf16 %v5468
      %v5493 = vunpack.c.l.bf16 %v5469
      %v5494 = vunpack.c.h.bf16 %v5467
      %v5495 = vunpack.c.h.bf16 %v5468
      %v5496 = vunpack.c.h.bf16 %v5469
      %v5497 = vunpack.c.l.bf16 %v5470
      %v5498 = vunpack.c.l.bf16 %v5471
      %v5499 = vunpack.c.l.bf16 %v5472
      %v5500 = vunpack.c.h.bf16 %v5470
      %v5501 = vunpack.c.h.bf16 %v5471
      %v5502 = vunpack.c.h.bf16 %v5472
      %v5503 = vunpack.c.l.bf16 %v5473
      %v5504 = vunpack.c.l.bf16 %v5474
      %v5505 = vunpack.c.l.bf16 %v5475
      %v5506 = vunpack.c.h.bf16 %v5473
      %v5507 = vunpack.c.h.bf16 %v5474
      %v5508 = vunpack.c.h.bf16 %v5475
      %v5509 = vunpack.c.l.bf16 %v5476
      %v5510 = vunpack.c.l.bf16 %v5477
      %v5511 = vunpack.c.l.bf16 %v5478
      %v5512 = vunpack.c.h.bf16 %v5476
      %v5513 = vunpack.c.h.bf16 %v5477
      %v5514 = vunpack.c.h.bf16 %v5478
      %v5515 = vunpack.c.l.bf16 %v5479
      %v5516 = vunpack.c.l.bf16 %v5480
      %v5517 = vunpack.c.l.bf16 %v5481
      %v5518 = vunpack.c.h.bf16 %v5479
      %v5519 = vunpack.c.h.bf16 %v5480
      %v5520 = vunpack.c.h.bf16 %v5481
      %v5521 = vunpack.c.l.bf16 %v5482
      %v5522 = vunpack.c.l.bf16 %v5483
      %v5523 = vunpack.c.l.bf16 %v5484
      %v5524 = vsub.f32 %v5412, %v5485
      %v5525 = vsub.f32 %v5451, %v5486
      %v5526 = vsub.f32 %v5083, %v5487
      %v5527 = vsub.f32 %v5413, %v5488
      %v5528 = vsub.f32 %v5452, %v5489
      %v5529 = vsub.f32 %v5084, %v5490
      %v5530 = vsub.f32 %v5414, %v5491
      %v5531 = vsub.f32 %v5453, %v5492
      %v5532 = vsub.f32 %v5085, %v5493
      %v5533 = vsub.f32 %v5415, %v5494
      %v5534 = vsub.f32 %v5454, %v5495
      %v5535 = vsub.f32 %v5086, %v5496
      %v5536 = vsub.f32 %v5416, %v5497
      %v5537 = vsub.f32 %v5455, %v5498
      %v5538 = vsub.f32 %v5087, %v5499
      %v5539 = vsub.f32 %v5417, %v5500
      %v5540 = vsub.f32 %v5456, %v5501
      %v5541 = vsub.f32 %v5088, %v5502
      %v5542 = vsub.f32 %v5418, %v5503
      %v5543 = vsub.f32 %v5457, %v5504
      %v5544 = vsub.f32 %v5089, %v5505
      %v5545 = vsub.f32 %v5419, %v5506
      %v5546 = vsub.f32 %v5458, %v5507
      %v5547 = vsub.f32 %v5090, %v5508
      %v5548 = vsub.f32 %v5420, %v5509
      %v5549 = vsub.f32 %v5459, %v5510
      %v5550 = vsub.f32 %v5091, %v5511
      %v5551 = vsub.f32 %v5421, %v5512
      %v5552 = vsub.f32 %v5460, %v5513
      %v5553 = vsub.f32 %v5092, %v5514
      %v5554 = vsub.f32 %v5422, %v5515
      %v5555 = vsub.f32 %v5461, %v5516
      %v5556 = vsub.f32 %v5093, %v5517
      %v5557 = vsub.f32 %v5423, %v5518
      %v5558 = vsub.f32 %v5462, %v5519
      %v5559 = vsub.f32 %v5094, %v5520
      %v5560 = vsub.f32 %v5424, %v5521
      %v5561 = vsub.f32 %v5463, %v5522
      %v5562 = vsub.f32 %v5095, %v5523
      %v5563 = vpack.c.bf16 %v5527, %v5524
      %v5564 = vpack.c.bf16 %v5528, %v5525
      %v5565 = vpack.c.bf16 %v5529, %v5526
      %v5566 = vpack.c.bf16 %v5533, %v5530
      %v5567 = vpack.c.bf16 %v5534, %v5531
      %v5568 = vpack.c.bf16 %v5535, %v5532
      %v5569 = vpack.c.bf16 %v5539, %v5536
      %v5570 = vpack.c.bf16 %v5540, %v5537
      %v5571 = vpack.c.bf16 %v5541, %v5538
      %v5572 = vpack.c.bf16 %v5545, %v5542
      %v5573 = vpack.c.bf16 %v5546, %v5543
      %v5574 = vpack.c.bf16 %v5547, %v5544
      %v5575 = vpack.c.bf16 %v5551, %v5548
      %v5576 = vpack.c.bf16 %v5552, %v5549
      %v5577 = vpack.c.bf16 %v5553, %v5550
      %v5578 = vpack.c.bf16 %v5557, %v5554
      %v5579 = vpack.c.bf16 %v5558, %v5555
      %v5580 = vpack.c.bf16 %v5559, %v5556
      %v5581 = vpack.c.bf16 %v5560, %v5560
      %v5582 = vpack.c.bf16 %v5561, %v5561
      %v5583 = vpack.c.bf16 %v5562, %v5562
      %s5584 = scalar_lea.vmem %s1, 576
      %v5585 = vld [vmem:[%s5584] sm:$0xf]
      %v5586 = vld [vmem:[%s5584 + $0x4] sm:$0xf]
      %v5587 = vld [vmem:[%s5584 + $0x8] sm:$0xf]
      %v5588 = vld [vmem:[%s5584 + $0xc] sm:$0xf]
      %v5589 = vld [vmem:[%s5584 + $0x10] sm:$0xf]
      %v5590 = vld [vmem:[%s5584 + $0x14] sm:$0xf]
      %v5591 = vld [vmem:[%s5584 + $0x18] sm:$0xf]
      %v5592 = vld [vmem:[%s5584 + $0x1c] sm:$0xf]
      %v5593 = vld [vmem:[%s5584 + $0x20] sm:$0xf]
      %v5594 = vld [vmem:[%s5584 + $0x24] sm:$0xf]
      %v5595 = vld [vmem:[%s5584 + $0x28] sm:$0xf]
      %v5596 = vld [vmem:[%s5584 + $0x2c] sm:$0xf]
      %v5597 = vld [vmem:[%s5584 + $0x30] sm:$0xf]
      %v5598 = vld [vmem:[%s5584 + $0x34] sm:$0xf]
      %v5599 = vld [vmem:[%s5584 + $0x38] sm:$0xf]
      %v5600 = vld [vmem:[%s5584 + $0x3c] sm:$0xf]
      %v5601 = vld [vmem:[%s5584 + $0x40] sm:$0xf]
      %v5602 = vld [vmem:[%s5584 + $0x44] sm:$0xf]
      %v5603 = vld [vmem:[%s5584 + $0x48] sm:$0xf]
      %v5604 = vld [vmem:[%s5584 + $0x4c] sm:$0xf]
      %v5605 = vld [vmem:[%s5584 + $0x50] sm:$0xf]
      %v5606 = vld [vmem:[%s5584 + $0x54] sm:$0xf]
      %v5607 = vld [vmem:[%s5584 + $0x58] sm:$0xf]
      %v5608 = vld [vmem:[%s5584 + $0x5c] sm:$0xf]
      %v5609 = vld [vmem:[%s5584 + $0x60] sm:$0xf]
      %v5610 = vld [vmem:[%s5584 + $0x64] sm:$0xf]
      %v5611 = vld [vmem:[%s5584 + $0x68] sm:$0xf]
      %v5612 = vld [vmem:[%s5584 + $0x6c] sm:$0xf]
      %v5613 = vld [vmem:[%s5584 + $0x70] sm:$0xf]
      %v5614 = vld [vmem:[%s5584 + $0x74] sm:$0xf]
      %v5615 = vld [vmem:[%s5584 + $0x78] sm:$0xf]
      %v5616 = vld [vmem:[%s5584 + $0x7c] sm:$0xf]
      %v5617 = vld [vmem:[%s5584 + $0x80] sm:$0xf]
      %v5618 = vld [vmem:[%s5584 + $0x84] sm:$0xf]
      %v5619 = vld [vmem:[%s5584 + $0x88] sm:$0xf]
      %v5620 = vld [vmem:[%s5584 + $0x8c] sm:$0xf]
      %v5657 = vunpack.c.l.b16 %v5585
      %v5658 = vunpack.c.l.b16 %v5586
      %v5659 = vunpack.c.l.b16 %v5587
      %v5660 = vunpack.c.l.b16 %v5588
      %v5661 = vunpack.c.l.b16 %v5589
      %v5662 = vunpack.c.l.b16 %v5590
      %v5663 = vunpack.c.l.b16 %v5591
      %v5664 = vunpack.c.l.b16 %v5592
      %v5665 = vunpack.c.l.b16 %v5593
      %v5666 = vunpack.c.l.b16 %v5594
      %v5667 = vunpack.c.l.b16 %v5595
      %v5668 = vunpack.c.l.b16 %v5596
      %v5669 = vunpack.c.l.b16 %v5597
      %v5670 = vunpack.c.l.b16 %v5598
      %v5671 = vunpack.c.l.b16 %v5599
      %v5672 = vunpack.c.l.b16 %v5600
      %v5673 = vunpack.c.l.b16 %v5601
      %v5674 = vunpack.c.l.b16 %v5602
      %v5675 = vunpack.c.l.b16 %v5603
      %v5676 = vunpack.c.l.b16 %v5604
      %v5677 = vunpack.c.l.b16 %v5605
      %v5678 = vunpack.c.l.b16 %v5606
      %v5679 = vunpack.c.l.b16 %v5607
      %v5680 = vunpack.c.l.b16 %v5608
      %v5681 = vunpack.c.l.b16 %v5609
      %v5682 = vunpack.c.l.b16 %v5610
      %v5683 = vunpack.c.l.b16 %v5611
      %v5684 = vunpack.c.l.b16 %v5612
      %v5685 = vunpack.c.l.b16 %v5613
      %v5686 = vunpack.c.l.b16 %v5614
      %v5687 = vunpack.c.l.b16 %v5615
      %v5688 = vunpack.c.l.b16 %v5616
      %v5689 = vunpack.c.l.b16 %v5617
      %v5690 = vunpack.c.l.b16 %v5618
      %v5691 = vunpack.c.l.b16 %v5619
      %v5692 = vunpack.c.l.b16 %v5620
      %v5693 = vpack.c.b16 %v5658, %v5657
      %v5694 = vpack.c.b16 %v5660, %v5659
      %v5695 = vpack.c.b16 %v5662, %v5661
      %v5696 = vpack.c.b16 %v5664, %v5663
      %v5697 = vpack.c.b16 %v5666, %v5665
      %v5698 = vpack.c.b16 %v5668, %v5667
      %v5699 = vpack.c.b16 %v5670, %v5669
      %v5700 = vpack.c.b16 %v5672, %v5671
      %v5701 = vpack.c.b16 %v5674, %v5673
      %v5702 = vpack.c.b16 %v5676, %v5675
      %v5703 = vpack.c.b16 %v5678, %v5677
      %v5704 = vpack.c.b16 %v5680, %v5679
      %v5705 = vpack.c.b16 %v5682, %v5681
      %v5706 = vpack.c.b16 %v5684, %v5683
      %v5707 = vpack.c.b16 %v5686, %v5685
      %v5708 = vpack.c.b16 %v5688, %v5687
      %v5709 = vpack.c.b16 %v5690, %v5689
      %v5710 = vpack.c.b16 %v5692, %v5691
      %v5730 = vsel %vm615, %v5565, 0
      %v5733 = vsel %vm615, %v5568, 0
      %v5736 = vsel %vm615, %v5571, 0
      %v5739 = vsel %vm615, %v5574, 0
      %v5742 = vsel %vm615, %v5577, 0
      %v5745 = vsel %vm615, %v5580, 0
      %v5748 = vsel %vm615, %v5583, 0
      %5750 = vmatprep.subr.bf16.mxu0 0
      %5751 = vmatpush1.bf16.msra.mxu0 %v5693
      %5752 = vmatprep.subr.bf16.mxu0 0
      %5753 = vmatpush1.bf16.msra.mxu0 %v5694
      %5754 = vmatprep.subr.bf16.mxu0 0
      %5755 = vmatpush1.bf16.msra.mxu0 %v5695
      %5756 = vmatprep.subr.bf16.mxu0 0
      %5757 = vmatpush1.bf16.msra.mxu0 %v5696
      %5758 = vmatprep.subr.bf16.mxu0 0
      %5759 = vmatpush1.bf16.msra.mxu0 %v5697
      %5760 = vmatprep.subr.bf16.mxu0 0
      %5761 = vmatpush1.bf16.msra.mxu0 %v5698
      %5762 = vmatprep.subr.bf16.mxu0 0
      %5763 = vmatpush1.bf16.msra.mxu0 %v5699
      %5764 = vmatprep.subr.bf16.mxu0 0
      %5765 = vmatpush1.bf16.msra.mxu0 %v5700
      %5766 = vmatprep.subr.bf16.mxu0 0
      %5767 = vmatpush1.bf16.msra.mxu0 %v5701
      %5768 = vmatprep.subr.bf16.mxu0 0
      %5769 = vmatpush1.bf16.msra.mxu0 %v5702
      %5770 = vmatprep.subr.bf16.mxu0 0
      %5771 = vmatpush1.bf16.msra.mxu0 %v5703
      %5772 = vmatprep.subr.bf16.mxu0 0
      %5773 = vmatpush1.bf16.msra.mxu0 %v5704
      %5774 = vmatprep.subr.bf16.mxu0 0
      %5775 = vmatpush1.bf16.msra.mxu0 %v5705
      %5776 = vmatprep.subr.bf16.mxu0 0
      %5777 = vmatpush1.bf16.msra.mxu0 %v5706
      %5778 = vmatprep.subr.bf16.mxu0 0
      %5779 = vmatpush1.bf16.msra.mxu0 %v5707
      %5780 = vmatprep.subr.bf16.mxu0 0
      %5781 = vmatpush1.bf16.msra.mxu0 %v5708
      %5782 = vmatprep.mubr.bf16.mxu0 %v5564
      %5783 = vmatmul.mubr.bf16.gmra.mrb[0].mxu0 %v5563
      %v5784 = vpop.f32.mrb[0].mxu0
      %v5785 = vadd.f32 0.0, %v5784
      %v5786 = vpop.f32.mrb[0].mxu0
      %v5787 = vpop.f32.mrb[0].mxu0
      %v5788 = vadd.f32 0.0, %v5787
      %v5789 = vpop.f32.mrb[0].mxu0
      %5790 = vmatprep.mubr.bf16.mxu0 %v5567
      %5791 = vmatmul.mubr.bf16.gmra.mrb[0].mxu0 %v5566
      %v5792 = vpop.f32.mrb[0].mxu0
      %v5793 = vadd.f32 0.0, %v5792
      %v5794 = vpop.f32.mrb[0].mxu0
      %v5795 = vpop.f32.mrb[0].mxu0
      %v5796 = vadd.f32 0.0, %v5795
      %v5797 = vpop.f32.mrb[0].mxu0
      %5798 = vmatprep.mubr.bf16.mxu0 %v5570
      %5799 = vmatmul.mubr.bf16.gmra.mrb[0].mxu0 %v5569
      %v5800 = vpop.f32.mrb[0].mxu0
      %v5801 = vadd.f32 0.0, %v5800
      %v5802 = vpop.f32.mrb[0].mxu0
      %v5803 = vpop.f32.mrb[0].mxu0
      %v5804 = vadd.f32 0.0, %v5803
      %v5805 = vpop.f32.mrb[0].mxu0
      %5806 = vmatprep.mubr.bf16.mxu0 %v5573
      %5807 = vmatmul.mubr.bf16.gmra.mrb[0].mxu0 %v5572
      %v5808 = vpop.f32.mrb[0].mxu0
      %v5809 = vadd.f32 0.0, %v5808
      %v5810 = vpop.f32.mrb[0].mxu0
      %v5811 = vpop.f32.mrb[0].mxu0
      %v5812 = vadd.f32 0.0, %v5811
      %v5813 = vpop.f32.mrb[0].mxu0
      %5814 = vmatprep.mubr.bf16.mxu0 %v5576
      %5815 = vmatmul.mubr.bf16.gmra.mrb[0].mxu0 %v5575
      %v5816 = vpop.f32.mrb[0].mxu0
      %v5817 = vadd.f32 0.0, %v5816
      %v5818 = vpop.f32.mrb[0].mxu0
      %v5819 = vpop.f32.mrb[0].mxu0
      %v5820 = vadd.f32 0.0, %v5819
      %v5821 = vpop.f32.mrb[0].mxu0
      %5822 = vmatprep.mubr.bf16.mxu0 %v5579
      %5823 = vmatmul.mubr.bf16.gmra.mrb[0].mxu0 %v5578
      %v5824 = vpop.f32.mrb[0].mxu0
      %v5825 = vadd.f32 0.0, %v5824
      %v5826 = vpop.f32.mrb[0].mxu0
      %v5827 = vpop.f32.mrb[0].mxu0
      %v5828 = vadd.f32 0.0, %v5827
      %v5829 = vpop.f32.mrb[0].mxu0
      %5830 = vmatprep.mubr.bf16.mxu0 %v5582
      %5831 = vmatmul.mubr.bf16.gmra.mrb[0].mxu0 %v5581
      %v5832 = vpop.f32.mrb[0].mxu0
      %v5833 = vadd.f32 0.0, %v5832
      %v5834 = vpop.f32.mrb[0].mxu0
      %v5835 = vpop.f32.mrb[0].mxu0
      %v5836 = vpop.f32.mrb[0].mxu0
      %5837 = vdwg.mxu0
      %5838 = vmatprep.subr.bf16.mxu0 0
      %5839 = vmatpush1.bf16.msra.mxu0 %v5709
      %5840 = vmatprep.subr.bf16.mxu0 0
      %5841 = vmatpush1.bf16.msra.mxu0 %v5710
      %5842 = vmatprep.subr.bf16.mxu0 0
      %5843 = vmatpush1.bf16.msra.mxu0 0
      %5844 = vmatprep.subr.bf16.mxu0 0
      %5845 = vmatpush1.bf16.msra.mxu0 0
      %5846 = vmatprep.subr.bf16.mxu0 0
      %5847 = vmatpush1.bf16.msra.mxu0 0
      %5848 = vmatprep.subr.bf16.mxu0 0
      %5849 = vmatpush1.bf16.msra.mxu0 0
      %5850 = vmatprep.subr.bf16.mxu0 0
      %5851 = vmatpush1.bf16.msra.mxu0 0
      %5852 = vmatprep.subr.bf16.mxu0 0
      %5853 = vmatpush1.bf16.msra.mxu0 0
      %5854 = vmatprep.subr.bf16.mxu0 0
      %5855 = vmatpush1.bf16.msra.mxu0 0
      %5856 = vmatprep.subr.bf16.mxu0 0
      %5857 = vmatpush1.bf16.msra.mxu0 0
      %5858 = vmatprep.subr.bf16.mxu0 0
      %5859 = vmatpush1.bf16.msra.mxu0 0
      %5860 = vmatprep.subr.bf16.mxu0 0
      %5861 = vmatpush1.bf16.msra.mxu0 0
      %5862 = vmatprep.subr.bf16.mxu0 0
      %5863 = vmatpush1.bf16.msra.mxu0 0
      %5864 = vmatprep.subr.bf16.mxu0 0
      %5865 = vmatpush1.bf16.msra.mxu0 0
      %5866 = vmatprep.subr.bf16.mxu0 0
      %5867 = vmatpush1.bf16.msra.mxu0 0
      %5868 = vmatprep.subr.bf16.mxu0 0
      %5869 = vmatpush1.bf16.msra.mxu0 0
      %5870 = vmatprep.mubr.bf16.mxu0 0
      %5871 = vmatmul.mubr.bf16.gmra.mrb[0].mxu0 %v5730
      %v5872 = vpop.f32.mrb[0].mxu0
      %v5873 = vadd.f32 %v5785, %v5872
      %v5874 = vpop.f32.mrb[0].mxu0
      %v5875 = vpop.f32.mrb[0].mxu0
      %v5876 = vadd.f32 %v5788, %v5875
      %v5877 = vpop.f32.mrb[0].mxu0
      %5878 = vmatprep.mubr.bf16.mxu0 0
      %5879 = vmatmul.mubr.bf16.gmra.mrb[0].mxu0 %v5733
      %v5880 = vpop.f32.mrb[0].mxu0
      %v5881 = vadd.f32 %v5793, %v5880
      %v5882 = vpop.f32.mrb[0].mxu0
      %v5883 = vpop.f32.mrb[0].mxu0
      %v5884 = vadd.f32 %v5796, %v5883
      %v5885 = vpop.f32.mrb[0].mxu0
      %5886 = vmatprep.mubr.bf16.mxu0 0
      %5887 = vmatmul.mubr.bf16.gmra.mrb[0].mxu0 %v5736
      %v5888 = vpop.f32.mrb[0].mxu0
      %v5889 = vadd.f32 %v5801, %v5888
      %v5890 = vpop.f32.mrb[0].mxu0
      %v5891 = vpop.f32.mrb[0].mxu0
      %v5892 = vadd.f32 %v5804, %v5891
      %v5893 = vpop.f32.mrb[0].mxu0
      %5894 = vmatprep.mubr.bf16.mxu0 0
      %5895 = vmatmul.mubr.bf16.gmra.mrb[0].mxu0 %v5739
      %v5896 = vpop.f32.mrb[0].mxu0
      %v5897 = vadd.f32 %v5809, %v5896
      %v5898 = vpop.f32.mrb[0].mxu0
      %v5899 = vpop.f32.mrb[0].mxu0
      %v5900 = vadd.f32 %v5812, %v5899
      %v5901 = vpop.f32.mrb[0].mxu0
      %5902 = vmatprep.mubr.bf16.mxu0 0
      %5903 = vmatmul.mubr.bf16.gmra.mrb[0].mxu0 %v5742
      %v5904 = vpop.f32.mrb[0].mxu0
      %v5905 = vadd.f32 %v5817, %v5904
      %v5906 = vpop.f32.mrb[0].mxu0
      %v5907 = vpop.f32.mrb[0].mxu0
      %v5908 = vadd.f32 %v5820, %v5907
      %v5909 = vpop.f32.mrb[0].mxu0
      %5910 = vmatprep.mubr.bf16.mxu0 0
      %5911 = vmatmul.mubr.bf16.gmra.mrb[0].mxu0 %v5745
      %v5912 = vpop.f32.mrb[0].mxu0
      %v5913 = vadd.f32 %v5825, %v5912
      %v5914 = vpop.f32.mrb[0].mxu0
      %v5915 = vpop.f32.mrb[0].mxu0
      %v5916 = vadd.f32 %v5828, %v5915
      %v5917 = vpop.f32.mrb[0].mxu0
      %5918 = vmatprep.mubr.bf16.mxu0 0
      %5919 = vmatmul.mubr.bf16.gmra.mrb[0].mxu0 %v5748
      %v5920 = vpop.f32.mrb[0].mxu0
      %v5921 = vadd.f32 %v5833, %v5920
      %v5922 = vpop.f32.mrb[0].mxu0
      %v5923 = vpop.f32.mrb[0].mxu0
      %v5924 = vpop.f32.mrb[0].mxu0
      %5925 = vdwg.mxu0
      %v5927 = vsel %vm615, %v5466, 0
      %v5930 = vsel %vm615, %v5469, 0
      %v5933 = vsel %vm615, %v5472, 0
      %v5936 = vsel %vm615, %v5475, 0
      %v5939 = vsel %vm615, %v5478, 0
      %v5942 = vsel %vm615, %v5481, 0
      %v5945 = vsel %vm615, %v5484, 0
      %5947 = vmatprep.subr.bf16.mxu0 0
      %5948 = vmatpush1.bf16.msra.mxu0 %v5693
      %5949 = vmatprep.subr.bf16.mxu0 0
      %5950 = vmatpush1.bf16.msra.mxu0 %v5694
      %5951 = vmatprep.subr.bf16.mxu0 0
      %5952 = vmatpush1.bf16.msra.mxu0 %v5695
      %5953 = vmatprep.subr.bf16.mxu0 0
      %5954 = vmatpush1.bf16.msra.mxu0 %v5696
      %5955 = vmatprep.subr.bf16.mxu0 0
      %5956 = vmatpush1.bf16.msra.mxu0 %v5697
      %5957 = vmatprep.subr.bf16.mxu0 0
      %5958 = vmatpush1.bf16.msra.mxu0 %v5698
      %5959 = vmatprep.subr.bf16.mxu0 0
      %5960 = vmatpush1.bf16.msra.mxu0 %v5699
      %5961 = vmatprep.subr.bf16.mxu0 0
      %5962 = vmatpush1.bf16.msra.mxu0 %v5700
      %5963 = vmatprep.subr.bf16.mxu0 0
      %5964 = vmatpush1.bf16.msra.mxu0 %v5701
      %5965 = vmatprep.subr.bf16.mxu0 0
      %5966 = vmatpush1.bf16.msra.mxu0 %v5702
      %5967 = vmatprep.subr.bf16.mxu0 0
      %5968 = vmatpush1.bf16.msra.mxu0 %v5703
      %5969 = vmatprep.subr.bf16.mxu0 0
      %5970 = vmatpush1.bf16.msra.mxu0 %v5704
      %5971 = vmatprep.subr.bf16.mxu0 0
      %5972 = vmatpush1.bf16.msra.mxu0 %v5705
      %5973 = vmatprep.subr.bf16.mxu0 0
      %5974 = vmatpush1.bf16.msra.mxu0 %v5706
      %5975 = vmatprep.subr.bf16.mxu0 0
      %5976 = vmatpush1.bf16.msra.mxu0 %v5707
      %5977 = vmatprep.subr.bf16.mxu0 0
      %5978 = vmatpush1.bf16.msra.mxu0 %v5708
      %5979 = vmatprep.mubr.bf16.mxu0 %v5465
      %5980 = vmatmul.mubr.bf16.gmra.mrb[0].mxu0 %v5464
      %v5981 = vpop.f32.mrb[0].mxu0
      %v5982 = vadd.f32 %v5873, %v5981
      %v5983 = vpop.f32.mrb[0].mxu0
      %v5984 = vpop.f32.mrb[0].mxu0
      %v5985 = vadd.f32 %v5876, %v5984
      %v5986 = vpop.f32.mrb[0].mxu0
      %5987 = vmatprep.mubr.bf16.mxu0 %v5468
      %5988 = vmatmul.mubr.bf16.gmra.mrb[0].mxu0 %v5467
      %v5989 = vpop.f32.mrb[0].mxu0
      %v5990 = vadd.f32 %v5881, %v5989
      %v5991 = vpop.f32.mrb[0].mxu0
      %v5992 = vpop.f32.mrb[0].mxu0
      %v5993 = vadd.f32 %v5884, %v5992
      %v5994 = vpop.f32.mrb[0].mxu0
      %5995 = vmatprep.mubr.bf16.mxu0 %v5471
      %5996 = vmatmul.mubr.bf16.gmra.mrb[0].mxu0 %v5470
      %v5997 = vpop.f32.mrb[0].mxu0
      %v5998 = vadd.f32 %v5889, %v5997
      %v5999 = vpop.f32.mrb[0].mxu0
      %v6000 = vpop.f32.mrb[0].mxu0
      %v6001 = vadd.f32 %v5892, %v6000
      %v6002 = vpop.f32.mrb[0].mxu0
      %6003 = vmatprep.mubr.bf16.mxu0 %v5474
      %6004 = vmatmul.mubr.bf16.gmra.mrb[0].mxu0 %v5473
      %v6005 = vpop.f32.mrb[0].mxu0
      %v6006 = vadd.f32 %v5897, %v6005
      %v6007 = vpop.f32.mrb[0].mxu0
      %v6008 = vpop.f32.mrb[0].mxu0
      %v6009 = vadd.f32 %v5900, %v6008
      %v6010 = vpop.f32.mrb[0].mxu0
      %6011 = vmatprep.mubr.bf16.mxu0 %v5477
      %6012 = vmatmul.mubr.bf16.gmra.mrb[0].mxu0 %v5476
      %v6013 = vpop.f32.mrb[0].mxu0
      %v6014 = vadd.f32 %v5905, %v6013
      %v6015 = vpop.f32.mrb[0].mxu0
      %v6016 = vpop.f32.mrb[0].mxu0
      %v6017 = vadd.f32 %v5908, %v6016
      %v6018 = vpop.f32.mrb[0].mxu0
      %6019 = vmatprep.mubr.bf16.mxu0 %v5480
      %6020 = vmatmul.mubr.bf16.gmra.mrb[0].mxu0 %v5479
      %v6021 = vpop.f32.mrb[0].mxu0
      %v6022 = vadd.f32 %v5913, %v6021
      %v6023 = vpop.f32.mrb[0].mxu0
      %v6024 = vpop.f32.mrb[0].mxu0
      %v6025 = vadd.f32 %v5916, %v6024
      %v6026 = vpop.f32.mrb[0].mxu0
      %6027 = vmatprep.mubr.bf16.mxu0 %v5483
      %6028 = vmatmul.mubr.bf16.gmra.mrb[0].mxu0 %v5482
      %v6029 = vpop.f32.mrb[0].mxu0
      %v6030 = vadd.f32 %v5921, %v6029
      %v6031 = vpop.f32.mrb[0].mxu0
      %v6032 = vpop.f32.mrb[0].mxu0
      %v6033 = vpop.f32.mrb[0].mxu0
      %6034 = vdwg.mxu0
      %6035 = vmatprep.subr.bf16.mxu0 0
      %6036 = vmatpush1.bf16.msra.mxu0 %v5709
      %6037 = vmatprep.subr.bf16.mxu0 0
      %6038 = vmatpush1.bf16.msra.mxu0 %v5710
      %6039 = vmatprep.subr.bf16.mxu0 0
      %6040 = vmatpush1.bf16.msra.mxu0 0
      %6041 = vmatprep.subr.bf16.mxu0 0
      %6042 = vmatpush1.bf16.msra.mxu0 0
      %6043 = vmatprep.subr.bf16.mxu0 0
      %6044 = vmatpush1.bf16.msra.mxu0 0
      %6045 = vmatprep.subr.bf16.mxu0 0
      %6046 = vmatpush1.bf16.msra.mxu0 0
      %6047 = vmatprep.subr.bf16.mxu0 0
      %6048 = vmatpush1.bf16.msra.mxu0 0
      %6049 = vmatprep.subr.bf16.mxu0 0
      %6050 = vmatpush1.bf16.msra.mxu0 0
      %6051 = vmatprep.subr.bf16.mxu0 0
      %6052 = vmatpush1.bf16.msra.mxu0 0
      %6053 = vmatprep.subr.bf16.mxu0 0
      %6054 = vmatpush1.bf16.msra.mxu0 0
      %6055 = vmatprep.subr.bf16.mxu0 0
      %6056 = vmatpush1.bf16.msra.mxu0 0
      %6057 = vmatprep.subr.bf16.mxu0 0
      %6058 = vmatpush1.bf16.msra.mxu0 0
      %6059 = vmatprep.subr.bf16.mxu0 0
      %6060 = vmatpush1.bf16.msra.mxu0 0
      %6061 = vmatprep.subr.bf16.mxu0 0
      %6062 = vmatpush1.bf16.msra.mxu0 0
      %6063 = vmatprep.subr.bf16.mxu0 0
      %6064 = vmatpush1.bf16.msra.mxu0 0
      %6065 = vmatprep.subr.bf16.mxu0 0
      %6066 = vmatpush1.bf16.msra.mxu0 0
      %6067 = vmatprep.mubr.bf16.mxu0 0
      %6068 = vmatmul.mubr.bf16.gmra.mrb[0].mxu0 %v5927
      %v6069 = vpop.f32.mrb[0].mxu0
      %v6070 = vadd.f32 %v5982, %v6069
      %v6071 = vpop.f32.mrb[0].mxu0
      %v6072 = vpop.f32.mrb[0].mxu0
      %v6073 = vadd.f32 %v5985, %v6072
      %v6074 = vpop.f32.mrb[0].mxu0
      %6075 = vmatprep.mubr.bf16.mxu0 0
      %6076 = vmatmul.mubr.bf16.gmra.mrb[0].mxu0 %v5930
      %v6077 = vpop.f32.mrb[0].mxu0
      %v6078 = vadd.f32 %v5990, %v6077
      %v6079 = vpop.f32.mrb[0].mxu0
      %v6080 = vpop.f32.mrb[0].mxu0
      %v6081 = vadd.f32 %v5993, %v6080
      %v6082 = vpop.f32.mrb[0].mxu0
      %6083 = vmatprep.mubr.bf16.mxu0 0
      %6084 = vmatmul.mubr.bf16.gmra.mrb[0].mxu0 %v5933
      %v6085 = vpop.f32.mrb[0].mxu0
      %v6086 = vadd.f32 %v5998, %v6085
      %v6087 = vpop.f32.mrb[0].mxu0
      %v6088 = vpop.f32.mrb[0].mxu0
      %v6089 = vadd.f32 %v6001, %v6088
      %v6090 = vpop.f32.mrb[0].mxu0
      %6091 = vmatprep.mubr.bf16.mxu0 0
      %6092 = vmatmul.mubr.bf16.gmra.mrb[0].mxu0 %v5936
      %v6093 = vpop.f32.mrb[0].mxu0
      %v6094 = vadd.f32 %v6006, %v6093
      %v6095 = vpop.f32.mrb[0].mxu0
      %v6096 = vpop.f32.mrb[0].mxu0
      %v6097 = vadd.f32 %v6009, %v6096
      %v6098 = vpop.f32.mrb[0].mxu0
      %6099 = vmatprep.mubr.bf16.mxu0 0
      %6100 = vmatmul.mubr.bf16.gmra.mrb[0].mxu0 %v5939
      %v6101 = vpop.f32.mrb[0].mxu0
      %v6102 = vadd.f32 %v6014, %v6101
      %v6103 = vpop.f32.mrb[0].mxu0
      %v6104 = vpop.f32.mrb[0].mxu0
      %v6105 = vadd.f32 %v6017, %v6104
      %v6106 = vpop.f32.mrb[0].mxu0
      %6107 = vmatprep.mubr.bf16.mxu0 0
      %6108 = vmatmul.mubr.bf16.gmra.mrb[0].mxu0 %v5942
      %v6109 = vpop.f32.mrb[0].mxu0
      %v6110 = vadd.f32 %v6022, %v6109
      %v6111 = vpop.f32.mrb[0].mxu0
      %v6112 = vpop.f32.mrb[0].mxu0
      %v6113 = vadd.f32 %v6025, %v6112
      %v6114 = vpop.f32.mrb[0].mxu0
      %6115 = vmatprep.mubr.bf16.mxu0 0
      %6116 = vmatmul.mubr.bf16.gmra.mrb[0].mxu0 %v5945
      %v6117 = vpop.f32.mrb[0].mxu0
      %v6118 = vadd.f32 %v6030, %v6117
      %v6119 = vpop.f32.mrb[0].mxu0
      %v6120 = vpop.f32.mrb[0].mxu0
      %v6121 = vpop.f32.mrb[0].mxu0
      %6122 = vdwg.mxu0
      %s6123 = scalar_lea.vmem %s2, 4
      %v6124 = vld [vmem:[%s6123] sm:$0x1]
      %v6126 = vlaneseq
      %v6127 = vshrl.u32 %v6126, 7
      %v6128 = vsub.s32 0, %v6127
      %v6129 = vrot.slane %v6124, %v6128
      %v6131 = vadd.f32 %v6070, %v6129
      %v6132 = vadd.f32 %v6073, %v6129
      %v6133 = vadd.f32 %v6078, %v6129
      %v6134 = vadd.f32 %v6081, %v6129
      %v6135 = vadd.f32 %v6086, %v6129
      %v6136 = vadd.f32 %v6089, %v6129
      %v6137 = vadd.f32 %v6094, %v6129
      %v6138 = vadd.f32 %v6097, %v6129
      %v6139 = vadd.f32 %v6102, %v6129
      %v6140 = vadd.f32 %v6105, %v6129
      %v6141 = vadd.f32 %v6110, %v6129
      %v6142 = vadd.f32 %v6113, %v6129
      %v6143 = vadd.f32 %v6118, %v6129
      %s6144 = scalar_lea.vmem %s3, 416
      %v6145 = vld [vmem:[%s6144] sm:$0xff]
      %v6146 = vld [vmem:[%s6144 + $0x8] sm:$0xff]
      %v6147 = vld [vmem:[%s6144 + $0x10] sm:$0xff]
      %v6148 = vld [vmem:[%s6144 + $0x18] sm:$0xff]
      %v6149 = vld [vmem:[%s6144 + $0x20] sm:$0xff]
      %v6150 = vld [vmem:[%s6144 + $0x28] sm:$0xff]
      %v6151 = vld [vmem:[%s6144 + $0x30] sm:$0xff]
      %v6152 = vld [vmem:[%s6144 + $0x38] sm:$0xff]
      %v6153 = vld [vmem:[%s6144 + $0x40] sm:$0xff]
      %v6154 = vld [vmem:[%s6144 + $0x48] sm:$0xff]
      %v6155 = vld [vmem:[%s6144 + $0x50] sm:$0xff]
      %v6156 = vld [vmem:[%s6144 + $0x58] sm:$0xff]
      %v6157 = vld [vmem:[%s6144 + $0x60] sm:$0xf]
      %v6158 = vmul.f32 %v6131, %v6145
      %v6159 = vmul.f32 %v6132, %v6146
      %v6160 = vmul.f32 %v6133, %v6147
      %v6161 = vmul.f32 %v6134, %v6148
      %v6162 = vmul.f32 %v6135, %v6149
      %v6163 = vmul.f32 %v6136, %v6150
      %v6164 = vmul.f32 %v6137, %v6151
      %v6165 = vmul.f32 %v6138, %v6152
      %v6166 = vmul.f32 %v6139, %v6153
      %v6167 = vmul.f32 %v6140, %v6154
      %v6168 = vmul.f32 %v6141, %v6155
      %v6169 = vmul.f32 %v6142, %v6156
      %v6170 = vmul.f32 %v6143, %v6157
      %6171 = vst [vmem:[#allocation2 + $0x10] sm:$0xff] %v6158
      %6172 = vst [vmem:[#allocation2 + $0x18] sm:$0xff] %v6159
      %6173 = vst [vmem:[#allocation2 + $0x20] sm:$0xff] %v6160
      %6174 = vst [vmem:[#allocation2 + $0x28] sm:$0xff] %v6161
      %6175 = vst [vmem:[#allocation2 + $0x30] sm:$0xff] %v6162
      %6176 = vst [vmem:[#allocation2 + $0x38] sm:$0xff] %v6163
      %6177 = vst [vmem:[#allocation2 + $0x40] sm:$0xff] %v6164
      %6178 = vst [vmem:[#allocation2 + $0x48] sm:$0xff] %v6165
      %6179 = vst [vmem:[#allocation2 + $0x50] sm:$0xff] %v6166
      %6180 = vst [vmem:[#allocation2 + $0x58] sm:$0xff] %v6167
      %6181 = vst [vmem:[#allocation2 + $0x60] sm:$0xff] %v6168
      %6182 = vst [vmem:[#allocation2 + $0x68] sm:$0xff] %v6169
      %6183 = vst [vmem:[#allocation2 + $0x70] sm:$0xf] %v6170
      %v6184 = vld [vmem:[#allocation2 + $0x5] sm:$0xff]
      %v6185 = vld [vmem:[#allocation2 + $0xd] sm:$0xff]
      %v6186 = vld [vmem:[#allocation2 + $0x15] sm:$0xff]
      %v6187 = vld [vmem:[#allocation2 + $0x1d] sm:$0xff]
      %v6188 = vld [vmem:[#allocation2 + $0x25] sm:$0xff]
      %v6189 = vld [vmem:[#allocation2 + $0x2d] sm:$0xff]
      %v6190 = vld [vmem:[#allocation2 + $0x35] sm:$0xff]
      %v6191 = vld [vmem:[#allocation2 + $0x3d] sm:$0xff]
      %v6192 = vld [vmem:[#allocation2 + $0x45] sm:$0xff]
      %v6193 = vld [vmem:[#allocation2 + $0x4d] sm:$0xff]
      %v6194 = vld [vmem:[#allocation2 + $0x55] sm:$0xff]
      %v6195 = vld [vmem:[#allocation2 + $0x5d] sm:$0xff]
      %v6196 = vld [vmem:[#allocation2 + $0x65] sm:$0xf]
      %v6197 = vld [vmem:[#allocation2 + $0x6] sm:$0xff]
      %v6198 = vld [vmem:[#allocation2 + $0xe] sm:$0xff]
      %v6199 = vld [vmem:[#allocation2 + $0x16] sm:$0xff]
      %v6200 = vld [vmem:[#allocation2 + $0x1e] sm:$0xff]
      %v6201 = vld [vmem:[#allocation2 + $0x26] sm:$0xff]
      %v6202 = vld [vmem:[#allocation2 + $0x2e] sm:$0xff]
      %v6203 = vld [vmem:[#allocation2 + $0x36] sm:$0xff]
      %v6204 = vld [vmem:[#allocation2 + $0x3e] sm:$0xff]
      %v6205 = vld [vmem:[#allocation2 + $0x46] sm:$0xff]
      %v6206 = vld [vmem:[#allocation2 + $0x4e] sm:$0xff]
      %v6207 = vld [vmem:[#allocation2 + $0x56] sm:$0xff]
      %v6208 = vld [vmem:[#allocation2 + $0x5e] sm:$0xff]
      %v6209 = vld [vmem:[#allocation2 + $0x66] sm:$0xf]
      %v6210 = vld [vmem:[#allocation2 + $0x7] sm:$0xff]
      %v6211 = vld [vmem:[#allocation2 + $0xf] sm:$0xff]
      %v6212 = vld [vmem:[#allocation2 + $0x17] sm:$0xff]
      %v6213 = vld [vmem:[#allocation2 + $0x1f] sm:$0xff]
      %v6214 = vld [vmem:[#allocation2 + $0x27] sm:$0xff]
      %v6215 = vld [vmem:[#allocation2 + $0x2f] sm:$0xff]
      %v6216 = vld [vmem:[#allocation2 + $0x37] sm:$0xff]
      %v6217 = vld [vmem:[#allocation2 + $0x3f] sm:$0xff]
      %v6218 = vld [vmem:[#allocation2 + $0x47] sm:$0xff]
      %v6219 = vld [vmem:[#allocation2 + $0x4f] sm:$0xff]
      %v6220 = vld [vmem:[#allocation2 + $0x57] sm:$0xff]
      %v6221 = vld [vmem:[#allocation2 + $0x5f] sm:$0xff]
      %v6222 = vld [vmem:[#allocation2 + $0x67] sm:$0xf]
      %v6223 = vld [vmem:[#allocation2 + $0x67] sm:$0xff]
      %v6224 = vld [vmem:[#allocation2 + $0x6f] sm:$0xf]
      %v6225 = vld [vmem:[#allocation2 + $0x10] sm:$0xff]
      %v6226 = vld [vmem:[#allocation2 + $0x18] sm:$0xff]
      %v6227 = vld [vmem:[#allocation2 + $0x20] sm:$0xff]
      %v6228 = vld [vmem:[#allocation2 + $0x28] sm:$0xff]
      %v6229 = vld [vmem:[#allocation2 + $0x30] sm:$0xff]
      %v6230 = vld [vmem:[#allocation2 + $0x38] sm:$0xff]
      %v6231 = vld [vmem:[#allocation2 + $0x40] sm:$0xff]
      %v6232 = vld [vmem:[#allocation2 + $0x48] sm:$0xff]
      %v6233 = vld [vmem:[#allocation2 + $0x50] sm:$0xff]
      %v6234 = vld [vmem:[#allocation2 + $0x58] sm:$0xff]
      %v6235 = vld [vmem:[#allocation2 + $0x60] sm:$0xff]
      %v6236 = vld [vmem:[#allocation2 + $0x68] sm:$0xff]
      %v6237 = vld [vmem:[#allocation2 + $0x70] sm:$0xf]
      %v6238 = vld [vmem:[#allocation2 + $0x11] sm:$0xff]
      %v6239 = vld [vmem:[#allocation2 + $0x19] sm:$0xff]
      %v6240 = vld [vmem:[#allocation2 + $0x21] sm:$0xff]
      %v6241 = vld [vmem:[#allocation2 + $0x29] sm:$0xff]
      %v6242 = vld [vmem:[#allocation2 + $0x31] sm:$0xff]
      %v6243 = vld [vmem:[#allocation2 + $0x39] sm:$0xff]
      %v6244 = vld [vmem:[#allocation2 + $0x41] sm:$0xff]
      %v6245 = vld [vmem:[#allocation2 + $0x49] sm:$0xff]
      %v6246 = vld [vmem:[#allocation2 + $0x51] sm:$0xff]
      %v6247 = vld [vmem:[#allocation2 + $0x59] sm:$0xff]
      %v6248 = vld [vmem:[#allocation2 + $0x61] sm:$0xff]
      %v6249 = vld [vmem:[#allocation2 + $0x69] sm:$0xff]
      %v6250 = vld [vmem:[#allocation2 + $0x71] sm:$0xf]
      %v6251 = vld [vmem:[#allocation2 + $0x71] sm:$0xff]
      %v6252 = vld [vmem:[#allocation2 + $0x79] sm:$0xf]
      %v6253 = vld [vmem:[#allocation2 + $0x1a] sm:$0xff]
      %v6254 = vld [vmem:[#allocation2 + $0x22] sm:$0xff]
      %v6255 = vld [vmem:[#allocation2 + $0x2a] sm:$0xff]
      %v6256 = vld [vmem:[#allocation2 + $0x32] sm:$0xff]
      %v6257 = vld [vmem:[#allocation2 + $0x3a] sm:$0xff]
      %v6258 = vld [vmem:[#allocation2 + $0x42] sm:$0xff]
      %v6259 = vld [vmem:[#allocation2 + $0x4a] sm:$0xff]
      %v6260 = vld [vmem:[#allocation2 + $0x52] sm:$0xff]
      %v6261 = vld [vmem:[#allocation2 + $0x5a] sm:$0xff]
      %v6262 = vld [vmem:[#allocation2 + $0x62] sm:$0xff]
      %v6263 = vld [vmem:[#allocation2 + $0x6a] sm:$0xff]
      %v6264 = vld [vmem:[#allocation2 + $0x72] sm:$0xff]
      %v6265 = vld [vmem:[#allocation2 + $0x7a] sm:$0xf]
      %v6266 = vld [vmem:[#allocation2 + $0x1b] sm:$0xff]
      %v6267 = vld [vmem:[#allocation2 + $0x23] sm:$0xff]
      %v6268 = vld [vmem:[#allocation2 + $0x2b] sm:$0xff]
      %v6269 = vld [vmem:[#allocation2 + $0x33] sm:$0xff]
      %v6270 = vld [vmem:[#allocation2 + $0x3b] sm:$0xff]
      %v6271 = vld [vmem:[#allocation2 + $0x43] sm:$0xff]
      %v6272 = vld [vmem:[#allocation2 + $0x4b] sm:$0xff]
      %v6273 = vld [vmem:[#allocation2 + $0x53] sm:$0xff]
      %v6274 = vld [vmem:[#allocation2 + $0x5b] sm:$0xff]
      %v6275 = vld [vmem:[#allocation2 + $0x63] sm:$0xff]
      %v6276 = vld [vmem:[#allocation2 + $0x6b] sm:$0xff]
      %v6277 = vld [vmem:[#allocation2 + $0x73] sm:$0xff]
      %v6278 = vld [vmem:[#allocation2 + $0x7b] sm:$0xf]
      %6292 = vrot.lane.b32.xlu0 %v6197, 32
      %v6293 = vpop.permute.xlu0 %6292
      %6294 = vrot.lane.b32.xlu0 %v6198, 32
      %v6295 = vpop.permute.xlu0 %6294
      %6296 = vrot.lane.b32.xlu0 %v6199, 32
      %v6297 = vpop.permute.xlu0 %6296
      %6298 = vrot.lane.b32.xlu0 %v6200, 32
      %v6299 = vpop.permute.xlu0 %6298
      %6300 = vrot.lane.b32.xlu0 %v6201, 32
      %v6301 = vpop.permute.xlu0 %6300
      %6302 = vrot.lane.b32.xlu0 %v6202, 32
      %v6303 = vpop.permute.xlu0 %6302
      %6304 = vrot.lane.b32.xlu0 %v6203, 32
      %v6305 = vpop.permute.xlu0 %6304
      %6306 = vrot.lane.b32.xlu0 %v6204, 32
      %v6307 = vpop.permute.xlu0 %6306
      %6308 = vrot.lane.b32.xlu0 %v6205, 32
      %v6309 = vpop.permute.xlu0 %6308
      %6310 = vrot.lane.b32.xlu0 %v6206, 32
      %v6311 = vpop.permute.xlu0 %6310
      %6312 = vrot.lane.b32.xlu0 %v6207, 32
      %v6313 = vpop.permute.xlu0 %6312
      %6314 = vrot.lane.b32.xlu0 %v6208, 32
      %v6315 = vpop.permute.xlu0 %6314
      %6316 = vrot.lane.b32.xlu0 %v6209, 32
      %v6317 = vpop.permute.xlu0 %6316
      %6344 = vrot.lane.b32.xlu0 %v6210, 64
      %v6345 = vpop.permute.xlu0 %6344
      %6346 = vrot.lane.b32.xlu0 %v6211, 64
      %v6347 = vpop.permute.xlu0 %6346
      %6348 = vrot.lane.b32.xlu0 %v6212, 64
      %v6349 = vpop.permute.xlu0 %6348
      %6350 = vrot.lane.b32.xlu0 %v6213, 64
      %v6351 = vpop.permute.xlu0 %6350
      %6352 = vrot.lane.b32.xlu0 %v6214, 64
      %v6353 = vpop.permute.xlu0 %6352
      %6354 = vrot.lane.b32.xlu0 %v6215, 64
      %v6355 = vpop.permute.xlu0 %6354
      %6356 = vrot.lane.b32.xlu0 %v6216, 64
      %v6357 = vpop.permute.xlu0 %6356
      %6358 = vrot.lane.b32.xlu0 %v6217, 64
      %v6359 = vpop.permute.xlu0 %6358
      %6360 = vrot.lane.b32.xlu0 %v6218, 64
      %v6361 = vpop.permute.xlu0 %6360
      %6362 = vrot.lane.b32.xlu0 %v6219, 64
      %v6363 = vpop.permute.xlu0 %6362
      %6364 = vrot.lane.b32.xlu0 %v6220, 64
      %v6365 = vpop.permute.xlu0 %6364
      %6366 = vrot.lane.b32.xlu0 %v6221, 64
      %v6367 = vpop.permute.xlu0 %6366
      %6368 = vrot.lane.b32.xlu0 %v6222, 64
      %v6369 = vpop.permute.xlu0 %6368
      %6385 = vrot.lane.b32.xlu0 %v6211, 96
      %v6386 = vpop.permute.xlu0 %6385
      %6387 = vrot.lane.b32.xlu0 %v6212, 96
      %v6388 = vpop.permute.xlu0 %6387
      %6389 = vrot.lane.b32.xlu0 %v6213, 96
      %v6390 = vpop.permute.xlu0 %6389
      %6391 = vrot.lane.b32.xlu0 %v6214, 96
      %v6392 = vpop.permute.xlu0 %6391
      %6393 = vrot.lane.b32.xlu0 %v6215, 96
      %v6394 = vpop.permute.xlu0 %6393
      %6395 = vrot.lane.b32.xlu0 %v6216, 96
      %v6396 = vpop.permute.xlu0 %6395
      %6397 = vrot.lane.b32.xlu0 %v6217, 96
      %v6398 = vpop.permute.xlu0 %6397
      %6399 = vrot.lane.b32.xlu0 %v6218, 96
      %v6400 = vpop.permute.xlu0 %6399
      %6401 = vrot.lane.b32.xlu0 %v6219, 96
      %v6402 = vpop.permute.xlu0 %6401
      %6403 = vrot.lane.b32.xlu0 %v6220, 96
      %v6404 = vpop.permute.xlu0 %6403
      %6405 = vrot.lane.b32.xlu0 %v6221, 96
      %v6406 = vpop.permute.xlu0 %6405
      %6407 = vrot.lane.b32.xlu0 %v6223, 96
      %v6408 = vpop.permute.xlu0 %6407
      %6409 = vrot.lane.b32.xlu0 %v6224, 96
      %v6410 = vpop.permute.xlu0 %6409
      %6437 = vrot.lane.b32.xlu0 %v6238, 32
      %v6438 = vpop.permute.xlu0 %6437
      %6439 = vrot.lane.b32.xlu0 %v6239, 32
      %v6440 = vpop.permute.xlu0 %6439
      %6441 = vrot.lane.b32.xlu0 %v6240, 32
      %v6442 = vpop.permute.xlu0 %6441
      %6443 = vrot.lane.b32.xlu0 %v6241, 32
      %v6444 = vpop.permute.xlu0 %6443
      %6445 = vrot.lane.b32.xlu0 %v6242, 32
      %v6446 = vpop.permute.xlu0 %6445
      %6447 = vrot.lane.b32.xlu0 %v6243, 32
      %v6448 = vpop.permute.xlu0 %6447
      %6449 = vrot.lane.b32.xlu0 %v6244, 32
      %v6450 = vpop.permute.xlu0 %6449
      %6451 = vrot.lane.b32.xlu0 %v6245, 32
      %v6452 = vpop.permute.xlu0 %6451
      %6453 = vrot.lane.b32.xlu0 %v6246, 32
      %v6454 = vpop.permute.xlu0 %6453
      %6455 = vrot.lane.b32.xlu0 %v6247, 32
      %v6456 = vpop.permute.xlu0 %6455
      %6457 = vrot.lane.b32.xlu0 %v6248, 32
      %v6458 = vpop.permute.xlu0 %6457
      %6459 = vrot.lane.b32.xlu0 %v6249, 32
      %v6460 = vpop.permute.xlu0 %6459
      %6461 = vrot.lane.b32.xlu0 %v6250, 32
      %v6462 = vpop.permute.xlu0 %6461
      %6478 = vrot.lane.b32.xlu0 %v6239, 64
      %v6479 = vpop.permute.xlu0 %6478
      %6480 = vrot.lane.b32.xlu0 %v6240, 64
      %v6481 = vpop.permute.xlu0 %6480
      %6482 = vrot.lane.b32.xlu0 %v6241, 64
      %v6483 = vpop.permute.xlu0 %6482
      %6484 = vrot.lane.b32.xlu0 %v6242, 64
      %v6485 = vpop.permute.xlu0 %6484
      %6486 = vrot.lane.b32.xlu0 %v6243, 64
      %v6487 = vpop.permute.xlu0 %6486
      %6488 = vrot.lane.b32.xlu0 %v6244, 64
      %v6489 = vpop.permute.xlu0 %6488
      %6490 = vrot.lane.b32.xlu0 %v6245, 64
      %v6491 = vpop.permute.xlu0 %6490
      %6492 = vrot.lane.b32.xlu0 %v6246, 64
      %v6493 = vpop.permute.xlu0 %6492
      %6494 = vrot.lane.b32.xlu0 %v6247, 64
      %v6495 = vpop.permute.xlu0 %6494
      %6496 = vrot.lane.b32.xlu0 %v6248, 64
      %v6497 = vpop.permute.xlu0 %6496
      %6498 = vrot.lane.b32.xlu0 %v6249, 64
      %v6499 = vpop.permute.xlu0 %6498
      %6500 = vrot.lane.b32.xlu0 %v6251, 64
      %v6501 = vpop.permute.xlu0 %6500
      %6502 = vrot.lane.b32.xlu0 %v6252, 64
      %v6503 = vpop.permute.xlu0 %6502
      %6530 = vrot.lane.b32.xlu0 %v6253, 96
      %v6531 = vpop.permute.xlu0 %6530
      %6532 = vrot.lane.b32.xlu0 %v6254, 96
      %v6533 = vpop.permute.xlu0 %6532
      %6534 = vrot.lane.b32.xlu0 %v6255, 96
      %v6535 = vpop.permute.xlu0 %6534
      %6536 = vrot.lane.b32.xlu0 %v6256, 96
      %v6537 = vpop.permute.xlu0 %6536
      %6538 = vrot.lane.b32.xlu0 %v6257, 96
      %v6539 = vpop.permute.xlu0 %6538
      %6540 = vrot.lane.b32.xlu0 %v6258, 96
      %v6541 = vpop.permute.xlu0 %6540
      %6542 = vrot.lane.b32.xlu0 %v6259, 96
      %v6543 = vpop.permute.xlu0 %6542
      %6544 = vrot.lane.b32.xlu0 %v6260, 96
      %v6545 = vpop.permute.xlu0 %6544
      %6546 = vrot.lane.b32.xlu0 %v6261, 96
      %v6547 = vpop.permute.xlu0 %6546
      %6548 = vrot.lane.b32.xlu0 %v6262, 96
      %v6549 = vpop.permute.xlu0 %6548
      %6550 = vrot.lane.b32.xlu0 %v6263, 96
      %v6551 = vpop.permute.xlu0 %6550
      %6552 = vrot.lane.b32.xlu0 %v6264, 96
      %v6553 = vpop.permute.xlu0 %6552
      %6554 = vrot.lane.b32.xlu0 %v6265, 96
      %v6555 = vpop.permute.xlu0 %6554
      %v6569 = vsel %vm615, %v6184, %v6293
      %v6570 = vsel %vm615, %v6185, %v6295
      %v6571 = vsel %vm615, %v6186, %v6297
      %v6572 = vsel %vm615, %v6187, %v6299
      %v6573 = vsel %vm615, %v6188, %v6301
      %v6574 = vsel %vm615, %v6189, %v6303
      %v6575 = vsel %vm615, %v6190, %v6305
      %v6576 = vsel %vm615, %v6191, %v6307
      %v6577 = vsel %vm615, %v6192, %v6309
      %v6578 = vsel %vm615, %v6193, %v6311
      %v6579 = vsel %vm615, %v6194, %v6313
      %v6580 = vsel %vm615, %v6195, %v6315
      %v6581 = vsel %vm615, %v6196, %v6317
      %v6582 = vsel %vm629, %v6569, %v6345
      %v6583 = vsel %vm629, %v6570, %v6347
      %v6584 = vsel %vm629, %v6571, %v6349
      %v6585 = vsel %vm629, %v6572, %v6351
      %v6586 = vsel %vm629, %v6573, %v6353
      %v6587 = vsel %vm629, %v6574, %v6355
      %v6588 = vsel %vm629, %v6575, %v6357
      %v6589 = vsel %vm629, %v6576, %v6359
      %v6590 = vsel %vm629, %v6577, %v6361
      %v6591 = vsel %vm629, %v6578, %v6363
      %v6592 = vsel %vm629, %v6579, %v6365
      %v6593 = vsel %vm629, %v6580, %v6367
      %v6594 = vsel %vm629, %v6581, %v6369
      %v6595 = vsel %vm643, %v6582, %v6386
      %v6596 = vsel %vm643, %v6583, %v6388
      %v6597 = vsel %vm643, %v6584, %v6390
      %v6598 = vsel %vm643, %v6585, %v6392
      %v6599 = vsel %vm643, %v6586, %v6394
      %v6600 = vsel %vm643, %v6587, %v6396
      %v6601 = vsel %vm643, %v6588, %v6398
      %v6602 = vsel %vm643, %v6589, %v6400
      %v6603 = vsel %vm643, %v6590, %v6402
      %v6604 = vsel %vm643, %v6591, %v6404
      %v6605 = vsel %vm643, %v6592, %v6406
      %v6606 = vsel %vm643, %v6593, %v6408
      %v6607 = vsel %vm643, %v6594, %v6410
      %v6608 = vsel %vm615, %v6225, %v6438
      %v6609 = vsel %vm615, %v6226, %v6440
      %v6610 = vsel %vm615, %v6227, %v6442
      %v6611 = vsel %vm615, %v6228, %v6444
      %v6612 = vsel %vm615, %v6229, %v6446
      %v6613 = vsel %vm615, %v6230, %v6448
      %v6614 = vsel %vm615, %v6231, %v6450
      %v6615 = vsel %vm615, %v6232, %v6452
      %v6616 = vsel %vm615, %v6233, %v6454
      %v6617 = vsel %vm615, %v6234, %v6456
      %v6618 = vsel %vm615, %v6235, %v6458
      %v6619 = vsel %vm615, %v6236, %v6460
      %v6620 = vsel %vm615, %v6237, %v6462
      %v6621 = vsel %vm629, %v6608, %v6479
      %v6622 = vsel %vm629, %v6609, %v6481
      %v6623 = vsel %vm629, %v6610, %v6483
      %v6624 = vsel %vm629, %v6611, %v6485
      %v6625 = vsel %vm629, %v6612, %v6487
      %v6626 = vsel %vm629, %v6613, %v6489
      %v6627 = vsel %vm629, %v6614, %v6491
      %v6628 = vsel %vm629, %v6615, %v6493
      %v6629 = vsel %vm629, %v6616, %v6495
      %v6630 = vsel %vm629, %v6617, %v6497
      %v6631 = vsel %vm629, %v6618, %v6499
      %v6632 = vsel %vm629, %v6619, %v6501
      %v6633 = vsel %vm629, %v6620, %v6503
      %v6634 = vsel %vm643, %v6621, %v6531
      %v6635 = vsel %vm643, %v6622, %v6533
      %v6636 = vsel %vm643, %v6623, %v6535
      %v6637 = vsel %vm643, %v6624, %v6537
      %v6638 = vsel %vm643, %v6625, %v6539
      %v6639 = vsel %vm643, %v6626, %v6541
      %v6640 = vsel %vm643, %v6627, %v6543
      %v6641 = vsel %vm643, %v6628, %v6545
      %v6642 = vsel %vm643, %v6629, %v6547
      %v6643 = vsel %vm643, %v6630, %v6549
      %v6644 = vsel %vm643, %v6631, %v6551
      %v6645 = vsel %vm643, %v6632, %v6553
      %v6646 = vsel %vm643, %v6633, %v6555
      %v6647 = vpack.c.bf16 %v6596, %v6595
      %v6648 = vpack.c.bf16 %v6635, %v6634
      %v6649 = vpack.c.bf16 %v6267, %v6266
      %v6650 = vpack.c.bf16 %v6598, %v6597
      %v6651 = vpack.c.bf16 %v6637, %v6636
      %v6652 = vpack.c.bf16 %v6269, %v6268
      %v6653 = vpack.c.bf16 %v6600, %v6599
      %v6654 = vpack.c.bf16 %v6639, %v6638
      %v6655 = vpack.c.bf16 %v6271, %v6270
      %v6656 = vpack.c.bf16 %v6602, %v6601
      %v6657 = vpack.c.bf16 %v6641, %v6640
      %v6658 = vpack.c.bf16 %v6273, %v6272
      %v6659 = vpack.c.bf16 %v6604, %v6603
      %v6660 = vpack.c.bf16 %v6643, %v6642
      %v6661 = vpack.c.bf16 %v6275, %v6274
      %v6662 = vpack.c.bf16 %v6606, %v6605
      %v6663 = vpack.c.bf16 %v6645, %v6644
      %v6664 = vpack.c.bf16 %v6277, %v6276
      %v6665 = vpack.c.bf16 %v6607, %v6607
      %v6666 = vpack.c.bf16 %v6646, %v6646
      %v6667 = vpack.c.bf16 %v6278, %v6278
      %v6668 = vunpack.c.l.bf16 %v6647
      %v6669 = vunpack.c.l.bf16 %v6648
      %v6670 = vunpack.c.l.bf16 %v6649
      %v6671 = vunpack.c.h.bf16 %v6647
      %v6672 = vunpack.c.h.bf16 %v6648
      %v6673 = vunpack.c.h.bf16 %v6649
      %v6674 = vunpack.c.l.bf16 %v6650
      %v6675 = vunpack.c.l.bf16 %v6651
      %v6676 = vunpack.c.l.bf16 %v6652
      %v6677 = vunpack.c.h.bf16 %v6650
      %v6678 = vunpack.c.h.bf16 %v6651
      %v6679 = vunpack.c.h.bf16 %v6652
      %v6680 = vunpack.c.l.bf16 %v6653
      %v6681 = vunpack.c.l.bf16 %v6654
      %v6682 = vunpack.c.l.bf16 %v6655
      %v6683 = vunpack.c.h.bf16 %v6653
      %v6684 = vunpack.c.h.bf16 %v6654
      %v6685 = vunpack.c.h.bf16 %v6655
      %v6686 = vunpack.c.l.bf16 %v6656
      %v6687 = vunpack.c.l.bf16 %v6657
      %v6688 = vunpack.c.l.bf16 %v6658
      %v6689 = vunpack.c.h.bf16 %v6656
      %v6690 = vunpack.c.h.bf16 %v6657
      %v6691 = vunpack.c.h.bf16 %v6658
      %v6692 = vunpack.c.l.bf16 %v6659
      %v6693 = vunpack.c.l.bf16 %v6660
      %v6694 = vunpack.c.l.bf16 %v6661
      %v6695 = vunpack.c.h.bf16 %v6659
      %v6696 = vunpack.c.h.bf16 %v6660
      %v6697 = vunpack.c.h.bf16 %v6661
      %v6698 = vunpack.c.l.bf16 %v6662
      %v6699 = vunpack.c.l.bf16 %v6663
      %v6700 = vunpack.c.l.bf16 %v6664
      %v6701 = vunpack.c.h.bf16 %v6662
      %v6702 = vunpack.c.h.bf16 %v6663
      %v6703 = vunpack.c.h.bf16 %v6664
      %v6704 = vunpack.c.l.bf16 %v6665
      %v6705 = vunpack.c.l.bf16 %v6666
      %v6706 = vunpack.c.l.bf16 %v6667
      %v6707 = vsub.f32 %v6595, %v6668
      %v6708 = vsub.f32 %v6634, %v6669
      %v6709 = vsub.f32 %v6266, %v6670
      %v6710 = vsub.f32 %v6596, %v6671
      %v6711 = vsub.f32 %v6635, %v6672
      %v6712 = vsub.f32 %v6267, %v6673
      %v6713 = vsub.f32 %v6597, %v6674
      %v6714 = vsub.f32 %v6636, %v6675
      %v6715 = vsub.f32 %v6268, %v6676
      %v6716 = vsub.f32 %v6598, %v6677
      %v6717 = vsub.f32 %v6637, %v6678
      %v6718 = vsub.f32 %v6269, %v6679
      %v6719 = vsub.f32 %v6599, %v6680
      %v6720 = vsub.f32 %v6638, %v6681
      %v6721 = vsub.f32 %v6270, %v6682
      %v6722 = vsub.f32 %v6600, %v6683
      %v6723 = vsub.f32 %v6639, %v6684
      %v6724 = vsub.f32 %v6271, %v6685
      %v6725 = vsub.f32 %v6601, %v6686
      %v6726 = vsub.f32 %v6640, %v6687
      %v6727 = vsub.f32 %v6272, %v6688
      %v6728 = vsub.f32 %v6602, %v6689
      %v6729 = vsub.f32 %v6641, %v6690
      %v6730 = vsub.f32 %v6273, %v6691
      %v6731 = vsub.f32 %v6603, %v6692
      %v6732 = vsub.f32 %v6642, %v6693
      %v6733 = vsub.f32 %v6274, %v6694
      %v6734 = vsub.f32 %v6604, %v6695
      %v6735 = vsub.f32 %v6643, %v6696
      %v6736 = vsub.f32 %v6275, %v6697
      %v6737 = vsub.f32 %v6605, %v6698
      %v6738 = vsub.f32 %v6644, %v6699
      %v6739 = vsub.f32 %v6276, %v6700
      %v6740 = vsub.f32 %v6606, %v6701
      %v6741 = vsub.f32 %v6645, %v6702
      %v6742 = vsub.f32 %v6277, %v6703
      %v6743 = vsub.f32 %v6607, %v6704
      %v6744 = vsub.f32 %v6646, %v6705
      %v6745 = vsub.f32 %v6278, %v6706
      %v6746 = vpack.c.bf16 %v6710, %v6707
      %v6747 = vpack.c.bf16 %v6711, %v6708
      %v6748 = vpack.c.bf16 %v6712, %v6709
      %v6749 = vpack.c.bf16 %v6716, %v6713
      %v6750 = vpack.c.bf16 %v6717, %v6714
      %v6751 = vpack.c.bf16 %v6718, %v6715
      %v6752 = vpack.c.bf16 %v6722, %v6719
      %v6753 = vpack.c.bf16 %v6723, %v6720
      %v6754 = vpack.c.bf16 %v6724, %v6721
      %v6755 = vpack.c.bf16 %v6728, %v6725
      %v6756 = vpack.c.bf16 %v6729, %v6726
      %v6757 = vpack.c.bf16 %v6730, %v6727
      %v6758 = vpack.c.bf16 %v6734, %v6731
      %v6759 = vpack.c.bf16 %v6735, %v6732
      %v6760 = vpack.c.bf16 %v6736, %v6733
      %v6761 = vpack.c.bf16 %v6740, %v6737
      %v6762 = vpack.c.bf16 %v6741, %v6738
      %v6763 = vpack.c.bf16 %v6742, %v6739
      %v6764 = vpack.c.bf16 %v6743, %v6743
      %v6765 = vpack.c.bf16 %v6744, %v6744
      %v6766 = vpack.c.bf16 %v6745, %v6745
      %s6767 = scalar_lea.vmem %s1, 720
      %v6768 = vld [vmem:[%s6767] sm:$0xf]
      %v6769 = vld [vmem:[%s6767 + $0x4] sm:$0xf]
      %v6770 = vld [vmem:[%s6767 + $0x8] sm:$0xf]
      %v6771 = vld [vmem:[%s6767 + $0xc] sm:$0xf]
      %v6772 = vld [vmem:[%s6767 + $0x10] sm:$0xf]
      %v6773 = vld [vmem:[%s6767 + $0x14] sm:$0xf]
      %v6774 = vld [vmem:[%s6767 + $0x18] sm:$0xf]
      %v6775 = vld [vmem:[%s6767 + $0x1c] sm:$0xf]
      %v6776 = vld [vmem:[%s6767 + $0x20] sm:$0xf]
      %v6777 = vld [vmem:[%s6767 + $0x24] sm:$0xf]
      %v6778 = vld [vmem:[%s6767 + $0x28] sm:$0xf]
      %v6779 = vld [vmem:[%s6767 + $0x2c] sm:$0xf]
      %v6780 = vld [vmem:[%s6767 + $0x30] sm:$0xf]
      %v6781 = vld [vmem:[%s6767 + $0x34] sm:$0xf]
      %v6782 = vld [vmem:[%s6767 + $0x38] sm:$0xf]
      %v6783 = vld [vmem:[%s6767 + $0x3c] sm:$0xf]
      %v6784 = vld [vmem:[%s6767 + $0x40] sm:$0xf]
      %v6785 = vld [vmem:[%s6767 + $0x44] sm:$0xf]
      %v6786 = vld [vmem:[%s6767 + $0x48] sm:$0xf]
      %v6787 = vld [vmem:[%s6767 + $0x4c] sm:$0xf]
      %v6788 = vld [vmem:[%s6767 + $0x50] sm:$0xf]
      %v6789 = vld [vmem:[%s6767 + $0x54] sm:$0xf]
      %v6790 = vld [vmem:[%s6767 + $0x58] sm:$0xf]
      %v6791 = vld [vmem:[%s6767 + $0x5c] sm:$0xf]
      %v6792 = vld [vmem:[%s6767 + $0x60] sm:$0xf]
      %v6793 = vld [vmem:[%s6767 + $0x64] sm:$0xf]
      %v6794 = vld [vmem:[%s6767 + $0x68] sm:$0xf]
      %v6795 = vld [vmem:[%s6767 + $0x6c] sm:$0xf]
      %v6796 = vld [vmem:[%s6767 + $0x70] sm:$0xf]
      %v6797 = vld [vmem:[%s6767 + $0x74] sm:$0xf]
      %v6798 = vld [vmem:[%s6767 + $0x78] sm:$0xf]
      %v6799 = vld [vmem:[%s6767 + $0x7c] sm:$0xf]
      %v6800 = vld [vmem:[%s6767 + $0x80] sm:$0xf]
      %v6801 = vld [vmem:[%s6767 + $0x84] sm:$0xf]
      %v6802 = vld [vmem:[%s6767 + $0x88] sm:$0xf]
      %v6803 = vld [vmem:[%s6767 + $0x8c] sm:$0xf]
      %v6840 = vunpack.c.l.b16 %v6768
      %v6841 = vunpack.c.l.b16 %v6769
      %v6842 = vunpack.c.l.b16 %v6770
      %v6843 = vunpack.c.l.b16 %v6771
      %v6844 = vunpack.c.l.b16 %v6772
      %v6845 = vunpack.c.l.b16 %v6773
      %v6846 = vunpack.c.l.b16 %v6774
      %v6847 = vunpack.c.l.b16 %v6775
      %v6848 = vunpack.c.l.b16 %v6776
      %v6849 = vunpack.c.l.b16 %v6777
      %v6850 = vunpack.c.l.b16 %v6778
      %v6851 = vunpack.c.l.b16 %v6779
      %v6852 = vunpack.c.l.b16 %v6780
      %v6853 = vunpack.c.l.b16 %v6781
      %v6854 = vunpack.c.l.b16 %v6782
      %v6855 = vunpack.c.l.b16 %v6783
      %v6856 = vunpack.c.l.b16 %v6784
      %v6857 = vunpack.c.l.b16 %v6785
      %v6858 = vunpack.c.l.b16 %v6786
      %v6859 = vunpack.c.l.b16 %v6787
      %v6860 = vunpack.c.l.b16 %v6788
      %v6861 = vunpack.c.l.b16 %v6789
      %v6862 = vunpack.c.l.b16 %v6790
      %v6863 = vunpack.c.l.b16 %v6791
      %v6864 = vunpack.c.l.b16 %v6792
      %v6865 = vunpack.c.l.b16 %v6793
      %v6866 = vunpack.c.l.b16 %v6794
      %v6867 = vunpack.c.l.b16 %v6795
      %v6868 = vunpack.c.l.b16 %v6796
      %v6869 = vunpack.c.l.b16 %v6797
      %v6870 = vunpack.c.l.b16 %v6798
      %v6871 = vunpack.c.l.b16 %v6799
      %v6872 = vunpack.c.l.b16 %v6800
      %v6873 = vunpack.c.l.b16 %v6801
      %v6874 = vunpack.c.l.b16 %v6802
      %v6875 = vunpack.c.l.b16 %v6803
      %v6876 = vpack.c.b16 %v6841, %v6840
      %v6877 = vpack.c.b16 %v6843, %v6842
      %v6878 = vpack.c.b16 %v6845, %v6844
      %v6879 = vpack.c.b16 %v6847, %v6846
      %v6880 = vpack.c.b16 %v6849, %v6848
      %v6881 = vpack.c.b16 %v6851, %v6850
      %v6882 = vpack.c.b16 %v6853, %v6852
      %v6883 = vpack.c.b16 %v6855, %v6854
      %v6884 = vpack.c.b16 %v6857, %v6856
      %v6885 = vpack.c.b16 %v6859, %v6858
      %v6886 = vpack.c.b16 %v6861, %v6860
      %v6887 = vpack.c.b16 %v6863, %v6862
      %v6888 = vpack.c.b16 %v6865, %v6864
      %v6889 = vpack.c.b16 %v6867, %v6866
      %v6890 = vpack.c.b16 %v6869, %v6868
      %v6891 = vpack.c.b16 %v6871, %v6870
      %v6892 = vpack.c.b16 %v6873, %v6872
      %v6893 = vpack.c.b16 %v6875, %v6874
      %v6913 = vsel %vm615, %v6748, 0
      %v6916 = vsel %vm615, %v6751, 0
      %v6919 = vsel %vm615, %v6754, 0
      %v6922 = vsel %vm615, %v6757, 0
      %v6925 = vsel %vm615, %v6760, 0
      %v6928 = vsel %vm615, %v6763, 0
      %v6931 = vsel %vm615, %v6766, 0
      %6933 = vmatprep.subr.bf16.mxu0 0
      %6934 = vmatpush1.bf16.msra.mxu0 %v6876
      %6935 = vmatprep.subr.bf16.mxu0 0
      %6936 = vmatpush1.bf16.msra.mxu0 %v6877
      %6937 = vmatprep.subr.bf16.mxu0 0
      %6938 = vmatpush1.bf16.msra.mxu0 %v6878
      %6939 = vmatprep.subr.bf16.mxu0 0
      %6940 = vmatpush1.bf16.msra.mxu0 %v6879
      %6941 = vmatprep.subr.bf16.mxu0 0
      %6942 = vmatpush1.bf16.msra.mxu0 %v6880
      %6943 = vmatprep.subr.bf16.mxu0 0
      %6944 = vmatpush1.bf16.msra.mxu0 %v6881
      %6945 = vmatprep.subr.bf16.mxu0 0
      %6946 = vmatpush1.bf16.msra.mxu0 %v6882
      %6947 = vmatprep.subr.bf16.mxu0 0
      %6948 = vmatpush1.bf16.msra.mxu0 %v6883
      %6949 = vmatprep.subr.bf16.mxu0 0
      %6950 = vmatpush1.bf16.msra.mxu0 %v6884
      %6951 = vmatprep.subr.bf16.mxu0 0
      %6952 = vmatpush1.bf16.msra.mxu0 %v6885
      %6953 = vmatprep.subr.bf16.mxu0 0
      %6954 = vmatpush1.bf16.msra.mxu0 %v6886
      %6955 = vmatprep.subr.bf16.mxu0 0
      %6956 = vmatpush1.bf16.msra.mxu0 %v6887
      %6957 = vmatprep.subr.bf16.mxu0 0
      %6958 = vmatpush1.bf16.msra.mxu0 %v6888
      %6959 = vmatprep.subr.bf16.mxu0 0
      %6960 = vmatpush1.bf16.msra.mxu0 %v6889
      %6961 = vmatprep.subr.bf16.mxu0 0
      %6962 = vmatpush1.bf16.msra.mxu0 %v6890
      %6963 = vmatprep.subr.bf16.mxu0 0
      %6964 = vmatpush1.bf16.msra.mxu0 %v6891
      %6965 = vmatprep.mubr.bf16.mxu0 %v6747
      %6966 = vmatmul.mubr.bf16.gmra.mrb[0].mxu0 %v6746
      %v6967 = vpop.f32.mrb[0].mxu0
      %v6968 = vadd.f32 0.0, %v6967
      %v6969 = vpop.f32.mrb[0].mxu0
      %v6970 = vpop.f32.mrb[0].mxu0
      %v6971 = vadd.f32 0.0, %v6970
      %v6972 = vpop.f32.mrb[0].mxu0
      %6973 = vmatprep.mubr.bf16.mxu0 %v6750
      %6974 = vmatmul.mubr.bf16.gmra.mrb[0].mxu0 %v6749
      %v6975 = vpop.f32.mrb[0].mxu0
      %v6976 = vadd.f32 0.0, %v6975
      %v6977 = vpop.f32.mrb[0].mxu0
      %v6978 = vpop.f32.mrb[0].mxu0
      %v6979 = vadd.f32 0.0, %v6978
      %v6980 = vpop.f32.mrb[0].mxu0
      %6981 = vmatprep.mubr.bf16.mxu0 %v6753
      %6982 = vmatmul.mubr.bf16.gmra.mrb[0].mxu0 %v6752
      %v6983 = vpop.f32.mrb[0].mxu0
      %v6984 = vadd.f32 0.0, %v6983
      %v6985 = vpop.f32.mrb[0].mxu0
      %v6986 = vpop.f32.mrb[0].mxu0
      %v6987 = vadd.f32 0.0, %v6986
      %v6988 = vpop.f32.mrb[0].mxu0
      %6989 = vmatprep.mubr.bf16.mxu0 %v6756
      %6990 = vmatmul.mubr.bf16.gmra.mrb[0].mxu0 %v6755
      %v6991 = vpop.f32.mrb[0].mxu0
      %v6992 = vadd.f32 0.0, %v6991
      %v6993 = vpop.f32.mrb[0].mxu0
      %v6994 = vpop.f32.mrb[0].mxu0
      %v6995 = vadd.f32 0.0, %v6994
      %v6996 = vpop.f32.mrb[0].mxu0
      %6997 = vmatprep.mubr.bf16.mxu0 %v6759
      %6998 = vmatmul.mubr.bf16.gmra.mrb[0].mxu0 %v6758
      %v6999 = vpop.f32.mrb[0].mxu0
      %v7000 = vadd.f32 0.0, %v6999
      %v7001 = vpop.f32.mrb[0].mxu0
      %v7002 = vpop.f32.mrb[0].mxu0
      %v7003 = vadd.f32 0.0, %v7002
      %v7004 = vpop.f32.mrb[0].mxu0
      %7005 = vmatprep.mubr.bf16.mxu0 %v6762
      %7006 = vmatmul.mubr.bf16.gmra.mrb[0].mxu0 %v6761
      %v7007 = vpop.f32.mrb[0].mxu0
      %v7008 = vadd.f32 0.0, %v7007
      %v7009 = vpop.f32.mrb[0].mxu0
      %v7010 = vpop.f32.mrb[0].mxu0
      %v7011 = vadd.f32 0.0, %v7010
      %v7012 = vpop.f32.mrb[0].mxu0
      %7013 = vmatprep.mubr.bf16.mxu0 %v6765
      %7014 = vmatmul.mubr.bf16.gmra.mrb[0].mxu0 %v6764
      %v7015 = vpop.f32.mrb[0].mxu0
      %v7016 = vadd.f32 0.0, %v7015
      %v7017 = vpop.f32.mrb[0].mxu0
      %v7018 = vpop.f32.mrb[0].mxu0
      %v7019 = vpop.f32.mrb[0].mxu0
      %7020 = vdwg.mxu0
      %7021 = vmatprep.subr.bf16.mxu0 0
      %7022 = vmatpush1.bf16.msra.mxu0 %v6892
      %7023 = vmatprep.subr.bf16.mxu0 0
      %7024 = vmatpush1.bf16.msra.mxu0 %v6893
      %7025 = vmatprep.subr.bf16.mxu0 0
      %7026 = vmatpush1.bf16.msra.mxu0 0
      %7027 = vmatprep.subr.bf16.mxu0 0
      %7028 = vmatpush1.bf16.msra.mxu0 0
      %7029 = vmatprep.subr.bf16.mxu0 0
      %7030 = vmatpush1.bf16.msra.mxu0 0
      %7031 = vmatprep.subr.bf16.mxu0 0
      %7032 = vmatpush1.bf16.msra.mxu0 0
      %7033 = vmatprep.subr.bf16.mxu0 0
      %7034 = vmatpush1.bf16.msra.mxu0 0
      %7035 = vmatprep.subr.bf16.mxu0 0
      %7036 = vmatpush1.bf16.msra.mxu0 0
      %7037 = vmatprep.subr.bf16.mxu0 0
      %7038 = vmatpush1.bf16.msra.mxu0 0
      %7039 = vmatprep.subr.bf16.mxu0 0
      %7040 = vmatpush1.bf16.msra.mxu0 0
      %7041 = vmatprep.subr.bf16.mxu0 0
      %7042 = vmatpush1.bf16.msra.mxu0 0
      %7043 = vmatprep.subr.bf16.mxu0 0
      %7044 = vmatpush1.bf16.msra.mxu0 0
      %7045 = vmatprep.subr.bf16.mxu0 0
      %7046 = vmatpush1.bf16.msra.mxu0 0
      %7047 = vmatprep.subr.bf16.mxu0 0
      %7048 = vmatpush1.bf16.msra.mxu0 0
      %7049 = vmatprep.subr.bf16.mxu0 0
      %7050 = vmatpush1.bf16.msra.mxu0 0
      %7051 = vmatprep.subr.bf16.mxu0 0
      %7052 = vmatpush1.bf16.msra.mxu0 0
      %7053 = vmatprep.mubr.bf16.mxu0 0
      %7054 = vmatmul.mubr.bf16.gmra.mrb[0].mxu0 %v6913
      %v7055 = vpop.f32.mrb[0].mxu0
      %v7056 = vadd.f32 %v6968, %v7055
      %v7057 = vpop.f32.mrb[0].mxu0
      %v7058 = vpop.f32.mrb[0].mxu0
      %v7059 = vadd.f32 %v6971, %v7058
      %v7060 = vpop.f32.mrb[0].mxu0
      %7061 = vmatprep.mubr.bf16.mxu0 0
      %7062 = vmatmul.mubr.bf16.gmra.mrb[0].mxu0 %v6916
      %v7063 = vpop.f32.mrb[0].mxu0
      %v7064 = vadd.f32 %v6976, %v7063
      %v7065 = vpop.f32.mrb[0].mxu0
      %v7066 = vpop.f32.mrb[0].mxu0
      %v7067 = vadd.f32 %v6979, %v7066
      %v7068 = vpop.f32.mrb[0].mxu0
      %7069 = vmatprep.mubr.bf16.mxu0 0
      %7070 = vmatmul.mubr.bf16.gmra.mrb[0].mxu0 %v6919
      %v7071 = vpop.f32.mrb[0].mxu0
      %v7072 = vadd.f32 %v6984, %v7071
      %v7073 = vpop.f32.mrb[0].mxu0
      %v7074 = vpop.f32.mrb[0].mxu0
      %v7075 = vadd.f32 %v6987, %v7074
      %v7076 = vpop.f32.mrb[0].mxu0
      %7077 = vmatprep.mubr.bf16.mxu0 0
      %7078 = vmatmul.mubr.bf16.gmra.mrb[0].mxu0 %v6922
      %v7079 = vpop.f32.mrb[0].mxu0
      %v7080 = vadd.f32 %v6992, %v7079
      %v7081 = vpop.f32.mrb[0].mxu0
      %v7082 = vpop.f32.mrb[0].mxu0
      %v7083 = vadd.f32 %v6995, %v7082
      %v7084 = vpop.f32.mrb[0].mxu0
      %7085 = vmatprep.mubr.bf16.mxu0 0
      %7086 = vmatmul.mubr.bf16.gmra.mrb[0].mxu0 %v6925
      %v7087 = vpop.f32.mrb[0].mxu0
      %v7088 = vadd.f32 %v7000, %v7087
      %v7089 = vpop.f32.mrb[0].mxu0
      %v7090 = vpop.f32.mrb[0].mxu0
      %v7091 = vadd.f32 %v7003, %v7090
      %v7092 = vpop.f32.mrb[0].mxu0
      %7093 = vmatprep.mubr.bf16.mxu0 0
      %7094 = vmatmul.mubr.bf16.gmra.mrb[0].mxu0 %v6928
      %v7095 = vpop.f32.mrb[0].mxu0
      %v7096 = vadd.f32 %v7008, %v7095
      %v7097 = vpop.f32.mrb[0].mxu0
      %v7098 = vpop.f32.mrb[0].mxu0
      %v7099 = vadd.f32 %v7011, %v7098
      %v7100 = vpop.f32.mrb[0].mxu0
      %7101 = vmatprep.mubr.bf16.mxu0 0
      %7102 = vmatmul.mubr.bf16.gmra.mrb[0].mxu0 %v6931
      %v7103 = vpop.f32.mrb[0].mxu0
      %v7104 = vadd.f32 %v7016, %v7103
      %v7105 = vpop.f32.mrb[0].mxu0
      %v7106 = vpop.f32.mrb[0].mxu0
      %v7107 = vpop.f32.mrb[0].mxu0
      %7108 = vdwg.mxu0
      %v7110 = vsel %vm615, %v6649, 0
      %v7113 = vsel %vm615, %v6652, 0
      %v7116 = vsel %vm615, %v6655, 0
      %v7119 = vsel %vm615, %v6658, 0
      %v7122 = vsel %vm615, %v6661, 0
      %v7125 = vsel %vm615, %v6664, 0
      %v7128 = vsel %vm615, %v6667, 0
      %7130 = vmatprep.subr.bf16.mxu0 0
      %7131 = vmatpush1.bf16.msra.mxu0 %v6876
      %7132 = vmatprep.subr.bf16.mxu0 0
      %7133 = vmatpush1.bf16.msra.mxu0 %v6877
      %7134 = vmatprep.subr.bf16.mxu0 0
      %7135 = vmatpush1.bf16.msra.mxu0 %v6878
      %7136 = vmatprep.subr.bf16.mxu0 0
      %7137 = vmatpush1.bf16.msra.mxu0 %v6879
      %7138 = vmatprep.subr.bf16.mxu0 0
      %7139 = vmatpush1.bf16.msra.mxu0 %v6880
      %7140 = vmatprep.subr.bf16.mxu0 0
      %7141 = vmatpush1.bf16.msra.mxu0 %v6881
      %7142 = vmatprep.subr.bf16.mxu0 0
      %7143 = vmatpush1.bf16.msra.mxu0 %v6882
      %7144 = vmatprep.subr.bf16.mxu0 0
      %7145 = vmatpush1.bf16.msra.mxu0 %v6883
      %7146 = vmatprep.subr.bf16.mxu0 0
      %7147 = vmatpush1.bf16.msra.mxu0 %v6884
      %7148 = vmatprep.subr.bf16.mxu0 0
      %7149 = vmatpush1.bf16.msra.mxu0 %v6885
      %7150 = vmatprep.subr.bf16.mxu0 0
      %7151 = vmatpush1.bf16.msra.mxu0 %v6886
      %7152 = vmatprep.subr.bf16.mxu0 0
      %7153 = vmatpush1.bf16.msra.mxu0 %v6887
      %7154 = vmatprep.subr.bf16.mxu0 0
      %7155 = vmatpush1.bf16.msra.mxu0 %v6888
      %7156 = vmatprep.subr.bf16.mxu0 0
      %7157 = vmatpush1.bf16.msra.mxu0 %v6889
      %7158 = vmatprep.subr.bf16.mxu0 0
      %7159 = vmatpush1.bf16.msra.mxu0 %v6890
      %7160 = vmatprep.subr.bf16.mxu0 0
      %7161 = vmatpush1.bf16.msra.mxu0 %v6891
      %7162 = vmatprep.mubr.bf16.mxu0 %v6648
      %7163 = vmatmul.mubr.bf16.gmra.mrb[0].mxu0 %v6647
      %v7164 = vpop.f32.mrb[0].mxu0
      %v7165 = vadd.f32 %v7056, %v7164
      %v7166 = vpop.f32.mrb[0].mxu0
      %v7167 = vpop.f32.mrb[0].mxu0
      %v7168 = vadd.f32 %v7059, %v7167
      %v7169 = vpop.f32.mrb[0].mxu0
      %7170 = vmatprep.mubr.bf16.mxu0 %v6651
      %7171 = vmatmul.mubr.bf16.gmra.mrb[0].mxu0 %v6650
      %v7172 = vpop.f32.mrb[0].mxu0
      %v7173 = vadd.f32 %v7064, %v7172
      %v7174 = vpop.f32.mrb[0].mxu0
      %v7175 = vpop.f32.mrb[0].mxu0
      %v7176 = vadd.f32 %v7067, %v7175
      %v7177 = vpop.f32.mrb[0].mxu0
      %7178 = vmatprep.mubr.bf16.mxu0 %v6654
      %7179 = vmatmul.mubr.bf16.gmra.mrb[0].mxu0 %v6653
      %v7180 = vpop.f32.mrb[0].mxu0
      %v7181 = vadd.f32 %v7072, %v7180
      %v7182 = vpop.f32.mrb[0].mxu0
      %v7183 = vpop.f32.mrb[0].mxu0
      %v7184 = vadd.f32 %v7075, %v7183
      %v7185 = vpop.f32.mrb[0].mxu0
      %7186 = vmatprep.mubr.bf16.mxu0 %v6657
      %7187 = vmatmul.mubr.bf16.gmra.mrb[0].mxu0 %v6656
      %v7188 = vpop.f32.mrb[0].mxu0
      %v7189 = vadd.f32 %v7080, %v7188
      %v7190 = vpop.f32.mrb[0].mxu0
      %v7191 = vpop.f32.mrb[0].mxu0
      %v7192 = vadd.f32 %v7083, %v7191
      %v7193 = vpop.f32.mrb[0].mxu0
      %7194 = vmatprep.mubr.bf16.mxu0 %v6660
      %7195 = vmatmul.mubr.bf16.gmra.mrb[0].mxu0 %v6659
      %v7196 = vpop.f32.mrb[0].mxu0
      %v7197 = vadd.f32 %v7088, %v7196
      %v7198 = vpop.f32.mrb[0].mxu0
      %v7199 = vpop.f32.mrb[0].mxu0
      %v7200 = vadd.f32 %v7091, %v7199
      %v7201 = vpop.f32.mrb[0].mxu0
      %7202 = vmatprep.mubr.bf16.mxu0 %v6663
      %7203 = vmatmul.mubr.bf16.gmra.mrb[0].mxu0 %v6662
      %v7204 = vpop.f32.mrb[0].mxu0
      %v7205 = vadd.f32 %v7096, %v7204
      %v7206 = vpop.f32.mrb[0].mxu0
      %v7207 = vpop.f32.mrb[0].mxu0
      %v7208 = vadd.f32 %v7099, %v7207
      %v7209 = vpop.f32.mrb[0].mxu0
      %7210 = vmatprep.mubr.bf16.mxu0 %v6666
      %7211 = vmatmul.mubr.bf16.gmra.mrb[0].mxu0 %v6665
      %v7212 = vpop.f32.mrb[0].mxu0
      %v7213 = vadd.f32 %v7104, %v7212
      %v7214 = vpop.f32.mrb[0].mxu0
      %v7215 = vpop.f32.mrb[0].mxu0
      %v7216 = vpop.f32.mrb[0].mxu0
      %7217 = vdwg.mxu0
      %7218 = vmatprep.subr.bf16.mxu0 0
      %7219 = vmatpush1.bf16.msra.mxu0 %v6892
      %7220 = vmatprep.subr.bf16.mxu0 0
      %7221 = vmatpush1.bf16.msra.mxu0 %v6893
      %7222 = vmatprep.subr.bf16.mxu0 0
      %7223 = vmatpush1.bf16.msra.mxu0 0
      %7224 = vmatprep.subr.bf16.mxu0 0
      %7225 = vmatpush1.bf16.msra.mxu0 0
      %7226 = vmatprep.subr.bf16.mxu0 0
      %7227 = vmatpush1.bf16.msra.mxu0 0
      %7228 = vmatprep.subr.bf16.mxu0 0
      %7229 = vmatpush1.bf16.msra.mxu0 0
      %7230 = vmatprep.subr.bf16.mxu0 0
      %7231 = vmatpush1.bf16.msra.mxu0 0
      %7232 = vmatprep.subr.bf16.mxu0 0
      %7233 = vmatpush1.bf16.msra.mxu0 0
      %7234 = vmatprep.subr.bf16.mxu0 0
      %7235 = vmatpush1.bf16.msra.mxu0 0
      %7236 = vmatprep.subr.bf16.mxu0 0
      %7237 = vmatpush1.bf16.msra.mxu0 0
      %7238 = vmatprep.subr.bf16.mxu0 0
      %7239 = vmatpush1.bf16.msra.mxu0 0
      %7240 = vmatprep.subr.bf16.mxu0 0
      %7241 = vmatpush1.bf16.msra.mxu0 0
      %7242 = vmatprep.subr.bf16.mxu0 0
      %7243 = vmatpush1.bf16.msra.mxu0 0
      %7244 = vmatprep.subr.bf16.mxu0 0
      %7245 = vmatpush1.bf16.msra.mxu0 0
      %7246 = vmatprep.subr.bf16.mxu0 0
      %7247 = vmatpush1.bf16.msra.mxu0 0
      %7248 = vmatprep.subr.bf16.mxu0 0
      %7249 = vmatpush1.bf16.msra.mxu0 0
      %7250 = vmatprep.mubr.bf16.mxu0 0
      %7251 = vmatmul.mubr.bf16.gmra.mrb[0].mxu0 %v7110
      %v7252 = vpop.f32.mrb[0].mxu0
      %v7253 = vadd.f32 %v7165, %v7252
      %v7254 = vpop.f32.mrb[0].mxu0
      %v7255 = vpop.f32.mrb[0].mxu0
      %v7256 = vadd.f32 %v7168, %v7255
      %v7257 = vpop.f32.mrb[0].mxu0
      %7258 = vmatprep.mubr.bf16.mxu0 0
      %7259 = vmatmul.mubr.bf16.gmra.mrb[0].mxu0 %v7113
      %v7260 = vpop.f32.mrb[0].mxu0
      %v7261 = vadd.f32 %v7173, %v7260
      %v7262 = vpop.f32.mrb[0].mxu0
      %v7263 = vpop.f32.mrb[0].mxu0
      %v7264 = vadd.f32 %v7176, %v7263
      %v7265 = vpop.f32.mrb[0].mxu0
      %7266 = vmatprep.mubr.bf16.mxu0 0
      %7267 = vmatmul.mubr.bf16.gmra.mrb[0].mxu0 %v7116
      %v7268 = vpop.f32.mrb[0].mxu0
      %v7269 = vadd.f32 %v7181, %v7268
      %v7270 = vpop.f32.mrb[0].mxu0
      %v7271 = vpop.f32.mrb[0].mxu0
      %v7272 = vadd.f32 %v7184, %v7271
      %v7273 = vpop.f32.mrb[0].mxu0
      %7274 = vmatprep.mubr.bf16.mxu0 0
      %7275 = vmatmul.mubr.bf16.gmra.mrb[0].mxu0 %v7119
      %v7276 = vpop.f32.mrb[0].mxu0
      %v7277 = vadd.f32 %v7189, %v7276
      %v7278 = vpop.f32.mrb[0].mxu0
      %v7279 = vpop.f32.mrb[0].mxu0
      %v7280 = vadd.f32 %v7192, %v7279
      %v7281 = vpop.f32.mrb[0].mxu0
      %7282 = vmatprep.mubr.bf16.mxu0 0
      %7283 = vmatmul.mubr.bf16.gmra.mrb[0].mxu0 %v7122
      %v7284 = vpop.f32.mrb[0].mxu0
      %v7285 = vadd.f32 %v7197, %v7284
      %v7286 = vpop.f32.mrb[0].mxu0
      %v7287 = vpop.f32.mrb[0].mxu0
      %v7288 = vadd.f32 %v7200, %v7287
      %v7289 = vpop.f32.mrb[0].mxu0
      %7290 = vmatprep.mubr.bf16.mxu0 0
      %7291 = vmatmul.mubr.bf16.gmra.mrb[0].mxu0 %v7125
      %v7292 = vpop.f32.mrb[0].mxu0
      %v7293 = vadd.f32 %v7205, %v7292
      %v7294 = vpop.f32.mrb[0].mxu0
      %v7295 = vpop.f32.mrb[0].mxu0
      %v7296 = vadd.f32 %v7208, %v7295
      %v7297 = vpop.f32.mrb[0].mxu0
      %7298 = vmatprep.mubr.bf16.mxu0 0
      %7299 = vmatmul.mubr.bf16.gmra.mrb[0].mxu0 %v7128
      %v7300 = vpop.f32.mrb[0].mxu0
      %v7301 = vadd.f32 %v7213, %v7300
      %v7302 = vpop.f32.mrb[0].mxu0
      %v7303 = vpop.f32.mrb[0].mxu0
      %v7304 = vpop.f32.mrb[0].mxu0
      %7305 = vdwg.mxu0
      %s7306 = scalar_lea.vmem %s2, 5
      %v7307 = vld [vmem:[%s7306] sm:$0x1]
      %v7309 = vlaneseq
      %v7310 = vshrl.u32 %v7309, 7
      %v7311 = vsub.s32 0, %v7310
      %v7312 = vrot.slane %v7307, %v7311
      %v7314 = vadd.f32 %v7253, %v7312
      %v7315 = vadd.f32 %v7256, %v7312
      %v7316 = vadd.f32 %v7261, %v7312
      %v7317 = vadd.f32 %v7264, %v7312
      %v7318 = vadd.f32 %v7269, %v7312
      %v7319 = vadd.f32 %v7272, %v7312
      %v7320 = vadd.f32 %v7277, %v7312
      %v7321 = vadd.f32 %v7280, %v7312
      %v7322 = vadd.f32 %v7285, %v7312
      %v7323 = vadd.f32 %v7288, %v7312
      %v7324 = vadd.f32 %v7293, %v7312
      %v7325 = vadd.f32 %v7296, %v7312
      %v7326 = vadd.f32 %v7301, %v7312
      %s7327 = scalar_lea.vmem %s3, 520
      %v7328 = vld [vmem:[%s7327] sm:$0xff]
      %v7329 = vld [vmem:[%s7327 + $0x8] sm:$0xff]
      %v7330 = vld [vmem:[%s7327 + $0x10] sm:$0xff]
      %v7331 = vld [vmem:[%s7327 + $0x18] sm:$0xff]
      %v7332 = vld [vmem:[%s7327 + $0x20] sm:$0xff]
      %v7333 = vld [vmem:[%s7327 + $0x28] sm:$0xff]
      %v7334 = vld [vmem:[%s7327 + $0x30] sm:$0xff]
      %v7335 = vld [vmem:[%s7327 + $0x38] sm:$0xff]
      %v7336 = vld [vmem:[%s7327 + $0x40] sm:$0xff]
      %v7337 = vld [vmem:[%s7327 + $0x48] sm:$0xff]
      %v7338 = vld [vmem:[%s7327 + $0x50] sm:$0xff]
      %v7339 = vld [vmem:[%s7327 + $0x58] sm:$0xff]
      %v7340 = vld [vmem:[%s7327 + $0x60] sm:$0xf]
      %v7341 = vmul.f32 %v7314, %v7328
      %v7342 = vmul.f32 %v7315, %v7329
      %v7343 = vmul.f32 %v7316, %v7330
      %v7344 = vmul.f32 %v7317, %v7331
      %v7345 = vmul.f32 %v7318, %v7332
      %v7346 = vmul.f32 %v7319, %v7333
      %v7347 = vmul.f32 %v7320, %v7334
      %v7348 = vmul.f32 %v7321, %v7335
      %v7349 = vmul.f32 %v7322, %v7336
      %v7350 = vmul.f32 %v7323, %v7337
      %v7351 = vmul.f32 %v7324, %v7338
      %v7352 = vmul.f32 %v7325, %v7339
      %v7353 = vmul.f32 %v7326, %v7340
      %7354 = vst [vmem:[#allocation2 + $0x10] sm:$0xff] %v7341
      %7355 = vst [vmem:[#allocation2 + $0x18] sm:$0xff] %v7342
      %7356 = vst [vmem:[#allocation2 + $0x20] sm:$0xff] %v7343
      %7357 = vst [vmem:[#allocation2 + $0x28] sm:$0xff] %v7344
      %7358 = vst [vmem:[#allocation2 + $0x30] sm:$0xff] %v7345
      %7359 = vst [vmem:[#allocation2 + $0x38] sm:$0xff] %v7346
      %7360 = vst [vmem:[#allocation2 + $0x40] sm:$0xff] %v7347
      %7361 = vst [vmem:[#allocation2 + $0x48] sm:$0xff] %v7348
      %7362 = vst [vmem:[#allocation2 + $0x50] sm:$0xff] %v7349
      %7363 = vst [vmem:[#allocation2 + $0x58] sm:$0xff] %v7350
      %7364 = vst [vmem:[#allocation2 + $0x60] sm:$0xff] %v7351
      %7365 = vst [vmem:[#allocation2 + $0x68] sm:$0xff] %v7352
      %7366 = vst [vmem:[#allocation2 + $0x70] sm:$0xf] %v7353
      %v7367 = vld [vmem:[#allocation2 + $0x5] sm:$0xff]
      %v7368 = vld [vmem:[#allocation2 + $0xd] sm:$0xff]
      %v7369 = vld [vmem:[#allocation2 + $0x15] sm:$0xff]
      %v7370 = vld [vmem:[#allocation2 + $0x1d] sm:$0xff]
      %v7371 = vld [vmem:[#allocation2 + $0x25] sm:$0xff]
      %v7372 = vld [vmem:[#allocation2 + $0x2d] sm:$0xff]
      %v7373 = vld [vmem:[#allocation2 + $0x35] sm:$0xff]
      %v7374 = vld [vmem:[#allocation2 + $0x3d] sm:$0xff]
      %v7375 = vld [vmem:[#allocation2 + $0x45] sm:$0xff]
      %v7376 = vld [vmem:[#allocation2 + $0x4d] sm:$0xff]
      %v7377 = vld [vmem:[#allocation2 + $0x55] sm:$0xff]
      %v7378 = vld [vmem:[#allocation2 + $0x5d] sm:$0xff]
      %v7379 = vld [vmem:[#allocation2 + $0x65] sm:$0xf]
      %v7380 = vld [vmem:[#allocation2 + $0x6] sm:$0xff]
      %v7381 = vld [vmem:[#allocation2 + $0xe] sm:$0xff]
      %v7382 = vld [vmem:[#allocation2 + $0x16] sm:$0xff]
      %v7383 = vld [vmem:[#allocation2 + $0x1e] sm:$0xff]
      %v7384 = vld [vmem:[#allocation2 + $0x26] sm:$0xff]
      %v7385 = vld [vmem:[#allocation2 + $0x2e] sm:$0xff]
      %v7386 = vld [vmem:[#allocation2 + $0x36] sm:$0xff]
      %v7387 = vld [vmem:[#allocation2 + $0x3e] sm:$0xff]
      %v7388 = vld [vmem:[#allocation2 + $0x46] sm:$0xff]
      %v7389 = vld [vmem:[#allocation2 + $0x4e] sm:$0xff]
      %v7390 = vld [vmem:[#allocation2 + $0x56] sm:$0xff]
      %v7391 = vld [vmem:[#allocation2 + $0x5e] sm:$0xff]
      %v7392 = vld [vmem:[#allocation2 + $0x66] sm:$0xf]
      %v7393 = vld [vmem:[#allocation2 + $0x7] sm:$0xff]
      %v7394 = vld [vmem:[#allocation2 + $0xf] sm:$0xff]
      %v7395 = vld [vmem:[#allocation2 + $0x17] sm:$0xff]
      %v7396 = vld [vmem:[#allocation2 + $0x1f] sm:$0xff]
      %v7397 = vld [vmem:[#allocation2 + $0x27] sm:$0xff]
      %v7398 = vld [vmem:[#allocation2 + $0x2f] sm:$0xff]
      %v7399 = vld [vmem:[#allocation2 + $0x37] sm:$0xff]
      %v7400 = vld [vmem:[#allocation2 + $0x3f] sm:$0xff]
      %v7401 = vld [vmem:[#allocation2 + $0x47] sm:$0xff]
      %v7402 = vld [vmem:[#allocation2 + $0x4f] sm:$0xff]
      %v7403 = vld [vmem:[#allocation2 + $0x57] sm:$0xff]
      %v7404 = vld [vmem:[#allocation2 + $0x5f] sm:$0xff]
      %v7405 = vld [vmem:[#allocation2 + $0x67] sm:$0xf]
      %v7406 = vld [vmem:[#allocation2 + $0x67] sm:$0xff]
      %v7407 = vld [vmem:[#allocation2 + $0x6f] sm:$0xf]
      %v7408 = vld [vmem:[#allocation2 + $0x10] sm:$0xff]
      %v7409 = vld [vmem:[#allocation2 + $0x18] sm:$0xff]
      %v7410 = vld [vmem:[#allocation2 + $0x20] sm:$0xff]
      %v7411 = vld [vmem:[#allocation2 + $0x28] sm:$0xff]
      %v7412 = vld [vmem:[#allocation2 + $0x30] sm:$0xff]
      %v7413 = vld [vmem:[#allocation2 + $0x38] sm:$0xff]
      %v7414 = vld [vmem:[#allocation2 + $0x40] sm:$0xff]
      %v7415 = vld [vmem:[#allocation2 + $0x48] sm:$0xff]
      %v7416 = vld [vmem:[#allocation2 + $0x50] sm:$0xff]
      %v7417 = vld [vmem:[#allocation2 + $0x58] sm:$0xff]
      %v7418 = vld [vmem:[#allocation2 + $0x60] sm:$0xff]
      %v7419 = vld [vmem:[#allocation2 + $0x68] sm:$0xff]
      %v7420 = vld [vmem:[#allocation2 + $0x70] sm:$0xf]
      %v7421 = vld [vmem:[#allocation2 + $0x11] sm:$0xff]
      %v7422 = vld [vmem:[#allocation2 + $0x19] sm:$0xff]
      %v7423 = vld [vmem:[#allocation2 + $0x21] sm:$0xff]
      %v7424 = vld [vmem:[#allocation2 + $0x29] sm:$0xff]
      %v7425 = vld [vmem:[#allocation2 + $0x31] sm:$0xff]
      %v7426 = vld [vmem:[#allocation2 + $0x39] sm:$0xff]
      %v7427 = vld [vmem:[#allocation2 + $0x41] sm:$0xff]
      %v7428 = vld [vmem:[#allocation2 + $0x49] sm:$0xff]
      %v7429 = vld [vmem:[#allocation2 + $0x51] sm:$0xff]
      %v7430 = vld [vmem:[#allocation2 + $0x59] sm:$0xff]
      %v7431 = vld [vmem:[#allocation2 + $0x61] sm:$0xff]
      %v7432 = vld [vmem:[#allocation2 + $0x69] sm:$0xff]
      %v7433 = vld [vmem:[#allocation2 + $0x71] sm:$0xf]
      %v7434 = vld [vmem:[#allocation2 + $0x71] sm:$0xff]
      %v7435 = vld [vmem:[#allocation2 + $0x79] sm:$0xf]
      %v7436 = vld [vmem:[#allocation2 + $0x1a] sm:$0xff]
      %v7437 = vld [vmem:[#allocation2 + $0x22] sm:$0xff]
      %v7438 = vld [vmem:[#allocation2 + $0x2a] sm:$0xff]
      %v7439 = vld [vmem:[#allocation2 + $0x32] sm:$0xff]
      %v7440 = vld [vmem:[#allocation2 + $0x3a] sm:$0xff]
      %v7441 = vld [vmem:[#allocation2 + $0x42] sm:$0xff]
      %v7442 = vld [vmem:[#allocation2 + $0x4a] sm:$0xff]
      %v7443 = vld [vmem:[#allocation2 + $0x52] sm:$0xff]
      %v7444 = vld [vmem:[#allocation2 + $0x5a] sm:$0xff]
      %v7445 = vld [vmem:[#allocation2 + $0x62] sm:$0xff]
      %v7446 = vld [vmem:[#allocation2 + $0x6a] sm:$0xff]
      %v7447 = vld [vmem:[#allocation2 + $0x72] sm:$0xff]
      %v7448 = vld [vmem:[#allocation2 + $0x7a] sm:$0xf]
      %v7449 = vld [vmem:[#allocation2 + $0x1b] sm:$0xff]
      %v7450 = vld [vmem:[#allocation2 + $0x23] sm:$0xff]
      %v7451 = vld [vmem:[#allocation2 + $0x2b] sm:$0xff]
      %v7452 = vld [vmem:[#allocation2 + $0x33] sm:$0xff]
      %v7453 = vld [vmem:[#allocation2 + $0x3b] sm:$0xff]
      %v7454 = vld [vmem:[#allocation2 + $0x43] sm:$0xff]
      %v7455 = vld [vmem:[#allocation2 + $0x4b] sm:$0xff]
      %v7456 = vld [vmem:[#allocation2 + $0x53] sm:$0xff]
      %v7457 = vld [vmem:[#allocation2 + $0x5b] sm:$0xff]
      %v7458 = vld [vmem:[#allocation2 + $0x63] sm:$0xff]
      %v7459 = vld [vmem:[#allocation2 + $0x6b] sm:$0xff]
      %v7460 = vld [vmem:[#allocation2 + $0x73] sm:$0xff]
      %v7461 = vld [vmem:[#allocation2 + $0x7b] sm:$0xf]
      %7475 = vrot.lane.b32.xlu0 %v7380, 32
      %v7476 = vpop.permute.xlu0 %7475
      %7477 = vrot.lane.b32.xlu0 %v7381, 32
      %v7478 = vpop.permute.xlu0 %7477
      %7479 = vrot.lane.b32.xlu0 %v7382, 32
      %v7480 = vpop.permute.xlu0 %7479
      %7481 = vrot.lane.b32.xlu0 %v7383, 32
      %v7482 = vpop.permute.xlu0 %7481
      %7483 = vrot.lane.b32.xlu0 %v7384, 32
      %v7484 = vpop.permute.xlu0 %7483
      %7485 = vrot.lane.b32.xlu0 %v7385, 32
      %v7486 = vpop.permute.xlu0 %7485
      %7487 = vrot.lane.b32.xlu0 %v7386, 32
      %v7488 = vpop.permute.xlu0 %7487
      %7489 = vrot.lane.b32.xlu0 %v7387, 32
      %v7490 = vpop.permute.xlu0 %7489
      %7491 = vrot.lane.b32.xlu0 %v7388, 32
      %v7492 = vpop.permute.xlu0 %7491
      %7493 = vrot.lane.b32.xlu0 %v7389, 32
      %v7494 = vpop.permute.xlu0 %7493
      %7495 = vrot.lane.b32.xlu0 %v7390, 32
      %v7496 = vpop.permute.xlu0 %7495
      %7497 = vrot.lane.b32.xlu0 %v7391, 32
      %v7498 = vpop.permute.xlu0 %7497
      %7499 = vrot.lane.b32.xlu0 %v7392, 32
      %v7500 = vpop.permute.xlu0 %7499
      %7527 = vrot.lane.b32.xlu0 %v7393, 64
      %v7528 = vpop.permute.xlu0 %7527
      %7529 = vrot.lane.b32.xlu0 %v7394, 64
      %v7530 = vpop.permute.xlu0 %7529
      %7531 = vrot.lane.b32.xlu0 %v7395, 64
      %v7532 = vpop.permute.xlu0 %7531
      %7533 = vrot.lane.b32.xlu0 %v7396, 64
      %v7534 = vpop.permute.xlu0 %7533
      %7535 = vrot.lane.b32.xlu0 %v7397, 64
      %v7536 = vpop.permute.xlu0 %7535
      %7537 = vrot.lane.b32.xlu0 %v7398, 64
      %v7538 = vpop.permute.xlu0 %7537
      %7539 = vrot.lane.b32.xlu0 %v7399, 64
      %v7540 = vpop.permute.xlu0 %7539
      %7541 = vrot.lane.b32.xlu0 %v7400, 64
      %v7542 = vpop.permute.xlu0 %7541
      %7543 = vrot.lane.b32.xlu0 %v7401, 64
      %v7544 = vpop.permute.xlu0 %7543
      %7545 = vrot.lane.b32.xlu0 %v7402, 64
      %v7546 = vpop.permute.xlu0 %7545
      %7547 = vrot.lane.b32.xlu0 %v7403, 64
      %v7548 = vpop.permute.xlu0 %7547
      %7549 = vrot.lane.b32.xlu0 %v7404, 64
      %v7550 = vpop.permute.xlu0 %7549
      %7551 = vrot.lane.b32.xlu0 %v7405, 64
      %v7552 = vpop.permute.xlu0 %7551
      %7568 = vrot.lane.b32.xlu0 %v7394, 96
      %v7569 = vpop.permute.xlu0 %7568
      %7570 = vrot.lane.b32.xlu0 %v7395, 96
      %v7571 = vpop.permute.xlu0 %7570
      %7572 = vrot.lane.b32.xlu0 %v7396, 96
      %v7573 = vpop.permute.xlu0 %7572
      %7574 = vrot.lane.b32.xlu0 %v7397, 96
      %v7575 = vpop.permute.xlu0 %7574
      %7576 = vrot.lane.b32.xlu0 %v7398, 96
      %v7577 = vpop.permute.xlu0 %7576
      %7578 = vrot.lane.b32.xlu0 %v7399, 96
      %v7579 = vpop.permute.xlu0 %7578
      %7580 = vrot.lane.b32.xlu0 %v7400, 96
      %v7581 = vpop.permute.xlu0 %7580
      %7582 = vrot.lane.b32.xlu0 %v7401, 96
      %v7583 = vpop.permute.xlu0 %7582
      %7584 = vrot.lane.b32.xlu0 %v7402, 96
      %v7585 = vpop.permute.xlu0 %7584
      %7586 = vrot.lane.b32.xlu0 %v7403, 96
      %v7587 = vpop.permute.xlu0 %7586
      %7588 = vrot.lane.b32.xlu0 %v7404, 96
      %v7589 = vpop.permute.xlu0 %7588
      %7590 = vrot.lane.b32.xlu0 %v7406, 96
      %v7591 = vpop.permute.xlu0 %7590
      %7592 = vrot.lane.b32.xlu0 %v7407, 96
      %v7593 = vpop.permute.xlu0 %7592
      %7620 = vrot.lane.b32.xlu0 %v7421, 32
      %v7621 = vpop.permute.xlu0 %7620
      %7622 = vrot.lane.b32.xlu0 %v7422, 32
      %v7623 = vpop.permute.xlu0 %7622
      %7624 = vrot.lane.b32.xlu0 %v7423, 32
      %v7625 = vpop.permute.xlu0 %7624
      %7626 = vrot.lane.b32.xlu0 %v7424, 32
      %v7627 = vpop.permute.xlu0 %7626
      %7628 = vrot.lane.b32.xlu0 %v7425, 32
      %v7629 = vpop.permute.xlu0 %7628
      %7630 = vrot.lane.b32.xlu0 %v7426, 32
      %v7631 = vpop.permute.xlu0 %7630
      %7632 = vrot.lane.b32.xlu0 %v7427, 32
      %v7633 = vpop.permute.xlu0 %7632
      %7634 = vrot.lane.b32.xlu0 %v7428, 32
      %v7635 = vpop.permute.xlu0 %7634
      %7636 = vrot.lane.b32.xlu0 %v7429, 32
      %v7637 = vpop.permute.xlu0 %7636
      %7638 = vrot.lane.b32.xlu0 %v7430, 32
      %v7639 = vpop.permute.xlu0 %7638
      %7640 = vrot.lane.b32.xlu0 %v7431, 32
      %v7641 = vpop.permute.xlu0 %7640
      %7642 = vrot.lane.b32.xlu0 %v7432, 32
      %v7643 = vpop.permute.xlu0 %7642
      %7644 = vrot.lane.b32.xlu0 %v7433, 32
      %v7645 = vpop.permute.xlu0 %7644
      %7661 = vrot.lane.b32.xlu0 %v7422, 64
      %v7662 = vpop.permute.xlu0 %7661
      %7663 = vrot.lane.b32.xlu0 %v7423, 64
      %v7664 = vpop.permute.xlu0 %7663
      %7665 = vrot.lane.b32.xlu0 %v7424, 64
      %v7666 = vpop.permute.xlu0 %7665
      %7667 = vrot.lane.b32.xlu0 %v7425, 64
      %v7668 = vpop.permute.xlu0 %7667
      %7669 = vrot.lane.b32.xlu0 %v7426, 64
      %v7670 = vpop.permute.xlu0 %7669
      %7671 = vrot.lane.b32.xlu0 %v7427, 64
      %v7672 = vpop.permute.xlu0 %7671
      %7673 = vrot.lane.b32.xlu0 %v7428, 64
      %v7674 = vpop.permute.xlu0 %7673
      %7675 = vrot.lane.b32.xlu0 %v7429, 64
      %v7676 = vpop.permute.xlu0 %7675
      %7677 = vrot.lane.b32.xlu0 %v7430, 64
      %v7678 = vpop.permute.xlu0 %7677
      %7679 = vrot.lane.b32.xlu0 %v7431, 64
      %v7680 = vpop.permute.xlu0 %7679
      %7681 = vrot.lane.b32.xlu0 %v7432, 64
      %v7682 = vpop.permute.xlu0 %7681
      %7683 = vrot.lane.b32.xlu0 %v7434, 64
      %v7684 = vpop.permute.xlu0 %7683
      %7685 = vrot.lane.b32.xlu0 %v7435, 64
      %v7686 = vpop.permute.xlu0 %7685
      %7713 = vrot.lane.b32.xlu0 %v7436, 96
      %v7714 = vpop.permute.xlu0 %7713
      %7715 = vrot.lane.b32.xlu0 %v7437, 96
      %v7716 = vpop.permute.xlu0 %7715
      %7717 = vrot.lane.b32.xlu0 %v7438, 96
      %v7718 = vpop.permute.xlu0 %7717
      %7719 = vrot.lane.b32.xlu0 %v7439, 96
      %v7720 = vpop.permute.xlu0 %7719
      %7721 = vrot.lane.b32.xlu0 %v7440, 96
      %v7722 = vpop.permute.xlu0 %7721
      %7723 = vrot.lane.b32.xlu0 %v7441, 96
      %v7724 = vpop.permute.xlu0 %7723
      %7725 = vrot.lane.b32.xlu0 %v7442, 96
      %v7726 = vpop.permute.xlu0 %7725
      %7727 = vrot.lane.b32.xlu0 %v7443, 96
      %v7728 = vpop.permute.xlu0 %7727
      %7729 = vrot.lane.b32.xlu0 %v7444, 96
      %v7730 = vpop.permute.xlu0 %7729
      %7731 = vrot.lane.b32.xlu0 %v7445, 96
      %v7732 = vpop.permute.xlu0 %7731
      %7733 = vrot.lane.b32.xlu0 %v7446, 96
      %v7734 = vpop.permute.xlu0 %7733
      %7735 = vrot.lane.b32.xlu0 %v7447, 96
      %v7736 = vpop.permute.xlu0 %7735
      %7737 = vrot.lane.b32.xlu0 %v7448, 96
      %v7738 = vpop.permute.xlu0 %7737
      %v7752 = vsel %vm615, %v7367, %v7476
      %v7753 = vsel %vm615, %v7368, %v7478
      %v7754 = vsel %vm615, %v7369, %v7480
      %v7755 = vsel %vm615, %v7370, %v7482
      %v7756 = vsel %vm615, %v7371, %v7484
      %v7757 = vsel %vm615, %v7372, %v7486
      %v7758 = vsel %vm615, %v7373, %v7488
      %v7759 = vsel %vm615, %v7374, %v7490
      %v7760 = vsel %vm615, %v7375, %v7492
      %v7761 = vsel %vm615, %v7376, %v7494
      %v7762 = vsel %vm615, %v7377, %v7496
      %v7763 = vsel %vm615, %v7378, %v7498
      %v7764 = vsel %vm615, %v7379, %v7500
      %v7765 = vsel %vm629, %v7752, %v7528
      %v7766 = vsel %vm629, %v7753, %v7530
      %v7767 = vsel %vm629, %v7754, %v7532
      %v7768 = vsel %vm629, %v7755, %v7534
      %v7769 = vsel %vm629, %v7756, %v7536
      %v7770 = vsel %vm629, %v7757, %v7538
      %v7771 = vsel %vm629, %v7758, %v7540
      %v7772 = vsel %vm629, %v7759, %v7542
      %v7773 = vsel %vm629, %v7760, %v7544
      %v7774 = vsel %vm629, %v7761, %v7546
      %v7775 = vsel %vm629, %v7762, %v7548
      %v7776 = vsel %vm629, %v7763, %v7550
      %v7777 = vsel %vm629, %v7764, %v7552
      %v7778 = vsel %vm643, %v7765, %v7569
      %v7779 = vsel %vm643, %v7766, %v7571
      %v7780 = vsel %vm643, %v7767, %v7573
      %v7781 = vsel %vm643, %v7768, %v7575
      %v7782 = vsel %vm643, %v7769, %v7577
      %v7783 = vsel %vm643, %v7770, %v7579
      %v7784 = vsel %vm643, %v7771, %v7581
      %v7785 = vsel %vm643, %v7772, %v7583
      %v7786 = vsel %vm643, %v7773, %v7585
      %v7787 = vsel %vm643, %v7774, %v7587
      %v7788 = vsel %vm643, %v7775, %v7589
      %v7789 = vsel %vm643, %v7776, %v7591
      %v7790 = vsel %vm643, %v7777, %v7593
      %v7791 = vsel %vm615, %v7408, %v7621
      %v7792 = vsel %vm615, %v7409, %v7623
      %v7793 = vsel %vm615, %v7410, %v7625
      %v7794 = vsel %vm615, %v7411, %v7627
      %v7795 = vsel %vm615, %v7412, %v7629
      %v7796 = vsel %vm615, %v7413, %v7631
      %v7797 = vsel %vm615, %v7414, %v7633
      %v7798 = vsel %vm615, %v7415, %v7635
      %v7799 = vsel %vm615, %v7416, %v7637
      %v7800 = vsel %vm615, %v7417, %v7639
      %v7801 = vsel %vm615, %v7418, %v7641
      %v7802 = vsel %vm615, %v7419, %v7643
      %v7803 = vsel %vm615, %v7420, %v7645
      %v7804 = vsel %vm629, %v7791, %v7662
      %v7805 = vsel %vm629, %v7792, %v7664
      %v7806 = vsel %vm629, %v7793, %v7666
      %v7807 = vsel %vm629, %v7794, %v7668
      %v7808 = vsel %vm629, %v7795, %v7670
      %v7809 = vsel %vm629, %v7796, %v7672
      %v7810 = vsel %vm629, %v7797, %v7674
      %v7811 = vsel %vm629, %v7798, %v7676
      %v7812 = vsel %vm629, %v7799, %v7678
      %v7813 = vsel %vm629, %v7800, %v7680
      %v7814 = vsel %vm629, %v7801, %v7682
      %v7815 = vsel %vm629, %v7802, %v7684
      %v7816 = vsel %vm629, %v7803, %v7686
      %v7817 = vsel %vm643, %v7804, %v7714
      %v7818 = vsel %vm643, %v7805, %v7716
      %v7819 = vsel %vm643, %v7806, %v7718
      %v7820 = vsel %vm643, %v7807, %v7720
      %v7821 = vsel %vm643, %v7808, %v7722
      %v7822 = vsel %vm643, %v7809, %v7724
      %v7823 = vsel %vm643, %v7810, %v7726
      %v7824 = vsel %vm643, %v7811, %v7728
      %v7825 = vsel %vm643, %v7812, %v7730
      %v7826 = vsel %vm643, %v7813, %v7732
      %v7827 = vsel %vm643, %v7814, %v7734
      %v7828 = vsel %vm643, %v7815, %v7736
      %v7829 = vsel %vm643, %v7816, %v7738
      %v7830 = vpack.c.bf16 %v7779, %v7778
      %v7831 = vpack.c.bf16 %v7818, %v7817
      %v7832 = vpack.c.bf16 %v7450, %v7449
      %v7833 = vpack.c.bf16 %v7781, %v7780
      %v7834 = vpack.c.bf16 %v7820, %v7819
      %v7835 = vpack.c.bf16 %v7452, %v7451
      %v7836 = vpack.c.bf16 %v7783, %v7782
      %v7837 = vpack.c.bf16 %v7822, %v7821
      %v7838 = vpack.c.bf16 %v7454, %v7453
      %v7839 = vpack.c.bf16 %v7785, %v7784
      %v7840 = vpack.c.bf16 %v7824, %v7823
      %v7841 = vpack.c.bf16 %v7456, %v7455
      %v7842 = vpack.c.bf16 %v7787, %v7786
      %v7843 = vpack.c.bf16 %v7826, %v7825
      %v7844 = vpack.c.bf16 %v7458, %v7457
      %v7845 = vpack.c.bf16 %v7789, %v7788
      %v7846 = vpack.c.bf16 %v7828, %v7827
      %v7847 = vpack.c.bf16 %v7460, %v7459
      %v7848 = vpack.c.bf16 %v7790, %v7790
      %v7849 = vpack.c.bf16 %v7829, %v7829
      %v7850 = vpack.c.bf16 %v7461, %v7461
      %v7851 = vunpack.c.l.bf16 %v7830
      %v7852 = vunpack.c.l.bf16 %v7831
      %v7853 = vunpack.c.l.bf16 %v7832
      %v7854 = vunpack.c.h.bf16 %v7830
      %v7855 = vunpack.c.h.bf16 %v7831
      %v7856 = vunpack.c.h.bf16 %v7832
      %v7857 = vunpack.c.l.bf16 %v7833
      %v7858 = vunpack.c.l.bf16 %v7834
      %v7859 = vunpack.c.l.bf16 %v7835
      %v7860 = vunpack.c.h.bf16 %v7833
      %v7861 = vunpack.c.h.bf16 %v7834
      %v7862 = vunpack.c.h.bf16 %v7835
      %v7863 = vunpack.c.l.bf16 %v7836
      %v7864 = vunpack.c.l.bf16 %v7837
      %v7865 = vunpack.c.l.bf16 %v7838
      %v7866 = vunpack.c.h.bf16 %v7836
      %v7867 = vunpack.c.h.bf16 %v7837
      %v7868 = vunpack.c.h.bf16 %v7838
      %v7869 = vunpack.c.l.bf16 %v7839
      %v7870 = vunpack.c.l.bf16 %v7840
      %v7871 = vunpack.c.l.bf16 %v7841
      %v7872 = vunpack.c.h.bf16 %v7839
      %v7873 = vunpack.c.h.bf16 %v7840
      %v7874 = vunpack.c.h.bf16 %v7841
      %v7875 = vunpack.c.l.bf16 %v7842
      %v7876 = vunpack.c.l.bf16 %v7843
      %v7877 = vunpack.c.l.bf16 %v7844
      %v7878 = vunpack.c.h.bf16 %v7842
      %v7879 = vunpack.c.h.bf16 %v7843
      %v7880 = vunpack.c.h.bf16 %v7844
      %v7881 = vunpack.c.l.bf16 %v7845
      %v7882 = vunpack.c.l.bf16 %v7846
      %v7883 = vunpack.c.l.bf16 %v7847
      %v7884 = vunpack.c.h.bf16 %v7845
      %v7885 = vunpack.c.h.bf16 %v7846
      %v7886 = vunpack.c.h.bf16 %v7847
      %v7887 = vunpack.c.l.bf16 %v7848
      %v7888 = vunpack.c.l.bf16 %v7849
      %v7889 = vunpack.c.l.bf16 %v7850
      %v7890 = vsub.f32 %v7778, %v7851
      %v7891 = vsub.f32 %v7817, %v7852
      %v7892 = vsub.f32 %v7449, %v7853
      %v7893 = vsub.f32 %v7779, %v7854
      %v7894 = vsub.f32 %v7818, %v7855
      %v7895 = vsub.f32 %v7450, %v7856
      %v7896 = vsub.f32 %v7780, %v7857
      %v7897 = vsub.f32 %v7819, %v7858
      %v7898 = vsub.f32 %v7451, %v7859
      %v7899 = vsub.f32 %v7781, %v7860
      %v7900 = vsub.f32 %v7820, %v7861
      %v7901 = vsub.f32 %v7452, %v7862
      %v7902 = vsub.f32 %v7782, %v7863
      %v7903 = vsub.f32 %v7821, %v7864
      %v7904 = vsub.f32 %v7453, %v7865
      %v7905 = vsub.f32 %v7783, %v7866
      %v7906 = vsub.f32 %v7822, %v7867
      %v7907 = vsub.f32 %v7454, %v7868
      %v7908 = vsub.f32 %v7784, %v7869
      %v7909 = vsub.f32 %v7823, %v7870
      %v7910 = vsub.f32 %v7455, %v7871
      %v7911 = vsub.f32 %v7785, %v7872
      %v7912 = vsub.f32 %v7824, %v7873
      %v7913 = vsub.f32 %v7456, %v7874
      %v7914 = vsub.f32 %v7786, %v7875
      %v7915 = vsub.f32 %v7825, %v7876
      %v7916 = vsub.f32 %v7457, %v7877
      %v7917 = vsub.f32 %v7787, %v7878
      %v7918 = vsub.f32 %v7826, %v7879
      %v7919 = vsub.f32 %v7458, %v7880
      %v7920 = vsub.f32 %v7788, %v7881
      %v7921 = vsub.f32 %v7827, %v7882
      %v7922 = vsub.f32 %v7459, %v7883
      %v7923 = vsub.f32 %v7789, %v7884
      %v7924 = vsub.f32 %v7828, %v7885
      %v7925 = vsub.f32 %v7460, %v7886
      %v7926 = vsub.f32 %v7790, %v7887
      %v7927 = vsub.f32 %v7829, %v7888
      %v7928 = vsub.f32 %v7461, %v7889
      %v7929 = vpack.c.bf16 %v7893, %v7890
      %v7930 = vpack.c.bf16 %v7894, %v7891
      %v7931 = vpack.c.bf16 %v7895, %v7892
      %v7932 = vpack.c.bf16 %v7899, %v7896
      %v7933 = vpack.c.bf16 %v7900, %v7897
      %v7934 = vpack.c.bf16 %v7901, %v7898
      %v7935 = vpack.c.bf16 %v7905, %v7902
      %v7936 = vpack.c.bf16 %v7906, %v7903
      %v7937 = vpack.c.bf16 %v7907, %v7904
      %v7938 = vpack.c.bf16 %v7911, %v7908
      %v7939 = vpack.c.bf16 %v7912, %v7909
      %v7940 = vpack.c.bf16 %v7913, %v7910
      %v7941 = vpack.c.bf16 %v7917, %v7914
      %v7942 = vpack.c.bf16 %v7918, %v7915
      %v7943 = vpack.c.bf16 %v7919, %v7916
      %v7944 = vpack.c.bf16 %v7923, %v7920
      %v7945 = vpack.c.bf16 %v7924, %v7921
      %v7946 = vpack.c.bf16 %v7925, %v7922
      %v7947 = vpack.c.bf16 %v7926, %v7926
      %v7948 = vpack.c.bf16 %v7927, %v7927
      %v7949 = vpack.c.bf16 %v7928, %v7928
      %s7950 = scalar_lea.vmem %s1, 864
      %v7951 = vld [vmem:[%s7950] sm:$0xf]
      %v7952 = vld [vmem:[%s7950 + $0x4] sm:$0xf]
      %v7953 = vld [vmem:[%s7950 + $0x8] sm:$0xf]
      %v7954 = vld [vmem:[%s7950 + $0xc] sm:$0xf]
      %v7955 = vld [vmem:[%s7950 + $0x10] sm:$0xf]
      %v7956 = vld [vmem:[%s7950 + $0x14] sm:$0xf]
      %v7957 = vld [vmem:[%s7950 + $0x18] sm:$0xf]
      %v7958 = vld [vmem:[%s7950 + $0x1c] sm:$0xf]
      %v7959 = vld [vmem:[%s7950 + $0x20] sm:$0xf]
      %v7960 = vld [vmem:[%s7950 + $0x24] sm:$0xf]
      %v7961 = vld [vmem:[%s7950 + $0x28] sm:$0xf]
      %v7962 = vld [vmem:[%s7950 + $0x2c] sm:$0xf]
      %v7963 = vld [vmem:[%s7950 + $0x30] sm:$0xf]
      %v7964 = vld [vmem:[%s7950 + $0x34] sm:$0xf]
      %v7965 = vld [vmem:[%s7950 + $0x38] sm:$0xf]
      %v7966 = vld [vmem:[%s7950 + $0x3c] sm:$0xf]
      %v7967 = vld [vmem:[%s7950 + $0x40] sm:$0xf]
      %v7968 = vld [vmem:[%s7950 + $0x44] sm:$0xf]
      %v7969 = vld [vmem:[%s7950 + $0x48] sm:$0xf]
      %v7970 = vld [vmem:[%s7950 + $0x4c] sm:$0xf]
      %v7971 = vld [vmem:[%s7950 + $0x50] sm:$0xf]
      %v7972 = vld [vmem:[%s7950 + $0x54] sm:$0xf]
      %v7973 = vld [vmem:[%s7950 + $0x58] sm:$0xf]
      %v7974 = vld [vmem:[%s7950 + $0x5c] sm:$0xf]
      %v7975 = vld [vmem:[%s7950 + $0x60] sm:$0xf]
      %v7976 = vld [vmem:[%s7950 + $0x64] sm:$0xf]
      %v7977 = vld [vmem:[%s7950 + $0x68] sm:$0xf]
      %v7978 = vld [vmem:[%s7950 + $0x6c] sm:$0xf]
      %v7979 = vld [vmem:[%s7950 + $0x70] sm:$0xf]
      %v7980 = vld [vmem:[%s7950 + $0x74] sm:$0xf]
      %v7981 = vld [vmem:[%s7950 + $0x78] sm:$0xf]
      %v7982 = vld [vmem:[%s7950 + $0x7c] sm:$0xf]
      %v7983 = vld [vmem:[%s7950 + $0x80] sm:$0xf]
      %v7984 = vld [vmem:[%s7950 + $0x84] sm:$0xf]
      %v7985 = vld [vmem:[%s7950 + $0x88] sm:$0xf]
      %v7986 = vld [vmem:[%s7950 + $0x8c] sm:$0xf]
      %v8023 = vunpack.c.l.b16 %v7951
      %v8024 = vunpack.c.l.b16 %v7952
      %v8025 = vunpack.c.l.b16 %v7953
      %v8026 = vunpack.c.l.b16 %v7954
      %v8027 = vunpack.c.l.b16 %v7955
      %v8028 = vunpack.c.l.b16 %v7956
      %v8029 = vunpack.c.l.b16 %v7957
      %v8030 = vunpack.c.l.b16 %v7958
      %v8031 = vunpack.c.l.b16 %v7959
      %v8032 = vunpack.c.l.b16 %v7960
      %v8033 = vunpack.c.l.b16 %v7961
      %v8034 = vunpack.c.l.b16 %v7962
      %v8035 = vunpack.c.l.b16 %v7963
      %v8036 = vunpack.c.l.b16 %v7964
      %v8037 = vunpack.c.l.b16 %v7965
      %v8038 = vunpack.c.l.b16 %v7966
      %v8039 = vunpack.c.l.b16 %v7967
      %v8040 = vunpack.c.l.b16 %v7968
      %v8041 = vunpack.c.l.b16 %v7969
      %v8042 = vunpack.c.l.b16 %v7970
      %v8043 = vunpack.c.l.b16 %v7971
      %v8044 = vunpack.c.l.b16 %v7972
      %v8045 = vunpack.c.l.b16 %v7973
      %v8046 = vunpack.c.l.b16 %v7974
      %v8047 = vunpack.c.l.b16 %v7975
      %v8048 = vunpack.c.l.b16 %v7976
      %v8049 = vunpack.c.l.b16 %v7977
      %v8050 = vunpack.c.l.b16 %v7978
      %v8051 = vunpack.c.l.b16 %v7979
      %v8052 = vunpack.c.l.b16 %v7980
      %v8053 = vunpack.c.l.b16 %v7981
      %v8054 = vunpack.c.l.b16 %v7982
      %v8055 = vunpack.c.l.b16 %v7983
      %v8056 = vunpack.c.l.b16 %v7984
      %v8057 = vunpack.c.l.b16 %v7985
      %v8058 = vunpack.c.l.b16 %v7986
      %v8059 = vpack.c.b16 %v8024, %v8023
      %v8060 = vpack.c.b16 %v8026, %v8025
      %v8061 = vpack.c.b16 %v8028, %v8027
      %v8062 = vpack.c.b16 %v8030, %v8029
      %v8063 = vpack.c.b16 %v8032, %v8031
      %v8064 = vpack.c.b16 %v8034, %v8033
      %v8065 = vpack.c.b16 %v8036, %v8035
      %v8066 = vpack.c.b16 %v8038, %v8037
      %v8067 = vpack.c.b16 %v8040, %v8039
      %v8068 = vpack.c.b16 %v8042, %v8041
      %v8069 = vpack.c.b16 %v8044, %v8043
      %v8070 = vpack.c.b16 %v8046, %v8045
      %v8071 = vpack.c.b16 %v8048, %v8047
      %v8072 = vpack.c.b16 %v8050, %v8049
      %v8073 = vpack.c.b16 %v8052, %v8051
      %v8074 = vpack.c.b16 %v8054, %v8053
      %v8075 = vpack.c.b16 %v8056, %v8055
      %v8076 = vpack.c.b16 %v8058, %v8057
      %v8096 = vsel %vm615, %v7931, 0
      %v8099 = vsel %vm615, %v7934, 0
      %v8102 = vsel %vm615, %v7937, 0
      %v8105 = vsel %vm615, %v7940, 0
      %v8108 = vsel %vm615, %v7943, 0
      %v8111 = vsel %vm615, %v7946, 0
      %v8114 = vsel %vm615, %v7949, 0
      %8116 = vmatprep.subr.bf16.mxu0 0
      %8117 = vmatpush1.bf16.msra.mxu0 %v8059
      %8118 = vmatprep.subr.bf16.mxu0 0
      %8119 = vmatpush1.bf16.msra.mxu0 %v8060
      %8120 = vmatprep.subr.bf16.mxu0 0
      %8121 = vmatpush1.bf16.msra.mxu0 %v8061
      %8122 = vmatprep.subr.bf16.mxu0 0
      %8123 = vmatpush1.bf16.msra.mxu0 %v8062
      %8124 = vmatprep.subr.bf16.mxu0 0
      %8125 = vmatpush1.bf16.msra.mxu0 %v8063
      %8126 = vmatprep.subr.bf16.mxu0 0
      %8127 = vmatpush1.bf16.msra.mxu0 %v8064
      %8128 = vmatprep.subr.bf16.mxu0 0
      %8129 = vmatpush1.bf16.msra.mxu0 %v8065
      %8130 = vmatprep.subr.bf16.mxu0 0
      %8131 = vmatpush1.bf16.msra.mxu0 %v8066
      %8132 = vmatprep.subr.bf16.mxu0 0
      %8133 = vmatpush1.bf16.msra.mxu0 %v8067
      %8134 = vmatprep.subr.bf16.mxu0 0
      %8135 = vmatpush1.bf16.msra.mxu0 %v8068
      %8136 = vmatprep.subr.bf16.mxu0 0
      %8137 = vmatpush1.bf16.msra.mxu0 %v8069
      %8138 = vmatprep.subr.bf16.mxu0 0
      %8139 = vmatpush1.bf16.msra.mxu0 %v8070
      %8140 = vmatprep.subr.bf16.mxu0 0
      %8141 = vmatpush1.bf16.msra.mxu0 %v8071
      %8142 = vmatprep.subr.bf16.mxu0 0
      %8143 = vmatpush1.bf16.msra.mxu0 %v8072
      %8144 = vmatprep.subr.bf16.mxu0 0
      %8145 = vmatpush1.bf16.msra.mxu0 %v8073
      %8146 = vmatprep.subr.bf16.mxu0 0
      %8147 = vmatpush1.bf16.msra.mxu0 %v8074
      %8148 = vmatprep.mubr.bf16.mxu0 %v7930
      %8149 = vmatmul.mubr.bf16.gmra.mrb[0].mxu0 %v7929
      %v8150 = vpop.f32.mrb[0].mxu0
      %v8151 = vadd.f32 0.0, %v8150
      %v8152 = vpop.f32.mrb[0].mxu0
      %v8153 = vpop.f32.mrb[0].mxu0
      %v8154 = vadd.f32 0.0, %v8153
      %v8155 = vpop.f32.mrb[0].mxu0
      %8156 = vmatprep.mubr.bf16.mxu0 %v7933
      %8157 = vmatmul.mubr.bf16.gmra.mrb[0].mxu0 %v7932
      %v8158 = vpop.f32.mrb[0].mxu0
      %v8159 = vadd.f32 0.0, %v8158
      %v8160 = vpop.f32.mrb[0].mxu0
      %v8161 = vpop.f32.mrb[0].mxu0
      %v8162 = vadd.f32 0.0, %v8161
      %v8163 = vpop.f32.mrb[0].mxu0
      %8164 = vmatprep.mubr.bf16.mxu0 %v7936
      %8165 = vmatmul.mubr.bf16.gmra.mrb[0].mxu0 %v7935
      %v8166 = vpop.f32.mrb[0].mxu0
      %v8167 = vadd.f32 0.0, %v8166
      %v8168 = vpop.f32.mrb[0].mxu0
      %v8169 = vpop.f32.mrb[0].mxu0
      %v8170 = vadd.f32 0.0, %v8169
      %v8171 = vpop.f32.mrb[0].mxu0
      %8172 = vmatprep.mubr.bf16.mxu0 %v7939
      %8173 = vmatmul.mubr.bf16.gmra.mrb[0].mxu0 %v7938
      %v8174 = vpop.f32.mrb[0].mxu0
      %v8175 = vadd.f32 0.0, %v8174
      %v8176 = vpop.f32.mrb[0].mxu0
      %v8177 = vpop.f32.mrb[0].mxu0
      %v8178 = vadd.f32 0.0, %v8177
      %v8179 = vpop.f32.mrb[0].mxu0
      %8180 = vmatprep.mubr.bf16.mxu0 %v7942
      %8181 = vmatmul.mubr.bf16.gmra.mrb[0].mxu0 %v7941
      %v8182 = vpop.f32.mrb[0].mxu0
      %v8183 = vadd.f32 0.0, %v8182
      %v8184 = vpop.f32.mrb[0].mxu0
      %v8185 = vpop.f32.mrb[0].mxu0
      %v8186 = vadd.f32 0.0, %v8185
      %v8187 = vpop.f32.mrb[0].mxu0
      %8188 = vmatprep.mubr.bf16.mxu0 %v7945
      %8189 = vmatmul.mubr.bf16.gmra.mrb[0].mxu0 %v7944
      %v8190 = vpop.f32.mrb[0].mxu0
      %v8191 = vadd.f32 0.0, %v8190
      %v8192 = vpop.f32.mrb[0].mxu0
      %v8193 = vpop.f32.mrb[0].mxu0
      %v8194 = vadd.f32 0.0, %v8193
      %v8195 = vpop.f32.mrb[0].mxu0
      %8196 = vmatprep.mubr.bf16.mxu0 %v7948
      %8197 = vmatmul.mubr.bf16.gmra.mrb[0].mxu0 %v7947
      %v8198 = vpop.f32.mrb[0].mxu0
      %v8199 = vadd.f32 0.0, %v8198
      %v8200 = vpop.f32.mrb[0].mxu0
      %v8201 = vpop.f32.mrb[0].mxu0
      %v8202 = vpop.f32.mrb[0].mxu0
      %8203 = vdwg.mxu0
      %8204 = vmatprep.subr.bf16.mxu0 0
      %8205 = vmatpush1.bf16.msra.mxu0 %v8075
      %8206 = vmatprep.subr.bf16.mxu0 0
      %8207 = vmatpush1.bf16.msra.mxu0 %v8076
      %8208 = vmatprep.subr.bf16.mxu0 0
      %8209 = vmatpush1.bf16.msra.mxu0 0
      %8210 = vmatprep.subr.bf16.mxu0 0
      %8211 = vmatpush1.bf16.msra.mxu0 0
      %8212 = vmatprep.subr.bf16.mxu0 0
      %8213 = vmatpush1.bf16.msra.mxu0 0
      %8214 = vmatprep.subr.bf16.mxu0 0
      %8215 = vmatpush1.bf16.msra.mxu0 0
      %8216 = vmatprep.subr.bf16.mxu0 0
      %8217 = vmatpush1.bf16.msra.mxu0 0
      %8218 = vmatprep.subr.bf16.mxu0 0
      %8219 = vmatpush1.bf16.msra.mxu0 0
      %8220 = vmatprep.subr.bf16.mxu0 0
      %8221 = vmatpush1.bf16.msra.mxu0 0
      %8222 = vmatprep.subr.bf16.mxu0 0
      %8223 = vmatpush1.bf16.msra.mxu0 0
      %8224 = vmatprep.subr.bf16.mxu0 0
      %8225 = vmatpush1.bf16.msra.mxu0 0
      %8226 = vmatprep.subr.bf16.mxu0 0
      %8227 = vmatpush1.bf16.msra.mxu0 0
      %8228 = vmatprep.subr.bf16.mxu0 0
      %8229 = vmatpush1.bf16.msra.mxu0 0
      %8230 = vmatprep.subr.bf16.mxu0 0
      %8231 = vmatpush1.bf16.msra.mxu0 0
      %8232 = vmatprep.subr.bf16.mxu0 0
      %8233 = vmatpush1.bf16.msra.mxu0 0
      %8234 = vmatprep.subr.bf16.mxu0 0
      %8235 = vmatpush1.bf16.msra.mxu0 0
      %8236 = vmatprep.mubr.bf16.mxu0 0
      %8237 = vmatmul.mubr.bf16.gmra.mrb[0].mxu0 %v8096
      %v8238 = vpop.f32.mrb[0].mxu0
      %v8239 = vadd.f32 %v8151, %v8238
      %v8240 = vpop.f32.mrb[0].mxu0
      %v8241 = vpop.f32.mrb[0].mxu0
      %v8242 = vadd.f32 %v8154, %v8241
      %v8243 = vpop.f32.mrb[0].mxu0
      %8244 = vmatprep.mubr.bf16.mxu0 0
      %8245 = vmatmul.mubr.bf16.gmra.mrb[0].mxu0 %v8099
      %v8246 = vpop.f32.mrb[0].mxu0
      %v8247 = vadd.f32 %v8159, %v8246
      %v8248 = vpop.f32.mrb[0].mxu0
      %v8249 = vpop.f32.mrb[0].mxu0
      %v8250 = vadd.f32 %v8162, %v8249
      %v8251 = vpop.f32.mrb[0].mxu0
      %8252 = vmatprep.mubr.bf16.mxu0 0
      %8253 = vmatmul.mubr.bf16.gmra.mrb[0].mxu0 %v8102
      %v8254 = vpop.f32.mrb[0].mxu0
      %v8255 = vadd.f32 %v8167, %v8254
      %v8256 = vpop.f32.mrb[0].mxu0
      %v8257 = vpop.f32.mrb[0].mxu0
      %v8258 = vadd.f32 %v8170, %v8257
      %v8259 = vpop.f32.mrb[0].mxu0
      %8260 = vmatprep.mubr.bf16.mxu0 0
      %8261 = vmatmul.mubr.bf16.gmra.mrb[0].mxu0 %v8105
      %v8262 = vpop.f32.mrb[0].mxu0
      %v8263 = vadd.f32 %v8175, %v8262
      %v8264 = vpop.f32.mrb[0].mxu0
      %v8265 = vpop.f32.mrb[0].mxu0
      %v8266 = vadd.f32 %v8178, %v8265
      %v8267 = vpop.f32.mrb[0].mxu0
      %8268 = vmatprep.mubr.bf16.mxu0 0
      %8269 = vmatmul.mubr.bf16.gmra.mrb[0].mxu0 %v8108
      %v8270 = vpop.f32.mrb[0].mxu0
      %v8271 = vadd.f32 %v8183, %v8270
      %v8272 = vpop.f32.mrb[0].mxu0
      %v8273 = vpop.f32.mrb[0].mxu0
      %v8274 = vadd.f32 %v8186, %v8273
      %v8275 = vpop.f32.mrb[0].mxu0
      %8276 = vmatprep.mubr.bf16.mxu0 0
      %8277 = vmatmul.mubr.bf16.gmra.mrb[0].mxu0 %v8111
      %v8278 = vpop.f32.mrb[0].mxu0
      %v8279 = vadd.f32 %v8191, %v8278
      %v8280 = vpop.f32.mrb[0].mxu0
      %v8281 = vpop.f32.mrb[0].mxu0
      %v8282 = vadd.f32 %v8194, %v8281
      %v8283 = vpop.f32.mrb[0].mxu0
      %8284 = vmatprep.mubr.bf16.mxu0 0
      %8285 = vmatmul.mubr.bf16.gmra.mrb[0].mxu0 %v8114
      %v8286 = vpop.f32.mrb[0].mxu0
      %v8287 = vadd.f32 %v8199, %v8286
      %v8288 = vpop.f32.mrb[0].mxu0
      %v8289 = vpop.f32.mrb[0].mxu0
      %v8290 = vpop.f32.mrb[0].mxu0
      %8291 = vdwg.mxu0
      %v8293 = vsel %vm615, %v7832, 0
      %v8296 = vsel %vm615, %v7835, 0
      %v8299 = vsel %vm615, %v7838, 0
      %v8302 = vsel %vm615, %v7841, 0
      %v8305 = vsel %vm615, %v7844, 0
      %v8308 = vsel %vm615, %v7847, 0
      %v8311 = vsel %vm615, %v7850, 0
      %8313 = vmatprep.subr.bf16.mxu0 0
      %8314 = vmatpush1.bf16.msra.mxu0 %v8059
      %8315 = vmatprep.subr.bf16.mxu0 0
      %8316 = vmatpush1.bf16.msra.mxu0 %v8060
      %8317 = vmatprep.subr.bf16.mxu0 0
      %8318 = vmatpush1.bf16.msra.mxu0 %v8061
      %8319 = vmatprep.subr.bf16.mxu0 0
      %8320 = vmatpush1.bf16.msra.mxu0 %v8062
      %8321 = vmatprep.subr.bf16.mxu0 0
      %8322 = vmatpush1.bf16.msra.mxu0 %v8063
      %8323 = vmatprep.subr.bf16.mxu0 0
      %8324 = vmatpush1.bf16.msra.mxu0 %v8064
      %8325 = vmatprep.subr.bf16.mxu0 0
      %8326 = vmatpush1.bf16.msra.mxu0 %v8065
      %8327 = vmatprep.subr.bf16.mxu0 0
      %8328 = vmatpush1.bf16.msra.mxu0 %v8066
      %8329 = vmatprep.subr.bf16.mxu0 0
      %8330 = vmatpush1.bf16.msra.mxu0 %v8067
      %8331 = vmatprep.subr.bf16.mxu0 0
      %8332 = vmatpush1.bf16.msra.mxu0 %v8068
      %8333 = vmatprep.subr.bf16.mxu0 0
      %8334 = vmatpush1.bf16.msra.mxu0 %v8069
      %8335 = vmatprep.subr.bf16.mxu0 0
      %8336 = vmatpush1.bf16.msra.mxu0 %v8070
      %8337 = vmatprep.subr.bf16.mxu0 0
      %8338 = vmatpush1.bf16.msra.mxu0 %v8071
      %8339 = vmatprep.subr.bf16.mxu0 0
      %8340 = vmatpush1.bf16.msra.mxu0 %v8072
      %8341 = vmatprep.subr.bf16.mxu0 0
      %8342 = vmatpush1.bf16.msra.mxu0 %v8073
      %8343 = vmatprep.subr.bf16.mxu0 0
      %8344 = vmatpush1.bf16.msra.mxu0 %v8074
      %8345 = vmatprep.mubr.bf16.mxu0 %v7831
      %8346 = vmatmul.mubr.bf16.gmra.mrb[0].mxu0 %v7830
      %v8347 = vpop.f32.mrb[0].mxu0
      %v8348 = vadd.f32 %v8239, %v8347
      %v8349 = vpop.f32.mrb[0].mxu0
      %v8350 = vpop.f32.mrb[0].mxu0
      %v8351 = vadd.f32 %v8242, %v8350
      %v8352 = vpop.f32.mrb[0].mxu0
      %8353 = vmatprep.mubr.bf16.mxu0 %v7834
      %8354 = vmatmul.mubr.bf16.gmra.mrb[0].mxu0 %v7833
      %v8355 = vpop.f32.mrb[0].mxu0
      %v8356 = vadd.f32 %v8247, %v8355
      %v8357 = vpop.f32.mrb[0].mxu0
      %v8358 = vpop.f32.mrb[0].mxu0
      %v8359 = vadd.f32 %v8250, %v8358
      %v8360 = vpop.f32.mrb[0].mxu0
      %8361 = vmatprep.mubr.bf16.mxu0 %v7837
      %8362 = vmatmul.mubr.bf16.gmra.mrb[0].mxu0 %v7836
      %v8363 = vpop.f32.mrb[0].mxu0
      %v8364 = vadd.f32 %v8255, %v8363
      %v8365 = vpop.f32.mrb[0].mxu0
      %v8366 = vpop.f32.mrb[0].mxu0
      %v8367 = vadd.f32 %v8258, %v8366
      %v8368 = vpop.f32.mrb[0].mxu0
      %8369 = vmatprep.mubr.bf16.mxu0 %v7840
      %8370 = vmatmul.mubr.bf16.gmra.mrb[0].mxu0 %v7839
      %v8371 = vpop.f32.mrb[0].mxu0
      %v8372 = vadd.f32 %v8263, %v8371
      %v8373 = vpop.f32.mrb[0].mxu0
      %v8374 = vpop.f32.mrb[0].mxu0
      %v8375 = vadd.f32 %v8266, %v8374
      %v8376 = vpop.f32.mrb[0].mxu0
      %8377 = vmatprep.mubr.bf16.mxu0 %v7843
      %8378 = vmatmul.mubr.bf16.gmra.mrb[0].mxu0 %v7842
      %v8379 = vpop.f32.mrb[0].mxu0
      %v8380 = vadd.f32 %v8271, %v8379
      %v8381 = vpop.f32.mrb[0].mxu0
      %v8382 = vpop.f32.mrb[0].mxu0
      %v8383 = vadd.f32 %v8274, %v8382
      %v8384 = vpop.f32.mrb[0].mxu0
      %8385 = vmatprep.mubr.bf16.mxu0 %v7846
      %8386 = vmatmul.mubr.bf16.gmra.mrb[0].mxu0 %v7845
      %v8387 = vpop.f32.mrb[0].mxu0
      %v8388 = vadd.f32 %v8279, %v8387
      %v8389 = vpop.f32.mrb[0].mxu0
      %v8390 = vpop.f32.mrb[0].mxu0
      %v8391 = vadd.f32 %v8282, %v8390
      %v8392 = vpop.f32.mrb[0].mxu0
      %8393 = vmatprep.mubr.bf16.mxu0 %v7849
      %8394 = vmatmul.mubr.bf16.gmra.mrb[0].mxu0 %v7848
      %v8395 = vpop.f32.mrb[0].mxu0
      %v8396 = vadd.f32 %v8287, %v8395
      %v8397 = vpop.f32.mrb[0].mxu0
      %v8398 = vpop.f32.mrb[0].mxu0
      %v8399 = vpop.f32.mrb[0].mxu0
      %8400 = vdwg.mxu0
      %8401 = vmatprep.subr.bf16.mxu0 0
      %8402 = vmatpush1.bf16.msra.mxu0 %v8075
      %8403 = vmatprep.subr.bf16.mxu0 0
      %8404 = vmatpush1.bf16.msra.mxu0 %v8076
      %8405 = vmatprep.subr.bf16.mxu0 0
      %8406 = vmatpush1.bf16.msra.mxu0 0
      %8407 = vmatprep.subr.bf16.mxu0 0
      %8408 = vmatpush1.bf16.msra.mxu0 0
      %8409 = vmatprep.subr.bf16.mxu0 0
      %8410 = vmatpush1.bf16.msra.mxu0 0
      %8411 = vmatprep.subr.bf16.mxu0 0
      %8412 = vmatpush1.bf16.msra.mxu0 0
      %8413 = vmatprep.subr.bf16.mxu0 0
      %8414 = vmatpush1.bf16.msra.mxu0 0
      %8415 = vmatprep.subr.bf16.mxu0 0
      %8416 = vmatpush1.bf16.msra.mxu0 0
      %8417 = vmatprep.subr.bf16.mxu0 0
      %8418 = vmatpush1.bf16.msra.mxu0 0
      %8419 = vmatprep.subr.bf16.mxu0 0
      %8420 = vmatpush1.bf16.msra.mxu0 0
      %8421 = vmatprep.subr.bf16.mxu0 0
      %8422 = vmatpush1.bf16.msra.mxu0 0
      %8423 = vmatprep.subr.bf16.mxu0 0
      %8424 = vmatpush1.bf16.msra.mxu0 0
      %8425 = vmatprep.subr.bf16.mxu0 0
      %8426 = vmatpush1.bf16.msra.mxu0 0
      %8427 = vmatprep.subr.bf16.mxu0 0
      %8428 = vmatpush1.bf16.msra.mxu0 0
      %8429 = vmatprep.subr.bf16.mxu0 0
      %8430 = vmatpush1.bf16.msra.mxu0 0
      %8431 = vmatprep.subr.bf16.mxu0 0
      %8432 = vmatpush1.bf16.msra.mxu0 0
      %8433 = vmatprep.mubr.bf16.mxu0 0
      %8434 = vmatmul.mubr.bf16.gmra.mrb[0].mxu0 %v8293
      %v8435 = vpop.f32.mrb[0].mxu0
      %v8436 = vadd.f32 %v8348, %v8435
      %v8437 = vpop.f32.mrb[0].mxu0
      %v8438 = vpop.f32.mrb[0].mxu0
      %v8439 = vadd.f32 %v8351, %v8438
      %v8440 = vpop.f32.mrb[0].mxu0
      %8441 = vmatprep.mubr.bf16.mxu0 0
      %8442 = vmatmul.mubr.bf16.gmra.mrb[0].mxu0 %v8296
      %v8443 = vpop.f32.mrb[0].mxu0
      %v8444 = vadd.f32 %v8356, %v8443
      %v8445 = vpop.f32.mrb[0].mxu0
      %v8446 = vpop.f32.mrb[0].mxu0
      %v8447 = vadd.f32 %v8359, %v8446
      %v8448 = vpop.f32.mrb[0].mxu0
      %8449 = vmatprep.mubr.bf16.mxu0 0
      %8450 = vmatmul.mubr.bf16.gmra.mrb[0].mxu0 %v8299
      %v8451 = vpop.f32.mrb[0].mxu0
      %v8452 = vadd.f32 %v8364, %v8451
      %v8453 = vpop.f32.mrb[0].mxu0
      %v8454 = vpop.f32.mrb[0].mxu0
      %v8455 = vadd.f32 %v8367, %v8454
      %v8456 = vpop.f32.mrb[0].mxu0
      %8457 = vmatprep.mubr.bf16.mxu0 0
      %8458 = vmatmul.mubr.bf16.gmra.mrb[0].mxu0 %v8302
      %v8459 = vpop.f32.mrb[0].mxu0
      %v8460 = vadd.f32 %v8372, %v8459
      %v8461 = vpop.f32.mrb[0].mxu0
      %v8462 = vpop.f32.mrb[0].mxu0
      %v8463 = vadd.f32 %v8375, %v8462
      %v8464 = vpop.f32.mrb[0].mxu0
      %8465 = vmatprep.mubr.bf16.mxu0 0
      %8466 = vmatmul.mubr.bf16.gmra.mrb[0].mxu0 %v8305
      %v8467 = vpop.f32.mrb[0].mxu0
      %v8468 = vadd.f32 %v8380, %v8467
      %v8469 = vpop.f32.mrb[0].mxu0
      %v8470 = vpop.f32.mrb[0].mxu0
      %v8471 = vadd.f32 %v8383, %v8470
      %v8472 = vpop.f32.mrb[0].mxu0
      %8473 = vmatprep.mubr.bf16.mxu0 0
      %8474 = vmatmul.mubr.bf16.gmra.mrb[0].mxu0 %v8308
      %v8475 = vpop.f32.mrb[0].mxu0
      %v8476 = vadd.f32 %v8388, %v8475
      %v8477 = vpop.f32.mrb[0].mxu0
      %v8478 = vpop.f32.mrb[0].mxu0
      %v8479 = vadd.f32 %v8391, %v8478
      %v8480 = vpop.f32.mrb[0].mxu0
      %8481 = vmatprep.mubr.bf16.mxu0 0
      %8482 = vmatmul.mubr.bf16.gmra.mrb[0].mxu0 %v8311
      %v8483 = vpop.f32.mrb[0].mxu0
      %v8484 = vadd.f32 %v8396, %v8483
      %v8485 = vpop.f32.mrb[0].mxu0
      %v8486 = vpop.f32.mrb[0].mxu0
      %v8487 = vpop.f32.mrb[0].mxu0
      %8488 = vdwg.mxu0
      %s8489 = scalar_lea.vmem %s2, 6
      %v8490 = vld [vmem:[%s8489] sm:$0x1]
      %v8492 = vlaneseq
      %v8493 = vshrl.u32 %v8492, 7
      %v8494 = vsub.s32 0, %v8493
      %v8495 = vrot.slane %v8490, %v8494
      %v8497 = vadd.f32 %v8436, %v8495
      %v8498 = vadd.f32 %v8439, %v8495
      %v8499 = vadd.f32 %v8444, %v8495
      %v8500 = vadd.f32 %v8447, %v8495
      %v8501 = vadd.f32 %v8452, %v8495
      %v8502 = vadd.f32 %v8455, %v8495
      %v8503 = vadd.f32 %v8460, %v8495
      %v8504 = vadd.f32 %v8463, %v8495
      %v8505 = vadd.f32 %v8468, %v8495
      %v8506 = vadd.f32 %v8471, %v8495
      %v8507 = vadd.f32 %v8476, %v8495
      %v8508 = vadd.f32 %v8479, %v8495
      %v8509 = vadd.f32 %v8484, %v8495
      %v8510 = vsub.f32 0.0, %v8497
      %v8511 = vsub.f32 0.0, %v8498
      %v8512 = vsub.f32 0.0, %v8499
      %v8513 = vsub.f32 0.0, %v8500
      %v8514 = vsub.f32 0.0, %v8501
      %v8515 = vsub.f32 0.0, %v8502
      %v8516 = vsub.f32 0.0, %v8503
      %v8517 = vsub.f32 0.0, %v8504
      %v8518 = vsub.f32 0.0, %v8505
      %v8519 = vsub.f32 0.0, %v8506
      %v8520 = vsub.f32 0.0, %v8507
      %v8521 = vsub.f32 0.0, %v8508
      %v8522 = vsub.f32 0.0, %v8509
      %v8523 = vmul.f32 %v8510, 1.442695
      %v8524 = vpow.pop %v8523
      %v8525 = vmul.f32 %v8511, 1.442695
      %v8526 = vpow.pop %v8525
      %v8527 = vmul.f32 %v8512, 1.442695
      %v8528 = vpow.pop %v8527
      %v8529 = vmul.f32 %v8513, 1.442695
      %v8530 = vpow.pop %v8529
      %v8531 = vmul.f32 %v8514, 1.442695
      %v8532 = vpow.pop %v8531
      %v8533 = vmul.f32 %v8515, 1.442695
      %v8534 = vpow.pop %v8533
      %v8535 = vmul.f32 %v8516, 1.442695
      %v8536 = vpow.pop %v8535
      %v8537 = vmul.f32 %v8517, 1.442695
      %v8538 = vpow.pop %v8537
      %v8539 = vmul.f32 %v8518, 1.442695
      %v8540 = vpow.pop %v8539
      %v8541 = vmul.f32 %v8519, 1.442695
      %v8542 = vpow.pop %v8541
      %v8543 = vmul.f32 %v8520, 1.442695
      %v8544 = vpow.pop %v8543
      %v8545 = vmul.f32 %v8521, 1.442695
      %v8546 = vpow.pop %v8545
      %v8547 = vmul.f32 %v8522, 1.442695
      %v8548 = vpow.pop %v8547
      %v8549 = vadd.f32 %v8524, 1.0
      %v8550 = vadd.f32 %v8526, 1.0
      %v8551 = vadd.f32 %v8528, 1.0
      %v8552 = vadd.f32 %v8530, 1.0
      %v8553 = vadd.f32 %v8532, 1.0
      %v8554 = vadd.f32 %v8534, 1.0
      %v8555 = vadd.f32 %v8536, 1.0
      %v8556 = vadd.f32 %v8538, 1.0
      %v8557 = vadd.f32 %v8540, 1.0
      %v8558 = vadd.f32 %v8542, 1.0
      %v8559 = vadd.f32 %v8544, 1.0
      %v8560 = vadd.f32 %v8546, 1.0
      %v8561 = vadd.f32 %v8548, 1.0
      %v8562 = vrcp.pop %v8549
      %v8563 = vrcp.pop %v8550
      %v8564 = vrcp.pop %v8551
      %v8565 = vrcp.pop %v8552
      %v8566 = vrcp.pop %v8553
      %v8567 = vrcp.pop %v8554
      %v8568 = vrcp.pop %v8555
      %v8569 = vrcp.pop %v8556
      %v8570 = vrcp.pop %v8557
      %v8571 = vrcp.pop %v8558
      %v8572 = vrcp.pop %v8559
      %v8573 = vrcp.pop %v8560
      %v8574 = vrcp.pop %v8561
      %8575 = vst [vmem:[%s197] sm:$0xff] %v8562
      %8576 = vst [vmem:[%s197 + $0x8] sm:$0xff] %v8563
      %8577 = vst [vmem:[%s197 + $0x10] sm:$0xff] %v8564
      %8578 = vst [vmem:[%s197 + $0x18] sm:$0xff] %v8565
      %8579 = vst [vmem:[%s197 + $0x20] sm:$0xff] %v8566
      %8580 = vst [vmem:[%s197 + $0x28] sm:$0xff] %v8567
      %8581 = vst [vmem:[%s197 + $0x30] sm:$0xff] %v8568
      %8582 = vst [vmem:[%s197 + $0x38] sm:$0xff] %v8569
      %8583 = vst [vmem:[%s197 + $0x40] sm:$0xff] %v8570
      %8584 = vst [vmem:[%s197 + $0x48] sm:$0xff] %v8571
      %8585 = vst [vmem:[%s197 + $0x50] sm:$0xff] %v8572
      %8586 = vst [vmem:[%s197 + $0x58] sm:$0xff] %v8573
      %8587 = vst [vmem:[%s197 + $0x60] sm:$0xf] %v8574
      %p8588 = scmp.lt.s32.totalorder %s15, 1
      %s8589 = scalar_select %p8588, %s15, 1
      %s8590 = smul.addr %s8589, 13
      %s8591 = smul.addr %s8590, 8
      %s8592 = scalar_lea.vmem %s4, %s8591
      // Predicated region
      $region37: #{dropout_model_forward.1} parent=35 // pred_check
        %p8593 = pneg %p122
      $region38: #{dropout_model_forward.1} parent=35 // pred_check_branch
        %8595 = sbr.rel (%p8593) target = $region40
      $region39: #{dropout_model_forward.1} parent=35 // pred_region
        _
      $region40: #{dropout_model_forward.1} parent=35 // pred_fallthru
        _
    $region36: #{dropout_model_forward.1} parent=5 // pred_fallthru
      _
    %p8596 = scmp.le.s32.totalorder 2, %s10
    // Predicated region
    $region41: #{dropout_model_forward.1} parent=5 // pred_check
      %p8597 = pneg %p8596
    $region42: #{dropout_model_forward.1} parent=5 // pred_check_branch
      %8599 = sbr.rel (%p8597) target = $region44
    $region43: #{dropout_model_forward.1} parent=5 // pred_region
      %s8600 = ssub.s32 %s10, 2
      // Predicated region
      $region45: #{dropout_model_forward.1} parent=43 // pred_check
        %p8601 = pneg %p128
      $region46: #{dropout_model_forward.1} parent=43 // pred_check_branch
        %8603 = sbr.rel (%p8601) target = $region48
      $region47: #{dropout_model_forward.1} parent=43 // pred_region
        %p8604 = scmp.lt.s32.totalorder %s16, 1
        %s8605 = scalar_select %p8604, %s16, 1
        %s8606 = smul.addr %s8605, 13
        %s8607 = smul.addr %s8606, 8
        %s8608 = scalar_lea.vmem %s4, %s8607
      $region48: #{dropout_model_forward.1} parent=43 // pred_fallthru
        _
    $region44: #{dropout_model_forward.1} parent=5 // pred_fallthru
      _
  $region6: #{dropout_model_forward.1} parent=0 // loop_footer
    %s14 = sadd.s32 1, %s10
  $region7: #{dropout_model_forward.1} parent=0 // loop_footer_branch
    %9 = sbr.rel target = $region3
  $region8: #{dropout_model_forward.1} parent=0 // loop_exit
    _

</llo_original>
